<compile_context>
chip_gen: v7x
topology: tpu7x:2x2x1
jax: 0.10.0
libtpu: 0.0.40
codegen_flags: <defaults>
</compile_context>

<pallas_src>
import jax
import jax.numpy as jnp
from jax.experimental import pallas as pl
from jax.experimental.pallas import tpu as pltpu

N_NODES = 32                      # nodes per graph
NUM_BY = 4                        # num_birthyear_disc (one-hot width)
NUM_SYMP = 15                     # symptom categories
NUM_OPT = 3                       # options per symptom {0,1,2}
IN_FEAT = NUM_BY + 1 + NUM_SYMP   # 20 raw categorical columns
EMB_DIM = 32                      # emb_hidden_dim
HID = 8                           # hidden_dim
HEADS = 2
D1 = HEADS * HID                  # conv1 concat width = 16
D2 = HID * HEADS                  # conv2 channels (heads=1) = 16
NEG_SLOPE = 0.2                   # GATv2Conv default leaky_relu slope


def _gatv2_layer(x, adj_mask, w_lr, b_lr, att_flat, bias, heads, c, concat):
    """Dense GATv2 layer (PyG GATv2Conv semantics) on an [N, F] node matrix.

    w_lr: [F, 2*heads*c] fused [lin_l | lin_r]; b_lr: [1, 2*heads*c];
    att_flat: [1, heads*c] (head-major); bias: [1, out_dim].
    """
    d = heads * c
    g = jnp.dot(x, w_lr, preferred_element_type=jnp.float32) + b_lr   # [N, 2d]
    gl = g[:, :d]                      # source transform (messages)
    gr = g[:, d:]                      # target transform
    # pairwise pre-activation for ALL heads in one pass: t[i,j,k] = gr[i,k]+gl[j,k]
    t = gr[:, None, :] + gl[None, :, :]                  # [N, N, d]
    t = jnp.where(t > 0.0, t, NEG_SLOPE * t)             # leaky_relu (single pass)
    u = t * att_flat.reshape(1, 1, d)                    # att-weighted, all heads
    outs = []
    for h in range(heads):
        e = jnp.sum(u[:, :, h * c:(h + 1) * c], axis=-1)       # [N_i, N_j]
        e = jnp.where(adj_mask, e, jnp.float32(-1e30))
        m = jnp.max(e, axis=-1, keepdims=True)
        p = jnp.exp(e - m)              # masked entries underflow to exactly 0
        denom = jnp.sum(p, axis=-1, keepdims=True)
        alpha = p * pl.reciprocal(denom, approx=True)           # softmax over j
        outs.append(jnp.dot(alpha, gl[:, h * c:(h + 1) * c],
                            preferred_element_type=jnp.float32))
    if concat:
        out = jnp.concatenate(outs, axis=-1)                    # [N, heads*c]
    else:
        out = outs[0] if heads == 1 else sum(outs) / float(heads)
    return out + bias


def gat_net_kernel(x_ref, edge_ref, wemb_ref, wgat_ref, vec_ref, out_ref):
    n = N_NODES
    x = x_ref[0]              # [N, 20]  raw categorical features (f32)
    edges = edge_ref[0]       # [2, E]   int32, row0 = src j, row1 = dst i (pad = -1)
    vecs = vec_ref[...]       # [8, 32]  packed small parameters

    # ---- embedding lookups as matmuls (no gathers) --------------------------
    # x_emb = (birth_emb + gender_emb + mean_i symptom_emb_i) / 3
    eq1 = (x == 1.0).astype(jnp.float32)
    eq2 = (x == 2.0).astype(jnp.float32)
    x_emb = (jnp.dot(x, wemb_ref[0], preferred_element_type=jnp.float32)
             + jnp.dot(eq1, wemb_ref[1], preferred_element_type=jnp.float32)
             + jnp.dot(eq2, wemb_ref[2], preferred_element_type=jnp.float32)
             + vecs[2:3, :]) * (1.0 / 3.0)                      # [N, EMB_DIM]
    # dropout(p=0.6) is identity in eval mode.

    # ---- dense adjacency (with self loops) from the edge list ---------------
    e_cnt = edges.shape[1]
    src = edges[0:1, :]                                          # [1, E]
    dst = edges[1:2, :]
    node_ids = jax.lax.broadcasted_iota(jnp.int32, (n, e_cnt), 0)
    src_ohT = (node_ids == src).astype(jnp.float32)              # [N, E]  (j, e)
    dst_ohT = (node_ids == dst).astype(jnp.float32)              # [N, E]  (i, e)
    adj_cnt = jnp.einsum('ie,je->ij', dst_ohT, src_ohT,
                         preferred_element_type=jnp.float32)     # [N_i, N_j]
    row_i = jax.lax.broadcasted_iota(jnp.int32, (n, n), 0)
    col_j = jax.lax.broadcasted_iota(jnp.int32, (n, n), 1)
    adj_mask = jnp.logical_or(adj_cnt > 0.5, row_i == col_j)

    # ---- conv1: GATv2(EMB_DIM -> HID, heads=2, concat) + ELU ----------------
    h1 = _gatv2_layer(x_emb, adj_mask, wgat_ref[0], vecs[0:1, :],
                      vecs[3:4, 0:D1], vecs[5:6, 0:D1], HEADS, HID, True)
    h1 = jnp.where(h1 > 0.0, h1, jnp.exp(jnp.minimum(h1, 0.0)) - 1.0)   # ELU

    # ---- conv2: GATv2(D1 -> D2, heads=1, mean) ------------------------------
    w_lr2 = wgat_ref[1][0:D1, :]                                 # [16, 32]
    h2 = _gatv2_layer(h1, adj_mask, w_lr2, vecs[1:2, :],
                      vecs[4:5, 0:D2], vecs[6:7, 0:D2], 1, D2, False)

    # ---- final Linear(D2 -> 1) ----------------------------------------------
    lin_w = vecs[7:8, 0:D2]                                      # [1, 16]
    lin_b = vecs[7:8, D2:D2 + 1]                                 # [1, 1]
    out_ref[0] = jnp.sum(h2 * lin_w, axis=-1, keepdims=True) + lin_b


@jax.jit
def gat_net_forward_batched(x_b, edge_index_b, wemb, wgat, vecs):
    """x_b: [B, N, 20] raw categorical features; edge_index_b: [B, 2, E] int32."""
    b, n, f = x_b.shape
    e_cnt = edge_index_b.shape[2]
    return pl.pallas_call(
        gat_net_kernel,
        out_shape=jax.ShapeDtypeStruct((b, n, 1), jnp.float32),
        grid=(b,),
        in_specs=[
            pl.BlockSpec((1, n, f), lambda i: (i, 0, 0)),
            pl.BlockSpec((1, 2, e_cnt), lambda i: (i, 0, 0)),
            pl.BlockSpec(wemb.shape, lambda i: (0, 0, 0)),   # weights: resident,
            pl.BlockSpec(wgat.shape, lambda i: (0, 0, 0)),   # fetched once
            pl.BlockSpec(vecs.shape, lambda i: (0, 0)),
        ],
        out_specs=pl.BlockSpec((1, n, 1), lambda i: (i, 0, 0)),
        compiler_params=pltpu.CompilerParams(
            dimension_semantics=("parallel",)),   # v7x: shard batch over both TCs
    )(x_b.astype(jnp.float32), edge_index_b.astype(jnp.int32), wemb, wgat, vecs)


def gat_net_forward(x, edge_index, packed):
    """Single-graph forward matching GAT_Net.forward(x, edge_index)."""
    return gat_net_forward_batched(x[None], edge_index[None], *packed)[0]


# ------------------------- parameters ----------------------------------------
def init_params(key):
    ks = jax.random.split(key, 40)
    nrm = lambda k, shape: 0.1 * jax.random.normal(k, shape, jnp.float32)
    p, i = {}, 0
    p["lookup_birth"] = nrm(ks[i], (NUM_BY, EMB_DIM)); i += 1
    p["lookup_gender"] = nrm(ks[i], (2, EMB_DIM)); i += 1
    for j in range(NUM_SYMP):
        p[f"lookup_a{j + 1}"] = nrm(ks[i], (NUM_OPT, EMB_DIM)); i += 1
    # conv1: GATv2Conv(EMB_DIM, HID, heads=HEADS)
    p["c1_wl"] = nrm(ks[i], (EMB_DIM, D1)); i += 1
    p["c1_bl"] = nrm(ks[i], (D1,)); i += 1
    p["c1_wr"] = nrm(ks[i], (EMB_DIM, D1)); i += 1
    p["c1_br"] = nrm(ks[i], (D1,)); i += 1
    p["c1_att"] = nrm(ks[i], (HEADS, HID)); i += 1
    p["c1_bias"] = nrm(ks[i], (D1,)); i += 1
    # conv2: GATv2Conv(D1, D2, heads=1, concat=False)
    p["c2_wl"] = nrm(ks[i], (D1, D2)); i += 1
    p["c2_bl"] = nrm(ks[i], (D2,)); i += 1
    p["c2_wr"] = nrm(ks[i], (D1, D2)); i += 1
    p["c2_br"] = nrm(ks[i], (D2,)); i += 1
    p["c2_att"] = nrm(ks[i], (1, D2)); i += 1
    p["c2_bias"] = nrm(ks[i], (D2,)); i += 1
    # final Linear(D2, 1)
    p["lin_w"] = nrm(ks[i], (D2,)); i += 1
    p["lin_b"] = nrm(ks[i], ()); i += 1
    return p


def pack_params(p):
    """Pack parameters into 3 slabs: wemb [3,20,32], wgat [2,32,32], vecs [8,32]."""
    # embedding-lookups-as-matmuls:
    # x_emb*3 = x @ m_lin + (x==1) @ m_eq1 + (x==2) @ m_eq2 + emb_bias
    m_lin = jnp.zeros((IN_FEAT, EMB_DIM), jnp.float32)
    m_lin = m_lin.at[0:NUM_BY, :].set(p["lookup_birth"])
    m_lin = m_lin.at[NUM_BY, :].set(p["lookup_gender"][1] - p["lookup_gender"][0])
    m_eq1 = jnp.zeros((IN_FEAT, EMB_DIM), jnp.float32)
    m_eq2 = jnp.zeros((IN_FEAT, EMB_DIM), jnp.float32)
    base = jnp.zeros((EMB_DIM,), jnp.float32)
    for i in range(NUM_SYMP):
        tbl = p[f"lookup_a{i + 1}"]
        r = NUM_BY + 1 + i
        m_eq1 = m_eq1.at[r, :].set((tbl[1] - tbl[0]) / NUM_SYMP)
        m_eq2 = m_eq2.at[r, :].set((tbl[2] - tbl[0]) / NUM_SYMP)
        base = base + tbl[0] / NUM_SYMP
    emb_bias = p["lookup_gender"][0] + base
    wemb = jnp.stack([m_lin, m_eq1, m_eq2])                        # [3, 20, 32]

    w_lr1 = jnp.concatenate([p["c1_wl"], p["c1_wr"]], axis=1)      # [32, 32]
    w_lr2 = jnp.concatenate([p["c2_wl"], p["c2_wr"]], axis=1)      # [16, 32]
    w_lr2 = jnp.zeros((EMB_DIM, 2 * D2), jnp.float32).at[:D1, :].set(w_lr2)
    wgat = jnp.stack([w_lr1, w_lr2])                               # [2, 32, 32]

    vecs = jnp.zeros((8, EMB_DIM), jnp.float32)
    vecs = vecs.at[0, :].set(jnp.concatenate([p["c1_bl"], p["c1_br"]]))
    vecs = vecs.at[1, :].set(jnp.concatenate([p["c2_bl"], p["c2_br"]]))
    vecs = vecs.at[2, :].set(emb_bias)
    vecs = vecs.at[3, 0:D1].set(p["c1_att"].reshape(-1))
    vecs = vecs.at[4, 0:D2].set(p["c2_att"].reshape(-1))
    vecs = vecs.at[5, 0:D1].set(p["c1_bias"])
    vecs = vecs.at[6, 0:D2].set(p["c2_bias"])
    vecs = vecs.at[7, 0:D2].set(p["lin_w"])
    vecs = vecs.at[7, D2].set(p["lin_b"])
    return wemb, wgat, vecs


# ------------------------- pure-JAX reference (for validation) ---------------
def gat_net_reference(x, edge_index, p):
    n = x.shape[0]
    birth = p["lookup_birth"][jnp.argmax(x[:, :NUM_BY], axis=1)]
    gender = p["lookup_gender"][x[:, NUM_BY].astype(jnp.int32)]
    feat = jnp.zeros((n, EMB_DIM), jnp.float32)
    for i in range(NUM_SYMP):
        feat = feat + p[f"lookup_a{i + 1}"][x[:, NUM_BY + 1 + i].astype(jnp.int32)]
    x_emb = (birth + gender + feat / NUM_SYMP) / 3.0

    src, dst = edge_index[0], edge_index[1]
    adj = jnp.zeros((n, n), jnp.float32).at[dst, src].set(1.0)
    adj = jnp.maximum(adj, jnp.eye(n, dtype=jnp.float32))

    def layer(h, wl, bl, wr, br, att, bias, heads, c, concat):
        gl = h @ wl + bl
        gr = h @ wr + br
        outs = []
        for hh in range(heads):
            glh = gl[:, hh * c:(hh + 1) * c]
            grh = gr[:, hh * c:(hh + 1) * c]
            t = grh[:, None, :] + glh[None, :, :]
            t = jnp.where(t > 0, t, NEG_SLOPE * t)
            e = jnp.sum(t * att[hh], axis=-1)
            e = jnp.where(adj > 0, e, -jnp.inf)
            outs.append(jax.nn.softmax(e, axis=-1) @ glh)
        out = jnp.concatenate(outs, -1) if concat else sum(outs) / heads
        return out + bias

    h1 = layer(x_emb, p["c1_wl"], p["c1_bl"], p["c1_wr"], p["c1_br"],
               p["c1_att"], p["c1_bias"], HEADS, HID, True)
    h1 = jax.nn.elu(h1)
    h2 = layer(h1, p["c2_wl"], p["c2_bl"], p["c2_wr"], p["c2_br"],
               p["c2_att"], p["c2_bias"], 1, D2, False)
    return h2 @ p["lin_w"][:, None] + p["lin_b"]


if __name__ == "__main__":
    key = jax.random.PRNGKey(0)
    kp, kb, kg, ks_, ke = jax.random.split(key, 5)
    params = init_params(kp)
    packed = pack_params(params)

    B, n = 4, N_NODES
    # raw categorical node features: [one-hot birth-year(4)] [gender] [15 symptoms]
    birth = jax.nn.one_hot(jax.random.randint(kb, (B, n), 0, NUM_BY), NUM_BY,
                           dtype=jnp.float32)
    gender = jax.random.randint(kg, (B, n, 1), 0, 2).astype(jnp.float32)
    symp = jax.random.randint(ks_, (B, n, NUM_SYMP), 0, NUM_OPT).astype(jnp.float32)
    x_b = jnp.concatenate([birth, gender, symp], axis=-1)            # [B, N, 20]

    # per-graph edges: bidirectional ring + a few random extras (row0=src, row1=dst)
    idx = jnp.arange(n)
    ring = jnp.stack([jnp.concatenate([idx, (idx + 1) % n]),
                      jnp.concatenate([(idx + 1) % n, idx])]).astype(jnp.int32)
    extra = jax.random.randint(ke, (B, 2, 16), 0, n, dtype=jnp.int32)
    edge_index_b = jnp.concatenate(
        [jnp.broadcast_to(ring[None], (B, 2, 2 * n)), extra], axis=-1)  # [B, 2, 80]

    out = gat_net_forward_batched(x_b, edge_index_b, *packed)
    out = jax.block_until_ready(out)
    assert out.shape == (B, n, 1), out.shape
    assert bool(jnp.all(jnp.isfinite(out)))

    # cross-check against the pure-JAX reference of the PyTorch forward
    ref = jnp.stack([gat_net_reference(x_b[b], edge_index_b[b], params)
                     for b in range(B)])
    assert bool(jnp.allclose(out, ref, rtol=2e-2, atol=2e-3)), (
        float(jnp.max(jnp.abs(out - ref))))

    print("KERNEL_OK")
</pallas_src>

<mosaic_0001>
module attributes {stable_mosaic.version = 11 : i64} {
  func.func @gat_net_kernel(%arg0: i32, %arg1: memref<1x32x20xf32, #tpu.memory_space<vmem>>, %arg2: memref<1x2x80xi32, #tpu.memory_space<vmem>>, %arg3: memref<3x20x32xf32, #tpu.memory_space<vmem>>, %arg4: memref<2x32x32xf32, #tpu.memory_space<vmem>>, %arg5: memref<8x32xf32, #tpu.memory_space<vmem>>, %arg6: memref<1x32x1xf32, #tpu.memory_space<vmem>>) attributes {dimension_semantics = [#tpu.dimension_semantics<parallel>], iteration_bounds = array<i64: 4>, scalar_prefetch = 0 : i64, scratch_operands = 0 : i64, tpu.core_type = #tpu.core_type<tc>, window_params = [{transform_indices = @transform_0, window_bounds = array<i64: 1, 32, 20>}, {transform_indices = @transform_1, window_bounds = array<i64: 1, 2, 80>}, {pipeline_mode = #tpu.pipeline_mode<synchronous>, transform_indices = @transform_2, window_bounds = array<i64: 3, 20, 32>}, {pipeline_mode = #tpu.pipeline_mode<synchronous>, transform_indices = @transform_3, window_bounds = array<i64: 2, 32, 32>}, {pipeline_mode = #tpu.pipeline_mode<synchronous>, transform_indices = @transform_4, window_bounds = array<i64: 8, 32>}, {transform_indices = @transform_5, window_bounds = array<i64: 1, 32, 1>}]} {
    %c0 = arith.constant 0 : index
    %c0_0 = arith.constant 0 : index
    %c0_1 = arith.constant 0 : index
    %0 = vector.load %arg1[%c0, %c0_0, %c0_1] : memref<1x32x20xf32, #tpu.memory_space<vmem>>, vector<1x32x20xf32>
    %1 = vector.shape_cast %0 : vector<1x32x20xf32> to vector<32x20xf32>
    %c0_2 = arith.constant 0 : index
    %c0_3 = arith.constant 0 : index
    %c0_4 = arith.constant 0 : index
    %2 = vector.load %arg2[%c0_2, %c0_3, %c0_4] : memref<1x2x80xi32, #tpu.memory_space<vmem>>, vector<1x2x80xi32>
    %3 = vector.shape_cast %2 : vector<1x2x80xi32> to vector<2x80xi32>
    %c0_5 = arith.constant 0 : index
    %c0_6 = arith.constant 0 : index
    %4 = vector.load %arg5[%c0_5, %c0_6] : memref<8x32xf32, #tpu.memory_space<vmem>>, vector<8x32xf32>
    %cst = arith.constant 1.000000e+00 : f32
    %5 = vector.broadcast %cst : f32 to vector<32x20xf32>
    %6 = arith.cmpf oeq, %1, %5 : vector<32x20xf32>
    %7 = arith.extui %6 : vector<32x20xi1> to vector<32x20xi32>
    %8 = arith.sitofp %7 : vector<32x20xi32> to vector<32x20xf32>
    %cst_7 = arith.constant 2.000000e+00 : f32
    %9 = vector.broadcast %cst_7 : f32 to vector<32x20xf32>
    %10 = arith.cmpf oeq, %1, %9 : vector<32x20xf32>
    %11 = arith.extui %10 : vector<32x20xi1> to vector<32x20xi32>
    %12 = arith.sitofp %11 : vector<32x20xi32> to vector<32x20xf32>
    %c0_8 = arith.constant 0 : index
    %c0_9 = arith.constant 0 : index
    %c0_10 = arith.constant 0 : index
    %13 = vector.load %arg3[%c0_8, %c0_9, %c0_10] : memref<3x20x32xf32, #tpu.memory_space<vmem>>, vector<1x20x32xf32>
    %14 = vector.shape_cast %13 : vector<1x20x32xf32> to vector<20x32xf32>
    %cst_11 = arith.constant dense<0.000000e+00> : vector<32x32xf32>
    %15 = tpu.matmul %1, %14, %cst_11 {dimension_numbers = #tpu.dot_dimension_numbers<[1], [0], [0], [1], [0, 0, 1, 1], [], []>} : vector<32x20xf32>, vector<20x32xf32>, vector<32x32xf32> -> vector<32x32xf32>
    %c1 = arith.constant 1 : index
    %c0_12 = arith.constant 0 : index
    %c0_13 = arith.constant 0 : index
    %16 = vector.load %arg3[%c1, %c0_12, %c0_13] : memref<3x20x32xf32, #tpu.memory_space<vmem>>, vector<1x20x32xf32>
    %17 = vector.shape_cast %16 : vector<1x20x32xf32> to vector<20x32xf32>
    %cst_14 = arith.constant dense<0.000000e+00> : vector<32x32xf32>
    %18 = tpu.matmul %8, %17, %cst_14 {dimension_numbers = #tpu.dot_dimension_numbers<[1], [0], [0], [1], [0, 0, 1, 1], [], []>} : vector<32x20xf32>, vector<20x32xf32>, vector<32x32xf32> -> vector<32x32xf32>
    %19 = arith.addf %15, %18 : vector<32x32xf32>
    %c2 = arith.constant 2 : index
    %c0_15 = arith.constant 0 : index
    %c0_16 = arith.constant 0 : index
    %20 = vector.load %arg3[%c2, %c0_15, %c0_16] : memref<3x20x32xf32, #tpu.memory_space<vmem>>, vector<1x20x32xf32>
    %21 = vector.shape_cast %20 : vector<1x20x32xf32> to vector<20x32xf32>
    %cst_17 = arith.constant dense<0.000000e+00> : vector<32x32xf32>
    %22 = tpu.matmul %12, %21, %cst_17 {dimension_numbers = #tpu.dot_dimension_numbers<[1], [0], [0], [1], [0, 0, 1, 1], [], []>} : vector<32x20xf32>, vector<20x32xf32>, vector<32x32xf32> -> vector<32x32xf32>
    %23 = arith.addf %19, %22 : vector<32x32xf32>
    %24 = vector.extract_strided_slice %4 {offsets = [2, 0], sizes = [1, 32], strides = [1, 1]} : vector<8x32xf32> to vector<1x32xf32>
    %25 = vector.broadcast %24 : vector<1x32xf32> to vector<32x32xf32>
    %26 = arith.addf %23, %25 : vector<32x32xf32>
    %cst_18 = arith.constant 0.333333343 : f32
    %27 = vector.broadcast %cst_18 : f32 to vector<32x32xf32>
    %28 = arith.mulf %26, %27 : vector<32x32xf32>
    %29 = vector.extract_strided_slice %3 {offsets = [0, 0], sizes = [1, 80], strides = [1, 1]} : vector<2x80xi32> to vector<1x80xi32>
    %30 = vector.extract_strided_slice %3 {offsets = [1, 0], sizes = [1, 80], strides = [1, 1]} : vector<2x80xi32> to vector<1x80xi32>
    %31 = tpu.iota {dimensions = array<i32: 0>} : vector<32x80xi32>
    %32 = vector.broadcast %29 : vector<1x80xi32> to vector<32x80xi32>
    %33 = arith.cmpi eq, %31, %32 : vector<32x80xi32>
    %34 = arith.extui %33 : vector<32x80xi1> to vector<32x80xi32>
    %35 = arith.sitofp %34 : vector<32x80xi32> to vector<32x80xf32>
    %36 = vector.broadcast %30 : vector<1x80xi32> to vector<32x80xi32>
    %37 = arith.cmpi eq, %31, %36 : vector<32x80xi32>
    %38 = arith.extui %37 : vector<32x80xi1> to vector<32x80xi32>
    %39 = arith.sitofp %38 : vector<32x80xi32> to vector<32x80xf32>
    "tpu.trace_start"() <{level = 10 : i32, message = "ie,je->ij"}> : () -> ()
    %cst_19 = arith.constant dense<0.000000e+00> : vector<32x32xf32>
    %40 = tpu.matmul %39, %35, %cst_19 {dimension_numbers = #tpu.dot_dimension_numbers<[1], [1], [0], [0], [0, 0, 1, 0], [], []>} : vector<32x80xf32>, vector<32x80xf32>, vector<32x32xf32> -> vector<32x32xf32>
    "tpu.trace_stop"() : () -> ()
    %41 = tpu.iota {dimensions = array<i32: 0>} : vector<32x32xi32>
    %42 = tpu.iota {dimensions = array<i32: 1>} : vector<32x32xi32>
    %cst_20 = arith.constant 5.000000e-01 : f32
    %43 = vector.broadcast %cst_20 : f32 to vector<32x32xf32>
    %44 = arith.cmpf ogt, %40, %43 : vector<32x32xf32>
    %45 = arith.cmpi eq, %41, %42 : vector<32x32xi32>
    %46 = arith.ori %44, %45 : vector<32x32xi1>
    %c0_21 = arith.constant 0 : index
    %c0_22 = arith.constant 0 : index
    %c0_23 = arith.constant 0 : index
    %47 = vector.load %arg4[%c0_21, %c0_22, %c0_23] : memref<2x32x32xf32, #tpu.memory_space<vmem>>, vector<1x32x32xf32>
    %48 = vector.shape_cast %47 : vector<1x32x32xf32> to vector<32x32xf32>
    %49 = vector.extract_strided_slice %4 {offsets = [0, 0], sizes = [1, 32], strides = [1, 1]} : vector<8x32xf32> to vector<1x32xf32>
    %50 = vector.extract_strided_slice %4 {offsets = [3, 0], sizes = [1, 16], strides = [1, 1]} : vector<8x32xf32> to vector<1x16xf32>
    %51 = vector.extract_strided_slice %4 {offsets = [5, 0], sizes = [1, 16], strides = [1, 1]} : vector<8x32xf32> to vector<1x16xf32>
    %cst_24 = arith.constant dense<0.000000e+00> : vector<32x32xf32>
    %52 = tpu.matmul %28, %48, %cst_24 {dimension_numbers = #tpu.dot_dimension_numbers<[1], [0], [0], [1], [0, 0, 1, 1], [], []>} : vector<32x32xf32>, vector<32x32xf32>, vector<32x32xf32> -> vector<32x32xf32>
    %53 = vector.broadcast %49 : vector<1x32xf32> to vector<32x32xf32>
    %54 = arith.addf %52, %53 : vector<32x32xf32>
    %55 = vector.extract_strided_slice %54 {offsets = [0, 0], sizes = [32, 16], strides = [1, 1]} : vector<32x32xf32> to vector<32x16xf32>
    %56 = vector.extract_strided_slice %54 {offsets = [0, 16], sizes = [32, 16], strides = [1, 1]} : vector<32x32xf32> to vector<32x16xf32>
    %57 = vector.shape_cast %56 : vector<32x16xf32> to vector<32x1x16xf32>
    %58 = vector.shape_cast %55 : vector<32x16xf32> to vector<1x32x16xf32>
    %59 = vector.broadcast %57 : vector<32x1x16xf32> to vector<32x32x16xf32>
    %60 = vector.broadcast %58 : vector<1x32x16xf32> to vector<32x32x16xf32>
    %61 = arith.addf %59, %60 : vector<32x32x16xf32>
    %cst_25 = arith.constant 0.000000e+00 : f32
    %62 = vector.broadcast %cst_25 : f32 to vector<32x32x16xf32>
    %63 = arith.cmpf ogt, %61, %62 : vector<32x32x16xf32>
    %cst_26 = arith.constant 2.000000e-01 : f32
    %64 = vector.broadcast %cst_26 : f32 to vector<32x32x16xf32>
    %65 = arith.mulf %64, %61 : vector<32x32x16xf32>
    %66 = arith.select %63, %61, %65 : vector<32x32x16xi1>, vector<32x32x16xf32>
    %67 = vector.shape_cast %50 : vector<1x16xf32> to vector<1x1x16xf32>
    %68 = vector.broadcast %67 : vector<1x1x16xf32> to vector<32x32x16xf32>
    %69 = arith.mulf %66, %68 : vector<32x32x16xf32>
    %70 = vector.extract_strided_slice %69 {offsets = [0, 0, 0], sizes = [32, 32, 8], strides = [1, 1, 1]} : vector<32x32x16xf32> to vector<32x32x8xf32>
    %cst_27 = arith.constant dense<0.000000e+00> : vector<32x32xf32>
    %71 = vector.multi_reduction <add>, %70, %cst_27 [2] : vector<32x32x8xf32> to vector<32x32xf32>
    %cst_28 = arith.constant -1.000000e+30 : f32
    %72 = vector.broadcast %cst_28 : f32 to vector<32x32xf32>
    %73 = arith.select %46, %71, %72 : vector<32x32xi1>, vector<32x32xf32>
    %cst_29 = arith.constant dense<0xFF800000> : vector<32xf32>
    %74 = vector.multi_reduction <maximumf>, %73, %cst_29 [1] : vector<32x32xf32> to vector<32xf32>
    %75 = vector.shape_cast %74 : vector<32xf32> to vector<32x1xf32>
    %76 = vector.broadcast %75 : vector<32x1xf32> to vector<32x32xf32>
    %77 = arith.subf %73, %76 : vector<32x32xf32>
    %78 = math.exp %77 : vector<32x32xf32>
    %cst_30 = arith.constant dense<0.000000e+00> : vector<32xf32>
    %79 = vector.multi_reduction <add>, %78, %cst_30 [1] : vector<32x32xf32> to vector<32xf32>
    %80 = vector.shape_cast %79 : vector<32xf32> to vector<32x1xf32>
    %81 = tpu.reciprocal %80 {approx = true} : vector<32x1xf32> -> vector<32x1xf32>
    %82 = vector.broadcast %81 : vector<32x1xf32> to vector<32x32xf32>
    %83 = arith.mulf %78, %82 : vector<32x32xf32>
    %84 = vector.extract_strided_slice %55 {offsets = [0, 0], sizes = [32, 8], strides = [1, 1]} : vector<32x16xf32> to vector<32x8xf32>
    %cst_31 = arith.constant dense<0.000000e+00> : vector<32x8xf32>
    %85 = tpu.matmul %83, %84, %cst_31 {dimension_numbers = #tpu.dot_dimension_numbers<[1], [0], [0], [1], [0, 0, 1, 1], [], []>} : vector<32x32xf32>, vector<32x8xf32>, vector<32x8xf32> -> vector<32x8xf32>
    %86 = vector.extract_strided_slice %69 {offsets = [0, 0, 8], sizes = [32, 32, 8], strides = [1, 1, 1]} : vector<32x32x16xf32> to vector<32x32x8xf32>
    %cst_32 = arith.constant dense<0.000000e+00> : vector<32x32xf32>
    %87 = vector.multi_reduction <add>, %86, %cst_32 [2] : vector<32x32x8xf32> to vector<32x32xf32>
    %cst_33 = arith.constant -1.000000e+30 : f32
    %88 = vector.broadcast %cst_33 : f32 to vector<32x32xf32>
    %89 = arith.select %46, %87, %88 : vector<32x32xi1>, vector<32x32xf32>
    %cst_34 = arith.constant dense<0xFF800000> : vector<32xf32>
    %90 = vector.multi_reduction <maximumf>, %89, %cst_34 [1] : vector<32x32xf32> to vector<32xf32>
    %91 = vector.shape_cast %90 : vector<32xf32> to vector<32x1xf32>
    %92 = vector.broadcast %91 : vector<32x1xf32> to vector<32x32xf32>
    %93 = arith.subf %89, %92 : vector<32x32xf32>
    %94 = math.exp %93 : vector<32x32xf32>
    %cst_35 = arith.constant dense<0.000000e+00> : vector<32xf32>
    %95 = vector.multi_reduction <add>, %94, %cst_35 [1] : vector<32x32xf32> to vector<32xf32>
    %96 = vector.shape_cast %95 : vector<32xf32> to vector<32x1xf32>
    %97 = tpu.reciprocal %96 {approx = true} : vector<32x1xf32> -> vector<32x1xf32>
    %98 = vector.broadcast %97 : vector<32x1xf32> to vector<32x32xf32>
    %99 = arith.mulf %94, %98 : vector<32x32xf32>
    %100 = vector.extract_strided_slice %55 {offsets = [0, 8], sizes = [32, 8], strides = [1, 1]} : vector<32x16xf32> to vector<32x8xf32>
    %cst_36 = arith.constant dense<0.000000e+00> : vector<32x8xf32>
    %101 = tpu.matmul %99, %100, %cst_36 {dimension_numbers = #tpu.dot_dimension_numbers<[1], [0], [0], [1], [0, 0, 1, 1], [], []>} : vector<32x32xf32>, vector<32x8xf32>, vector<32x8xf32> -> vector<32x8xf32>
    %102 = tpu.concatenate %85, %101 in 1 : vector<32x8xf32>, vector<32x8xf32> -> vector<32x16xf32>
    %103 = vector.broadcast %51 : vector<1x16xf32> to vector<32x16xf32>
    %104 = arith.addf %102, %103 : vector<32x16xf32>
    %cst_37 = arith.constant 0.000000e+00 : f32
    %105 = vector.broadcast %cst_37 : f32 to vector<32x16xf32>
    %106 = arith.cmpf ogt, %104, %105 : vector<32x16xf32>
    %cst_38 = arith.constant 0.000000e+00 : f32
    %107 = vector.broadcast %cst_38 : f32 to vector<32x16xf32>
    %108 = arith.minimumf %104, %107 : vector<32x16xf32>
    %109 = math.exp %108 : vector<32x16xf32>
    %cst_39 = arith.constant 1.000000e+00 : f32
    %110 = vector.broadcast %cst_39 : f32 to vector<32x16xf32>
    %111 = arith.subf %109, %110 : vector<32x16xf32>
    %112 = arith.select %106, %104, %111 : vector<32x16xi1>, vector<32x16xf32>
    %c1_40 = arith.constant 1 : index
    %c0_41 = arith.constant 0 : index
    %c0_42 = arith.constant 0 : index
    %113 = vector.load %arg4[%c1_40, %c0_41, %c0_42] : memref<2x32x32xf32, #tpu.memory_space<vmem>>, vector<1x32x32xf32>
    %114 = vector.shape_cast %113 : vector<1x32x32xf32> to vector<32x32xf32>
    %115 = vector.extract_strided_slice %114 {offsets = [0, 0], sizes = [16, 32], strides = [1, 1]} : vector<32x32xf32> to vector<16x32xf32>
    %116 = vector.extract_strided_slice %4 {offsets = [1, 0], sizes = [1, 32], strides = [1, 1]} : vector<8x32xf32> to vector<1x32xf32>
    %117 = vector.extract_strided_slice %4 {offsets = [4, 0], sizes = [1, 16], strides = [1, 1]} : vector<8x32xf32> to vector<1x16xf32>
    %118 = vector.extract_strided_slice %4 {offsets = [6, 0], sizes = [1, 16], strides = [1, 1]} : vector<8x32xf32> to vector<1x16xf32>
    %cst_43 = arith.constant dense<0.000000e+00> : vector<32x32xf32>
    %119 = tpu.matmul %112, %115, %cst_43 {dimension_numbers = #tpu.dot_dimension_numbers<[1], [0], [0], [1], [0, 0, 1, 1], [], []>} : vector<32x16xf32>, vector<16x32xf32>, vector<32x32xf32> -> vector<32x32xf32>
    %120 = vector.broadcast %116 : vector<1x32xf32> to vector<32x32xf32>
    %121 = arith.addf %119, %120 : vector<32x32xf32>
    %122 = vector.extract_strided_slice %121 {offsets = [0, 0], sizes = [32, 16], strides = [1, 1]} : vector<32x32xf32> to vector<32x16xf32>
    %123 = vector.extract_strided_slice %121 {offsets = [0, 16], sizes = [32, 16], strides = [1, 1]} : vector<32x32xf32> to vector<32x16xf32>
    %124 = vector.shape_cast %123 : vector<32x16xf32> to vector<32x1x16xf32>
    %125 = vector.shape_cast %122 : vector<32x16xf32> to vector<1x32x16xf32>
    %126 = vector.broadcast %124 : vector<32x1x16xf32> to vector<32x32x16xf32>
    %127 = vector.broadcast %125 : vector<1x32x16xf32> to vector<32x32x16xf32>
    %128 = arith.addf %126, %127 : vector<32x32x16xf32>
    %cst_44 = arith.constant 0.000000e+00 : f32
    %129 = vector.broadcast %cst_44 : f32 to vector<32x32x16xf32>
    %130 = arith.cmpf ogt, %128, %129 : vector<32x32x16xf32>
    %cst_45 = arith.constant 2.000000e-01 : f32
    %131 = vector.broadcast %cst_45 : f32 to vector<32x32x16xf32>
    %132 = arith.mulf %131, %128 : vector<32x32x16xf32>
    %133 = arith.select %130, %128, %132 : vector<32x32x16xi1>, vector<32x32x16xf32>
    %134 = vector.shape_cast %117 : vector<1x16xf32> to vector<1x1x16xf32>
    %135 = vector.broadcast %134 : vector<1x1x16xf32> to vector<32x32x16xf32>
    %136 = arith.mulf %133, %135 : vector<32x32x16xf32>
    %cst_46 = arith.constant dense<0.000000e+00> : vector<32x32xf32>
    %137 = vector.multi_reduction <add>, %136, %cst_46 [2] : vector<32x32x16xf32> to vector<32x32xf32>
    %cst_47 = arith.constant -1.000000e+30 : f32
    %138 = vector.broadcast %cst_47 : f32 to vector<32x32xf32>
    %139 = arith.select %46, %137, %138 : vector<32x32xi1>, vector<32x32xf32>
    %cst_48 = arith.constant dense<0xFF800000> : vector<32xf32>
    %140 = vector.multi_reduction <maximumf>, %139, %cst_48 [1] : vector<32x32xf32> to vector<32xf32>
    %141 = vector.shape_cast %140 : vector<32xf32> to vector<32x1xf32>
    %142 = vector.broadcast %141 : vector<32x1xf32> to vector<32x32xf32>
    %143 = arith.subf %139, %142 : vector<32x32xf32>
    %144 = math.exp %143 : vector<32x32xf32>
    %cst_49 = arith.constant dense<0.000000e+00> : vector<32xf32>
    %145 = vector.multi_reduction <add>, %144, %cst_49 [1] : vector<32x32xf32> to vector<32xf32>
    %146 = vector.shape_cast %145 : vector<32xf32> to vector<32x1xf32>
    %147 = tpu.reciprocal %146 {approx = true} : vector<32x1xf32> -> vector<32x1xf32>
    %148 = vector.broadcast %147 : vector<32x1xf32> to vector<32x32xf32>
    %149 = arith.mulf %144, %148 : vector<32x32xf32>
    %cst_50 = arith.constant dense<0.000000e+00> : vector<32x16xf32>
    %150 = tpu.matmul %149, %122, %cst_50 {dimension_numbers = #tpu.dot_dimension_numbers<[1], [0], [0], [1], [0, 0, 1, 1], [], []>} : vector<32x32xf32>, vector<32x16xf32>, vector<32x16xf32> -> vector<32x16xf32>
    %151 = vector.broadcast %118 : vector<1x16xf32> to vector<32x16xf32>
    %152 = arith.addf %150, %151 : vector<32x16xf32>
    %153 = vector.extract_strided_slice %4 {offsets = [7, 0], sizes = [1, 16], strides = [1, 1]} : vector<8x32xf32> to vector<1x16xf32>
    %154 = vector.extract_strided_slice %4 {offsets = [7, 16], sizes = [1, 1], strides = [1, 1]} : vector<8x32xf32> to vector<1x1xf32>
    %155 = vector.broadcast %153 : vector<1x16xf32> to vector<32x16xf32>
    %156 = arith.mulf %152, %155 : vector<32x16xf32>
    %cst_51 = arith.constant dense<0.000000e+00> : vector<32xf32>
    %157 = vector.multi_reduction <add>, %156, %cst_51 [1] : vector<32x16xf32> to vector<32xf32>
    %158 = vector.shape_cast %157 : vector<32xf32> to vector<32x1xf32>
    %159 = vector.broadcast %154 : vector<1x1xf32> to vector<32x1xf32>
    %160 = arith.addf %158, %159 : vector<32x1xf32>
    %c0_52 = arith.constant 0 : index
    %c0_53 = arith.constant 0 : index
    %c0_54 = arith.constant 0 : index
    %161 = vector.load %arg6[%c0_52, %c0_53, %c0_54] : memref<1x32x1xf32, #tpu.memory_space<vmem>>, vector<1x32x1xf32>
    %162 = vector.shape_cast %161 : vector<1x32x1xf32> to vector<32x1xf32>
    %163 = vector.shape_cast %160 : vector<32x1xf32> to vector<1x32x1xf32>
    tpu.vector_store %arg6[%c0_52, %c0_53, %c0_54], %163 {strides = array<i32>} : memref<1x32x1xf32, #tpu.memory_space<vmem>>, vector<1x32x1xf32>,
    return
  }
  func.func @transform_0(%arg0: i32) -> (i32, i32, i32) {
    %c0_i32 = arith.constant 0 : i32
    %c0_i32_0 = arith.constant 0 : i32
    %c0_i32_1 = arith.constant 0 : i32
    return %arg0, %c0_i32, %c0_i32_0 : i32, i32, i32
  }
  func.func @transform_1(%arg0: i32) -> (i32, i32, i32) {
    %c0_i32 = arith.constant 0 : i32
    %c0_i32_0 = arith.constant 0 : i32
    %c0_i32_1 = arith.constant 0 : i32
    return %arg0, %c0_i32, %c0_i32_0 : i32, i32, i32
  }
  func.func @transform_2(%arg0: i32) -> (i32, i32, i32) {
    %c0_i32 = arith.constant 0 : i32
    %c0_i32_0 = arith.constant 0 : i32
    %c0_i32_1 = arith.constant 0 : i32
    %c0_i32_2 = arith.constant 0 : i32
    return %c0_i32, %c0_i32_0, %c0_i32_1 : i32, i32, i32
  }
  func.func @transform_3(%arg0: i32) -> (i32, i32, i32) {
    %c0_i32 = arith.constant 0 : i32
    %c0_i32_0 = arith.constant 0 : i32
    %c0_i32_1 = arith.constant 0 : i32
    %c0_i32_2 = arith.constant 0 : i32
    return %c0_i32, %c0_i32_0, %c0_i32_1 : i32, i32, i32
  }
  func.func @transform_4(%arg0: i32) -> (i32, i32) {
    %c0_i32 = arith.constant 0 : i32
    %c0_i32_0 = arith.constant 0 : i32
    %c0_i32_1 = arith.constant 0 : i32
    return %c0_i32, %c0_i32_0 : i32, i32
  }
  func.func @transform_5(%arg0: i32) -> (i32, i32, i32) {
    %c0_i32 = arith.constant 0 : i32
    %c0_i32_0 = arith.constant 0 : i32
    %c0_i32_1 = arith.constant 0 : i32
    return %arg0, %c0_i32, %c0_i32_0 : i32, i32, i32
  }
}

</mosaic_0001>

<llo_original>
// kernel: gat_net_forward_batched.1
$region0: #{gat_net_forward_batched.1}
  #allocation0 [shape = 'u32[]', space=smem, size = 0x4, offset = 0x4, fixed_abs, tag = 'smem constant byte address 0x4 - core index']
  #allocation1 [shape = 'u32[144,128]{1,0:T(1,128)}', space=vmem, size = 0x12000, scoped, tag = 'internal scratch']
  %s0 = inlined_call_operand.vmem [shape: f32[4,32,20], index: 0, kind: input, shape index: {}]
  %s1 = inlined_call_operand.vmem [shape: s32[4,2,80], index: 1, kind: input, shape index: {}]
  %s2 = inlined_call_operand.vmem [shape: f32[3,20,32], index: 2, kind: input, shape index: {}]
  %s3 = inlined_call_operand.vmem [shape: f32[2,32,32], index: 3, kind: input, shape index: {}]
  %s4 = inlined_call_operand.vmem [shape: f32[8,32], index: 4, kind: input, shape index: {}]
  %s5 = inlined_call_operand.vmem [shape: f32[4,32,1], index: 5, kind: output, shape index: {}]
  %s6 = sld [smem:[#allocation0]]
  $region53: #{gat_net_forward_batched.1} parent=0
    _
  %s8 = ssub.s32 1, %s6
  %s9 = scalar_select 0, %s8, %s6
  loop: start=0, step=1, limit=6
  $region2: #{gat_net_forward_batched.1} parent=0 // loop_pre_header
    _
  $region3: #{gat_net_forward_batched.1} parent=0 // loop_header
    %s11 = sphi 0, %s15
    %p12 = scmp.ge.s32.totalorder %s11, 6
    %s21 = sphi 0, %s23
    %s24 = sphi 0, %s21
    %s25 = sphi 0, %s24
    %s41 = sphi 0, %s25
    %s47 = sphi 0, %s49
    %s50 = sphi 0, %s47
    %s51 = sphi 0, %s50
    %s67 = sphi 0, %s51
    %s71 = sphi 0, %s71
    %s73 = sphi 0, %s71
    %s74 = sphi 0, %s73
    %s88 = sphi 0, %s74
    %s92 = sphi 0, %s92
    %s94 = sphi 0, %s92
    %s95 = sphi 0, %s94
    %s109 = sphi 0, %s95
    %s113 = sphi 0, %s113
    %s115 = sphi 0, %s113
    %s116 = sphi 0, %s115
    %s130 = sphi 0, %s116
    %s136 = sphi 0, %s138
    %s139 = sphi 0, %s136
    %s140 = sphi 0, %s139
    %s156 = sphi 0, %s140
  $region4: #{gat_net_forward_batched.1} parent=0 // loop_header_branch
    %14 = sbr.rel (%p12) target = $region8
  $region5: #{gat_net_forward_batched.1} parent=0 // loop_body
    %s16 = ssub.s32 %s11, 1
    %s17 = ssub.s32 %s11, 2
    %s18 = sadd.s32 %s11, 1
    %s19 = ssub.s32 %s11, %s18
    %p20 = scmp.eq.s32.totalorder %s19, 0
    %s22 = sadd.s32 %s21, 1
    %s23 = scalar_select %p20, %s21, %s22
    %p26 = pneg %p20
    %p27 = scmp.eq.s32.totalorder %s11, 3
    %p28 = por %p26, %p27
    %p29 = scmp.ne.s32.totalorder %s21, %s24
    %p30 = scmp.eq.s32.totalorder %s11, 0
    %p31 = por %p29, %p30
    %p32 = scmp.ne.s32.totalorder %s21, %s24
    %p33 = scmp.eq.s32.totalorder %s16, 3
    %p34 = por %p32, %p33
    %p35 = scmp.ne.s32.totalorder %s24, %s25
    %p36 = scmp.eq.s32.totalorder %s16, 0
    %p37 = por %p35, %p36
    %p38 = scmp.ne.s32.totalorder %s24, %s25
    %p39 = scmp.eq.s32.totalorder %s17, 3
    %p40 = por %p38, %p39
    %p42 = scmp.ne.s32.totalorder %s25, %s41
    %p43 = scmp.eq.s32.totalorder %s17, 0
    %p44 = por %p42, %p43
    %s45 = ssub.s32 %s11, %s18
    %p46 = scmp.eq.s32.totalorder %s45, 0
    %s48 = sadd.s32 %s47, 1
    %s49 = scalar_select %p46, %s47, %s48
    %p52 = pneg %p46
    %p53 = scmp.eq.s32.totalorder %s11, 3
    %p54 = por %p52, %p53
    %p55 = scmp.ne.s32.totalorder %s47, %s50
    %p56 = scmp.eq.s32.totalorder %s11, 0
    %p57 = por %p55, %p56
    %p58 = scmp.ne.s32.totalorder %s47, %s50
    %p59 = scmp.eq.s32.totalorder %s16, 3
    %p60 = por %p58, %p59
    %p61 = scmp.ne.s32.totalorder %s50, %s51
    %p62 = scmp.eq.s32.totalorder %s16, 0
    %p63 = por %p61, %p62
    %p64 = scmp.ne.s32.totalorder %s50, %s51
    %p65 = scmp.eq.s32.totalorder %s17, 3
    %p66 = por %p64, %p65
    %p68 = scmp.ne.s32.totalorder %s51, %s67
    %p69 = scmp.eq.s32.totalorder %s17, 0
    %p70 = por %p68, %p69
    %s72 = sadd.s32 %s71, 1
    %p75 = scmp.eq.s32.totalorder %s11, 3
    %p76 = scmp.ne.s32.totalorder %s71, %s73
    %p77 = scmp.eq.s32.totalorder %s11, 0
    %p78 = por %p76, %p77
    %p79 = scmp.ne.s32.totalorder %s71, %s73
    %p80 = scmp.eq.s32.totalorder %s16, 3
    %p81 = por %p79, %p80
    %p82 = scmp.ne.s32.totalorder %s73, %s74
    %p83 = scmp.eq.s32.totalorder %s16, 0
    %p84 = por %p82, %p83
    %p85 = scmp.ne.s32.totalorder %s73, %s74
    %p86 = scmp.eq.s32.totalorder %s17, 3
    %p87 = por %p85, %p86
    %p89 = scmp.ne.s32.totalorder %s74, %s88
    %p90 = scmp.eq.s32.totalorder %s17, 0
    %p91 = por %p89, %p90
    %s93 = sadd.s32 %s92, 1
    %p96 = scmp.eq.s32.totalorder %s11, 3
    %p97 = scmp.ne.s32.totalorder %s92, %s94
    %p98 = scmp.eq.s32.totalorder %s11, 0
    %p99 = por %p97, %p98
    %p100 = scmp.ne.s32.totalorder %s92, %s94
    %p101 = scmp.eq.s32.totalorder %s16, 3
    %p102 = por %p100, %p101
    %p103 = scmp.ne.s32.totalorder %s94, %s95
    %p104 = scmp.eq.s32.totalorder %s16, 0
    %p105 = por %p103, %p104
    %p106 = scmp.ne.s32.totalorder %s94, %s95
    %p107 = scmp.eq.s32.totalorder %s17, 3
    %p108 = por %p106, %p107
    %p110 = scmp.ne.s32.totalorder %s95, %s109
    %p111 = scmp.eq.s32.totalorder %s17, 0
    %p112 = por %p110, %p111
    %s114 = sadd.s32 %s113, 1
    %p117 = scmp.eq.s32.totalorder %s11, 3
    %p118 = scmp.ne.s32.totalorder %s113, %s115
    %p119 = scmp.eq.s32.totalorder %s11, 0
    %p120 = por %p118, %p119
    %p121 = scmp.ne.s32.totalorder %s113, %s115
    %p122 = scmp.eq.s32.totalorder %s16, 3
    %p123 = por %p121, %p122
    %p124 = scmp.ne.s32.totalorder %s115, %s116
    %p125 = scmp.eq.s32.totalorder %s16, 0
    %p126 = por %p124, %p125
    %p127 = scmp.ne.s32.totalorder %s115, %s116
    %p128 = scmp.eq.s32.totalorder %s17, 3
    %p129 = por %p127, %p128
    %p131 = scmp.ne.s32.totalorder %s116, %s130
    %p132 = scmp.eq.s32.totalorder %s17, 0
    %p133 = por %p131, %p132
    %s134 = ssub.s32 %s11, %s18
    %p135 = scmp.eq.s32.totalorder %s134, 0
    %s137 = sadd.s32 %s136, 1
    %s138 = scalar_select %p135, %s136, %s137
    %p141 = pneg %p135
    %p142 = scmp.eq.s32.totalorder %s11, 3
    %p143 = por %p141, %p142
    %p144 = scmp.ne.s32.totalorder %s136, %s139
    %p145 = scmp.eq.s32.totalorder %s11, 0
    %p146 = por %p144, %p145
    %p147 = scmp.ne.s32.totalorder %s136, %s139
    %p148 = scmp.eq.s32.totalorder %s16, 3
    %p149 = por %p147, %p148
    %p150 = scmp.ne.s32.totalorder %s139, %s140
    %p151 = scmp.eq.s32.totalorder %s16, 0
    %p152 = por %p150, %p151
    %p153 = scmp.ne.s32.totalorder %s139, %s140
    %p154 = scmp.eq.s32.totalorder %s17, 3
    %p155 = por %p153, %p154
    %p157 = scmp.ne.s32.totalorder %s140, %s156
    %p158 = scmp.eq.s32.totalorder %s17, 0
    %p159 = por %p157, %p158
    %p160 = scmp.le.s32.totalorder 1, %s11
    %p161 = scmp.lt.s32.totalorder %s11, 5
    %p162 = pnand %p160, %p161
    %p163 = pneg %p162
    // Predicated region
    $region9: #{gat_net_forward_batched.1} parent=5 // pred_check
      _
    $region10: #{gat_net_forward_batched.1} parent=5 // pred_check_branch
      %165 = sbr.rel (%p162) target = $region12
    $region11: #{gat_net_forward_batched.1} parent=5 // pred_region
      %s166 = ssub.s32 %s11, 1
      // Predicated region
      $region13: #{gat_net_forward_batched.1} parent=11 // pred_check
        %p167 = pneg %p84
      $region14: #{gat_net_forward_batched.1} parent=11 // pred_check_branch
        %169 = sbr.rel (%p167) target = $region16
      $region15: #{gat_net_forward_batched.1} parent=11 // pred_region
        _
      $region16: #{gat_net_forward_batched.1} parent=11 // pred_fallthru
        _
      // Predicated region
      $region17: #{gat_net_forward_batched.1} parent=11 // pred_check
        %p170 = pneg %p105
      $region18: #{gat_net_forward_batched.1} parent=11 // pred_check_branch
        %172 = sbr.rel (%p170) target = $region20
      $region19: #{gat_net_forward_batched.1} parent=11 // pred_region
        _
      $region20: #{gat_net_forward_batched.1} parent=11 // pred_fallthru
        _
      // Predicated region
      $region21: #{gat_net_forward_batched.1} parent=11 // pred_check
        %p173 = pneg %p126
      $region22: #{gat_net_forward_batched.1} parent=11 // pred_check_branch
        %175 = sbr.rel (%p173) target = $region24
      $region23: #{gat_net_forward_batched.1} parent=11 // pred_region
        _
      $region24: #{gat_net_forward_batched.1} parent=11 // pred_fallthru
        _
    $region12: #{gat_net_forward_batched.1} parent=5 // pred_fallthru
      _
    %p176 = scmp.lt.s32.totalorder %s11, 4
    // Predicated region
    $region25: #{gat_net_forward_batched.1} parent=5 // pred_check
      %p177 = pneg %p176
    $region26: #{gat_net_forward_batched.1} parent=5 // pred_check_branch
      %179 = sbr.rel (%p177) target = $region28
    $region27: #{gat_net_forward_batched.1} parent=5 // pred_region
      // Predicated region
      $region29: #{gat_net_forward_batched.1} parent=27 // pred_check
        %p180 = pneg %p31
      $region30: #{gat_net_forward_batched.1} parent=27 // pred_check_branch
        %182 = sbr.rel (%p180) target = $region32
      $region31: #{gat_net_forward_batched.1} parent=27 // pred_region
        %p183 = scmp.lt.s32.totalorder %s11, 3
        %s184 = scalar_select %p183, %s11, 3
        %s185 = smul.addr %s184, 4
        %s186 = smul.addr %s185, 8
        %s187 = scalar_lea.vmem %s0, %s186
      $region32: #{gat_net_forward_batched.1} parent=27 // pred_fallthru
        _
      // Predicated region
      $region33: #{gat_net_forward_batched.1} parent=27 // pred_check
        %p188 = pneg %p57
      $region34: #{gat_net_forward_batched.1} parent=27 // pred_check_branch
        %190 = sbr.rel (%p188) target = $region36
      $region35: #{gat_net_forward_batched.1} parent=27 // pred_region
        %p191 = scmp.lt.s32.totalorder %s11, 3
        %s192 = scalar_select %p191, %s11, 3
        %s193 = smul.addr %s192, 2
        %s194 = scalar_lea.vmem %s1, %s193
      $region36: #{gat_net_forward_batched.1} parent=27 // pred_fallthru
        _
    $region28: #{gat_net_forward_batched.1} parent=5 // pred_fallthru
      _
    %p195 = scmp.le.s32.totalorder 1, %s11
    %p196 = scmp.lt.s32.totalorder %s11, 5
    %p197 = pnand %p195, %p196
    %p198 = pneg %p197
    // Predicated region
    $region37: #{gat_net_forward_batched.1} parent=5 // pred_check
      _
    $region38: #{gat_net_forward_batched.1} parent=5 // pred_check_branch
      %200 = sbr.rel (%p197) target = $region40
    $region39: #{gat_net_forward_batched.1} parent=5 // pred_region
      %s201 = ssub.s32 %s11, 1
      %p202 = scmp.lt.s32.totalorder %s16, 3
      %s203 = scalar_select %p202, %s16, 3
      %s204 = smul.addr %s203, 4
      %s205 = smul.addr %s204, 8
      %s206 = scalar_lea.vmem %s0, %s205
      %p207 = pneg %p37
      %p208 = pneg %p34
      %p209 = scmp.lt.s32.totalorder %s16, 3
      %s210 = scalar_select %p209, %s16, 3
      %s211 = smul.addr %s210, 2
      %s212 = scalar_lea.vmem %s1, %s211
      %p213 = pneg %p63
      %p214 = pneg %p60
      %p215 = pneg %p84
      %p216 = pneg %p81
      %p217 = pneg %p105
      %p218 = pneg %p102
      %p219 = pneg %p126
      %p220 = pneg %p123
      %p221 = pneg %p152
      %p222 = pneg %p149
      %p223 = scmp.lt.s32.totalorder %s16, 3
      %s224 = scalar_select %p223, %s16, 3
      %s225 = smul.addr %s224, 4
      %s226 = smul.addr %s225, 8
      %s227 = scalar_lea.vmem %s5, %s226
      %p228 = scmp.lt.s32.totalorder %s16, 3
      %s229 = scalar_select %p228, %s16, 3
      %s230 = smul.addr %s229, 4
      %s231 = smul.addr %s230, 8
      %s232 = scalar_lea.vmem %s0, %s231
      %p233 = scmp.lt.s32.totalorder %s16, 3
      %s234 = scalar_select %p233, %s16, 3
      %s235 = smul.addr %s234, 2
      %s236 = scalar_lea.vmem %s1, %s235
      %p237 = scmp.lt.s32.totalorder %s16, 3
      %s238 = scalar_select %p237, %s16, 3
      %s239 = smul.addr %s238, 4
      %s240 = smul.addr %s239, 8
      %s241 = scalar_lea.vmem %s5, %s240
      %v242 = vld [vmem:[%s232] sm:$0xff]
      %v243 = vld [vmem:[%s232 + $0x8] sm:$0xff]
      %v244 = vld [vmem:[%s232 + $0x10] sm:$0xff]
      %v245 = vld [vmem:[%s232 + $0x18] sm:$0xff]
      %v246 = vld [vmem:[%s236] sm:$0x3]
      %v247 = vld [vmem:[%s4] sm:$0xff]
      %vm248 = vcmp.eq.f32.partialorder %v242, 1.0
      %vm249 = vcmp.eq.f32.partialorder %v243, 1.0
      %vm250 = vcmp.eq.f32.partialorder %v244, 1.0
      %vm251 = vcmp.eq.f32.partialorder %v245, 1.0
      %v252 = vsel %vm248, 1, 0
      %v253 = vsel %vm249, 1, 0
      %v254 = vsel %vm250, 1, 0
      %v255 = vsel %vm251, 1, 0
      %v256 = vcvt.s32.f32 %v252
      %v257 = vcvt.s32.f32 %v253
      %v258 = vcvt.s32.f32 %v254
      %v259 = vcvt.s32.f32 %v255
      %vm260 = vcmp.eq.f32.partialorder %v242, 2.0
      %vm261 = vcmp.eq.f32.partialorder %v243, 2.0
      %vm262 = vcmp.eq.f32.partialorder %v244, 2.0
      %vm263 = vcmp.eq.f32.partialorder %v245, 2.0
      %v264 = vsel %vm260, 1, 0
      %v265 = vsel %vm261, 1, 0
      %v266 = vsel %vm262, 1, 0
      %v267 = vsel %vm263, 1, 0
      %v268 = vcvt.s32.f32 %v264
      %v269 = vcvt.s32.f32 %v265
      %v270 = vcvt.s32.f32 %v266
      %v271 = vcvt.s32.f32 %v267
      %v272 = vld [vmem:[%s2] sm:$0xff]
      %v273 = vld [vmem:[%s2 + $0x8] sm:$0xff]
      %v274 = vld [vmem:[%s2 + $0x10] sm:$0xf]
      %s275 = scalar_lea.vmem %s2, 24
      %v276 = vld [vmem:[%s275] sm:$0xff]
      %v277 = vld [vmem:[%s275 + $0x8] sm:$0xff]
      %v278 = vld [vmem:[%s275 + $0x10] sm:$0xf]
      %vm279 = vcmask 162816
      %v281 = vsel %vm279, %v256, 0
      %v284 = vsel %vm279, %v257, 0
      %v287 = vsel %vm279, %v258, 0
      %v290 = vsel %vm279, %v259, 0
      %vm292 = vcmask 1043456
      %v294 = vsel %vm292, %v278, 0
      %296 = vmatprep.subr.mxu0 0.0
      %297 = vmatpush1.msra.mxu0 %v276
      %298 = vmatprep.subr.mxu0 0.0
      %299 = vmatpush1.msra.mxu0 %v277
      %300 = vmatprep.subr.mxu0 0.0
      %301 = vmatpush1.msra.mxu0 %v294
      %302 = vmatprep.subr.mxu0 0.0
      %303 = vmatpush1.msra.mxu0 0.0
      %304 = vmatprep.subr.mxu0 0.0
      %305 = vmatpush1.msra.mxu0 0.0
      %306 = vmatprep.subr.mxu0 0.0
      %307 = vmatpush1.msra.mxu0 0.0
      %308 = vmatprep.subr.mxu0 0.0
      %309 = vmatpush1.msra.mxu0 0.0
      %310 = vmatprep.subr.mxu0 0.0
      %311 = vmatpush1.msra.mxu0 0.0
      %312 = vmatprep.subr.mxu0 0.0
      %313 = vmatpush1.msra.mxu0 0.0
      %314 = vmatprep.subr.mxu0 0.0
      %315 = vmatpush1.msra.mxu0 0.0
      %316 = vmatprep.subr.mxu0 0.0
      %317 = vmatpush1.msra.mxu0 0.0
      %318 = vmatprep.subr.mxu0 0.0
      %319 = vmatpush1.msra.mxu0 0.0
      %320 = vmatprep.subr.mxu0 0.0
      %321 = vmatpush1.msra.mxu0 0.0
      %322 = vmatprep.subr.mxu0 0.0
      %323 = vmatpush1.msra.mxu0 0.0
      %324 = vmatprep.subr.mxu0 0.0
      %325 = vmatpush1.msra.mxu0 0.0
      %326 = vmatprep.subr.mxu0 0.0
      %327 = vmatpush1.msra.mxu0 0.0
      %328 = vmatprep.subr.mxu0 0.0
      %329 = vmatpush1.msra.mxu0 0.0
      %330 = vmatprep.subr.mxu0 0.0
      %331 = vmatpush1.msra.mxu0 0.0
      %332 = vmatprep.subr.mxu0 0.0
      %333 = vmatpush1.msra.mxu0 0.0
      %334 = vmatprep.subr.mxu0 0.0
      %335 = vmatpush1.msra.mxu0 0.0
      %336 = vmatprep.subr.mxu0 0.0
      %337 = vmatpush1.msra.mxu0 0.0
      %338 = vmatprep.subr.mxu0 0.0
      %339 = vmatpush1.msra.mxu0 0.0
      %340 = vmatprep.subr.mxu0 0.0
      %341 = vmatpush1.msra.mxu0 0.0
      %342 = vmatprep.subr.mxu0 0.0
      %343 = vmatpush1.msra.mxu0 0.0
      %344 = vmatprep.subr.mxu0 0.0
      %345 = vmatpush1.msra.mxu0 0.0
      %346 = vmatprep.subr.mxu0 0.0
      %347 = vmatpush1.msra.mxu0 0.0
      %348 = vmatprep.subr.mxu0 0.0
      %349 = vmatpush1.msra.mxu0 0.0
      %350 = vmatprep.subr.mxu0 0.0
      %351 = vmatpush1.msra.mxu0 0.0
      %352 = vmatprep.subr.mxu0 0.0
      %353 = vmatpush1.msra.mxu0 0.0
      %354 = vmatprep.subr.mxu0 0.0
      %355 = vmatpush1.msra.mxu0 0.0
      %356 = vmatprep.subr.mxu0 0.0
      %357 = vmatpush1.msra.mxu0 0.0
      %358 = vmatprep.subr.mxu0 0.0
      %359 = vmatpush1.msra.mxu0 0.0
      %360 = vmatprep.mubr.f32.mxu0 0.0
      %361 = vmatmul.mubr.f32.gmra.mrb[0].mxu0 %v281
      %v362 = vpop.f32.mrb[0].mxu0
      %v363 = vadd.f32 0.0, %v362
      %v364 = vpop.f32.mrb[0].mxu0
      %365 = vmatprep.mubr.f32.mxu0 0.0
      %366 = vmatmul.mubr.f32.gmra.mrb[0].mxu0 %v284
      %v367 = vpop.f32.mrb[0].mxu0
      %v368 = vadd.f32 0.0, %v367
      %v369 = vpop.f32.mrb[0].mxu0
      %370 = vmatprep.mubr.f32.mxu0 0.0
      %371 = vmatmul.mubr.f32.gmra.mrb[0].mxu0 %v287
      %v372 = vpop.f32.mrb[0].mxu0
      %v373 = vadd.f32 0.0, %v372
      %v374 = vpop.f32.mrb[0].mxu0
      %375 = vmatprep.mubr.f32.mxu0 0.0
      %376 = vmatmul.mubr.f32.gmra.mrb[0].mxu0 %v290
      %v377 = vpop.f32.mrb[0].mxu0
      %v378 = vadd.f32 0.0, %v377
      %v379 = vpop.f32.mrb[0].mxu0
      %380 = vdwg.mxu0
      %v382 = vsel %vm279, %v242, 0
      %v385 = vsel %vm279, %v243, 0
      %v388 = vsel %vm279, %v244, 0
      %v391 = vsel %vm279, %v245, 0
      %v394 = vsel %vm292, %v274, 0
      %396 = vmatprep.subr.mxu0 0.0
      %397 = vmatpush1.msra.mxu0 %v272
      %398 = vmatprep.subr.mxu0 0.0
      %399 = vmatpush1.msra.mxu0 %v273
      %400 = vmatprep.subr.mxu0 0.0
      %401 = vmatpush1.msra.mxu0 %v394
      %402 = vmatprep.subr.mxu0 0.0
      %403 = vmatpush1.msra.mxu0 0.0
      %404 = vmatprep.subr.mxu0 0.0
      %405 = vmatpush1.msra.mxu0 0.0
      %406 = vmatprep.subr.mxu0 0.0
      %407 = vmatpush1.msra.mxu0 0.0
      %408 = vmatprep.subr.mxu0 0.0
      %409 = vmatpush1.msra.mxu0 0.0
      %410 = vmatprep.subr.mxu0 0.0
      %411 = vmatpush1.msra.mxu0 0.0
      %412 = vmatprep.subr.mxu0 0.0
      %413 = vmatpush1.msra.mxu0 0.0
      %414 = vmatprep.subr.mxu0 0.0
      %415 = vmatpush1.msra.mxu0 0.0
      %416 = vmatprep.subr.mxu0 0.0
      %417 = vmatpush1.msra.mxu0 0.0
      %418 = vmatprep.subr.mxu0 0.0
      %419 = vmatpush1.msra.mxu0 0.0
      %420 = vmatprep.subr.mxu0 0.0
      %421 = vmatpush1.msra.mxu0 0.0
      %422 = vmatprep.subr.mxu0 0.0
      %423 = vmatpush1.msra.mxu0 0.0
      %424 = vmatprep.subr.mxu0 0.0
      %425 = vmatpush1.msra.mxu0 0.0
      %426 = vmatprep.subr.mxu0 0.0
      %427 = vmatpush1.msra.mxu0 0.0
      %428 = vmatprep.subr.mxu0 0.0
      %429 = vmatpush1.msra.mxu0 0.0
      %430 = vmatprep.subr.mxu0 0.0
      %431 = vmatpush1.msra.mxu0 0.0
      %432 = vmatprep.subr.mxu0 0.0
      %433 = vmatpush1.msra.mxu0 0.0
      %434 = vmatprep.subr.mxu0 0.0
      %435 = vmatpush1.msra.mxu0 0.0
      %436 = vmatprep.subr.mxu0 0.0
      %437 = vmatpush1.msra.mxu0 0.0
      %438 = vmatprep.subr.mxu0 0.0
      %439 = vmatpush1.msra.mxu0 0.0
      %440 = vmatprep.subr.mxu0 0.0
      %441 = vmatpush1.msra.mxu0 0.0
      %442 = vmatprep.subr.mxu0 0.0
      %443 = vmatpush1.msra.mxu0 0.0
      %444 = vmatprep.subr.mxu0 0.0
      %445 = vmatpush1.msra.mxu0 0.0
      %446 = vmatprep.subr.mxu0 0.0
      %447 = vmatpush1.msra.mxu0 0.0
      %448 = vmatprep.subr.mxu0 0.0
      %449 = vmatpush1.msra.mxu0 0.0
      %450 = vmatprep.subr.mxu0 0.0
      %451 = vmatpush1.msra.mxu0 0.0
      %452 = vmatprep.subr.mxu0 0.0
      %453 = vmatpush1.msra.mxu0 0.0
      %454 = vmatprep.subr.mxu0 0.0
      %455 = vmatpush1.msra.mxu0 0.0
      %456 = vmatprep.subr.mxu0 0.0
      %457 = vmatpush1.msra.mxu0 0.0
      %458 = vmatprep.subr.mxu0 0.0
      %459 = vmatpush1.msra.mxu0 0.0
      %460 = vmatprep.mubr.f32.mxu0 0.0
      %461 = vmatmul.mubr.f32.gmra.mrb[0].mxu0 %v382
      %v462 = vpop.f32.mrb[0].mxu0
      %v463 = vadd.f32 %v363, %v462
      %v464 = vpop.f32.mrb[0].mxu0
      %465 = vmatprep.mubr.f32.mxu0 0.0
      %466 = vmatmul.mubr.f32.gmra.mrb[0].mxu0 %v385
      %v467 = vpop.f32.mrb[0].mxu0
      %v468 = vadd.f32 %v368, %v467
      %v469 = vpop.f32.mrb[0].mxu0
      %470 = vmatprep.mubr.f32.mxu0 0.0
      %471 = vmatmul.mubr.f32.gmra.mrb[0].mxu0 %v388
      %v472 = vpop.f32.mrb[0].mxu0
      %v473 = vadd.f32 %v373, %v472
      %v474 = vpop.f32.mrb[0].mxu0
      %475 = vmatprep.mubr.f32.mxu0 0.0
      %476 = vmatmul.mubr.f32.gmra.mrb[0].mxu0 %v391
      %v477 = vpop.f32.mrb[0].mxu0
      %v478 = vadd.f32 %v378, %v477
      %v479 = vpop.f32.mrb[0].mxu0
      %480 = vdwg.mxu0
      %s481 = scalar_lea.vmem %s2, 48
      %v482 = vld [vmem:[%s481] sm:$0xff]
      %v483 = vld [vmem:[%s481 + $0x8] sm:$0xff]
      %v484 = vld [vmem:[%s481 + $0x10] sm:$0xf]
      %v486 = vsel %vm279, %v268, 0
      %v489 = vsel %vm279, %v269, 0
      %v492 = vsel %vm279, %v270, 0
      %v495 = vsel %vm279, %v271, 0
      %v498 = vsel %vm292, %v484, 0
      %500 = vmatprep.subr.mxu0 0.0
      %501 = vmatpush1.msra.mxu0 %v482
      %502 = vmatprep.subr.mxu0 0.0
      %503 = vmatpush1.msra.mxu0 %v483
      %504 = vmatprep.subr.mxu0 0.0
      %505 = vmatpush1.msra.mxu0 %v498
      %506 = vmatprep.subr.mxu0 0.0
      %507 = vmatpush1.msra.mxu0 0.0
      %508 = vmatprep.subr.mxu0 0.0
      %509 = vmatpush1.msra.mxu0 0.0
      %510 = vmatprep.subr.mxu0 0.0
      %511 = vmatpush1.msra.mxu0 0.0
      %512 = vmatprep.subr.mxu0 0.0
      %513 = vmatpush1.msra.mxu0 0.0
      %514 = vmatprep.subr.mxu0 0.0
      %515 = vmatpush1.msra.mxu0 0.0
      %516 = vmatprep.subr.mxu0 0.0
      %517 = vmatpush1.msra.mxu0 0.0
      %518 = vmatprep.subr.mxu0 0.0
      %519 = vmatpush1.msra.mxu0 0.0
      %520 = vmatprep.subr.mxu0 0.0
      %521 = vmatpush1.msra.mxu0 0.0
      %522 = vmatprep.subr.mxu0 0.0
      %523 = vmatpush1.msra.mxu0 0.0
      %524 = vmatprep.subr.mxu0 0.0
      %525 = vmatpush1.msra.mxu0 0.0
      %526 = vmatprep.subr.mxu0 0.0
      %527 = vmatpush1.msra.mxu0 0.0
      %528 = vmatprep.subr.mxu0 0.0
      %529 = vmatpush1.msra.mxu0 0.0
      %530 = vmatprep.subr.mxu0 0.0
      %531 = vmatpush1.msra.mxu0 0.0
      %532 = vmatprep.subr.mxu0 0.0
      %533 = vmatpush1.msra.mxu0 0.0
      %534 = vmatprep.subr.mxu0 0.0
      %535 = vmatpush1.msra.mxu0 0.0
      %536 = vmatprep.subr.mxu0 0.0
      %537 = vmatpush1.msra.mxu0 0.0
      %538 = vmatprep.subr.mxu0 0.0
      %539 = vmatpush1.msra.mxu0 0.0
      %540 = vmatprep.subr.mxu0 0.0
      %541 = vmatpush1.msra.mxu0 0.0
      %542 = vmatprep.subr.mxu0 0.0
      %543 = vmatpush1.msra.mxu0 0.0
      %544 = vmatprep.subr.mxu0 0.0
      %545 = vmatpush1.msra.mxu0 0.0
      %546 = vmatprep.subr.mxu0 0.0
      %547 = vmatpush1.msra.mxu0 0.0
      %548 = vmatprep.subr.mxu0 0.0
      %549 = vmatpush1.msra.mxu0 0.0
      %550 = vmatprep.subr.mxu0 0.0
      %551 = vmatpush1.msra.mxu0 0.0
      %552 = vmatprep.subr.mxu0 0.0
      %553 = vmatpush1.msra.mxu0 0.0
      %554 = vmatprep.subr.mxu0 0.0
      %555 = vmatpush1.msra.mxu0 0.0
      %556 = vmatprep.subr.mxu0 0.0
      %557 = vmatpush1.msra.mxu0 0.0
      %558 = vmatprep.subr.mxu0 0.0
      %559 = vmatpush1.msra.mxu0 0.0
      %560 = vmatprep.subr.mxu0 0.0
      %561 = vmatpush1.msra.mxu0 0.0
      %562 = vmatprep.subr.mxu0 0.0
      %563 = vmatpush1.msra.mxu0 0.0
      %564 = vmatprep.mubr.f32.mxu0 0.0
      %565 = vmatmul.mubr.f32.gmra.mrb[0].mxu0 %v486
      %v566 = vpop.f32.mrb[0].mxu0
      %v567 = vadd.f32 0.0, %v566
      %v568 = vpop.f32.mrb[0].mxu0
      %569 = vmatprep.mubr.f32.mxu0 0.0
      %570 = vmatmul.mubr.f32.gmra.mrb[0].mxu0 %v489
      %v571 = vpop.f32.mrb[0].mxu0
      %v572 = vadd.f32 0.0, %v571
      %v573 = vpop.f32.mrb[0].mxu0
      %574 = vmatprep.mubr.f32.mxu0 0.0
      %575 = vmatmul.mubr.f32.gmra.mrb[0].mxu0 %v492
      %v576 = vpop.f32.mrb[0].mxu0
      %v577 = vadd.f32 0.0, %v576
      %v578 = vpop.f32.mrb[0].mxu0
      %579 = vmatprep.mubr.f32.mxu0 0.0
      %580 = vmatmul.mubr.f32.gmra.mrb[0].mxu0 %v495
      %v581 = vpop.f32.mrb[0].mxu0
      %v582 = vadd.f32 0.0, %v581
      %v583 = vpop.f32.mrb[0].mxu0
      %584 = vdwg.mxu0
      %v585 = vadd.f32 %v463, %v567
      %v586 = vadd.f32 %v468, %v572
      %v587 = vadd.f32 %v473, %v577
      %v588 = vadd.f32 %v478, %v582
      %v589 = vlaneseq
      %v590 = vshrl.u32 %v589, 7
      %v591 = vsub.s32 2, %v590
      %v592 = vrot.slane %v247, %v591
      %v593 = vadd.f32 %v585, %v592
      %v594 = vadd.f32 %v586, %v592
      %v595 = vadd.f32 %v587, %v592
      %v596 = vadd.f32 %v588, %v592
      %v597 = vmul.f32 %v593, 0.33333334
      %v598 = vmul.f32 %v594, 0.33333334
      %v599 = vmul.f32 %v595, 0.33333334
      %v600 = vmul.f32 %v596, 0.33333334
      %v601 = vlaneseq
      %v602 = vshrl.u32 %v601, 7
      %v603 = vadd.s32 %v602, 8
      %v604 = vadd.s32 %v602, 16
      %v605 = vadd.s32 %v602, 24
      %v606 = vlaneseq
      %v607 = vshrl.u32 %v606, 7
      %v608 = vsub.s32 0, %v607
      %v609 = vrot.slane %v246, %v608
      %vm610 = vcmp.eq.s32.totalorder %v602, %v609
      %vm611 = vcmp.eq.s32.totalorder %v603, %v609
      %vm612 = vcmp.eq.s32.totalorder %v604, %v609
      %vm613 = vcmp.eq.s32.totalorder %v605, %v609
      %v614 = vsel %vm610, 1, 0
      %v615 = vsel %vm611, 1, 0
      %v616 = vsel %vm612, 1, 0
      %v617 = vsel %vm613, 1, 0
      %v618 = vcvt.s32.f32 %v614
      %v619 = vcvt.s32.f32 %v615
      %v620 = vcvt.s32.f32 %v616
      %v621 = vcvt.s32.f32 %v617
      %v622 = vlaneseq
      %v623 = vshrl.u32 %v622, 7
      %v624 = vsub.s32 1, %v623
      %v625 = vrot.slane %v246, %v624
      %vm626 = vcmp.eq.s32.totalorder %v602, %v625
      %vm627 = vcmp.eq.s32.totalorder %v603, %v625
      %vm628 = vcmp.eq.s32.totalorder %v604, %v625
      %vm629 = vcmp.eq.s32.totalorder %v605, %v625
      %v630 = vsel %vm626, 1, 0
      %v631 = vsel %vm627, 1, 0
      %v632 = vsel %vm628, 1, 0
      %v633 = vsel %vm629, 1, 0
      %v634 = vcvt.s32.f32 %v630
      %v635 = vcvt.s32.f32 %v631
      %v636 = vcvt.s32.f32 %v632
      %v637 = vcvt.s32.f32 %v633
      %vm638 = vcmask 654336
      %v640 = vsel %vm638, %v634, 0
      %v643 = vsel %vm638, %v635, 0
      %v646 = vsel %vm638, %v636, 0
      %v649 = vsel %vm638, %v637, 0
      %v652 = vsel %vm638, %v618, 0
      %v655 = vsel %vm638, %v619, 0
      %v658 = vsel %vm638, %v620, 0
      %v661 = vsel %vm638, %v621, 0
      %663 = vmatprep.subr.mxu0 0.0
      %664 = vmatpush1.xpose.msra.mxu0 %v652
      %665 = vmatprep.subr.mxu0 0.0
      %666 = vmatpush1.xpose.msra.mxu0 %v655
      %667 = vmatprep.subr.mxu0 0.0
      %668 = vmatpush1.xpose.msra.mxu0 %v658
      %669 = vmatprep.subr.mxu0 0.0
      %670 = vmatpush1.xpose.msra.mxu0 %v661
      %671 = vmatprep.subr.mxu0 0.0
      %672 = vmatpush1.xpose.msra.mxu0 0.0
      %673 = vmatprep.subr.mxu0 0.0
      %674 = vmatpush1.xpose.msra.mxu0 0.0
      %675 = vmatprep.subr.mxu0 0.0
      %676 = vmatpush1.xpose.msra.mxu0 0.0
      %677 = vmatprep.subr.mxu0 0.0
      %678 = vmatpush1.xpose.msra.mxu0 0.0
      %679 = vmatprep.subr.mxu0 0.0
      %680 = vmatpush1.xpose.msra.mxu0 0.0
      %681 = vmatprep.subr.mxu0 0.0
      %682 = vmatpush1.xpose.msra.mxu0 0.0
      %683 = vmatprep.subr.mxu0 0.0
      %684 = vmatpush1.xpose.msra.mxu0 0.0
      %685 = vmatprep.subr.mxu0 0.0
      %686 = vmatpush1.xpose.msra.mxu0 0.0
      %687 = vmatprep.subr.mxu0 0.0
      %688 = vmatpush1.xpose.msra.mxu0 0.0
      %689 = vmatprep.subr.mxu0 0.0
      %690 = vmatpush1.xpose.msra.mxu0 0.0
      %691 = vmatprep.subr.mxu0 0.0
      %692 = vmatpush1.xpose.msra.mxu0 0.0
      %693 = vmatprep.subr.mxu0 0.0
      %694 = vmatpush1.xpose.msra.mxu0 0.0
      %695 = vmatprep.subr.mxu0 0.0
      %696 = vmatpush1.xpose.msra.mxu0 0.0
      %697 = vmatprep.subr.mxu0 0.0
      %698 = vmatpush1.xpose.msra.mxu0 0.0
      %699 = vmatprep.subr.mxu0 0.0
      %700 = vmatpush1.xpose.msra.mxu0 0.0
      %701 = vmatprep.subr.mxu0 0.0
      %702 = vmatpush1.xpose.msra.mxu0 0.0
      %703 = vmatprep.subr.mxu0 0.0
      %704 = vmatpush1.xpose.msra.mxu0 0.0
      %705 = vmatprep.subr.mxu0 0.0
      %706 = vmatpush1.xpose.msra.mxu0 0.0
      %707 = vmatprep.subr.mxu0 0.0
      %708 = vmatpush1.xpose.msra.mxu0 0.0
      %709 = vmatprep.subr.mxu0 0.0
      %710 = vmatpush1.xpose.msra.mxu0 0.0
      %711 = vmatprep.subr.mxu0 0.0
      %712 = vmatpush1.xpose.msra.mxu0 0.0
      %713 = vmatprep.subr.mxu0 0.0
      %714 = vmatpush1.xpose.msra.mxu0 0.0
      %715 = vmatprep.subr.mxu0 0.0
      %716 = vmatpush1.xpose.msra.mxu0 0.0
      %717 = vmatprep.subr.mxu0 0.0
      %718 = vmatpush1.xpose.msra.mxu0 0.0
      %719 = vmatprep.subr.mxu0 0.0
      %720 = vmatpush1.xpose.msra.mxu0 0.0
      %721 = vmatprep.subr.mxu0 0.0
      %722 = vmatpush1.xpose.msra.mxu0 0.0
      %723 = vmatprep.subr.mxu0 0.0
      %724 = vmatpush1.xpose.msra.mxu0 0.0
      %725 = vmatprep.subr.mxu0 0.0
      %726 = vmatpush1.xpose.msra.mxu0 0.0
      %727 = vmatprep.mubr.f32.mxu0 0.0
      %728 = vmatmul.mubr.f32.gmra.mrb[0].mxu0 %v640
      %v729 = vpop.f32.mrb[0].mxu0
      %v730 = vadd.f32 0.0, %v729
      %v731 = vpop.f32.mrb[0].mxu0
      %732 = vmatprep.mubr.f32.mxu0 0.0
      %733 = vmatmul.mubr.f32.gmra.mrb[0].mxu0 %v643
      %v734 = vpop.f32.mrb[0].mxu0
      %v735 = vadd.f32 0.0, %v734
      %v736 = vpop.f32.mrb[0].mxu0
      %737 = vmatprep.mubr.f32.mxu0 0.0
      %738 = vmatmul.mubr.f32.gmra.mrb[0].mxu0 %v646
      %v739 = vpop.f32.mrb[0].mxu0
      %v740 = vadd.f32 0.0, %v739
      %v741 = vpop.f32.mrb[0].mxu0
      %742 = vmatprep.mubr.f32.mxu0 0.0
      %743 = vmatmul.mubr.f32.gmra.mrb[0].mxu0 %v649
      %v744 = vpop.f32.mrb[0].mxu0
      %v745 = vadd.f32 0.0, %v744
      %v746 = vpop.f32.mrb[0].mxu0
      %747 = vdwg.mxu0
      %v748 = vlaneseq
      %v749 = vand.u32 %v748, 127
      %vm750 = vcmp.gt.f32.partialorder %v730, 0.5
      %vm751 = vcmp.gt.f32.partialorder %v735, 0.5
      %vm752 = vcmp.gt.f32.partialorder %v740, 0.5
      %vm753 = vcmp.gt.f32.partialorder %v745, 0.5
      %vm754 = vcmp.eq.s32.totalorder %v602, %v749
      %vm755 = vcmp.eq.s32.totalorder %v603, %v749
      %vm756 = vcmp.eq.s32.totalorder %v604, %v749
      %vm757 = vcmp.eq.s32.totalorder %v605, %v749
      %vm758 = vmor %vm750, %vm754
      %vm759 = vmor %vm751, %vm755
      %vm760 = vmor %vm752, %vm756
      %vm761 = vmor %vm753, %vm757
      %v762 = vld [vmem:[%s3] sm:$0xff]
      %v763 = vld [vmem:[%s3 + $0x8] sm:$0xff]
      %v764 = vld [vmem:[%s3 + $0x10] sm:$0xff]
      %v765 = vld [vmem:[%s3 + $0x18] sm:$0xff]
      %v766 = vlaneseq
      %v767 = vshrl.u32 %v766, 7
      %v768 = vsub.s32 0, %v767
      %v769 = vrot.slane %v247, %v768
      %vm770 = vcmask 261120
      %v772 = vsel %vm770, %v597, 0
      %v775 = vsel %vm770, %v598, 0
      %v778 = vsel %vm770, %v599, 0
      %v781 = vsel %vm770, %v600, 0
      %783 = vmatprep.subr.mxu0 0.0
      %784 = vmatpush1.msra.mxu0 %v762
      %785 = vmatprep.subr.mxu0 0.0
      %786 = vmatpush1.msra.mxu0 %v763
      %787 = vmatprep.subr.mxu0 0.0
      %788 = vmatpush1.msra.mxu0 %v764
      %789 = vmatprep.subr.mxu0 0.0
      %790 = vmatpush1.msra.mxu0 %v765
      %791 = vmatprep.subr.mxu0 0.0
      %792 = vmatpush1.msra.mxu0 0.0
      %793 = vmatprep.subr.mxu0 0.0
      %794 = vmatpush1.msra.mxu0 0.0
      %795 = vmatprep.subr.mxu0 0.0
      %796 = vmatpush1.msra.mxu0 0.0
      %797 = vmatprep.subr.mxu0 0.0
      %798 = vmatpush1.msra.mxu0 0.0
      %799 = vmatprep.subr.mxu0 0.0
      %800 = vmatpush1.msra.mxu0 0.0
      %801 = vmatprep.subr.mxu0 0.0
      %802 = vmatpush1.msra.mxu0 0.0
      %803 = vmatprep.subr.mxu0 0.0
      %804 = vmatpush1.msra.mxu0 0.0
      %805 = vmatprep.subr.mxu0 0.0
      %806 = vmatpush1.msra.mxu0 0.0
      %807 = vmatprep.subr.mxu0 0.0
      %808 = vmatpush1.msra.mxu0 0.0
      %809 = vmatprep.subr.mxu0 0.0
      %810 = vmatpush1.msra.mxu0 0.0
      %811 = vmatprep.subr.mxu0 0.0
      %812 = vmatpush1.msra.mxu0 0.0
      %813 = vmatprep.subr.mxu0 0.0
      %814 = vmatpush1.msra.mxu0 0.0
      %815 = vmatprep.subr.mxu0 0.0
      %816 = vmatpush1.msra.mxu0 0.0
      %817 = vmatprep.subr.mxu0 0.0
      %818 = vmatpush1.msra.mxu0 0.0
      %819 = vmatprep.subr.mxu0 0.0
      %820 = vmatpush1.msra.mxu0 0.0
      %821 = vmatprep.subr.mxu0 0.0
      %822 = vmatpush1.msra.mxu0 0.0
      %823 = vmatprep.subr.mxu0 0.0
      %824 = vmatpush1.msra.mxu0 0.0
      %825 = vmatprep.subr.mxu0 0.0
      %826 = vmatpush1.msra.mxu0 0.0
      %827 = vmatprep.subr.mxu0 0.0
      %828 = vmatpush1.msra.mxu0 0.0
      %829 = vmatprep.subr.mxu0 0.0
      %830 = vmatpush1.msra.mxu0 0.0
      %831 = vmatprep.subr.mxu0 0.0
      %832 = vmatpush1.msra.mxu0 0.0
      %833 = vmatprep.subr.mxu0 0.0
      %834 = vmatpush1.msra.mxu0 0.0
      %835 = vmatprep.subr.mxu0 0.0
      %836 = vmatpush1.msra.mxu0 0.0
      %837 = vmatprep.subr.mxu0 0.0
      %838 = vmatpush1.msra.mxu0 0.0
      %839 = vmatprep.subr.mxu0 0.0
      %840 = vmatpush1.msra.mxu0 0.0
      %841 = vmatprep.subr.mxu0 0.0
      %842 = vmatpush1.msra.mxu0 0.0
      %843 = vmatprep.subr.mxu0 0.0
      %844 = vmatpush1.msra.mxu0 0.0
      %845 = vmatprep.subr.mxu0 0.0
      %846 = vmatpush1.msra.mxu0 0.0
      %847 = vmatprep.mubr.f32.mxu0 0.0
      %848 = vmatmul.mubr.f32.gmra.mrb[0].mxu0 %v772
      %v849 = vpop.f32.mrb[0].mxu0
      %v850 = vadd.f32 %v769, %v849
      %v851 = vpop.f32.mrb[0].mxu0
      %852 = vmatprep.mubr.f32.mxu0 0.0
      %853 = vmatmul.mubr.f32.gmra.mrb[0].mxu0 %v775
      %v854 = vpop.f32.mrb[0].mxu0
      %v855 = vadd.f32 %v769, %v854
      %v856 = vpop.f32.mrb[0].mxu0
      %857 = vmatprep.mubr.f32.mxu0 0.0
      %858 = vmatmul.mubr.f32.gmra.mrb[0].mxu0 %v778
      %v859 = vpop.f32.mrb[0].mxu0
      %v860 = vadd.f32 %v769, %v859
      %v861 = vpop.f32.mrb[0].mxu0
      %862 = vmatprep.mubr.f32.mxu0 0.0
      %863 = vmatmul.mubr.f32.gmra.mrb[0].mxu0 %v781
      %v864 = vpop.f32.mrb[0].mxu0
      %v865 = vadd.f32 %v769, %v864
      %v866 = vpop.f32.mrb[0].mxu0
      %867 = vdwg.mxu0
      %v872 = vcombine.high %v850, %v850
      %v874 = vunpack.c.l.s4 1966171168
      %v875 = vunpack.c.0.s8 %v874
      %v876 = vlaneseq
      %v877 = vshrl.u32 %v876, 7
      %v878 = vsub.s32 %v875, %v877
      %v879 = vrot.slane %v850, %v878
      %v881 = vunpack.c.l.s4 1966171168
      %v882 = vunpack.c.0.s8 %v881
      %v883 = vlaneseq
      %v884 = vshrl.u32 %v883, 7
      %v885 = vsub.s32 %v882, %v884
      %v886 = vrot.slane %v872, %v885
      %v887 = vcombine.high %v879, %v879
      %v888 = vcombine.high %v886, %v886
      %v890 = vunpack.c.l.s4 1966171168
      %v891 = vunpack.c.0.s8 %v890
      %v892 = vlaneseq
      %v893 = vshrl.u32 %v892, 7
      %v894 = vsub.s32 %v891, %v893
      %v895 = vrot.slane %v879, %v894
      %v897 = vunpack.c.l.s4 1966171168
      %v898 = vunpack.c.0.s8 %v897
      %v899 = vlaneseq
      %v900 = vshrl.u32 %v899, 7
      %v901 = vsub.s32 %v898, %v900
      %v902 = vrot.slane %v886, %v901
      %v904 = vunpack.c.l.s4 1966171168
      %v905 = vunpack.c.0.s8 %v904
      %v906 = vlaneseq
      %v907 = vshrl.u32 %v906, 7
      %v908 = vsub.s32 %v905, %v907
      %v909 = vrot.slane %v887, %v908
      %v911 = vunpack.c.l.s4 1966171168
      %v912 = vunpack.c.0.s8 %v911
      %v913 = vlaneseq
      %v914 = vshrl.u32 %v913, 7
      %v915 = vsub.s32 %v912, %v914
      %v916 = vrot.slane %v888, %v915
      %v917 = vcombine.high %v895, %v895
      %v918 = vcombine.high %v902, %v902
      %v919 = vcombine.high %v909, %v909
      %v920 = vcombine.high %v916, %v916
      %v921 = vcombine.high %v855, %v855
      %v923 = vunpack.c.l.s4 1966171168
      %v924 = vunpack.c.0.s8 %v923
      %v925 = vlaneseq
      %v926 = vshrl.u32 %v925, 7
      %v927 = vsub.s32 %v924, %v926
      %v928 = vrot.slane %v855, %v927
      %v930 = vunpack.c.l.s4 1966171168
      %v931 = vunpack.c.0.s8 %v930
      %v932 = vlaneseq
      %v933 = vshrl.u32 %v932, 7
      %v934 = vsub.s32 %v931, %v933
      %v935 = vrot.slane %v921, %v934
      %v936 = vcombine.high %v928, %v928
      %v937 = vcombine.high %v935, %v935
      %v939 = vunpack.c.l.s4 1966171168
      %v940 = vunpack.c.0.s8 %v939
      %v941 = vlaneseq
      %v942 = vshrl.u32 %v941, 7
      %v943 = vsub.s32 %v940, %v942
      %v944 = vrot.slane %v928, %v943
      %v946 = vunpack.c.l.s4 1966171168
      %v947 = vunpack.c.0.s8 %v946
      %v948 = vlaneseq
      %v949 = vshrl.u32 %v948, 7
      %v950 = vsub.s32 %v947, %v949
      %v951 = vrot.slane %v935, %v950
      %v953 = vunpack.c.l.s4 1966171168
      %v954 = vunpack.c.0.s8 %v953
      %v955 = vlaneseq
      %v956 = vshrl.u32 %v955, 7
      %v957 = vsub.s32 %v954, %v956
      %v958 = vrot.slane %v936, %v957
      %v960 = vunpack.c.l.s4 1966171168
      %v961 = vunpack.c.0.s8 %v960
      %v962 = vlaneseq
      %v963 = vshrl.u32 %v962, 7
      %v964 = vsub.s32 %v961, %v963
      %v965 = vrot.slane %v937, %v964
      %v966 = vcombine.high %v944, %v944
      %v967 = vcombine.high %v951, %v951
      %v968 = vcombine.high %v958, %v958
      %v969 = vcombine.high %v965, %v965
      %v970 = vcombine.high %v860, %v860
      %v972 = vunpack.c.l.s4 1966171168
      %v973 = vunpack.c.0.s8 %v972
      %v974 = vlaneseq
      %v975 = vshrl.u32 %v974, 7
      %v976 = vsub.s32 %v973, %v975
      %v977 = vrot.slane %v860, %v976
      %v979 = vunpack.c.l.s4 1966171168
      %v980 = vunpack.c.0.s8 %v979
      %v981 = vlaneseq
      %v982 = vshrl.u32 %v981, 7
      %v983 = vsub.s32 %v980, %v982
      %v984 = vrot.slane %v970, %v983
      %v985 = vcombine.high %v977, %v977
      %v986 = vcombine.high %v984, %v984
      %v988 = vunpack.c.l.s4 1966171168
      %v989 = vunpack.c.0.s8 %v988
      %v990 = vlaneseq
      %v991 = vshrl.u32 %v990, 7
      %v992 = vsub.s32 %v989, %v991
      %v993 = vrot.slane %v977, %v992
      %v995 = vunpack.c.l.s4 1966171168
      %v996 = vunpack.c.0.s8 %v995
      %v997 = vlaneseq
      %v998 = vshrl.u32 %v997, 7
      %v999 = vsub.s32 %v996, %v998
      %v1000 = vrot.slane %v984, %v999
      %v1002 = vunpack.c.l.s4 1966171168
      %v1003 = vunpack.c.0.s8 %v1002
      %v1004 = vlaneseq
      %v1005 = vshrl.u32 %v1004, 7
      %v1006 = vsub.s32 %v1003, %v1005
      %v1007 = vrot.slane %v985, %v1006
      %v1009 = vunpack.c.l.s4 1966171168
      %v1010 = vunpack.c.0.s8 %v1009
      %v1011 = vlaneseq
      %v1012 = vshrl.u32 %v1011, 7
      %v1013 = vsub.s32 %v1010, %v1012
      %v1014 = vrot.slane %v986, %v1013
      %v1015 = vcombine.high %v993, %v993
      %v1016 = vcombine.high %v1000, %v1000
      %v1017 = vcombine.high %v1007, %v1007
      %v1018 = vcombine.high %v1014, %v1014
      %v1019 = vcombine.high %v865, %v865
      %v1021 = vunpack.c.l.s4 1966171168
      %v1022 = vunpack.c.0.s8 %v1021
      %v1023 = vlaneseq
      %v1024 = vshrl.u32 %v1023, 7
      %v1025 = vsub.s32 %v1022, %v1024
      %v1026 = vrot.slane %v865, %v1025
      %v1028 = vunpack.c.l.s4 1966171168
      %v1029 = vunpack.c.0.s8 %v1028
      %v1030 = vlaneseq
      %v1031 = vshrl.u32 %v1030, 7
      %v1032 = vsub.s32 %v1029, %v1031
      %v1033 = vrot.slane %v1019, %v1032
      %v1034 = vcombine.high %v1026, %v1026
      %v1035 = vcombine.high %v1033, %v1033
      %v1037 = vunpack.c.l.s4 1966171168
      %v1038 = vunpack.c.0.s8 %v1037
      %v1039 = vlaneseq
      %v1040 = vshrl.u32 %v1039, 7
      %v1041 = vsub.s32 %v1038, %v1040
      %v1042 = vrot.slane %v1026, %v1041
      %v1044 = vunpack.c.l.s4 1966171168
      %v1045 = vunpack.c.0.s8 %v1044
      %v1046 = vlaneseq
      %v1047 = vshrl.u32 %v1046, 7
      %v1048 = vsub.s32 %v1045, %v1047
      %v1049 = vrot.slane %v1033, %v1048
      %v1051 = vunpack.c.l.s4 1966171168
      %v1052 = vunpack.c.0.s8 %v1051
      %v1053 = vlaneseq
      %v1054 = vshrl.u32 %v1053, 7
      %v1055 = vsub.s32 %v1052, %v1054
      %v1056 = vrot.slane %v1034, %v1055
      %v1058 = vunpack.c.l.s4 1966171168
      %v1059 = vunpack.c.0.s8 %v1058
      %v1060 = vlaneseq
      %v1061 = vshrl.u32 %v1060, 7
      %v1062 = vsub.s32 %v1059, %v1061
      %v1063 = vrot.slane %v1035, %v1062
      %v1064 = vcombine.high %v1042, %v1042
      %v1065 = vcombine.high %v1049, %v1049
      %v1066 = vcombine.high %v1056, %v1056
      %v1067 = vcombine.high %v1063, %v1063
      %v1068 = vlaneseq
      %v1069 = vshrl.u32 %v1068, 7
      %v1070 = vsub.s32 0, %v1069
      %v1071 = vrot.slane %v895, %v1070
      %v1072 = vlaneseq
      %v1073 = vshrl.u32 %v1072, 7
      %v1074 = vsub.s32 0, %v1073
      %v1075 = vrot.slane %v909, %v1074
      %v1076 = vlaneseq
      %v1077 = vshrl.u32 %v1076, 7
      %v1078 = vsub.s32 0, %v1077
      %v1079 = vrot.slane %v917, %v1078
      %v1080 = vlaneseq
      %v1081 = vshrl.u32 %v1080, 7
      %v1082 = vsub.s32 0, %v1081
      %v1083 = vrot.slane %v919, %v1082
      %v1084 = vlaneseq
      %v1085 = vshrl.u32 %v1084, 7
      %v1086 = vsub.s32 0, %v1085
      %v1087 = vrot.slane %v902, %v1086
      %v1088 = vlaneseq
      %v1089 = vshrl.u32 %v1088, 7
      %v1090 = vsub.s32 0, %v1089
      %v1091 = vrot.slane %v916, %v1090
      %v1092 = vlaneseq
      %v1093 = vshrl.u32 %v1092, 7
      %v1094 = vsub.s32 0, %v1093
      %v1095 = vrot.slane %v918, %v1094
      %v1096 = vlaneseq
      %v1097 = vshrl.u32 %v1096, 7
      %v1098 = vsub.s32 0, %v1097
      %v1099 = vrot.slane %v920, %v1098
      %v1100 = vlaneseq
      %v1101 = vshrl.u32 %v1100, 7
      %v1102 = vsub.s32 0, %v1101
      %v1103 = vrot.slane %v944, %v1102
      %v1104 = vlaneseq
      %v1105 = vshrl.u32 %v1104, 7
      %v1106 = vsub.s32 0, %v1105
      %v1107 = vrot.slane %v958, %v1106
      %v1108 = vlaneseq
      %v1109 = vshrl.u32 %v1108, 7
      %v1110 = vsub.s32 0, %v1109
      %v1111 = vrot.slane %v966, %v1110
      %v1112 = vlaneseq
      %v1113 = vshrl.u32 %v1112, 7
      %v1114 = vsub.s32 0, %v1113
      %v1115 = vrot.slane %v968, %v1114
      %v1116 = vlaneseq
      %v1117 = vshrl.u32 %v1116, 7
      %v1118 = vsub.s32 0, %v1117
      %v1119 = vrot.slane %v951, %v1118
      %v1120 = vlaneseq
      %v1121 = vshrl.u32 %v1120, 7
      %v1122 = vsub.s32 0, %v1121
      %v1123 = vrot.slane %v965, %v1122
      %v1124 = vlaneseq
      %v1125 = vshrl.u32 %v1124, 7
      %v1126 = vsub.s32 0, %v1125
      %v1127 = vrot.slane %v967, %v1126
      %v1128 = vlaneseq
      %v1129 = vshrl.u32 %v1128, 7
      %v1130 = vsub.s32 0, %v1129
      %v1131 = vrot.slane %v969, %v1130
      %v1132 = vlaneseq
      %v1133 = vshrl.u32 %v1132, 7
      %v1134 = vsub.s32 0, %v1133
      %v1135 = vrot.slane %v993, %v1134
      %v1136 = vlaneseq
      %v1137 = vshrl.u32 %v1136, 7
      %v1138 = vsub.s32 0, %v1137
      %v1139 = vrot.slane %v1007, %v1138
      %v1140 = vlaneseq
      %v1141 = vshrl.u32 %v1140, 7
      %v1142 = vsub.s32 0, %v1141
      %v1143 = vrot.slane %v1015, %v1142
      %v1144 = vlaneseq
      %v1145 = vshrl.u32 %v1144, 7
      %v1146 = vsub.s32 0, %v1145
      %v1147 = vrot.slane %v1017, %v1146
      %v1148 = vlaneseq
      %v1149 = vshrl.u32 %v1148, 7
      %v1150 = vsub.s32 0, %v1149
      %v1151 = vrot.slane %v1000, %v1150
      %v1152 = vlaneseq
      %v1153 = vshrl.u32 %v1152, 7
      %v1154 = vsub.s32 0, %v1153
      %v1155 = vrot.slane %v1014, %v1154
      %v1156 = vlaneseq
      %v1157 = vshrl.u32 %v1156, 7
      %v1158 = vsub.s32 0, %v1157
      %v1159 = vrot.slane %v1016, %v1158
      %v1160 = vlaneseq
      %v1161 = vshrl.u32 %v1160, 7
      %v1162 = vsub.s32 0, %v1161
      %v1163 = vrot.slane %v1018, %v1162
      %v1164 = vlaneseq
      %v1165 = vshrl.u32 %v1164, 7
      %v1166 = vsub.s32 0, %v1165
      %v1167 = vrot.slane %v1042, %v1166
      %v1168 = vlaneseq
      %v1169 = vshrl.u32 %v1168, 7
      %v1170 = vsub.s32 0, %v1169
      %v1171 = vrot.slane %v1056, %v1170
      %v1172 = vlaneseq
      %v1173 = vshrl.u32 %v1172, 7
      %v1174 = vsub.s32 0, %v1173
      %v1175 = vrot.slane %v1064, %v1174
      %v1176 = vlaneseq
      %v1177 = vshrl.u32 %v1176, 7
      %v1178 = vsub.s32 0, %v1177
      %v1179 = vrot.slane %v1066, %v1178
      %v1180 = vlaneseq
      %v1181 = vshrl.u32 %v1180, 7
      %v1182 = vsub.s32 0, %v1181
      %v1183 = vrot.slane %v1049, %v1182
      %v1184 = vlaneseq
      %v1185 = vshrl.u32 %v1184, 7
      %v1186 = vsub.s32 0, %v1185
      %v1187 = vrot.slane %v1063, %v1186
      %v1188 = vlaneseq
      %v1189 = vshrl.u32 %v1188, 7
      %v1190 = vsub.s32 0, %v1189
      %v1191 = vrot.slane %v1065, %v1190
      %v1192 = vlaneseq
      %v1193 = vshrl.u32 %v1192, 7
      %v1194 = vsub.s32 0, %v1193
      %v1195 = vrot.slane %v1067, %v1194
      %1228 = vrot.lane.b32.xlu0 %v850, 16
      %v1229 = vpop.permute.xlu0 %1228
      %1230 = vrot.lane.b32.xlu0 %v855, 16
      %v1231 = vpop.permute.xlu0 %1230
      %1232 = vrot.lane.b32.xlu0 %v860, 16
      %v1233 = vpop.permute.xlu0 %1232
      %1234 = vrot.lane.b32.xlu0 %v865, 16
      %v1235 = vpop.permute.xlu0 %1234
      %v1240 = vadd.f32 %v1071, %v1229
      %v1241 = vadd.f32 %v1071, %v1231
      %v1242 = vadd.f32 %v1071, %v1233
      %v1243 = vadd.f32 %v1071, %v1235
      %v1244 = vadd.f32 %v1075, %v1229
      %v1245 = vadd.f32 %v1075, %v1231
      %v1246 = vadd.f32 %v1075, %v1233
      %v1247 = vadd.f32 %v1075, %v1235
      %v1248 = vadd.f32 %v1079, %v1229
      %v1249 = vadd.f32 %v1079, %v1231
      %v1250 = vadd.f32 %v1079, %v1233
      %v1251 = vadd.f32 %v1079, %v1235
      %v1252 = vadd.f32 %v1083, %v1229
      %v1253 = vadd.f32 %v1083, %v1231
      %v1254 = vadd.f32 %v1083, %v1233
      %v1255 = vadd.f32 %v1083, %v1235
      %v1256 = vadd.f32 %v1087, %v1229
      %v1257 = vadd.f32 %v1087, %v1231
      %v1258 = vadd.f32 %v1087, %v1233
      %v1259 = vadd.f32 %v1087, %v1235
      %v1260 = vadd.f32 %v1091, %v1229
      %v1261 = vadd.f32 %v1091, %v1231
      %v1262 = vadd.f32 %v1091, %v1233
      %v1263 = vadd.f32 %v1091, %v1235
      %v1264 = vadd.f32 %v1095, %v1229
      %v1265 = vadd.f32 %v1095, %v1231
      %v1266 = vadd.f32 %v1095, %v1233
      %v1267 = vadd.f32 %v1095, %v1235
      %v1268 = vadd.f32 %v1099, %v1229
      %v1269 = vadd.f32 %v1099, %v1231
      %v1270 = vadd.f32 %v1099, %v1233
      %v1271 = vadd.f32 %v1099, %v1235
      %v1272 = vadd.f32 %v1103, %v1229
      %v1273 = vadd.f32 %v1103, %v1231
      %v1274 = vadd.f32 %v1103, %v1233
      %v1275 = vadd.f32 %v1103, %v1235
      %v1276 = vadd.f32 %v1107, %v1229
      %v1277 = vadd.f32 %v1107, %v1231
      %v1278 = vadd.f32 %v1107, %v1233
      %v1279 = vadd.f32 %v1107, %v1235
      %v1280 = vadd.f32 %v1111, %v1229
      %v1281 = vadd.f32 %v1111, %v1231
      %v1282 = vadd.f32 %v1111, %v1233
      %v1283 = vadd.f32 %v1111, %v1235
      %v1284 = vadd.f32 %v1115, %v1229
      %v1285 = vadd.f32 %v1115, %v1231
      %v1286 = vadd.f32 %v1115, %v1233
      %v1287 = vadd.f32 %v1115, %v1235
      %v1288 = vadd.f32 %v1119, %v1229
      %v1289 = vadd.f32 %v1119, %v1231
      %v1290 = vadd.f32 %v1119, %v1233
      %v1291 = vadd.f32 %v1119, %v1235
      %v1292 = vadd.f32 %v1123, %v1229
      %v1293 = vadd.f32 %v1123, %v1231
      %v1294 = vadd.f32 %v1123, %v1233
      %v1295 = vadd.f32 %v1123, %v1235
      %v1296 = vadd.f32 %v1127, %v1229
      %v1297 = vadd.f32 %v1127, %v1231
      %v1298 = vadd.f32 %v1127, %v1233
      %v1299 = vadd.f32 %v1127, %v1235
      %v1300 = vadd.f32 %v1131, %v1229
      %v1301 = vadd.f32 %v1131, %v1231
      %v1302 = vadd.f32 %v1131, %v1233
      %v1303 = vadd.f32 %v1131, %v1235
      %v1304 = vadd.f32 %v1135, %v1229
      %v1305 = vadd.f32 %v1135, %v1231
      %v1306 = vadd.f32 %v1135, %v1233
      %v1307 = vadd.f32 %v1135, %v1235
      %v1308 = vadd.f32 %v1139, %v1229
      %v1309 = vadd.f32 %v1139, %v1231
      %v1310 = vadd.f32 %v1139, %v1233
      %v1311 = vadd.f32 %v1139, %v1235
      %v1312 = vadd.f32 %v1143, %v1229
      %v1313 = vadd.f32 %v1143, %v1231
      %v1314 = vadd.f32 %v1143, %v1233
      %v1315 = vadd.f32 %v1143, %v1235
      %v1316 = vadd.f32 %v1147, %v1229
      %v1317 = vadd.f32 %v1147, %v1231
      %v1318 = vadd.f32 %v1147, %v1233
      %v1319 = vadd.f32 %v1147, %v1235
      %v1320 = vadd.f32 %v1151, %v1229
      %v1321 = vadd.f32 %v1151, %v1231
      %v1322 = vadd.f32 %v1151, %v1233
      %v1323 = vadd.f32 %v1151, %v1235
      %v1324 = vadd.f32 %v1155, %v1229
      %v1325 = vadd.f32 %v1155, %v1231
      %v1326 = vadd.f32 %v1155, %v1233
      %v1327 = vadd.f32 %v1155, %v1235
      %v1328 = vadd.f32 %v1159, %v1229
      %v1329 = vadd.f32 %v1159, %v1231
      %v1330 = vadd.f32 %v1159, %v1233
      %v1331 = vadd.f32 %v1159, %v1235
      %v1332 = vadd.f32 %v1163, %v1229
      %v1333 = vadd.f32 %v1163, %v1231
      %v1334 = vadd.f32 %v1163, %v1233
      %v1335 = vadd.f32 %v1163, %v1235
      %v1336 = vadd.f32 %v1167, %v1229
      %v1337 = vadd.f32 %v1167, %v1231
      %v1338 = vadd.f32 %v1167, %v1233
      %v1339 = vadd.f32 %v1167, %v1235
      %v1340 = vadd.f32 %v1171, %v1229
      %v1341 = vadd.f32 %v1171, %v1231
      %v1342 = vadd.f32 %v1171, %v1233
      %v1343 = vadd.f32 %v1171, %v1235
      %v1344 = vadd.f32 %v1175, %v1229
      %v1345 = vadd.f32 %v1175, %v1231
      %v1346 = vadd.f32 %v1175, %v1233
      %v1347 = vadd.f32 %v1175, %v1235
      %v1348 = vadd.f32 %v1179, %v1229
      %v1349 = vadd.f32 %v1179, %v1231
      %v1350 = vadd.f32 %v1179, %v1233
      %v1351 = vadd.f32 %v1179, %v1235
      %v1352 = vadd.f32 %v1183, %v1229
      %v1353 = vadd.f32 %v1183, %v1231
      %v1354 = vadd.f32 %v1183, %v1233
      %v1355 = vadd.f32 %v1183, %v1235
      %v1356 = vadd.f32 %v1187, %v1229
      %v1357 = vadd.f32 %v1187, %v1231
      %v1358 = vadd.f32 %v1187, %v1233
      %v1359 = vadd.f32 %v1187, %v1235
      %v1360 = vadd.f32 %v1191, %v1229
      %v1361 = vadd.f32 %v1191, %v1231
      %v1362 = vadd.f32 %v1191, %v1233
      %v1363 = vadd.f32 %v1191, %v1235
      %v1364 = vadd.f32 %v1195, %v1229
      %v1365 = vadd.f32 %v1195, %v1231
      %v1366 = vadd.f32 %v1195, %v1233
      %v1367 = vadd.f32 %v1195, %v1235
      %vm1368 = vcmp.gt.f32.partialorder %v1240, 0.0
      %vm1369 = vcmp.gt.f32.partialorder %v1241, 0.0
      %vm1370 = vcmp.gt.f32.partialorder %v1242, 0.0
      %vm1371 = vcmp.gt.f32.partialorder %v1243, 0.0
      %vm1372 = vcmp.gt.f32.partialorder %v1244, 0.0
      %vm1373 = vcmp.gt.f32.partialorder %v1245, 0.0
      %vm1374 = vcmp.gt.f32.partialorder %v1246, 0.0
      %vm1375 = vcmp.gt.f32.partialorder %v1247, 0.0
      %vm1376 = vcmp.gt.f32.partialorder %v1248, 0.0
      %vm1377 = vcmp.gt.f32.partialorder %v1249, 0.0
      %vm1378 = vcmp.gt.f32.partialorder %v1250, 0.0
      %vm1379 = vcmp.gt.f32.partialorder %v1251, 0.0
      %vm1380 = vcmp.gt.f32.partialorder %v1252, 0.0
      %vm1381 = vcmp.gt.f32.partialorder %v1253, 0.0
      %vm1382 = vcmp.gt.f32.partialorder %v1254, 0.0
      %vm1383 = vcmp.gt.f32.partialorder %v1255, 0.0
      %vm1384 = vcmp.gt.f32.partialorder %v1256, 0.0
      %vm1385 = vcmp.gt.f32.partialorder %v1257, 0.0
      %vm1386 = vcmp.gt.f32.partialorder %v1258, 0.0
      %vm1387 = vcmp.gt.f32.partialorder %v1259, 0.0
      %vm1388 = vcmp.gt.f32.partialorder %v1260, 0.0
      %vm1389 = vcmp.gt.f32.partialorder %v1261, 0.0
      %vm1390 = vcmp.gt.f32.partialorder %v1262, 0.0
      %vm1391 = vcmp.gt.f32.partialorder %v1263, 0.0
      %vm1392 = vcmp.gt.f32.partialorder %v1264, 0.0
      %vm1393 = vcmp.gt.f32.partialorder %v1265, 0.0
      %vm1394 = vcmp.gt.f32.partialorder %v1266, 0.0
      %vm1395 = vcmp.gt.f32.partialorder %v1267, 0.0
      %vm1396 = vcmp.gt.f32.partialorder %v1268, 0.0
      %vm1397 = vcmp.gt.f32.partialorder %v1269, 0.0
      %vm1398 = vcmp.gt.f32.partialorder %v1270, 0.0
      %vm1399 = vcmp.gt.f32.partialorder %v1271, 0.0
      %vm1400 = vcmp.gt.f32.partialorder %v1272, 0.0
      %vm1401 = vcmp.gt.f32.partialorder %v1273, 0.0
      %vm1402 = vcmp.gt.f32.partialorder %v1274, 0.0
      %vm1403 = vcmp.gt.f32.partialorder %v1275, 0.0
      %vm1404 = vcmp.gt.f32.partialorder %v1276, 0.0
      %vm1405 = vcmp.gt.f32.partialorder %v1277, 0.0
      %vm1406 = vcmp.gt.f32.partialorder %v1278, 0.0
      %vm1407 = vcmp.gt.f32.partialorder %v1279, 0.0
      %vm1408 = vcmp.gt.f32.partialorder %v1280, 0.0
      %vm1409 = vcmp.gt.f32.partialorder %v1281, 0.0
      %vm1410 = vcmp.gt.f32.partialorder %v1282, 0.0
      %vm1411 = vcmp.gt.f32.partialorder %v1283, 0.0
      %vm1412 = vcmp.gt.f32.partialorder %v1284, 0.0
      %vm1413 = vcmp.gt.f32.partialorder %v1285, 0.0
      %vm1414 = vcmp.gt.f32.partialorder %v1286, 0.0
      %vm1415 = vcmp.gt.f32.partialorder %v1287, 0.0
      %vm1416 = vcmp.gt.f32.partialorder %v1288, 0.0
      %vm1417 = vcmp.gt.f32.partialorder %v1289, 0.0
      %vm1418 = vcmp.gt.f32.partialorder %v1290, 0.0
      %vm1419 = vcmp.gt.f32.partialorder %v1291, 0.0
      %vm1420 = vcmp.gt.f32.partialorder %v1292, 0.0
      %vm1421 = vcmp.gt.f32.partialorder %v1293, 0.0
      %vm1422 = vcmp.gt.f32.partialorder %v1294, 0.0
      %vm1423 = vcmp.gt.f32.partialorder %v1295, 0.0
      %vm1424 = vcmp.gt.f32.partialorder %v1296, 0.0
      %vm1425 = vcmp.gt.f32.partialorder %v1297, 0.0
      %vm1426 = vcmp.gt.f32.partialorder %v1298, 0.0
      %vm1427 = vcmp.gt.f32.partialorder %v1299, 0.0
      %vm1428 = vcmp.gt.f32.partialorder %v1300, 0.0
      %vm1429 = vcmp.gt.f32.partialorder %v1301, 0.0
      %vm1430 = vcmp.gt.f32.partialorder %v1302, 0.0
      %vm1431 = vcmp.gt.f32.partialorder %v1303, 0.0
      %vm1432 = vcmp.gt.f32.partialorder %v1304, 0.0
      %vm1433 = vcmp.gt.f32.partialorder %v1305, 0.0
      %vm1434 = vcmp.gt.f32.partialorder %v1306, 0.0
      %vm1435 = vcmp.gt.f32.partialorder %v1307, 0.0
      %vm1436 = vcmp.gt.f32.partialorder %v1308, 0.0
      %vm1437 = vcmp.gt.f32.partialorder %v1309, 0.0
      %vm1438 = vcmp.gt.f32.partialorder %v1310, 0.0
      %vm1439 = vcmp.gt.f32.partialorder %v1311, 0.0
      %vm1440 = vcmp.gt.f32.partialorder %v1312, 0.0
      %vm1441 = vcmp.gt.f32.partialorder %v1313, 0.0
      %vm1442 = vcmp.gt.f32.partialorder %v1314, 0.0
      %vm1443 = vcmp.gt.f32.partialorder %v1315, 0.0
      %vm1444 = vcmp.gt.f32.partialorder %v1316, 0.0
      %vm1445 = vcmp.gt.f32.partialorder %v1317, 0.0
      %vm1446 = vcmp.gt.f32.partialorder %v1318, 0.0
      %vm1447 = vcmp.gt.f32.partialorder %v1319, 0.0
      %vm1448 = vcmp.gt.f32.partialorder %v1320, 0.0
      %vm1449 = vcmp.gt.f32.partialorder %v1321, 0.0
      %vm1450 = vcmp.gt.f32.partialorder %v1322, 0.0
      %vm1451 = vcmp.gt.f32.partialorder %v1323, 0.0
      %vm1452 = vcmp.gt.f32.partialorder %v1324, 0.0
      %vm1453 = vcmp.gt.f32.partialorder %v1325, 0.0
      %vm1454 = vcmp.gt.f32.partialorder %v1326, 0.0
      %vm1455 = vcmp.gt.f32.partialorder %v1327, 0.0
      %vm1456 = vcmp.gt.f32.partialorder %v1328, 0.0
      %vm1457 = vcmp.gt.f32.partialorder %v1329, 0.0
      %vm1458 = vcmp.gt.f32.partialorder %v1330, 0.0
      %vm1459 = vcmp.gt.f32.partialorder %v1331, 0.0
      %vm1460 = vcmp.gt.f32.partialorder %v1332, 0.0
      %vm1461 = vcmp.gt.f32.partialorder %v1333, 0.0
      %vm1462 = vcmp.gt.f32.partialorder %v1334, 0.0
      %vm1463 = vcmp.gt.f32.partialorder %v1335, 0.0
      %vm1464 = vcmp.gt.f32.partialorder %v1336, 0.0
      %vm1465 = vcmp.gt.f32.partialorder %v1337, 0.0
      %vm1466 = vcmp.gt.f32.partialorder %v1338, 0.0
      %vm1467 = vcmp.gt.f32.partialorder %v1339, 0.0
      %vm1468 = vcmp.gt.f32.partialorder %v1340, 0.0
      %vm1469 = vcmp.gt.f32.partialorder %v1341, 0.0
      %vm1470 = vcmp.gt.f32.partialorder %v1342, 0.0
      %vm1471 = vcmp.gt.f32.partialorder %v1343, 0.0
      %vm1472 = vcmp.gt.f32.partialorder %v1344, 0.0
      %vm1473 = vcmp.gt.f32.partialorder %v1345, 0.0
      %vm1474 = vcmp.gt.f32.partialorder %v1346, 0.0
      %vm1475 = vcmp.gt.f32.partialorder %v1347, 0.0
      %vm1476 = vcmp.gt.f32.partialorder %v1348, 0.0
      %vm1477 = vcmp.gt.f32.partialorder %v1349, 0.0
      %vm1478 = vcmp.gt.f32.partialorder %v1350, 0.0
      %vm1479 = vcmp.gt.f32.partialorder %v1351, 0.0
      %vm1480 = vcmp.gt.f32.partialorder %v1352, 0.0
      %vm1481 = vcmp.gt.f32.partialorder %v1353, 0.0
      %vm1482 = vcmp.gt.f32.partialorder %v1354, 0.0
      %vm1483 = vcmp.gt.f32.partialorder %v1355, 0.0
      %vm1484 = vcmp.gt.f32.partialorder %v1356, 0.0
      %vm1485 = vcmp.gt.f32.partialorder %v1357, 0.0
      %vm1486 = vcmp.gt.f32.partialorder %v1358, 0.0
      %vm1487 = vcmp.gt.f32.partialorder %v1359, 0.0
      %vm1488 = vcmp.gt.f32.partialorder %v1360, 0.0
      %vm1489 = vcmp.gt.f32.partialorder %v1361, 0.0
      %vm1490 = vcmp.gt.f32.partialorder %v1362, 0.0
      %vm1491 = vcmp.gt.f32.partialorder %v1363, 0.0
      %vm1492 = vcmp.gt.f32.partialorder %v1364, 0.0
      %vm1493 = vcmp.gt.f32.partialorder %v1365, 0.0
      %vm1494 = vcmp.gt.f32.partialorder %v1366, 0.0
      %vm1495 = vcmp.gt.f32.partialorder %v1367, 0.0
      %v1496 = vmul.f32 %v1240, 0.2
      %v1497 = vmul.f32 %v1241, 0.2
      %v1498 = vmul.f32 %v1242, 0.2
      %v1499 = vmul.f32 %v1243, 0.2
      %v1500 = vmul.f32 %v1244, 0.2
      %v1501 = vmul.f32 %v1245, 0.2
      %v1502 = vmul.f32 %v1246, 0.2
      %v1503 = vmul.f32 %v1247, 0.2
      %v1504 = vmul.f32 %v1248, 0.2
      %v1505 = vmul.f32 %v1249, 0.2
      %v1506 = vmul.f32 %v1250, 0.2
      %v1507 = vmul.f32 %v1251, 0.2
      %v1508 = vmul.f32 %v1252, 0.2
      %v1509 = vmul.f32 %v1253, 0.2
      %v1510 = vmul.f32 %v1254, 0.2
      %v1511 = vmul.f32 %v1255, 0.2
      %v1512 = vmul.f32 %v1256, 0.2
      %v1513 = vmul.f32 %v1257, 0.2
      %v1514 = vmul.f32 %v1258, 0.2
      %v1515 = vmul.f32 %v1259, 0.2
      %v1516 = vmul.f32 %v1260, 0.2
      %v1517 = vmul.f32 %v1261, 0.2
      %v1518 = vmul.f32 %v1262, 0.2
      %v1519 = vmul.f32 %v1263, 0.2
      %v1520 = vmul.f32 %v1264, 0.2
      %v1521 = vmul.f32 %v1265, 0.2
      %v1522 = vmul.f32 %v1266, 0.2
      %v1523 = vmul.f32 %v1267, 0.2
      %v1524 = vmul.f32 %v1268, 0.2
      %v1525 = vmul.f32 %v1269, 0.2
      %v1526 = vmul.f32 %v1270, 0.2
      %v1527 = vmul.f32 %v1271, 0.2
      %v1528 = vmul.f32 %v1272, 0.2
      %v1529 = vmul.f32 %v1273, 0.2
      %v1530 = vmul.f32 %v1274, 0.2
      %v1531 = vmul.f32 %v1275, 0.2
      %v1532 = vmul.f32 %v1276, 0.2
      %v1533 = vmul.f32 %v1277, 0.2
      %v1534 = vmul.f32 %v1278, 0.2
      %v1535 = vmul.f32 %v1279, 0.2
      %v1536 = vmul.f32 %v1280, 0.2
      %v1537 = vmul.f32 %v1281, 0.2
      %v1538 = vmul.f32 %v1282, 0.2
      %v1539 = vmul.f32 %v1283, 0.2
      %v1540 = vmul.f32 %v1284, 0.2
      %v1541 = vmul.f32 %v1285, 0.2
      %v1542 = vmul.f32 %v1286, 0.2
      %v1543 = vmul.f32 %v1287, 0.2
      %v1544 = vmul.f32 %v1288, 0.2
      %v1545 = vmul.f32 %v1289, 0.2
      %v1546 = vmul.f32 %v1290, 0.2
      %v1547 = vmul.f32 %v1291, 0.2
      %v1548 = vmul.f32 %v1292, 0.2
      %v1549 = vmul.f32 %v1293, 0.2
      %v1550 = vmul.f32 %v1294, 0.2
      %v1551 = vmul.f32 %v1295, 0.2
      %v1552 = vmul.f32 %v1296, 0.2
      %v1553 = vmul.f32 %v1297, 0.2
      %v1554 = vmul.f32 %v1298, 0.2
      %v1555 = vmul.f32 %v1299, 0.2
      %v1556 = vmul.f32 %v1300, 0.2
      %v1557 = vmul.f32 %v1301, 0.2
      %v1558 = vmul.f32 %v1302, 0.2
      %v1559 = vmul.f32 %v1303, 0.2
      %v1560 = vmul.f32 %v1304, 0.2
      %v1561 = vmul.f32 %v1305, 0.2
      %v1562 = vmul.f32 %v1306, 0.2
      %v1563 = vmul.f32 %v1307, 0.2
      %v1564 = vmul.f32 %v1308, 0.2
      %v1565 = vmul.f32 %v1309, 0.2
      %v1566 = vmul.f32 %v1310, 0.2
      %v1567 = vmul.f32 %v1311, 0.2
      %v1568 = vmul.f32 %v1312, 0.2
      %v1569 = vmul.f32 %v1313, 0.2
      %v1570 = vmul.f32 %v1314, 0.2
      %v1571 = vmul.f32 %v1315, 0.2
      %v1572 = vmul.f32 %v1316, 0.2
      %v1573 = vmul.f32 %v1317, 0.2
      %v1574 = vmul.f32 %v1318, 0.2
      %v1575 = vmul.f32 %v1319, 0.2
      %v1576 = vmul.f32 %v1320, 0.2
      %v1577 = vmul.f32 %v1321, 0.2
      %v1578 = vmul.f32 %v1322, 0.2
      %v1579 = vmul.f32 %v1323, 0.2
      %v1580 = vmul.f32 %v1324, 0.2
      %v1581 = vmul.f32 %v1325, 0.2
      %v1582 = vmul.f32 %v1326, 0.2
      %v1583 = vmul.f32 %v1327, 0.2
      %v1584 = vmul.f32 %v1328, 0.2
      %v1585 = vmul.f32 %v1329, 0.2
      %v1586 = vmul.f32 %v1330, 0.2
      %v1587 = vmul.f32 %v1331, 0.2
      %v1588 = vmul.f32 %v1332, 0.2
      %v1589 = vmul.f32 %v1333, 0.2
      %v1590 = vmul.f32 %v1334, 0.2
      %v1591 = vmul.f32 %v1335, 0.2
      %v1592 = vmul.f32 %v1336, 0.2
      %v1593 = vmul.f32 %v1337, 0.2
      %v1594 = vmul.f32 %v1338, 0.2
      %v1595 = vmul.f32 %v1339, 0.2
      %v1596 = vmul.f32 %v1340, 0.2
      %v1597 = vmul.f32 %v1341, 0.2
      %v1598 = vmul.f32 %v1342, 0.2
      %v1599 = vmul.f32 %v1343, 0.2
      %v1600 = vmul.f32 %v1344, 0.2
      %v1601 = vmul.f32 %v1345, 0.2
      %v1602 = vmul.f32 %v1346, 0.2
      %v1603 = vmul.f32 %v1347, 0.2
      %v1604 = vmul.f32 %v1348, 0.2
      %v1605 = vmul.f32 %v1349, 0.2
      %v1606 = vmul.f32 %v1350, 0.2
      %v1607 = vmul.f32 %v1351, 0.2
      %v1608 = vmul.f32 %v1352, 0.2
      %v1609 = vmul.f32 %v1353, 0.2
      %v1610 = vmul.f32 %v1354, 0.2
      %v1611 = vmul.f32 %v1355, 0.2
      %v1612 = vmul.f32 %v1356, 0.2
      %v1613 = vmul.f32 %v1357, 0.2
      %v1614 = vmul.f32 %v1358, 0.2
      %v1615 = vmul.f32 %v1359, 0.2
      %v1616 = vmul.f32 %v1360, 0.2
      %v1617 = vmul.f32 %v1361, 0.2
      %v1618 = vmul.f32 %v1362, 0.2
      %v1619 = vmul.f32 %v1363, 0.2
      %v1620 = vmul.f32 %v1364, 0.2
      %v1621 = vmul.f32 %v1365, 0.2
      %v1622 = vmul.f32 %v1366, 0.2
      %v1623 = vmul.f32 %v1367, 0.2
      %v1624 = vsel %vm1368, %v1240, %v1496
      %v1625 = vsel %vm1369, %v1241, %v1497
      %v1626 = vsel %vm1370, %v1242, %v1498
      %v1627 = vsel %vm1371, %v1243, %v1499
      %v1628 = vsel %vm1372, %v1244, %v1500
      %v1629 = vsel %vm1373, %v1245, %v1501
      %v1630 = vsel %vm1374, %v1246, %v1502
      %v1631 = vsel %vm1375, %v1247, %v1503
      %v1632 = vsel %vm1376, %v1248, %v1504
      %v1633 = vsel %vm1377, %v1249, %v1505
      %v1634 = vsel %vm1378, %v1250, %v1506
      %v1635 = vsel %vm1379, %v1251, %v1507
      %v1636 = vsel %vm1380, %v1252, %v1508
      %v1637 = vsel %vm1381, %v1253, %v1509
      %v1638 = vsel %vm1382, %v1254, %v1510
      %v1639 = vsel %vm1383, %v1255, %v1511
      %v1640 = vsel %vm1384, %v1256, %v1512
      %v1641 = vsel %vm1385, %v1257, %v1513
      %v1642 = vsel %vm1386, %v1258, %v1514
      %v1643 = vsel %vm1387, %v1259, %v1515
      %v1644 = vsel %vm1388, %v1260, %v1516
      %v1645 = vsel %vm1389, %v1261, %v1517
      %v1646 = vsel %vm1390, %v1262, %v1518
      %v1647 = vsel %vm1391, %v1263, %v1519
      %v1648 = vsel %vm1392, %v1264, %v1520
      %v1649 = vsel %vm1393, %v1265, %v1521
      %v1650 = vsel %vm1394, %v1266, %v1522
      %v1651 = vsel %vm1395, %v1267, %v1523
      %v1652 = vsel %vm1396, %v1268, %v1524
      %v1653 = vsel %vm1397, %v1269, %v1525
      %v1654 = vsel %vm1398, %v1270, %v1526
      %v1655 = vsel %vm1399, %v1271, %v1527
      %v1656 = vsel %vm1400, %v1272, %v1528
      %v1657 = vsel %vm1401, %v1273, %v1529
      %v1658 = vsel %vm1402, %v1274, %v1530
      %v1659 = vsel %vm1403, %v1275, %v1531
      %v1660 = vsel %vm1404, %v1276, %v1532
      %v1661 = vsel %vm1405, %v1277, %v1533
      %v1662 = vsel %vm1406, %v1278, %v1534
      %v1663 = vsel %vm1407, %v1279, %v1535
      %v1664 = vsel %vm1408, %v1280, %v1536
      %v1665 = vsel %vm1409, %v1281, %v1537
      %v1666 = vsel %vm1410, %v1282, %v1538
      %v1667 = vsel %vm1411, %v1283, %v1539
      %v1668 = vsel %vm1412, %v1284, %v1540
      %v1669 = vsel %vm1413, %v1285, %v1541
      %v1670 = vsel %vm1414, %v1286, %v1542
      %v1671 = vsel %vm1415, %v1287, %v1543
      %v1672 = vsel %vm1416, %v1288, %v1544
      %v1673 = vsel %vm1417, %v1289, %v1545
      %v1674 = vsel %vm1418, %v1290, %v1546
      %v1675 = vsel %vm1419, %v1291, %v1547
      %v1676 = vsel %vm1420, %v1292, %v1548
      %v1677 = vsel %vm1421, %v1293, %v1549
      %v1678 = vsel %vm1422, %v1294, %v1550
      %v1679 = vsel %vm1423, %v1295, %v1551
      %v1680 = vsel %vm1424, %v1296, %v1552
      %v1681 = vsel %vm1425, %v1297, %v1553
      %v1682 = vsel %vm1426, %v1298, %v1554
      %v1683 = vsel %vm1427, %v1299, %v1555
      %v1684 = vsel %vm1428, %v1300, %v1556
      %v1685 = vsel %vm1429, %v1301, %v1557
      %v1686 = vsel %vm1430, %v1302, %v1558
      %v1687 = vsel %vm1431, %v1303, %v1559
      %v1688 = vsel %vm1432, %v1304, %v1560
      %v1689 = vsel %vm1433, %v1305, %v1561
      %v1690 = vsel %vm1434, %v1306, %v1562
      %v1691 = vsel %vm1435, %v1307, %v1563
      %v1692 = vsel %vm1436, %v1308, %v1564
      %v1693 = vsel %vm1437, %v1309, %v1565
      %v1694 = vsel %vm1438, %v1310, %v1566
      %v1695 = vsel %vm1439, %v1311, %v1567
      %v1696 = vsel %vm1440, %v1312, %v1568
      %v1697 = vsel %vm1441, %v1313, %v1569
      %v1698 = vsel %vm1442, %v1314, %v1570
      %v1699 = vsel %vm1443, %v1315, %v1571
      %v1700 = vsel %vm1444, %v1316, %v1572
      %v1701 = vsel %vm1445, %v1317, %v1573
      %v1702 = vsel %vm1446, %v1318, %v1574
      %v1703 = vsel %vm1447, %v1319, %v1575
      %v1704 = vsel %vm1448, %v1320, %v1576
      %v1705 = vsel %vm1449, %v1321, %v1577
      %v1706 = vsel %vm1450, %v1322, %v1578
      %v1707 = vsel %vm1451, %v1323, %v1579
      %v1708 = vsel %vm1452, %v1324, %v1580
      %v1709 = vsel %vm1453, %v1325, %v1581
      %v1710 = vsel %vm1454, %v1326, %v1582
      %v1711 = vsel %vm1455, %v1327, %v1583
      %v1712 = vsel %vm1456, %v1328, %v1584
      %v1713 = vsel %vm1457, %v1329, %v1585
      %v1714 = vsel %vm1458, %v1330, %v1586
      %v1715 = vsel %vm1459, %v1331, %v1587
      %v1716 = vsel %vm1460, %v1332, %v1588
      %v1717 = vsel %vm1461, %v1333, %v1589
      %v1718 = vsel %vm1462, %v1334, %v1590
      %v1719 = vsel %vm1463, %v1335, %v1591
      %v1720 = vsel %vm1464, %v1336, %v1592
      %v1721 = vsel %vm1465, %v1337, %v1593
      %v1722 = vsel %vm1466, %v1338, %v1594
      %v1723 = vsel %vm1467, %v1339, %v1595
      %v1724 = vsel %vm1468, %v1340, %v1596
      %v1725 = vsel %vm1469, %v1341, %v1597
      %v1726 = vsel %vm1470, %v1342, %v1598
      %v1727 = vsel %vm1471, %v1343, %v1599
      %v1728 = vsel %vm1472, %v1344, %v1600
      %v1729 = vsel %vm1473, %v1345, %v1601
      %v1730 = vsel %vm1474, %v1346, %v1602
      %v1731 = vsel %vm1475, %v1347, %v1603
      %v1732 = vsel %vm1476, %v1348, %v1604
      %v1733 = vsel %vm1477, %v1349, %v1605
      %v1734 = vsel %vm1478, %v1350, %v1606
      %v1735 = vsel %vm1479, %v1351, %v1607
      %v1736 = vsel %vm1480, %v1352, %v1608
      %v1737 = vsel %vm1481, %v1353, %v1609
      %v1738 = vsel %vm1482, %v1354, %v1610
      %v1739 = vsel %vm1483, %v1355, %v1611
      %v1740 = vsel %vm1484, %v1356, %v1612
      %v1741 = vsel %vm1485, %v1357, %v1613
      %v1742 = vsel %vm1486, %v1358, %v1614
      %v1743 = vsel %vm1487, %v1359, %v1615
      %v1744 = vsel %vm1488, %v1360, %v1616
      %v1745 = vsel %vm1489, %v1361, %v1617
      %v1746 = vsel %vm1490, %v1362, %v1618
      %v1747 = vsel %vm1491, %v1363, %v1619
      %v1748 = vsel %vm1492, %v1364, %v1620
      %v1749 = vsel %vm1493, %v1365, %v1621
      %v1750 = vsel %vm1494, %v1366, %v1622
      %v1751 = vsel %vm1495, %v1367, %v1623
      %v1752 = vlaneseq
      %v1753 = vshrl.u32 %v1752, 7
      %v1754 = vsub.s32 3, %v1753
      %v1755 = vrot.slane %v247, %v1754
      %1757 = vrot.lane.b32.xlu0 %v1755, 16
      %v1758 = vpop.permute.xlu0 %1757
      %v1760 = vmul.f32 %v1624, %v1758
      %v1761 = vmul.f32 %v1625, %v1758
      %v1762 = vmul.f32 %v1626, %v1758
      %v1763 = vmul.f32 %v1627, %v1758
      %v1764 = vmul.f32 %v1628, %v1758
      %v1765 = vmul.f32 %v1629, %v1758
      %v1766 = vmul.f32 %v1630, %v1758
      %v1767 = vmul.f32 %v1631, %v1758
      %v1768 = vmul.f32 %v1632, %v1758
      %v1769 = vmul.f32 %v1633, %v1758
      %v1770 = vmul.f32 %v1634, %v1758
      %v1771 = vmul.f32 %v1635, %v1758
      %v1772 = vmul.f32 %v1636, %v1758
      %v1773 = vmul.f32 %v1637, %v1758
      %v1774 = vmul.f32 %v1638, %v1758
      %v1775 = vmul.f32 %v1639, %v1758
      %v1776 = vmul.f32 %v1640, %v1758
      %v1777 = vmul.f32 %v1641, %v1758
      %v1778 = vmul.f32 %v1642, %v1758
      %v1779 = vmul.f32 %v1643, %v1758
      %v1780 = vmul.f32 %v1644, %v1758
      %v1781 = vmul.f32 %v1645, %v1758
      %v1782 = vmul.f32 %v1646, %v1758
      %v1783 = vmul.f32 %v1647, %v1758
      %v1784 = vmul.f32 %v1648, %v1758
      %v1785 = vmul.f32 %v1649, %v1758
      %v1786 = vmul.f32 %v1650, %v1758
      %v1787 = vmul.f32 %v1651, %v1758
      %v1788 = vmul.f32 %v1652, %v1758
      %v1789 = vmul.f32 %v1653, %v1758
      %v1790 = vmul.f32 %v1654, %v1758
      %v1791 = vmul.f32 %v1655, %v1758
      %v1792 = vmul.f32 %v1656, %v1758
      %v1793 = vmul.f32 %v1657, %v1758
      %v1794 = vmul.f32 %v1658, %v1758
      %v1795 = vmul.f32 %v1659, %v1758
      %v1796 = vmul.f32 %v1660, %v1758
      %v1797 = vmul.f32 %v1661, %v1758
      %v1798 = vmul.f32 %v1662, %v1758
      %v1799 = vmul.f32 %v1663, %v1758
      %v1800 = vmul.f32 %v1664, %v1758
      %v1801 = vmul.f32 %v1665, %v1758
      %v1802 = vmul.f32 %v1666, %v1758
      %v1803 = vmul.f32 %v1667, %v1758
      %v1804 = vmul.f32 %v1668, %v1758
      %v1805 = vmul.f32 %v1669, %v1758
      %v1806 = vmul.f32 %v1670, %v1758
      %v1807 = vmul.f32 %v1671, %v1758
      %v1808 = vmul.f32 %v1672, %v1758
      %v1809 = vmul.f32 %v1673, %v1758
      %v1810 = vmul.f32 %v1674, %v1758
      %v1811 = vmul.f32 %v1675, %v1758
      %v1812 = vmul.f32 %v1676, %v1758
      %v1813 = vmul.f32 %v1677, %v1758
      %v1814 = vmul.f32 %v1678, %v1758
      %v1815 = vmul.f32 %v1679, %v1758
      %v1816 = vmul.f32 %v1680, %v1758
      %v1817 = vmul.f32 %v1681, %v1758
      %v1818 = vmul.f32 %v1682, %v1758
      %v1819 = vmul.f32 %v1683, %v1758
      %v1820 = vmul.f32 %v1684, %v1758
      %v1821 = vmul.f32 %v1685, %v1758
      %v1822 = vmul.f32 %v1686, %v1758
      %v1823 = vmul.f32 %v1687, %v1758
      %v1824 = vmul.f32 %v1688, %v1758
      %v1825 = vmul.f32 %v1689, %v1758
      %v1826 = vmul.f32 %v1690, %v1758
      %v1827 = vmul.f32 %v1691, %v1758
      %v1828 = vmul.f32 %v1692, %v1758
      %v1829 = vmul.f32 %v1693, %v1758
      %v1830 = vmul.f32 %v1694, %v1758
      %v1831 = vmul.f32 %v1695, %v1758
      %v1832 = vmul.f32 %v1696, %v1758
      %v1833 = vmul.f32 %v1697, %v1758
      %v1834 = vmul.f32 %v1698, %v1758
      %v1835 = vmul.f32 %v1699, %v1758
      %v1836 = vmul.f32 %v1700, %v1758
      %v1837 = vmul.f32 %v1701, %v1758
      %v1838 = vmul.f32 %v1702, %v1758
      %v1839 = vmul.f32 %v1703, %v1758
      %v1840 = vmul.f32 %v1704, %v1758
      %v1841 = vmul.f32 %v1705, %v1758
      %v1842 = vmul.f32 %v1706, %v1758
      %v1843 = vmul.f32 %v1707, %v1758
      %v1844 = vmul.f32 %v1708, %v1758
      %v1845 = vmul.f32 %v1709, %v1758
      %v1846 = vmul.f32 %v1710, %v1758
      %v1847 = vmul.f32 %v1711, %v1758
      %v1848 = vmul.f32 %v1712, %v1758
      %v1849 = vmul.f32 %v1713, %v1758
      %v1850 = vmul.f32 %v1714, %v1758
      %v1851 = vmul.f32 %v1715, %v1758
      %v1852 = vmul.f32 %v1716, %v1758
      %v1853 = vmul.f32 %v1717, %v1758
      %v1854 = vmul.f32 %v1718, %v1758
      %v1855 = vmul.f32 %v1719, %v1758
      %v1856 = vmul.f32 %v1720, %v1758
      %v1857 = vmul.f32 %v1721, %v1758
      %v1858 = vmul.f32 %v1722, %v1758
      %v1859 = vmul.f32 %v1723, %v1758
      %v1860 = vmul.f32 %v1724, %v1758
      %v1861 = vmul.f32 %v1725, %v1758
      %v1862 = vmul.f32 %v1726, %v1758
      %v1863 = vmul.f32 %v1727, %v1758
      %v1864 = vmul.f32 %v1728, %v1758
      %v1865 = vmul.f32 %v1729, %v1758
      %v1866 = vmul.f32 %v1730, %v1758
      %v1867 = vmul.f32 %v1731, %v1758
      %v1868 = vmul.f32 %v1732, %v1758
      %v1869 = vmul.f32 %v1733, %v1758
      %v1870 = vmul.f32 %v1734, %v1758
      %v1871 = vmul.f32 %v1735, %v1758
      %v1872 = vmul.f32 %v1736, %v1758
      %v1873 = vmul.f32 %v1737, %v1758
      %v1874 = vmul.f32 %v1738, %v1758
      %v1875 = vmul.f32 %v1739, %v1758
      %v1876 = vmul.f32 %v1740, %v1758
      %v1877 = vmul.f32 %v1741, %v1758
      %v1878 = vmul.f32 %v1742, %v1758
      %v1879 = vmul.f32 %v1743, %v1758
      %v1880 = vmul.f32 %v1744, %v1758
      %v1881 = vmul.f32 %v1745, %v1758
      %v1882 = vmul.f32 %v1746, %v1758
      %v1883 = vmul.f32 %v1747, %v1758
      %v1884 = vmul.f32 %v1748, %v1758
      %v1885 = vmul.f32 %v1749, %v1758
      %v1886 = vmul.f32 %v1750, %v1758
      %v1887 = vmul.f32 %v1751, %v1758
      %2016 = vrot.lane.b32.xlu0 %v1760, 112
      %v2017 = vpop.permute.xlu0 %2016
      %2018 = vrot.lane.b32.xlu0 %v1761, 112
      %v2019 = vpop.permute.xlu0 %2018
      %2020 = vrot.lane.b32.xlu0 %v1762, 112
      %v2021 = vpop.permute.xlu0 %2020
      %2022 = vrot.lane.b32.xlu0 %v1763, 112
      %v2023 = vpop.permute.xlu0 %2022
      %2024 = vrot.lane.b32.xlu0 %v1764, 112
      %v2025 = vpop.permute.xlu0 %2024
      %2026 = vrot.lane.b32.xlu0 %v1765, 112
      %v2027 = vpop.permute.xlu0 %2026
      %2028 = vrot.lane.b32.xlu0 %v1766, 112
      %v2029 = vpop.permute.xlu0 %2028
      %2030 = vrot.lane.b32.xlu0 %v1767, 112
      %v2031 = vpop.permute.xlu0 %2030
      %2032 = vrot.lane.b32.xlu0 %v1768, 112
      %v2033 = vpop.permute.xlu0 %2032
      %2034 = vrot.lane.b32.xlu0 %v1769, 112
      %v2035 = vpop.permute.xlu0 %2034
      %2036 = vrot.lane.b32.xlu0 %v1770, 112
      %v2037 = vpop.permute.xlu0 %2036
      %2038 = vrot.lane.b32.xlu0 %v1771, 112
      %v2039 = vpop.permute.xlu0 %2038
      %2040 = vrot.lane.b32.xlu0 %v1772, 112
      %v2041 = vpop.permute.xlu0 %2040
      %2042 = vrot.lane.b32.xlu0 %v1773, 112
      %v2043 = vpop.permute.xlu0 %2042
      %2044 = vrot.lane.b32.xlu0 %v1774, 112
      %v2045 = vpop.permute.xlu0 %2044
      %2046 = vrot.lane.b32.xlu0 %v1775, 112
      %v2047 = vpop.permute.xlu0 %2046
      %2048 = vrot.lane.b32.xlu0 %v1776, 112
      %v2049 = vpop.permute.xlu0 %2048
      %2050 = vrot.lane.b32.xlu0 %v1777, 112
      %v2051 = vpop.permute.xlu0 %2050
      %2052 = vrot.lane.b32.xlu0 %v1778, 112
      %v2053 = vpop.permute.xlu0 %2052
      %2054 = vrot.lane.b32.xlu0 %v1779, 112
      %v2055 = vpop.permute.xlu0 %2054
      %2056 = vrot.lane.b32.xlu0 %v1780, 112
      %v2057 = vpop.permute.xlu0 %2056
      %2058 = vrot.lane.b32.xlu0 %v1781, 112
      %v2059 = vpop.permute.xlu0 %2058
      %2060 = vrot.lane.b32.xlu0 %v1782, 112
      %v2061 = vpop.permute.xlu0 %2060
      %2062 = vrot.lane.b32.xlu0 %v1783, 112
      %v2063 = vpop.permute.xlu0 %2062
      %2064 = vrot.lane.b32.xlu0 %v1784, 112
      %v2065 = vpop.permute.xlu0 %2064
      %2066 = vrot.lane.b32.xlu0 %v1785, 112
      %v2067 = vpop.permute.xlu0 %2066
      %2068 = vrot.lane.b32.xlu0 %v1786, 112
      %v2069 = vpop.permute.xlu0 %2068
      %2070 = vrot.lane.b32.xlu0 %v1787, 112
      %v2071 = vpop.permute.xlu0 %2070
      %2072 = vrot.lane.b32.xlu0 %v1788, 112
      %v2073 = vpop.permute.xlu0 %2072
      %2074 = vrot.lane.b32.xlu0 %v1789, 112
      %v2075 = vpop.permute.xlu0 %2074
      %2076 = vrot.lane.b32.xlu0 %v1790, 112
      %v2077 = vpop.permute.xlu0 %2076
      %2078 = vrot.lane.b32.xlu0 %v1791, 112
      %v2079 = vpop.permute.xlu0 %2078
      %2080 = vrot.lane.b32.xlu0 %v1792, 112
      %v2081 = vpop.permute.xlu0 %2080
      %2082 = vrot.lane.b32.xlu0 %v1793, 112
      %v2083 = vpop.permute.xlu0 %2082
      %2084 = vrot.lane.b32.xlu0 %v1794, 112
      %v2085 = vpop.permute.xlu0 %2084
      %2086 = vrot.lane.b32.xlu0 %v1795, 112
      %v2087 = vpop.permute.xlu0 %2086
      %2088 = vrot.lane.b32.xlu0 %v1796, 112
      %v2089 = vpop.permute.xlu0 %2088
      %2090 = vrot.lane.b32.xlu0 %v1797, 112
      %v2091 = vpop.permute.xlu0 %2090
      %2092 = vrot.lane.b32.xlu0 %v1798, 112
      %v2093 = vpop.permute.xlu0 %2092
      %2094 = vrot.lane.b32.xlu0 %v1799, 112
      %v2095 = vpop.permute.xlu0 %2094
      %2096 = vrot.lane.b32.xlu0 %v1800, 112
      %v2097 = vpop.permute.xlu0 %2096
      %2098 = vrot.lane.b32.xlu0 %v1801, 112
      %v2099 = vpop.permute.xlu0 %2098
      %2100 = vrot.lane.b32.xlu0 %v1802, 112
      %v2101 = vpop.permute.xlu0 %2100
      %2102 = vrot.lane.b32.xlu0 %v1803, 112
      %v2103 = vpop.permute.xlu0 %2102
      %2104 = vrot.lane.b32.xlu0 %v1804, 112
      %v2105 = vpop.permute.xlu0 %2104
      %2106 = vrot.lane.b32.xlu0 %v1805, 112
      %v2107 = vpop.permute.xlu0 %2106
      %2108 = vrot.lane.b32.xlu0 %v1806, 112
      %v2109 = vpop.permute.xlu0 %2108
      %2110 = vrot.lane.b32.xlu0 %v1807, 112
      %v2111 = vpop.permute.xlu0 %2110
      %2112 = vrot.lane.b32.xlu0 %v1808, 112
      %v2113 = vpop.permute.xlu0 %2112
      %2114 = vrot.lane.b32.xlu0 %v1809, 112
      %v2115 = vpop.permute.xlu0 %2114
      %2116 = vrot.lane.b32.xlu0 %v1810, 112
      %v2117 = vpop.permute.xlu0 %2116
      %2118 = vrot.lane.b32.xlu0 %v1811, 112
      %v2119 = vpop.permute.xlu0 %2118
      %2120 = vrot.lane.b32.xlu0 %v1812, 112
      %v2121 = vpop.permute.xlu0 %2120
      %2122 = vrot.lane.b32.xlu0 %v1813, 112
      %v2123 = vpop.permute.xlu0 %2122
      %2124 = vrot.lane.b32.xlu0 %v1814, 112
      %v2125 = vpop.permute.xlu0 %2124
      %2126 = vrot.lane.b32.xlu0 %v1815, 112
      %v2127 = vpop.permute.xlu0 %2126
      %2128 = vrot.lane.b32.xlu0 %v1816, 112
      %v2129 = vpop.permute.xlu0 %2128
      %2130 = vrot.lane.b32.xlu0 %v1817, 112
      %v2131 = vpop.permute.xlu0 %2130
      %2132 = vrot.lane.b32.xlu0 %v1818, 112
      %v2133 = vpop.permute.xlu0 %2132
      %2134 = vrot.lane.b32.xlu0 %v1819, 112
      %v2135 = vpop.permute.xlu0 %2134
      %2136 = vrot.lane.b32.xlu0 %v1820, 112
      %v2137 = vpop.permute.xlu0 %2136
      %2138 = vrot.lane.b32.xlu0 %v1821, 112
      %v2139 = vpop.permute.xlu0 %2138
      %2140 = vrot.lane.b32.xlu0 %v1822, 112
      %v2141 = vpop.permute.xlu0 %2140
      %2142 = vrot.lane.b32.xlu0 %v1823, 112
      %v2143 = vpop.permute.xlu0 %2142
      %2144 = vrot.lane.b32.xlu0 %v1824, 112
      %v2145 = vpop.permute.xlu0 %2144
      %2146 = vrot.lane.b32.xlu0 %v1825, 112
      %v2147 = vpop.permute.xlu0 %2146
      %2148 = vrot.lane.b32.xlu0 %v1826, 112
      %v2149 = vpop.permute.xlu0 %2148
      %2150 = vrot.lane.b32.xlu0 %v1827, 112
      %v2151 = vpop.permute.xlu0 %2150
      %2152 = vrot.lane.b32.xlu0 %v1828, 112
      %v2153 = vpop.permute.xlu0 %2152
      %2154 = vrot.lane.b32.xlu0 %v1829, 112
      %v2155 = vpop.permute.xlu0 %2154
      %2156 = vrot.lane.b32.xlu0 %v1830, 112
      %v2157 = vpop.permute.xlu0 %2156
      %2158 = vrot.lane.b32.xlu0 %v1831, 112
      %v2159 = vpop.permute.xlu0 %2158
      %2160 = vrot.lane.b32.xlu0 %v1832, 112
      %v2161 = vpop.permute.xlu0 %2160
      %2162 = vrot.lane.b32.xlu0 %v1833, 112
      %v2163 = vpop.permute.xlu0 %2162
      %2164 = vrot.lane.b32.xlu0 %v1834, 112
      %v2165 = vpop.permute.xlu0 %2164
      %2166 = vrot.lane.b32.xlu0 %v1835, 112
      %v2167 = vpop.permute.xlu0 %2166
      %2168 = vrot.lane.b32.xlu0 %v1836, 112
      %v2169 = vpop.permute.xlu0 %2168
      %2170 = vrot.lane.b32.xlu0 %v1837, 112
      %v2171 = vpop.permute.xlu0 %2170
      %2172 = vrot.lane.b32.xlu0 %v1838, 112
      %v2173 = vpop.permute.xlu0 %2172
      %2174 = vrot.lane.b32.xlu0 %v1839, 112
      %v2175 = vpop.permute.xlu0 %2174
      %2176 = vrot.lane.b32.xlu0 %v1840, 112
      %v2177 = vpop.permute.xlu0 %2176
      %2178 = vrot.lane.b32.xlu0 %v1841, 112
      %v2179 = vpop.permute.xlu0 %2178
      %2180 = vrot.lane.b32.xlu0 %v1842, 112
      %v2181 = vpop.permute.xlu0 %2180
      %2182 = vrot.lane.b32.xlu0 %v1843, 112
      %v2183 = vpop.permute.xlu0 %2182
      %2184 = vrot.lane.b32.xlu0 %v1844, 112
      %v2185 = vpop.permute.xlu0 %2184
      %2186 = vrot.lane.b32.xlu0 %v1845, 112
      %v2187 = vpop.permute.xlu0 %2186
      %2188 = vrot.lane.b32.xlu0 %v1846, 112
      %v2189 = vpop.permute.xlu0 %2188
      %2190 = vrot.lane.b32.xlu0 %v1847, 112
      %v2191 = vpop.permute.xlu0 %2190
      %2192 = vrot.lane.b32.xlu0 %v1848, 112
      %v2193 = vpop.permute.xlu0 %2192
      %2194 = vrot.lane.b32.xlu0 %v1849, 112
      %v2195 = vpop.permute.xlu0 %2194
      %2196 = vrot.lane.b32.xlu0 %v1850, 112
      %v2197 = vpop.permute.xlu0 %2196
      %2198 = vrot.lane.b32.xlu0 %v1851, 112
      %v2199 = vpop.permute.xlu0 %2198
      %2200 = vrot.lane.b32.xlu0 %v1852, 112
      %v2201 = vpop.permute.xlu0 %2200
      %2202 = vrot.lane.b32.xlu0 %v1853, 112
      %v2203 = vpop.permute.xlu0 %2202
      %2204 = vrot.lane.b32.xlu0 %v1854, 112
      %v2205 = vpop.permute.xlu0 %2204
      %2206 = vrot.lane.b32.xlu0 %v1855, 112
      %v2207 = vpop.permute.xlu0 %2206
      %2208 = vrot.lane.b32.xlu0 %v1856, 112
      %v2209 = vpop.permute.xlu0 %2208
      %2210 = vrot.lane.b32.xlu0 %v1857, 112
      %v2211 = vpop.permute.xlu0 %2210
      %2212 = vrot.lane.b32.xlu0 %v1858, 112
      %v2213 = vpop.permute.xlu0 %2212
      %2214 = vrot.lane.b32.xlu0 %v1859, 112
      %v2215 = vpop.permute.xlu0 %2214
      %2216 = vrot.lane.b32.xlu0 %v1860, 112
      %v2217 = vpop.permute.xlu0 %2216
      %2218 = vrot.lane.b32.xlu0 %v1861, 112
      %v2219 = vpop.permute.xlu0 %2218
      %2220 = vrot.lane.b32.xlu0 %v1862, 112
      %v2221 = vpop.permute.xlu0 %2220
      %2222 = vrot.lane.b32.xlu0 %v1863, 112
      %v2223 = vpop.permute.xlu0 %2222
      %2224 = vrot.lane.b32.xlu0 %v1864, 112
      %v2225 = vpop.permute.xlu0 %2224
      %2226 = vrot.lane.b32.xlu0 %v1865, 112
      %v2227 = vpop.permute.xlu0 %2226
      %2228 = vrot.lane.b32.xlu0 %v1866, 112
      %v2229 = vpop.permute.xlu0 %2228
      %2230 = vrot.lane.b32.xlu0 %v1867, 112
      %v2231 = vpop.permute.xlu0 %2230
      %2232 = vrot.lane.b32.xlu0 %v1868, 112
      %v2233 = vpop.permute.xlu0 %2232
      %2234 = vrot.lane.b32.xlu0 %v1869, 112
      %v2235 = vpop.permute.xlu0 %2234
      %2236 = vrot.lane.b32.xlu0 %v1870, 112
      %v2237 = vpop.permute.xlu0 %2236
      %2238 = vrot.lane.b32.xlu0 %v1871, 112
      %v2239 = vpop.permute.xlu0 %2238
      %2240 = vrot.lane.b32.xlu0 %v1872, 112
      %v2241 = vpop.permute.xlu0 %2240
      %2242 = vrot.lane.b32.xlu0 %v1873, 112
      %v2243 = vpop.permute.xlu0 %2242
      %2244 = vrot.lane.b32.xlu0 %v1874, 112
      %v2245 = vpop.permute.xlu0 %2244
      %2246 = vrot.lane.b32.xlu0 %v1875, 112
      %v2247 = vpop.permute.xlu0 %2246
      %2248 = vrot.lane.b32.xlu0 %v1876, 112
      %v2249 = vpop.permute.xlu0 %2248
      %2250 = vrot.lane.b32.xlu0 %v1877, 112
      %v2251 = vpop.permute.xlu0 %2250
      %2252 = vrot.lane.b32.xlu0 %v1878, 112
      %v2253 = vpop.permute.xlu0 %2252
      %2254 = vrot.lane.b32.xlu0 %v1879, 112
      %v2255 = vpop.permute.xlu0 %2254
      %2256 = vrot.lane.b32.xlu0 %v1880, 112
      %v2257 = vpop.permute.xlu0 %2256
      %2258 = vrot.lane.b32.xlu0 %v1881, 112
      %v2259 = vpop.permute.xlu0 %2258
      %2260 = vrot.lane.b32.xlu0 %v1882, 112
      %v2261 = vpop.permute.xlu0 %2260
      %2262 = vrot.lane.b32.xlu0 %v1883, 112
      %v2263 = vpop.permute.xlu0 %2262
      %2264 = vrot.lane.b32.xlu0 %v1884, 112
      %v2265 = vpop.permute.xlu0 %2264
      %2266 = vrot.lane.b32.xlu0 %v1885, 112
      %v2267 = vpop.permute.xlu0 %2266
      %2268 = vrot.lane.b32.xlu0 %v1886, 112
      %v2269 = vpop.permute.xlu0 %2268
      %2270 = vrot.lane.b32.xlu0 %v1887, 112
      %v2271 = vpop.permute.xlu0 %2270
      %vm2400 = vcmask 64512
      %v2401 = vsel %vm2400, %v2017, 0.0
      %2402 = vadd.xlane.f32.xlu0 %v2401
      %v2403 = vpop.xlane.xlu0 %2402
      %v2404 = vsel %vm2400, %v2019, 0.0
      %2405 = vadd.xlane.f32.xlu0 %v2404
      %v2406 = vpop.xlane.xlu0 %2405
      %v2407 = vsel %vm2400, %v2021, 0.0
      %2408 = vadd.xlane.f32.xlu0 %v2407
      %v2409 = vpop.xlane.xlu0 %2408
      %v2410 = vsel %vm2400, %v2023, 0.0
      %2411 = vadd.xlane.f32.xlu0 %v2410
      %v2412 = vpop.xlane.xlu0 %2411
      %v2413 = vsel %vm2400, %v2025, 0.0
      %2414 = vadd.xlane.f32.xlu0 %v2413
      %v2415 = vpop.xlane.xlu0 %2414
      %v2416 = vsel %vm2400, %v2027, 0.0
      %2417 = vadd.xlane.f32.xlu0 %v2416
      %v2418 = vpop.xlane.xlu0 %2417
      %v2419 = vsel %vm2400, %v2029, 0.0
      %2420 = vadd.xlane.f32.xlu0 %v2419
      %v2421 = vpop.xlane.xlu0 %2420
      %v2422 = vsel %vm2400, %v2031, 0.0
      %2423 = vadd.xlane.f32.xlu0 %v2422
      %v2424 = vpop.xlane.xlu0 %2423
      %v2425 = vsel %vm2400, %v2033, 0.0
      %2426 = vadd.xlane.f32.xlu0 %v2425
      %v2427 = vpop.xlane.xlu0 %2426
      %v2428 = vsel %vm2400, %v2035, 0.0
      %2429 = vadd.xlane.f32.xlu0 %v2428
      %v2430 = vpop.xlane.xlu0 %2429
      %v2431 = vsel %vm2400, %v2037, 0.0
      %2432 = vadd.xlane.f32.xlu0 %v2431
      %v2433 = vpop.xlane.xlu0 %2432
      %v2434 = vsel %vm2400, %v2039, 0.0
      %2435 = vadd.xlane.f32.xlu0 %v2434
      %v2436 = vpop.xlane.xlu0 %2435
      %v2437 = vsel %vm2400, %v2041, 0.0
      %2438 = vadd.xlane.f32.xlu0 %v2437
      %v2439 = vpop.xlane.xlu0 %2438
      %v2440 = vsel %vm2400, %v2043, 0.0
      %2441 = vadd.xlane.f32.xlu0 %v2440
      %v2442 = vpop.xlane.xlu0 %2441
      %v2443 = vsel %vm2400, %v2045, 0.0
      %2444 = vadd.xlane.f32.xlu0 %v2443
      %v2445 = vpop.xlane.xlu0 %2444
      %v2446 = vsel %vm2400, %v2047, 0.0
      %2447 = vadd.xlane.f32.xlu0 %v2446
      %v2448 = vpop.xlane.xlu0 %2447
      %v2449 = vsel %vm2400, %v2049, 0.0
      %2450 = vadd.xlane.f32.xlu0 %v2449
      %v2451 = vpop.xlane.xlu0 %2450
      %v2452 = vsel %vm2400, %v2051, 0.0
      %2453 = vadd.xlane.f32.xlu0 %v2452
      %v2454 = vpop.xlane.xlu0 %2453
      %v2455 = vsel %vm2400, %v2053, 0.0
      %2456 = vadd.xlane.f32.xlu0 %v2455
      %v2457 = vpop.xlane.xlu0 %2456
      %v2458 = vsel %vm2400, %v2055, 0.0
      %2459 = vadd.xlane.f32.xlu0 %v2458
      %v2460 = vpop.xlane.xlu0 %2459
      %v2461 = vsel %vm2400, %v2057, 0.0
      %2462 = vadd.xlane.f32.xlu0 %v2461
      %v2463 = vpop.xlane.xlu0 %2462
      %v2464 = vsel %vm2400, %v2059, 0.0
      %2465 = vadd.xlane.f32.xlu0 %v2464
      %v2466 = vpop.xlane.xlu0 %2465
      %v2467 = vsel %vm2400, %v2061, 0.0
      %2468 = vadd.xlane.f32.xlu0 %v2467
      %v2469 = vpop.xlane.xlu0 %2468
      %v2470 = vsel %vm2400, %v2063, 0.0
      %2471 = vadd.xlane.f32.xlu0 %v2470
      %v2472 = vpop.xlane.xlu0 %2471
      %v2473 = vsel %vm2400, %v2065, 0.0
      %2474 = vadd.xlane.f32.xlu0 %v2473
      %v2475 = vpop.xlane.xlu0 %2474
      %v2476 = vsel %vm2400, %v2067, 0.0
      %2477 = vadd.xlane.f32.xlu0 %v2476
      %v2478 = vpop.xlane.xlu0 %2477
      %v2479 = vsel %vm2400, %v2069, 0.0
      %2480 = vadd.xlane.f32.xlu0 %v2479
      %v2481 = vpop.xlane.xlu0 %2480
      %v2482 = vsel %vm2400, %v2071, 0.0
      %2483 = vadd.xlane.f32.xlu0 %v2482
      %v2484 = vpop.xlane.xlu0 %2483
      %v2485 = vsel %vm2400, %v2073, 0.0
      %2486 = vadd.xlane.f32.xlu0 %v2485
      %v2487 = vpop.xlane.xlu0 %2486
      %v2488 = vsel %vm2400, %v2075, 0.0
      %2489 = vadd.xlane.f32.xlu0 %v2488
      %v2490 = vpop.xlane.xlu0 %2489
      %v2491 = vsel %vm2400, %v2077, 0.0
      %2492 = vadd.xlane.f32.xlu0 %v2491
      %v2493 = vpop.xlane.xlu0 %2492
      %v2494 = vsel %vm2400, %v2079, 0.0
      %2495 = vadd.xlane.f32.xlu0 %v2494
      %v2496 = vpop.xlane.xlu0 %2495
      %v2497 = vsel %vm2400, %v2081, 0.0
      %2498 = vadd.xlane.f32.xlu0 %v2497
      %v2499 = vpop.xlane.xlu0 %2498
      %v2500 = vsel %vm2400, %v2083, 0.0
      %2501 = vadd.xlane.f32.xlu0 %v2500
      %v2502 = vpop.xlane.xlu0 %2501
      %v2503 = vsel %vm2400, %v2085, 0.0
      %2504 = vadd.xlane.f32.xlu0 %v2503
      %v2505 = vpop.xlane.xlu0 %2504
      %v2506 = vsel %vm2400, %v2087, 0.0
      %2507 = vadd.xlane.f32.xlu0 %v2506
      %v2508 = vpop.xlane.xlu0 %2507
      %v2509 = vsel %vm2400, %v2089, 0.0
      %2510 = vadd.xlane.f32.xlu0 %v2509
      %v2511 = vpop.xlane.xlu0 %2510
      %v2512 = vsel %vm2400, %v2091, 0.0
      %2513 = vadd.xlane.f32.xlu0 %v2512
      %v2514 = vpop.xlane.xlu0 %2513
      %v2515 = vsel %vm2400, %v2093, 0.0
      %2516 = vadd.xlane.f32.xlu0 %v2515
      %v2517 = vpop.xlane.xlu0 %2516
      %v2518 = vsel %vm2400, %v2095, 0.0
      %2519 = vadd.xlane.f32.xlu0 %v2518
      %v2520 = vpop.xlane.xlu0 %2519
      %v2521 = vsel %vm2400, %v2097, 0.0
      %2522 = vadd.xlane.f32.xlu0 %v2521
      %v2523 = vpop.xlane.xlu0 %2522
      %v2524 = vsel %vm2400, %v2099, 0.0
      %2525 = vadd.xlane.f32.xlu0 %v2524
      %v2526 = vpop.xlane.xlu0 %2525
      %v2527 = vsel %vm2400, %v2101, 0.0
      %2528 = vadd.xlane.f32.xlu0 %v2527
      %v2529 = vpop.xlane.xlu0 %2528
      %v2530 = vsel %vm2400, %v2103, 0.0
      %2531 = vadd.xlane.f32.xlu0 %v2530
      %v2532 = vpop.xlane.xlu0 %2531
      %v2533 = vsel %vm2400, %v2105, 0.0
      %2534 = vadd.xlane.f32.xlu0 %v2533
      %v2535 = vpop.xlane.xlu0 %2534
      %v2536 = vsel %vm2400, %v2107, 0.0
      %2537 = vadd.xlane.f32.xlu0 %v2536
      %v2538 = vpop.xlane.xlu0 %2537
      %v2539 = vsel %vm2400, %v2109, 0.0
      %2540 = vadd.xlane.f32.xlu0 %v2539
      %v2541 = vpop.xlane.xlu0 %2540
      %v2542 = vsel %vm2400, %v2111, 0.0
      %2543 = vadd.xlane.f32.xlu0 %v2542
      %v2544 = vpop.xlane.xlu0 %2543
      %v2545 = vsel %vm2400, %v2113, 0.0
      %2546 = vadd.xlane.f32.xlu0 %v2545
      %v2547 = vpop.xlane.xlu0 %2546
      %v2548 = vsel %vm2400, %v2115, 0.0
      %2549 = vadd.xlane.f32.xlu0 %v2548
      %v2550 = vpop.xlane.xlu0 %2549
      %v2551 = vsel %vm2400, %v2117, 0.0
      %2552 = vadd.xlane.f32.xlu0 %v2551
      %v2553 = vpop.xlane.xlu0 %2552
      %v2554 = vsel %vm2400, %v2119, 0.0
      %2555 = vadd.xlane.f32.xlu0 %v2554
      %v2556 = vpop.xlane.xlu0 %2555
      %v2557 = vsel %vm2400, %v2121, 0.0
      %2558 = vadd.xlane.f32.xlu0 %v2557
      %v2559 = vpop.xlane.xlu0 %2558
      %v2560 = vsel %vm2400, %v2123, 0.0
      %2561 = vadd.xlane.f32.xlu0 %v2560
      %v2562 = vpop.xlane.xlu0 %2561
      %v2563 = vsel %vm2400, %v2125, 0.0
      %2564 = vadd.xlane.f32.xlu0 %v2563
      %v2565 = vpop.xlane.xlu0 %2564
      %v2566 = vsel %vm2400, %v2127, 0.0
      %2567 = vadd.xlane.f32.xlu0 %v2566
      %v2568 = vpop.xlane.xlu0 %2567
      %v2569 = vsel %vm2400, %v2129, 0.0
      %2570 = vadd.xlane.f32.xlu0 %v2569
      %v2571 = vpop.xlane.xlu0 %2570
      %v2572 = vsel %vm2400, %v2131, 0.0
      %2573 = vadd.xlane.f32.xlu0 %v2572
      %v2574 = vpop.xlane.xlu0 %2573
      %v2575 = vsel %vm2400, %v2133, 0.0
      %2576 = vadd.xlane.f32.xlu0 %v2575
      %v2577 = vpop.xlane.xlu0 %2576
      %v2578 = vsel %vm2400, %v2135, 0.0
      %2579 = vadd.xlane.f32.xlu0 %v2578
      %v2580 = vpop.xlane.xlu0 %2579
      %v2581 = vsel %vm2400, %v2137, 0.0
      %2582 = vadd.xlane.f32.xlu0 %v2581
      %v2583 = vpop.xlane.xlu0 %2582
      %v2584 = vsel %vm2400, %v2139, 0.0
      %2585 = vadd.xlane.f32.xlu0 %v2584
      %v2586 = vpop.xlane.xlu0 %2585
      %v2587 = vsel %vm2400, %v2141, 0.0
      %2588 = vadd.xlane.f32.xlu0 %v2587
      %v2589 = vpop.xlane.xlu0 %2588
      %v2590 = vsel %vm2400, %v2143, 0.0
      %2591 = vadd.xlane.f32.xlu0 %v2590
      %v2592 = vpop.xlane.xlu0 %2591
      %v2593 = vsel %vm2400, %v2145, 0.0
      %2594 = vadd.xlane.f32.xlu0 %v2593
      %v2595 = vpop.xlane.xlu0 %2594
      %v2596 = vsel %vm2400, %v2147, 0.0
      %2597 = vadd.xlane.f32.xlu0 %v2596
      %v2598 = vpop.xlane.xlu0 %2597
      %v2599 = vsel %vm2400, %v2149, 0.0
      %2600 = vadd.xlane.f32.xlu0 %v2599
      %v2601 = vpop.xlane.xlu0 %2600
      %v2602 = vsel %vm2400, %v2151, 0.0
      %2603 = vadd.xlane.f32.xlu0 %v2602
      %v2604 = vpop.xlane.xlu0 %2603
      %v2605 = vsel %vm2400, %v2153, 0.0
      %2606 = vadd.xlane.f32.xlu0 %v2605
      %v2607 = vpop.xlane.xlu0 %2606
      %v2608 = vsel %vm2400, %v2155, 0.0
      %2609 = vadd.xlane.f32.xlu0 %v2608
      %v2610 = vpop.xlane.xlu0 %2609
      %v2611 = vsel %vm2400, %v2157, 0.0
      %2612 = vadd.xlane.f32.xlu0 %v2611
      %v2613 = vpop.xlane.xlu0 %2612
      %v2614 = vsel %vm2400, %v2159, 0.0
      %2615 = vadd.xlane.f32.xlu0 %v2614
      %v2616 = vpop.xlane.xlu0 %2615
      %v2617 = vsel %vm2400, %v2161, 0.0
      %2618 = vadd.xlane.f32.xlu0 %v2617
      %v2619 = vpop.xlane.xlu0 %2618
      %v2620 = vsel %vm2400, %v2163, 0.0
      %2621 = vadd.xlane.f32.xlu0 %v2620
      %v2622 = vpop.xlane.xlu0 %2621
      %v2623 = vsel %vm2400, %v2165, 0.0
      %2624 = vadd.xlane.f32.xlu0 %v2623
      %v2625 = vpop.xlane.xlu0 %2624
      %v2626 = vsel %vm2400, %v2167, 0.0
      %2627 = vadd.xlane.f32.xlu0 %v2626
      %v2628 = vpop.xlane.xlu0 %2627
      %v2629 = vsel %vm2400, %v2169, 0.0
      %2630 = vadd.xlane.f32.xlu0 %v2629
      %v2631 = vpop.xlane.xlu0 %2630
      %v2632 = vsel %vm2400, %v2171, 0.0
      %2633 = vadd.xlane.f32.xlu0 %v2632
      %v2634 = vpop.xlane.xlu0 %2633
      %v2635 = vsel %vm2400, %v2173, 0.0
      %2636 = vadd.xlane.f32.xlu0 %v2635
      %v2637 = vpop.xlane.xlu0 %2636
      %v2638 = vsel %vm2400, %v2175, 0.0
      %2639 = vadd.xlane.f32.xlu0 %v2638
      %v2640 = vpop.xlane.xlu0 %2639
      %v2641 = vsel %vm2400, %v2177, 0.0
      %2642 = vadd.xlane.f32.xlu0 %v2641
      %v2643 = vpop.xlane.xlu0 %2642
      %v2644 = vsel %vm2400, %v2179, 0.0
      %2645 = vadd.xlane.f32.xlu0 %v2644
      %v2646 = vpop.xlane.xlu0 %2645
      %v2647 = vsel %vm2400, %v2181, 0.0
      %2648 = vadd.xlane.f32.xlu0 %v2647
      %v2649 = vpop.xlane.xlu0 %2648
      %v2650 = vsel %vm2400, %v2183, 0.0
      %2651 = vadd.xlane.f32.xlu0 %v2650
      %v2652 = vpop.xlane.xlu0 %2651
      %v2653 = vsel %vm2400, %v2185, 0.0
      %2654 = vadd.xlane.f32.xlu0 %v2653
      %v2655 = vpop.xlane.xlu0 %2654
      %v2656 = vsel %vm2400, %v2187, 0.0
      %2657 = vadd.xlane.f32.xlu0 %v2656
      %v2658 = vpop.xlane.xlu0 %2657
      %v2659 = vsel %vm2400, %v2189, 0.0
      %2660 = vadd.xlane.f32.xlu0 %v2659
      %v2661 = vpop.xlane.xlu0 %2660
      %v2662 = vsel %vm2400, %v2191, 0.0
      %2663 = vadd.xlane.f32.xlu0 %v2662
      %v2664 = vpop.xlane.xlu0 %2663
      %v2665 = vsel %vm2400, %v2193, 0.0
      %2666 = vadd.xlane.f32.xlu0 %v2665
      %v2667 = vpop.xlane.xlu0 %2666
      %v2668 = vsel %vm2400, %v2195, 0.0
      %2669 = vadd.xlane.f32.xlu0 %v2668
      %v2670 = vpop.xlane.xlu0 %2669
      %v2671 = vsel %vm2400, %v2197, 0.0
      %2672 = vadd.xlane.f32.xlu0 %v2671
      %v2673 = vpop.xlane.xlu0 %2672
      %v2674 = vsel %vm2400, %v2199, 0.0
      %2675 = vadd.xlane.f32.xlu0 %v2674
      %v2676 = vpop.xlane.xlu0 %2675
      %v2677 = vsel %vm2400, %v2201, 0.0
      %2678 = vadd.xlane.f32.xlu0 %v2677
      %v2679 = vpop.xlane.xlu0 %2678
      %v2680 = vsel %vm2400, %v2203, 0.0
      %2681 = vadd.xlane.f32.xlu0 %v2680
      %v2682 = vpop.xlane.xlu0 %2681
      %v2683 = vsel %vm2400, %v2205, 0.0
      %2684 = vadd.xlane.f32.xlu0 %v2683
      %v2685 = vpop.xlane.xlu0 %2684
      %v2686 = vsel %vm2400, %v2207, 0.0
      %2687 = vadd.xlane.f32.xlu0 %v2686
      %v2688 = vpop.xlane.xlu0 %2687
      %v2689 = vsel %vm2400, %v2209, 0.0
      %2690 = vadd.xlane.f32.xlu0 %v2689
      %v2691 = vpop.xlane.xlu0 %2690
      %v2692 = vsel %vm2400, %v2211, 0.0
      %2693 = vadd.xlane.f32.xlu0 %v2692
      %v2694 = vpop.xlane.xlu0 %2693
      %v2695 = vsel %vm2400, %v2213, 0.0
      %2696 = vadd.xlane.f32.xlu0 %v2695
      %v2697 = vpop.xlane.xlu0 %2696
      %v2698 = vsel %vm2400, %v2215, 0.0
      %2699 = vadd.xlane.f32.xlu0 %v2698
      %v2700 = vpop.xlane.xlu0 %2699
      %v2701 = vsel %vm2400, %v2217, 0.0
      %2702 = vadd.xlane.f32.xlu0 %v2701
      %v2703 = vpop.xlane.xlu0 %2702
      %v2704 = vsel %vm2400, %v2219, 0.0
      %2705 = vadd.xlane.f32.xlu0 %v2704
      %v2706 = vpop.xlane.xlu0 %2705
      %v2707 = vsel %vm2400, %v2221, 0.0
      %2708 = vadd.xlane.f32.xlu0 %v2707
      %v2709 = vpop.xlane.xlu0 %2708
      %v2710 = vsel %vm2400, %v2223, 0.0
      %2711 = vadd.xlane.f32.xlu0 %v2710
      %v2712 = vpop.xlane.xlu0 %2711
      %v2713 = vsel %vm2400, %v2225, 0.0
      %2714 = vadd.xlane.f32.xlu0 %v2713
      %v2715 = vpop.xlane.xlu0 %2714
      %v2716 = vsel %vm2400, %v2227, 0.0
      %2717 = vadd.xlane.f32.xlu0 %v2716
      %v2718 = vpop.xlane.xlu0 %2717
      %v2719 = vsel %vm2400, %v2229, 0.0
      %2720 = vadd.xlane.f32.xlu0 %v2719
      %v2721 = vpop.xlane.xlu0 %2720
      %v2722 = vsel %vm2400, %v2231, 0.0
      %2723 = vadd.xlane.f32.xlu0 %v2722
      %v2724 = vpop.xlane.xlu0 %2723
      %v2725 = vsel %vm2400, %v2233, 0.0
      %2726 = vadd.xlane.f32.xlu0 %v2725
      %v2727 = vpop.xlane.xlu0 %2726
      %v2728 = vsel %vm2400, %v2235, 0.0
      %2729 = vadd.xlane.f32.xlu0 %v2728
      %v2730 = vpop.xlane.xlu0 %2729
      %v2731 = vsel %vm2400, %v2237, 0.0
      %2732 = vadd.xlane.f32.xlu0 %v2731
      %v2733 = vpop.xlane.xlu0 %2732
      %v2734 = vsel %vm2400, %v2239, 0.0
      %2735 = vadd.xlane.f32.xlu0 %v2734
      %v2736 = vpop.xlane.xlu0 %2735
      %v2737 = vsel %vm2400, %v2241, 0.0
      %2738 = vadd.xlane.f32.xlu0 %v2737
      %v2739 = vpop.xlane.xlu0 %2738
      %v2740 = vsel %vm2400, %v2243, 0.0
      %2741 = vadd.xlane.f32.xlu0 %v2740
      %v2742 = vpop.xlane.xlu0 %2741
      %v2743 = vsel %vm2400, %v2245, 0.0
      %2744 = vadd.xlane.f32.xlu0 %v2743
      %v2745 = vpop.xlane.xlu0 %2744
      %v2746 = vsel %vm2400, %v2247, 0.0
      %2747 = vadd.xlane.f32.xlu0 %v2746
      %v2748 = vpop.xlane.xlu0 %2747
      %v2749 = vsel %vm2400, %v2249, 0.0
      %2750 = vadd.xlane.f32.xlu0 %v2749
      %v2751 = vpop.xlane.xlu0 %2750
      %v2752 = vsel %vm2400, %v2251, 0.0
      %2753 = vadd.xlane.f32.xlu0 %v2752
      %v2754 = vpop.xlane.xlu0 %2753
      %v2755 = vsel %vm2400, %v2253, 0.0
      %2756 = vadd.xlane.f32.xlu0 %v2755
      %v2757 = vpop.xlane.xlu0 %2756
      %v2758 = vsel %vm2400, %v2255, 0.0
      %2759 = vadd.xlane.f32.xlu0 %v2758
      %v2760 = vpop.xlane.xlu0 %2759
      %v2761 = vsel %vm2400, %v2257, 0.0
      %2762 = vadd.xlane.f32.xlu0 %v2761
      %v2763 = vpop.xlane.xlu0 %2762
      %v2764 = vsel %vm2400, %v2259, 0.0
      %2765 = vadd.xlane.f32.xlu0 %v2764
      %v2766 = vpop.xlane.xlu0 %2765
      %v2767 = vsel %vm2400, %v2261, 0.0
      %2768 = vadd.xlane.f32.xlu0 %v2767
      %v2769 = vpop.xlane.xlu0 %2768
      %v2770 = vsel %vm2400, %v2263, 0.0
      %2771 = vadd.xlane.f32.xlu0 %v2770
      %v2772 = vpop.xlane.xlu0 %2771
      %v2773 = vsel %vm2400, %v2265, 0.0
      %2774 = vadd.xlane.f32.xlu0 %v2773
      %v2775 = vpop.xlane.xlu0 %2774
      %v2776 = vsel %vm2400, %v2267, 0.0
      %2777 = vadd.xlane.f32.xlu0 %v2776
      %v2778 = vpop.xlane.xlu0 %2777
      %v2779 = vsel %vm2400, %v2269, 0.0
      %2780 = vadd.xlane.f32.xlu0 %v2779
      %v2781 = vpop.xlane.xlu0 %2780
      %v2782 = vsel %vm2400, %v2271, 0.0
      %2783 = vadd.xlane.f32.xlu0 %v2782
      %v2784 = vpop.xlane.xlu0 %2783
      %v2913 = vlaneseq
      %v2914 = vshrl.u32 %v2913, 7
      %v2915 = vsub.s32 %v749, %v2914
      %v2916 = vrot.slane %v2403, %v2915
      %v2917 = vadd.s32 %v749, 4294967288
      %v2918 = vlaneseq
      %v2919 = vshrl.u32 %v2918, 7
      %v2920 = vsub.s32 %v2917, %v2919
      %v2921 = vrot.slane %v2406, %v2920
      %vm2922 = vcmask 130112
      %v2923 = vsel %vm2922, %v2921, %v2916
      %v2924 = vadd.s32 %v749, 4294967280
      %v2925 = vlaneseq
      %v2926 = vshrl.u32 %v2925, 7
      %v2927 = vsub.s32 %v2924, %v2926
      %v2928 = vrot.slane %v2409, %v2927
      %vm2929 = vcmask 195712
      %v2930 = vsel %vm2929, %v2928, %v2923
      %v2931 = vadd.s32 %v749, 4294967272
      %v2932 = vlaneseq
      %v2933 = vshrl.u32 %v2932, 7
      %v2934 = vsub.s32 %v2931, %v2933
      %v2935 = vrot.slane %v2412, %v2934
      %vm2936 = vcmask 261312
      %v2937 = vsel %vm2936, %v2935, %v2930
      %v2938 = vlaneseq
      %v2939 = vshrl.u32 %v2938, 7
      %v2940 = vsub.s32 %v749, %v2939
      %v2941 = vrot.slane %v2415, %v2940
      %v2942 = vlaneseq
      %v2943 = vshrl.u32 %v2942, 7
      %v2944 = vsub.s32 %v2917, %v2943
      %v2945 = vrot.slane %v2418, %v2944
      %v2946 = vsel %vm2922, %v2945, %v2941
      %v2947 = vlaneseq
      %v2948 = vshrl.u32 %v2947, 7
      %v2949 = vsub.s32 %v2924, %v2948
      %v2950 = vrot.slane %v2421, %v2949
      %v2951 = vsel %vm2929, %v2950, %v2946
      %v2952 = vlaneseq
      %v2953 = vshrl.u32 %v2952, 7
      %v2954 = vsub.s32 %v2931, %v2953
      %v2955 = vrot.slane %v2424, %v2954
      %v2956 = vsel %vm2936, %v2955, %v2951
      %v2957 = vlaneseq
      %v2958 = vshrl.u32 %v2957, 7
      %v2959 = vsub.s32 %v749, %v2958
      %v2960 = vrot.slane %v2427, %v2959
      %v2961 = vlaneseq
      %v2962 = vshrl.u32 %v2961, 7
      %v2963 = vsub.s32 %v2917, %v2962
      %v2964 = vrot.slane %v2430, %v2963
      %v2965 = vsel %vm2922, %v2964, %v2960
      %v2966 = vlaneseq
      %v2967 = vshrl.u32 %v2966, 7
      %v2968 = vsub.s32 %v2924, %v2967
      %v2969 = vrot.slane %v2433, %v2968
      %v2970 = vsel %vm2929, %v2969, %v2965
      %v2971 = vlaneseq
      %v2972 = vshrl.u32 %v2971, 7
      %v2973 = vsub.s32 %v2931, %v2972
      %v2974 = vrot.slane %v2436, %v2973
      %v2975 = vsel %vm2936, %v2974, %v2970
      %v2976 = vlaneseq
      %v2977 = vshrl.u32 %v2976, 7
      %v2978 = vsub.s32 %v749, %v2977
      %v2979 = vrot.slane %v2439, %v2978
      %v2980 = vlaneseq
      %v2981 = vshrl.u32 %v2980, 7
      %v2982 = vsub.s32 %v2917, %v2981
      %v2983 = vrot.slane %v2442, %v2982
      %v2984 = vsel %vm2922, %v2983, %v2979
      %v2985 = vlaneseq
      %v2986 = vshrl.u32 %v2985, 7
      %v2987 = vsub.s32 %v2924, %v2986
      %v2988 = vrot.slane %v2445, %v2987
      %v2989 = vsel %vm2929, %v2988, %v2984
      %v2990 = vlaneseq
      %v2991 = vshrl.u32 %v2990, 7
      %v2992 = vsub.s32 %v2931, %v2991
      %v2993 = vrot.slane %v2448, %v2992
      %v2994 = vsel %vm2936, %v2993, %v2989
      %v2995 = vlaneseq
      %v2996 = vshrl.u32 %v2995, 7
      %v2997 = vsub.s32 %v749, %v2996
      %v2998 = vrot.slane %v2451, %v2997
      %v2999 = vlaneseq
      %v3000 = vshrl.u32 %v2999, 7
      %v3001 = vsub.s32 %v2917, %v3000
      %v3002 = vrot.slane %v2454, %v3001
      %v3003 = vsel %vm2922, %v3002, %v2998
      %v3004 = vlaneseq
      %v3005 = vshrl.u32 %v3004, 7
      %v3006 = vsub.s32 %v2924, %v3005
      %v3007 = vrot.slane %v2457, %v3006
      %v3008 = vsel %vm2929, %v3007, %v3003
      %v3009 = vlaneseq
      %v3010 = vshrl.u32 %v3009, 7
      %v3011 = vsub.s32 %v2931, %v3010
      %v3012 = vrot.slane %v2460, %v3011
      %v3013 = vsel %vm2936, %v3012, %v3008
      %v3014 = vlaneseq
      %v3015 = vshrl.u32 %v3014, 7
      %v3016 = vsub.s32 %v749, %v3015
      %v3017 = vrot.slane %v2463, %v3016
      %v3018 = vlaneseq
      %v3019 = vshrl.u32 %v3018, 7
      %v3020 = vsub.s32 %v2917, %v3019
      %v3021 = vrot.slane %v2466, %v3020
      %v3022 = vsel %vm2922, %v3021, %v3017
      %v3023 = vlaneseq
      %v3024 = vshrl.u32 %v3023, 7
      %v3025 = vsub.s32 %v2924, %v3024
      %v3026 = vrot.slane %v2469, %v3025
      %v3027 = vsel %vm2929, %v3026, %v3022
      %v3028 = vlaneseq
      %v3029 = vshrl.u32 %v3028, 7
      %v3030 = vsub.s32 %v2931, %v3029
      %v3031 = vrot.slane %v2472, %v3030
      %v3032 = vsel %vm2936, %v3031, %v3027
      %v3033 = vlaneseq
      %v3034 = vshrl.u32 %v3033, 7
      %v3035 = vsub.s32 %v749, %v3034
      %v3036 = vrot.slane %v2475, %v3035
      %v3037 = vlaneseq
      %v3038 = vshrl.u32 %v3037, 7
      %v3039 = vsub.s32 %v2917, %v3038
      %v3040 = vrot.slane %v2478, %v3039
      %v3041 = vsel %vm2922, %v3040, %v3036
      %v3042 = vlaneseq
      %v3043 = vshrl.u32 %v3042, 7
      %v3044 = vsub.s32 %v2924, %v3043
      %v3045 = vrot.slane %v2481, %v3044
      %v3046 = vsel %vm2929, %v3045, %v3041
      %v3047 = vlaneseq
      %v3048 = vshrl.u32 %v3047, 7
      %v3049 = vsub.s32 %v2931, %v3048
      %v3050 = vrot.slane %v2484, %v3049
      %v3051 = vsel %vm2936, %v3050, %v3046
      %v3052 = vlaneseq
      %v3053 = vshrl.u32 %v3052, 7
      %v3054 = vsub.s32 %v749, %v3053
      %v3055 = vrot.slane %v2487, %v3054
      %v3056 = vlaneseq
      %v3057 = vshrl.u32 %v3056, 7
      %v3058 = vsub.s32 %v2917, %v3057
      %v3059 = vrot.slane %v2490, %v3058
      %v3060 = vsel %vm2922, %v3059, %v3055
      %v3061 = vlaneseq
      %v3062 = vshrl.u32 %v3061, 7
      %v3063 = vsub.s32 %v2924, %v3062
      %v3064 = vrot.slane %v2493, %v3063
      %v3065 = vsel %vm2929, %v3064, %v3060
      %v3066 = vlaneseq
      %v3067 = vshrl.u32 %v3066, 7
      %v3068 = vsub.s32 %v2931, %v3067
      %v3069 = vrot.slane %v2496, %v3068
      %v3070 = vsel %vm2936, %v3069, %v3065
      %v3071 = vlaneseq
      %v3072 = vshrl.u32 %v3071, 7
      %v3073 = vsub.s32 %v749, %v3072
      %v3074 = vrot.slane %v2499, %v3073
      %v3075 = vlaneseq
      %v3076 = vshrl.u32 %v3075, 7
      %v3077 = vsub.s32 %v2917, %v3076
      %v3078 = vrot.slane %v2502, %v3077
      %v3079 = vsel %vm2922, %v3078, %v3074
      %v3080 = vlaneseq
      %v3081 = vshrl.u32 %v3080, 7
      %v3082 = vsub.s32 %v2924, %v3081
      %v3083 = vrot.slane %v2505, %v3082
      %v3084 = vsel %vm2929, %v3083, %v3079
      %v3085 = vlaneseq
      %v3086 = vshrl.u32 %v3085, 7
      %v3087 = vsub.s32 %v2931, %v3086
      %v3088 = vrot.slane %v2508, %v3087
      %v3089 = vsel %vm2936, %v3088, %v3084
      %v3090 = vlaneseq
      %v3091 = vshrl.u32 %v3090, 7
      %v3092 = vsub.s32 %v749, %v3091
      %v3093 = vrot.slane %v2511, %v3092
      %v3094 = vlaneseq
      %v3095 = vshrl.u32 %v3094, 7
      %v3096 = vsub.s32 %v2917, %v3095
      %v3097 = vrot.slane %v2514, %v3096
      %v3098 = vsel %vm2922, %v3097, %v3093
      %v3099 = vlaneseq
      %v3100 = vshrl.u32 %v3099, 7
      %v3101 = vsub.s32 %v2924, %v3100
      %v3102 = vrot.slane %v2517, %v3101
      %v3103 = vsel %vm2929, %v3102, %v3098
      %v3104 = vlaneseq
      %v3105 = vshrl.u32 %v3104, 7
      %v3106 = vsub.s32 %v2931, %v3105
      %v3107 = vrot.slane %v2520, %v3106
      %v3108 = vsel %vm2936, %v3107, %v3103
      %v3109 = vlaneseq
      %v3110 = vshrl.u32 %v3109, 7
      %v3111 = vsub.s32 %v749, %v3110
      %v3112 = vrot.slane %v2523, %v3111
      %v3113 = vlaneseq
      %v3114 = vshrl.u32 %v3113, 7
      %v3115 = vsub.s32 %v2917, %v3114
      %v3116 = vrot.slane %v2526, %v3115
      %v3117 = vsel %vm2922, %v3116, %v3112
      %v3118 = vlaneseq
      %v3119 = vshrl.u32 %v3118, 7
      %v3120 = vsub.s32 %v2924, %v3119
      %v3121 = vrot.slane %v2529, %v3120
      %v3122 = vsel %vm2929, %v3121, %v3117
      %v3123 = vlaneseq
      %v3124 = vshrl.u32 %v3123, 7
      %v3125 = vsub.s32 %v2931, %v3124
      %v3126 = vrot.slane %v2532, %v3125
      %v3127 = vsel %vm2936, %v3126, %v3122
      %v3128 = vlaneseq
      %v3129 = vshrl.u32 %v3128, 7
      %v3130 = vsub.s32 %v749, %v3129
      %v3131 = vrot.slane %v2535, %v3130
      %v3132 = vlaneseq
      %v3133 = vshrl.u32 %v3132, 7
      %v3134 = vsub.s32 %v2917, %v3133
      %v3135 = vrot.slane %v2538, %v3134
      %v3136 = vsel %vm2922, %v3135, %v3131
      %v3137 = vlaneseq
      %v3138 = vshrl.u32 %v3137, 7
      %v3139 = vsub.s32 %v2924, %v3138
      %v3140 = vrot.slane %v2541, %v3139
      %v3141 = vsel %vm2929, %v3140, %v3136
      %v3142 = vlaneseq
      %v3143 = vshrl.u32 %v3142, 7
      %v3144 = vsub.s32 %v2931, %v3143
      %v3145 = vrot.slane %v2544, %v3144
      %v3146 = vsel %vm2936, %v3145, %v3141
      %v3147 = vlaneseq
      %v3148 = vshrl.u32 %v3147, 7
      %v3149 = vsub.s32 %v749, %v3148
      %v3150 = vrot.slane %v2547, %v3149
      %v3151 = vlaneseq
      %v3152 = vshrl.u32 %v3151, 7
      %v3153 = vsub.s32 %v2917, %v3152
      %v3154 = vrot.slane %v2550, %v3153
      %v3155 = vsel %vm2922, %v3154, %v3150
      %v3156 = vlaneseq
      %v3157 = vshrl.u32 %v3156, 7
      %v3158 = vsub.s32 %v2924, %v3157
      %v3159 = vrot.slane %v2553, %v3158
      %v3160 = vsel %vm2929, %v3159, %v3155
      %v3161 = vlaneseq
      %v3162 = vshrl.u32 %v3161, 7
      %v3163 = vsub.s32 %v2931, %v3162
      %v3164 = vrot.slane %v2556, %v3163
      %v3165 = vsel %vm2936, %v3164, %v3160
      %v3166 = vlaneseq
      %v3167 = vshrl.u32 %v3166, 7
      %v3168 = vsub.s32 %v749, %v3167
      %v3169 = vrot.slane %v2559, %v3168
      %v3170 = vlaneseq
      %v3171 = vshrl.u32 %v3170, 7
      %v3172 = vsub.s32 %v2917, %v3171
      %v3173 = vrot.slane %v2562, %v3172
      %v3174 = vsel %vm2922, %v3173, %v3169
      %v3175 = vlaneseq
      %v3176 = vshrl.u32 %v3175, 7
      %v3177 = vsub.s32 %v2924, %v3176
      %v3178 = vrot.slane %v2565, %v3177
      %v3179 = vsel %vm2929, %v3178, %v3174
      %v3180 = vlaneseq
      %v3181 = vshrl.u32 %v3180, 7
      %v3182 = vsub.s32 %v2931, %v3181
      %v3183 = vrot.slane %v2568, %v3182
      %v3184 = vsel %vm2936, %v3183, %v3179
      %v3185 = vlaneseq
      %v3186 = vshrl.u32 %v3185, 7
      %v3187 = vsub.s32 %v749, %v3186
      %v3188 = vrot.slane %v2571, %v3187
      %v3189 = vlaneseq
      %v3190 = vshrl.u32 %v3189, 7
      %v3191 = vsub.s32 %v2917, %v3190
      %v3192 = vrot.slane %v2574, %v3191
      %v3193 = vsel %vm2922, %v3192, %v3188
      %v3194 = vlaneseq
      %v3195 = vshrl.u32 %v3194, 7
      %v3196 = vsub.s32 %v2924, %v3195
      %v3197 = vrot.slane %v2577, %v3196
      %v3198 = vsel %vm2929, %v3197, %v3193
      %v3199 = vlaneseq
      %v3200 = vshrl.u32 %v3199, 7
      %v3201 = vsub.s32 %v2931, %v3200
      %v3202 = vrot.slane %v2580, %v3201
      %v3203 = vsel %vm2936, %v3202, %v3198
      %v3204 = vlaneseq
      %v3205 = vshrl.u32 %v3204, 7
      %v3206 = vsub.s32 %v749, %v3205
      %v3207 = vrot.slane %v2583, %v3206
      %v3208 = vlaneseq
      %v3209 = vshrl.u32 %v3208, 7
      %v3210 = vsub.s32 %v2917, %v3209
      %v3211 = vrot.slane %v2586, %v3210
      %v3212 = vsel %vm2922, %v3211, %v3207
      %v3213 = vlaneseq
      %v3214 = vshrl.u32 %v3213, 7
      %v3215 = vsub.s32 %v2924, %v3214
      %v3216 = vrot.slane %v2589, %v3215
      %v3217 = vsel %vm2929, %v3216, %v3212
      %v3218 = vlaneseq
      %v3219 = vshrl.u32 %v3218, 7
      %v3220 = vsub.s32 %v2931, %v3219
      %v3221 = vrot.slane %v2592, %v3220
      %v3222 = vsel %vm2936, %v3221, %v3217
      %v3223 = vlaneseq
      %v3224 = vshrl.u32 %v3223, 7
      %v3225 = vsub.s32 %v749, %v3224
      %v3226 = vrot.slane %v2595, %v3225
      %v3227 = vlaneseq
      %v3228 = vshrl.u32 %v3227, 7
      %v3229 = vsub.s32 %v2917, %v3228
      %v3230 = vrot.slane %v2598, %v3229
      %v3231 = vsel %vm2922, %v3230, %v3226
      %v3232 = vlaneseq
      %v3233 = vshrl.u32 %v3232, 7
      %v3234 = vsub.s32 %v2924, %v3233
      %v3235 = vrot.slane %v2601, %v3234
      %v3236 = vsel %vm2929, %v3235, %v3231
      %v3237 = vlaneseq
      %v3238 = vshrl.u32 %v3237, 7
      %v3239 = vsub.s32 %v2931, %v3238
      %v3240 = vrot.slane %v2604, %v3239
      %v3241 = vsel %vm2936, %v3240, %v3236
      %v3242 = vlaneseq
      %v3243 = vshrl.u32 %v3242, 7
      %v3244 = vsub.s32 %v749, %v3243
      %v3245 = vrot.slane %v2607, %v3244
      %v3246 = vlaneseq
      %v3247 = vshrl.u32 %v3246, 7
      %v3248 = vsub.s32 %v2917, %v3247
      %v3249 = vrot.slane %v2610, %v3248
      %v3250 = vsel %vm2922, %v3249, %v3245
      %v3251 = vlaneseq
      %v3252 = vshrl.u32 %v3251, 7
      %v3253 = vsub.s32 %v2924, %v3252
      %v3254 = vrot.slane %v2613, %v3253
      %v3255 = vsel %vm2929, %v3254, %v3250
      %v3256 = vlaneseq
      %v3257 = vshrl.u32 %v3256, 7
      %v3258 = vsub.s32 %v2931, %v3257
      %v3259 = vrot.slane %v2616, %v3258
      %v3260 = vsel %vm2936, %v3259, %v3255
      %v3261 = vlaneseq
      %v3262 = vshrl.u32 %v3261, 7
      %v3263 = vsub.s32 %v749, %v3262
      %v3264 = vrot.slane %v2619, %v3263
      %v3265 = vlaneseq
      %v3266 = vshrl.u32 %v3265, 7
      %v3267 = vsub.s32 %v2917, %v3266
      %v3268 = vrot.slane %v2622, %v3267
      %v3269 = vsel %vm2922, %v3268, %v3264
      %v3270 = vlaneseq
      %v3271 = vshrl.u32 %v3270, 7
      %v3272 = vsub.s32 %v2924, %v3271
      %v3273 = vrot.slane %v2625, %v3272
      %v3274 = vsel %vm2929, %v3273, %v3269
      %v3275 = vlaneseq
      %v3276 = vshrl.u32 %v3275, 7
      %v3277 = vsub.s32 %v2931, %v3276
      %v3278 = vrot.slane %v2628, %v3277
      %v3279 = vsel %vm2936, %v3278, %v3274
      %v3280 = vlaneseq
      %v3281 = vshrl.u32 %v3280, 7
      %v3282 = vsub.s32 %v749, %v3281
      %v3283 = vrot.slane %v2631, %v3282
      %v3284 = vlaneseq
      %v3285 = vshrl.u32 %v3284, 7
      %v3286 = vsub.s32 %v2917, %v3285
      %v3287 = vrot.slane %v2634, %v3286
      %v3288 = vsel %vm2922, %v3287, %v3283
      %v3289 = vlaneseq
      %v3290 = vshrl.u32 %v3289, 7
      %v3291 = vsub.s32 %v2924, %v3290
      %v3292 = vrot.slane %v2637, %v3291
      %v3293 = vsel %vm2929, %v3292, %v3288
      %v3294 = vlaneseq
      %v3295 = vshrl.u32 %v3294, 7
      %v3296 = vsub.s32 %v2931, %v3295
      %v3297 = vrot.slane %v2640, %v3296
      %v3298 = vsel %vm2936, %v3297, %v3293
      %v3299 = vlaneseq
      %v3300 = vshrl.u32 %v3299, 7
      %v3301 = vsub.s32 %v749, %v3300
      %v3302 = vrot.slane %v2643, %v3301
      %v3303 = vlaneseq
      %v3304 = vshrl.u32 %v3303, 7
      %v3305 = vsub.s32 %v2917, %v3304
      %v3306 = vrot.slane %v2646, %v3305
      %v3307 = vsel %vm2922, %v3306, %v3302
      %v3308 = vlaneseq
      %v3309 = vshrl.u32 %v3308, 7
      %v3310 = vsub.s32 %v2924, %v3309
      %v3311 = vrot.slane %v2649, %v3310
      %v3312 = vsel %vm2929, %v3311, %v3307
      %v3313 = vlaneseq
      %v3314 = vshrl.u32 %v3313, 7
      %v3315 = vsub.s32 %v2931, %v3314
      %v3316 = vrot.slane %v2652, %v3315
      %v3317 = vsel %vm2936, %v3316, %v3312
      %v3318 = vlaneseq
      %v3319 = vshrl.u32 %v3318, 7
      %v3320 = vsub.s32 %v749, %v3319
      %v3321 = vrot.slane %v2655, %v3320
      %v3322 = vlaneseq
      %v3323 = vshrl.u32 %v3322, 7
      %v3324 = vsub.s32 %v2917, %v3323
      %v3325 = vrot.slane %v2658, %v3324
      %v3326 = vsel %vm2922, %v3325, %v3321
      %v3327 = vlaneseq
      %v3328 = vshrl.u32 %v3327, 7
      %v3329 = vsub.s32 %v2924, %v3328
      %v3330 = vrot.slane %v2661, %v3329
      %v3331 = vsel %vm2929, %v3330, %v3326
      %v3332 = vlaneseq
      %v3333 = vshrl.u32 %v3332, 7
      %v3334 = vsub.s32 %v2931, %v3333
      %v3335 = vrot.slane %v2664, %v3334
      %v3336 = vsel %vm2936, %v3335, %v3331
      %v3337 = vlaneseq
      %v3338 = vshrl.u32 %v3337, 7
      %v3339 = vsub.s32 %v749, %v3338
      %v3340 = vrot.slane %v2667, %v3339
      %v3341 = vlaneseq
      %v3342 = vshrl.u32 %v3341, 7
      %v3343 = vsub.s32 %v2917, %v3342
      %v3344 = vrot.slane %v2670, %v3343
      %v3345 = vsel %vm2922, %v3344, %v3340
      %v3346 = vlaneseq
      %v3347 = vshrl.u32 %v3346, 7
      %v3348 = vsub.s32 %v2924, %v3347
      %v3349 = vrot.slane %v2673, %v3348
      %v3350 = vsel %vm2929, %v3349, %v3345
      %v3351 = vlaneseq
      %v3352 = vshrl.u32 %v3351, 7
      %v3353 = vsub.s32 %v2931, %v3352
      %v3354 = vrot.slane %v2676, %v3353
      %v3355 = vsel %vm2936, %v3354, %v3350
      %v3356 = vlaneseq
      %v3357 = vshrl.u32 %v3356, 7
      %v3358 = vsub.s32 %v749, %v3357
      %v3359 = vrot.slane %v2679, %v3358
      %v3360 = vlaneseq
      %v3361 = vshrl.u32 %v3360, 7
      %v3362 = vsub.s32 %v2917, %v3361
      %v3363 = vrot.slane %v2682, %v3362
      %v3364 = vsel %vm2922, %v3363, %v3359
      %v3365 = vlaneseq
      %v3366 = vshrl.u32 %v3365, 7
      %v3367 = vsub.s32 %v2924, %v3366
      %v3368 = vrot.slane %v2685, %v3367
      %v3369 = vsel %vm2929, %v3368, %v3364
      %v3370 = vlaneseq
      %v3371 = vshrl.u32 %v3370, 7
      %v3372 = vsub.s32 %v2931, %v3371
      %v3373 = vrot.slane %v2688, %v3372
      %v3374 = vsel %vm2936, %v3373, %v3369
      %v3375 = vlaneseq
      %v3376 = vshrl.u32 %v3375, 7
      %v3377 = vsub.s32 %v749, %v3376
      %v3378 = vrot.slane %v2691, %v3377
      %v3379 = vlaneseq
      %v3380 = vshrl.u32 %v3379, 7
      %v3381 = vsub.s32 %v2917, %v3380
      %v3382 = vrot.slane %v2694, %v3381
      %v3383 = vsel %vm2922, %v3382, %v3378
      %v3384 = vlaneseq
      %v3385 = vshrl.u32 %v3384, 7
      %v3386 = vsub.s32 %v2924, %v3385
      %v3387 = vrot.slane %v2697, %v3386
      %v3388 = vsel %vm2929, %v3387, %v3383
      %v3389 = vlaneseq
      %v3390 = vshrl.u32 %v3389, 7
      %v3391 = vsub.s32 %v2931, %v3390
      %v3392 = vrot.slane %v2700, %v3391
      %v3393 = vsel %vm2936, %v3392, %v3388
      %v3394 = vlaneseq
      %v3395 = vshrl.u32 %v3394, 7
      %v3396 = vsub.s32 %v749, %v3395
      %v3397 = vrot.slane %v2703, %v3396
      %v3398 = vlaneseq
      %v3399 = vshrl.u32 %v3398, 7
      %v3400 = vsub.s32 %v2917, %v3399
      %v3401 = vrot.slane %v2706, %v3400
      %v3402 = vsel %vm2922, %v3401, %v3397
      %v3403 = vlaneseq
      %v3404 = vshrl.u32 %v3403, 7
      %v3405 = vsub.s32 %v2924, %v3404
      %v3406 = vrot.slane %v2709, %v3405
      %v3407 = vsel %vm2929, %v3406, %v3402
      %v3408 = vlaneseq
      %v3409 = vshrl.u32 %v3408, 7
      %v3410 = vsub.s32 %v2931, %v3409
      %v3411 = vrot.slane %v2712, %v3410
      %v3412 = vsel %vm2936, %v3411, %v3407
      %v3413 = vlaneseq
      %v3414 = vshrl.u32 %v3413, 7
      %v3415 = vsub.s32 %v749, %v3414
      %v3416 = vrot.slane %v2715, %v3415
      %v3417 = vlaneseq
      %v3418 = vshrl.u32 %v3417, 7
      %v3419 = vsub.s32 %v2917, %v3418
      %v3420 = vrot.slane %v2718, %v3419
      %v3421 = vsel %vm2922, %v3420, %v3416
      %v3422 = vlaneseq
      %v3423 = vshrl.u32 %v3422, 7
      %v3424 = vsub.s32 %v2924, %v3423
      %v3425 = vrot.slane %v2721, %v3424
      %v3426 = vsel %vm2929, %v3425, %v3421
      %v3427 = vlaneseq
      %v3428 = vshrl.u32 %v3427, 7
      %v3429 = vsub.s32 %v2931, %v3428
      %v3430 = vrot.slane %v2724, %v3429
      %v3431 = vsel %vm2936, %v3430, %v3426
      %v3432 = vlaneseq
      %v3433 = vshrl.u32 %v3432, 7
      %v3434 = vsub.s32 %v749, %v3433
      %v3435 = vrot.slane %v2727, %v3434
      %v3436 = vlaneseq
      %v3437 = vshrl.u32 %v3436, 7
      %v3438 = vsub.s32 %v2917, %v3437
      %v3439 = vrot.slane %v2730, %v3438
      %v3440 = vsel %vm2922, %v3439, %v3435
      %v3441 = vlaneseq
      %v3442 = vshrl.u32 %v3441, 7
      %v3443 = vsub.s32 %v2924, %v3442
      %v3444 = vrot.slane %v2733, %v3443
      %v3445 = vsel %vm2929, %v3444, %v3440
      %v3446 = vlaneseq
      %v3447 = vshrl.u32 %v3446, 7
      %v3448 = vsub.s32 %v2931, %v3447
      %v3449 = vrot.slane %v2736, %v3448
      %v3450 = vsel %vm2936, %v3449, %v3445
      %v3451 = vlaneseq
      %v3452 = vshrl.u32 %v3451, 7
      %v3453 = vsub.s32 %v749, %v3452
      %v3454 = vrot.slane %v2739, %v3453
      %v3455 = vlaneseq
      %v3456 = vshrl.u32 %v3455, 7
      %v3457 = vsub.s32 %v2917, %v3456
      %v3458 = vrot.slane %v2742, %v3457
      %v3459 = vsel %vm2922, %v3458, %v3454
      %v3460 = vlaneseq
      %v3461 = vshrl.u32 %v3460, 7
      %v3462 = vsub.s32 %v2924, %v3461
      %v3463 = vrot.slane %v2745, %v3462
      %v3464 = vsel %vm2929, %v3463, %v3459
      %v3465 = vlaneseq
      %v3466 = vshrl.u32 %v3465, 7
      %v3467 = vsub.s32 %v2931, %v3466
      %v3468 = vrot.slane %v2748, %v3467
      %v3469 = vsel %vm2936, %v3468, %v3464
      %v3470 = vlaneseq
      %v3471 = vshrl.u32 %v3470, 7
      %v3472 = vsub.s32 %v749, %v3471
      %v3473 = vrot.slane %v2751, %v3472
      %v3474 = vlaneseq
      %v3475 = vshrl.u32 %v3474, 7
      %v3476 = vsub.s32 %v2917, %v3475
      %v3477 = vrot.slane %v2754, %v3476
      %v3478 = vsel %vm2922, %v3477, %v3473
      %v3479 = vlaneseq
      %v3480 = vshrl.u32 %v3479, 7
      %v3481 = vsub.s32 %v2924, %v3480
      %v3482 = vrot.slane %v2757, %v3481
      %v3483 = vsel %vm2929, %v3482, %v3478
      %v3484 = vlaneseq
      %v3485 = vshrl.u32 %v3484, 7
      %v3486 = vsub.s32 %v2931, %v3485
      %v3487 = vrot.slane %v2760, %v3486
      %v3488 = vsel %vm2936, %v3487, %v3483
      %v3489 = vlaneseq
      %v3490 = vshrl.u32 %v3489, 7
      %v3491 = vsub.s32 %v749, %v3490
      %v3492 = vrot.slane %v2763, %v3491
      %v3493 = vlaneseq
      %v3494 = vshrl.u32 %v3493, 7
      %v3495 = vsub.s32 %v2917, %v3494
      %v3496 = vrot.slane %v2766, %v3495
      %v3497 = vsel %vm2922, %v3496, %v3492
      %v3498 = vlaneseq
      %v3499 = vshrl.u32 %v3498, 7
      %v3500 = vsub.s32 %v2924, %v3499
      %v3501 = vrot.slane %v2769, %v3500
      %v3502 = vsel %vm2929, %v3501, %v3497
      %v3503 = vlaneseq
      %v3504 = vshrl.u32 %v3503, 7
      %v3505 = vsub.s32 %v2931, %v3504
      %v3506 = vrot.slane %v2772, %v3505
      %v3507 = vsel %vm2936, %v3506, %v3502
      %v3508 = vlaneseq
      %v3509 = vshrl.u32 %v3508, 7
      %v3510 = vsub.s32 %v749, %v3509
      %v3511 = vrot.slane %v2775, %v3510
      %v3512 = vlaneseq
      %v3513 = vshrl.u32 %v3512, 7
      %v3514 = vsub.s32 %v2917, %v3513
      %v3515 = vrot.slane %v2778, %v3514
      %v3516 = vsel %vm2922, %v3515, %v3511
      %v3517 = vlaneseq
      %v3518 = vshrl.u32 %v3517, 7
      %v3519 = vsub.s32 %v2924, %v3518
      %v3520 = vrot.slane %v2781, %v3519
      %v3521 = vsel %vm2929, %v3520, %v3516
      %v3522 = vlaneseq
      %v3523 = vshrl.u32 %v3522, 7
      %v3524 = vsub.s32 %v2931, %v3523
      %v3525 = vrot.slane %v2784, %v3524
      %v3526 = vsel %vm2936, %v3525, %v3521
      %vm3527 = vcmask 1041409
      %v3528 = vsel %vm3527, %v2956, %v2937
      %vm3529 = vcmask 1042434
      %v3530 = vsel %vm3529, %v2975, %v3528
      %vm3531 = vcmask 1043459
      %v3532 = vsel %vm3531, %v2994, %v3530
      %vm3533 = vcmask 1044484
      %v3534 = vsel %vm3533, %v3013, %v3532
      %vm3535 = vcmask 1045509
      %v3536 = vsel %vm3535, %v3032, %v3534
      %vm3537 = vcmask 1046534
      %v3538 = vsel %vm3537, %v3051, %v3536
      %vm3539 = vcmask 1047559
      %v3540 = vsel %vm3539, %v3070, %v3538
      %v3541 = vsel %vm3527, %v3108, %v3089
      %v3542 = vsel %vm3529, %v3127, %v3541
      %v3543 = vsel %vm3531, %v3146, %v3542
      %v3544 = vsel %vm3533, %v3165, %v3543
      %v3545 = vsel %vm3535, %v3184, %v3544
      %v3546 = vsel %vm3537, %v3203, %v3545
      %v3547 = vsel %vm3539, %v3222, %v3546
      %v3548 = vsel %vm3527, %v3260, %v3241
      %v3549 = vsel %vm3529, %v3279, %v3548
      %v3550 = vsel %vm3531, %v3298, %v3549
      %v3551 = vsel %vm3533, %v3317, %v3550
      %v3552 = vsel %vm3535, %v3336, %v3551
      %v3553 = vsel %vm3537, %v3355, %v3552
      %v3554 = vsel %vm3539, %v3374, %v3553
      %v3555 = vsel %vm3527, %v3412, %v3393
      %v3556 = vsel %vm3529, %v3431, %v3555
      %v3557 = vsel %vm3531, %v3450, %v3556
      %v3558 = vsel %vm3533, %v3469, %v3557
      %v3559 = vsel %vm3535, %v3488, %v3558
      %v3560 = vsel %vm3537, %v3507, %v3559
      %v3561 = vsel %vm3539, %v3526, %v3560
      %v3566 = vsel %vm758, %v3540, -1e+30
      %v3567 = vsel %vm759, %v3547, -1e+30
      %v3568 = vsel %vm760, %v3554, -1e+30
      %v3569 = vsel %vm761, %v3561, -1e+30
      %v3570 = vsel %vm770, %v3566, -inf
      %3571 = vmax.xlane.f32.xlu0 %v3570
      %v3572 = vpop.xlane.xlu0 %3571
      %v3573 = vsel %vm770, %v3567, -inf
      %3574 = vmax.xlane.f32.xlu0 %v3573
      %v3575 = vpop.xlane.xlu0 %3574
      %v3576 = vsel %vm770, %v3568, -inf
      %3577 = vmax.xlane.f32.xlu0 %v3576
      %v3578 = vpop.xlane.xlu0 %3577
      %v3579 = vsel %vm770, %v3569, -inf
      %3580 = vmax.xlane.f32.xlu0 %v3579
      %v3581 = vpop.xlane.xlu0 %3580
      %v3582 = vsub.f32 %v3566, %v3572
      %v3583 = vsub.f32 %v3567, %v3575
      %v3584 = vsub.f32 %v3568, %v3578
      %v3585 = vsub.f32 %v3569, %v3581
      %v3586 = vmul.f32 %v3582, 1.442695
      %v3587 = vpow.pop %v3586
      %v3588 = vmul.f32 %v3583, 1.442695
      %v3589 = vpow.pop %v3588
      %v3590 = vmul.f32 %v3584, 1.442695
      %v3591 = vpow.pop %v3590
      %v3592 = vmul.f32 %v3585, 1.442695
      %v3593 = vpow.pop %v3592
      %v3594 = vsel %vm770, %v3587, 0.0
      %3595 = vadd.xlane.f32.xlu0 %v3594
      %v3596 = vpop.xlane.xlu0 %3595
      %v3597 = vsel %vm770, %v3589, 0.0
      %3598 = vadd.xlane.f32.xlu0 %v3597
      %v3599 = vpop.xlane.xlu0 %3598
      %v3600 = vsel %vm770, %v3591, 0.0
      %3601 = vadd.xlane.f32.xlu0 %v3600
      %v3602 = vpop.xlane.xlu0 %3601
      %v3603 = vsel %vm770, %v3593, 0.0
      %3604 = vadd.xlane.f32.xlu0 %v3603
      %v3605 = vpop.xlane.xlu0 %3604
      %v3606 = vrcp.pop %v3596
      %v3607 = vrcp.pop %v3599
      %v3608 = vrcp.pop %v3602
      %v3609 = vrcp.pop %v3605
      %v3610 = vmul.f32 %v3587, %v3606
      %v3611 = vmul.f32 %v3589, %v3607
      %v3612 = vmul.f32 %v3591, %v3608
      %v3613 = vmul.f32 %v3593, %v3609
      %v3615 = vsel %vm770, %v3610, 0
      %v3618 = vsel %vm770, %v3611, 0
      %v3621 = vsel %vm770, %v3612, 0
      %v3624 = vsel %vm770, %v3613, 0
      %3626 = vmatprep.subr.mxu0 0.0
      %3627 = vmatpush1.msra.mxu0 %v850
      %3628 = vmatprep.subr.mxu0 0.0
      %3629 = vmatpush1.msra.mxu0 %v855
      %3630 = vmatprep.subr.mxu0 0.0
      %3631 = vmatpush1.msra.mxu0 %v860
      %3632 = vmatprep.subr.mxu0 0.0
      %3633 = vmatpush1.msra.mxu0 %v865
      %3634 = vmatprep.subr.mxu0 0.0
      %3635 = vmatpush1.msra.mxu0 0.0
      %3636 = vmatprep.subr.mxu0 0.0
      %3637 = vmatpush1.msra.mxu0 0.0
      %3638 = vmatprep.subr.mxu0 0.0
      %3639 = vmatpush1.msra.mxu0 0.0
      %3640 = vmatprep.subr.mxu0 0.0
      %3641 = vmatpush1.msra.mxu0 0.0
      %3642 = vmatprep.subr.mxu0 0.0
      %3643 = vmatpush1.msra.mxu0 0.0
      %3644 = vmatprep.subr.mxu0 0.0
      %3645 = vmatpush1.msra.mxu0 0.0
      %3646 = vmatprep.subr.mxu0 0.0
      %3647 = vmatpush1.msra.mxu0 0.0
      %3648 = vmatprep.subr.mxu0 0.0
      %3649 = vmatpush1.msra.mxu0 0.0
      %3650 = vmatprep.subr.mxu0 0.0
      %3651 = vmatpush1.msra.mxu0 0.0
      %3652 = vmatprep.subr.mxu0 0.0
      %3653 = vmatpush1.msra.mxu0 0.0
      %3654 = vmatprep.subr.mxu0 0.0
      %3655 = vmatpush1.msra.mxu0 0.0
      %3656 = vmatprep.subr.mxu0 0.0
      %3657 = vmatpush1.msra.mxu0 0.0
      %3658 = vmatprep.subr.mxu0 0.0
      %3659 = vmatpush1.msra.mxu0 0.0
      %3660 = vmatprep.subr.mxu0 0.0
      %3661 = vmatpush1.msra.mxu0 0.0
      %3662 = vmatprep.subr.mxu0 0.0
      %3663 = vmatpush1.msra.mxu0 0.0
      %3664 = vmatprep.subr.mxu0 0.0
      %3665 = vmatpush1.msra.mxu0 0.0
      %3666 = vmatprep.subr.mxu0 0.0
      %3667 = vmatpush1.msra.mxu0 0.0
      %3668 = vmatprep.subr.mxu0 0.0
      %3669 = vmatpush1.msra.mxu0 0.0
      %3670 = vmatprep.subr.mxu0 0.0
      %3671 = vmatpush1.msra.mxu0 0.0
      %3672 = vmatprep.subr.mxu0 0.0
      %3673 = vmatpush1.msra.mxu0 0.0
      %3674 = vmatprep.subr.mxu0 0.0
      %3675 = vmatpush1.msra.mxu0 0.0
      %3676 = vmatprep.subr.mxu0 0.0
      %3677 = vmatpush1.msra.mxu0 0.0
      %3678 = vmatprep.subr.mxu0 0.0
      %3679 = vmatpush1.msra.mxu0 0.0
      %3680 = vmatprep.subr.mxu0 0.0
      %3681 = vmatpush1.msra.mxu0 0.0
      %3682 = vmatprep.subr.mxu0 0.0
      %3683 = vmatpush1.msra.mxu0 0.0
      %3684 = vmatprep.subr.mxu0 0.0
      %3685 = vmatpush1.msra.mxu0 0.0
      %3686 = vmatprep.subr.mxu0 0.0
      %3687 = vmatpush1.msra.mxu0 0.0
      %3688 = vmatprep.subr.mxu0 0.0
      %3689 = vmatpush1.msra.mxu0 0.0
      %3690 = vmatprep.mubr.f32.mxu0 0.0
      %3691 = vmatmul.mubr.f32.gmra.mrb[0].mxu0 %v3615
      %v3692 = vpop.f32.mrb[0].mxu0
      %v3693 = vadd.f32 0.0, %v3692
      %v3694 = vpop.f32.mrb[0].mxu0
      %3695 = vmatprep.mubr.f32.mxu0 0.0
      %3696 = vmatmul.mubr.f32.gmra.mrb[0].mxu0 %v3618
      %v3697 = vpop.f32.mrb[0].mxu0
      %v3698 = vadd.f32 0.0, %v3697
      %v3699 = vpop.f32.mrb[0].mxu0
      %3700 = vmatprep.mubr.f32.mxu0 0.0
      %3701 = vmatmul.mubr.f32.gmra.mrb[0].mxu0 %v3621
      %v3702 = vpop.f32.mrb[0].mxu0
      %v3703 = vadd.f32 0.0, %v3702
      %v3704 = vpop.f32.mrb[0].mxu0
      %3705 = vmatprep.mubr.f32.mxu0 0.0
      %3706 = vmatmul.mubr.f32.gmra.mrb[0].mxu0 %v3624
      %v3707 = vpop.f32.mrb[0].mxu0
      %v3708 = vadd.f32 0.0, %v3707
      %v3709 = vpop.f32.mrb[0].mxu0
      %3710 = vdwg.mxu0
      %3711 = vrot.lane.b32.xlu0 %v1760, 104
      %v3712 = vpop.permute.xlu0 %3711
      %3713 = vrot.lane.b32.xlu0 %v1761, 104
      %v3714 = vpop.permute.xlu0 %3713
      %3715 = vrot.lane.b32.xlu0 %v1762, 104
      %v3716 = vpop.permute.xlu0 %3715
      %3717 = vrot.lane.b32.xlu0 %v1763, 104
      %v3718 = vpop.permute.xlu0 %3717
      %3719 = vrot.lane.b32.xlu0 %v1764, 104
      %v3720 = vpop.permute.xlu0 %3719
      %3721 = vrot.lane.b32.xlu0 %v1765, 104
      %v3722 = vpop.permute.xlu0 %3721
      %3723 = vrot.lane.b32.xlu0 %v1766, 104
      %v3724 = vpop.permute.xlu0 %3723
      %3725 = vrot.lane.b32.xlu0 %v1767, 104
      %v3726 = vpop.permute.xlu0 %3725
      %3727 = vrot.lane.b32.xlu0 %v1768, 104
      %v3728 = vpop.permute.xlu0 %3727
      %3729 = vrot.lane.b32.xlu0 %v1769, 104
      %v3730 = vpop.permute.xlu0 %3729
      %3731 = vrot.lane.b32.xlu0 %v1770, 104
      %v3732 = vpop.permute.xlu0 %3731
      %3733 = vrot.lane.b32.xlu0 %v1771, 104
      %v3734 = vpop.permute.xlu0 %3733
      %3735 = vrot.lane.b32.xlu0 %v1772, 104
      %v3736 = vpop.permute.xlu0 %3735
      %3737 = vrot.lane.b32.xlu0 %v1773, 104
      %v3738 = vpop.permute.xlu0 %3737
      %3739 = vrot.lane.b32.xlu0 %v1774, 104
      %v3740 = vpop.permute.xlu0 %3739
      %3741 = vrot.lane.b32.xlu0 %v1775, 104
      %v3742 = vpop.permute.xlu0 %3741
      %3743 = vrot.lane.b32.xlu0 %v1776, 104
      %v3744 = vpop.permute.xlu0 %3743
      %3745 = vrot.lane.b32.xlu0 %v1777, 104
      %v3746 = vpop.permute.xlu0 %3745
      %3747 = vrot.lane.b32.xlu0 %v1778, 104
      %v3748 = vpop.permute.xlu0 %3747
      %3749 = vrot.lane.b32.xlu0 %v1779, 104
      %v3750 = vpop.permute.xlu0 %3749
      %3751 = vrot.lane.b32.xlu0 %v1780, 104
      %v3752 = vpop.permute.xlu0 %3751
      %3753 = vrot.lane.b32.xlu0 %v1781, 104
      %v3754 = vpop.permute.xlu0 %3753
      %3755 = vrot.lane.b32.xlu0 %v1782, 104
      %v3756 = vpop.permute.xlu0 %3755
      %3757 = vrot.lane.b32.xlu0 %v1783, 104
      %v3758 = vpop.permute.xlu0 %3757
      %3759 = vrot.lane.b32.xlu0 %v1784, 104
      %v3760 = vpop.permute.xlu0 %3759
      %3761 = vrot.lane.b32.xlu0 %v1785, 104
      %v3762 = vpop.permute.xlu0 %3761
      %3763 = vrot.lane.b32.xlu0 %v1786, 104
      %v3764 = vpop.permute.xlu0 %3763
      %3765 = vrot.lane.b32.xlu0 %v1787, 104
      %v3766 = vpop.permute.xlu0 %3765
      %3767 = vrot.lane.b32.xlu0 %v1788, 104
      %v3768 = vpop.permute.xlu0 %3767
      %3769 = vrot.lane.b32.xlu0 %v1789, 104
      %v3770 = vpop.permute.xlu0 %3769
      %3771 = vrot.lane.b32.xlu0 %v1790, 104
      %v3772 = vpop.permute.xlu0 %3771
      %3773 = vrot.lane.b32.xlu0 %v1791, 104
      %v3774 = vpop.permute.xlu0 %3773
      %3775 = vrot.lane.b32.xlu0 %v1792, 104
      %v3776 = vpop.permute.xlu0 %3775
      %3777 = vrot.lane.b32.xlu0 %v1793, 104
      %v3778 = vpop.permute.xlu0 %3777
      %3779 = vrot.lane.b32.xlu0 %v1794, 104
      %v3780 = vpop.permute.xlu0 %3779
      %3781 = vrot.lane.b32.xlu0 %v1795, 104
      %v3782 = vpop.permute.xlu0 %3781
      %3783 = vrot.lane.b32.xlu0 %v1796, 104
      %v3784 = vpop.permute.xlu0 %3783
      %3785 = vrot.lane.b32.xlu0 %v1797, 104
      %v3786 = vpop.permute.xlu0 %3785
      %3787 = vrot.lane.b32.xlu0 %v1798, 104
      %v3788 = vpop.permute.xlu0 %3787
      %3789 = vrot.lane.b32.xlu0 %v1799, 104
      %v3790 = vpop.permute.xlu0 %3789
      %3791 = vrot.lane.b32.xlu0 %v1800, 104
      %v3792 = vpop.permute.xlu0 %3791
      %3793 = vrot.lane.b32.xlu0 %v1801, 104
      %v3794 = vpop.permute.xlu0 %3793
      %3795 = vrot.lane.b32.xlu0 %v1802, 104
      %v3796 = vpop.permute.xlu0 %3795
      %3797 = vrot.lane.b32.xlu0 %v1803, 104
      %v3798 = vpop.permute.xlu0 %3797
      %3799 = vrot.lane.b32.xlu0 %v1804, 104
      %v3800 = vpop.permute.xlu0 %3799
      %3801 = vrot.lane.b32.xlu0 %v1805, 104
      %v3802 = vpop.permute.xlu0 %3801
      %3803 = vrot.lane.b32.xlu0 %v1806, 104
      %v3804 = vpop.permute.xlu0 %3803
      %3805 = vrot.lane.b32.xlu0 %v1807, 104
      %v3806 = vpop.permute.xlu0 %3805
      %3807 = vrot.lane.b32.xlu0 %v1808, 104
      %v3808 = vpop.permute.xlu0 %3807
      %3809 = vrot.lane.b32.xlu0 %v1809, 104
      %v3810 = vpop.permute.xlu0 %3809
      %3811 = vrot.lane.b32.xlu0 %v1810, 104
      %v3812 = vpop.permute.xlu0 %3811
      %3813 = vrot.lane.b32.xlu0 %v1811, 104
      %v3814 = vpop.permute.xlu0 %3813
      %3815 = vrot.lane.b32.xlu0 %v1812, 104
      %v3816 = vpop.permute.xlu0 %3815
      %3817 = vrot.lane.b32.xlu0 %v1813, 104
      %v3818 = vpop.permute.xlu0 %3817
      %3819 = vrot.lane.b32.xlu0 %v1814, 104
      %v3820 = vpop.permute.xlu0 %3819
      %3821 = vrot.lane.b32.xlu0 %v1815, 104
      %v3822 = vpop.permute.xlu0 %3821
      %3823 = vrot.lane.b32.xlu0 %v1816, 104
      %v3824 = vpop.permute.xlu0 %3823
      %3825 = vrot.lane.b32.xlu0 %v1817, 104
      %v3826 = vpop.permute.xlu0 %3825
      %3827 = vrot.lane.b32.xlu0 %v1818, 104
      %v3828 = vpop.permute.xlu0 %3827
      %3829 = vrot.lane.b32.xlu0 %v1819, 104
      %v3830 = vpop.permute.xlu0 %3829
      %3831 = vrot.lane.b32.xlu0 %v1820, 104
      %v3832 = vpop.permute.xlu0 %3831
      %3833 = vrot.lane.b32.xlu0 %v1821, 104
      %v3834 = vpop.permute.xlu0 %3833
      %3835 = vrot.lane.b32.xlu0 %v1822, 104
      %v3836 = vpop.permute.xlu0 %3835
      %3837 = vrot.lane.b32.xlu0 %v1823, 104
      %v3838 = vpop.permute.xlu0 %3837
      %3839 = vrot.lane.b32.xlu0 %v1824, 104
      %v3840 = vpop.permute.xlu0 %3839
      %3841 = vrot.lane.b32.xlu0 %v1825, 104
      %v3842 = vpop.permute.xlu0 %3841
      %3843 = vrot.lane.b32.xlu0 %v1826, 104
      %v3844 = vpop.permute.xlu0 %3843
      %3845 = vrot.lane.b32.xlu0 %v1827, 104
      %v3846 = vpop.permute.xlu0 %3845
      %3847 = vrot.lane.b32.xlu0 %v1828, 104
      %v3848 = vpop.permute.xlu0 %3847
      %3849 = vrot.lane.b32.xlu0 %v1829, 104
      %v3850 = vpop.permute.xlu0 %3849
      %3851 = vrot.lane.b32.xlu0 %v1830, 104
      %v3852 = vpop.permute.xlu0 %3851
      %3853 = vrot.lane.b32.xlu0 %v1831, 104
      %v3854 = vpop.permute.xlu0 %3853
      %3855 = vrot.lane.b32.xlu0 %v1832, 104
      %v3856 = vpop.permute.xlu0 %3855
      %3857 = vrot.lane.b32.xlu0 %v1833, 104
      %v3858 = vpop.permute.xlu0 %3857
      %3859 = vrot.lane.b32.xlu0 %v1834, 104
      %v3860 = vpop.permute.xlu0 %3859
      %3861 = vrot.lane.b32.xlu0 %v1835, 104
      %v3862 = vpop.permute.xlu0 %3861
      %3863 = vrot.lane.b32.xlu0 %v1836, 104
      %v3864 = vpop.permute.xlu0 %3863
      %3865 = vrot.lane.b32.xlu0 %v1837, 104
      %v3866 = vpop.permute.xlu0 %3865
      %3867 = vrot.lane.b32.xlu0 %v1838, 104
      %v3868 = vpop.permute.xlu0 %3867
      %3869 = vrot.lane.b32.xlu0 %v1839, 104
      %v3870 = vpop.permute.xlu0 %3869
      %3871 = vrot.lane.b32.xlu0 %v1840, 104
      %v3872 = vpop.permute.xlu0 %3871
      %3873 = vrot.lane.b32.xlu0 %v1841, 104
      %v3874 = vpop.permute.xlu0 %3873
      %3875 = vrot.lane.b32.xlu0 %v1842, 104
      %v3876 = vpop.permute.xlu0 %3875
      %3877 = vrot.lane.b32.xlu0 %v1843, 104
      %v3878 = vpop.permute.xlu0 %3877
      %3879 = vrot.lane.b32.xlu0 %v1844, 104
      %v3880 = vpop.permute.xlu0 %3879
      %3881 = vrot.lane.b32.xlu0 %v1845, 104
      %v3882 = vpop.permute.xlu0 %3881
      %3883 = vrot.lane.b32.xlu0 %v1846, 104
      %v3884 = vpop.permute.xlu0 %3883
      %3885 = vrot.lane.b32.xlu0 %v1847, 104
      %v3886 = vpop.permute.xlu0 %3885
      %3887 = vrot.lane.b32.xlu0 %v1848, 104
      %v3888 = vpop.permute.xlu0 %3887
      %3889 = vrot.lane.b32.xlu0 %v1849, 104
      %v3890 = vpop.permute.xlu0 %3889
      %3891 = vrot.lane.b32.xlu0 %v1850, 104
      %v3892 = vpop.permute.xlu0 %3891
      %3893 = vrot.lane.b32.xlu0 %v1851, 104
      %v3894 = vpop.permute.xlu0 %3893
      %3895 = vrot.lane.b32.xlu0 %v1852, 104
      %v3896 = vpop.permute.xlu0 %3895
      %3897 = vrot.lane.b32.xlu0 %v1853, 104
      %v3898 = vpop.permute.xlu0 %3897
      %3899 = vrot.lane.b32.xlu0 %v1854, 104
      %v3900 = vpop.permute.xlu0 %3899
      %3901 = vrot.lane.b32.xlu0 %v1855, 104
      %v3902 = vpop.permute.xlu0 %3901
      %3903 = vrot.lane.b32.xlu0 %v1856, 104
      %v3904 = vpop.permute.xlu0 %3903
      %3905 = vrot.lane.b32.xlu0 %v1857, 104
      %v3906 = vpop.permute.xlu0 %3905
      %3907 = vrot.lane.b32.xlu0 %v1858, 104
      %v3908 = vpop.permute.xlu0 %3907
      %3909 = vrot.lane.b32.xlu0 %v1859, 104
      %v3910 = vpop.permute.xlu0 %3909
      %3911 = vrot.lane.b32.xlu0 %v1860, 104
      %v3912 = vpop.permute.xlu0 %3911
      %3913 = vrot.lane.b32.xlu0 %v1861, 104
      %v3914 = vpop.permute.xlu0 %3913
      %3915 = vrot.lane.b32.xlu0 %v1862, 104
      %v3916 = vpop.permute.xlu0 %3915
      %3917 = vrot.lane.b32.xlu0 %v1863, 104
      %v3918 = vpop.permute.xlu0 %3917
      %3919 = vrot.lane.b32.xlu0 %v1864, 104
      %v3920 = vpop.permute.xlu0 %3919
      %3921 = vrot.lane.b32.xlu0 %v1865, 104
      %v3922 = vpop.permute.xlu0 %3921
      %3923 = vrot.lane.b32.xlu0 %v1866, 104
      %v3924 = vpop.permute.xlu0 %3923
      %3925 = vrot.lane.b32.xlu0 %v1867, 104
      %v3926 = vpop.permute.xlu0 %3925
      %3927 = vrot.lane.b32.xlu0 %v1868, 104
      %v3928 = vpop.permute.xlu0 %3927
      %3929 = vrot.lane.b32.xlu0 %v1869, 104
      %v3930 = vpop.permute.xlu0 %3929
      %3931 = vrot.lane.b32.xlu0 %v1870, 104
      %v3932 = vpop.permute.xlu0 %3931
      %3933 = vrot.lane.b32.xlu0 %v1871, 104
      %v3934 = vpop.permute.xlu0 %3933
      %3935 = vrot.lane.b32.xlu0 %v1872, 104
      %v3936 = vpop.permute.xlu0 %3935
      %3937 = vrot.lane.b32.xlu0 %v1873, 104
      %v3938 = vpop.permute.xlu0 %3937
      %3939 = vrot.lane.b32.xlu0 %v1874, 104
      %v3940 = vpop.permute.xlu0 %3939
      %3941 = vrot.lane.b32.xlu0 %v1875, 104
      %v3942 = vpop.permute.xlu0 %3941
      %3943 = vrot.lane.b32.xlu0 %v1876, 104
      %v3944 = vpop.permute.xlu0 %3943
      %3945 = vrot.lane.b32.xlu0 %v1877, 104
      %v3946 = vpop.permute.xlu0 %3945
      %3947 = vrot.lane.b32.xlu0 %v1878, 104
      %v3948 = vpop.permute.xlu0 %3947
      %3949 = vrot.lane.b32.xlu0 %v1879, 104
      %v3950 = vpop.permute.xlu0 %3949
      %3951 = vrot.lane.b32.xlu0 %v1880, 104
      %v3952 = vpop.permute.xlu0 %3951
      %3953 = vrot.lane.b32.xlu0 %v1881, 104
      %v3954 = vpop.permute.xlu0 %3953
      %3955 = vrot.lane.b32.xlu0 %v1882, 104
      %v3956 = vpop.permute.xlu0 %3955
      %3957 = vrot.lane.b32.xlu0 %v1883, 104
      %v3958 = vpop.permute.xlu0 %3957
      %3959 = vrot.lane.b32.xlu0 %v1884, 104
      %v3960 = vpop.permute.xlu0 %3959
      %3961 = vrot.lane.b32.xlu0 %v1885, 104
      %v3962 = vpop.permute.xlu0 %3961
      %3963 = vrot.lane.b32.xlu0 %v1886, 104
      %v3964 = vpop.permute.xlu0 %3963
      %3965 = vrot.lane.b32.xlu0 %v1887, 104
      %v3966 = vpop.permute.xlu0 %3965
      %v4095 = vsel %vm2400, %v3712, 0.0
      %4096 = vadd.xlane.f32.xlu0 %v4095
      %v4097 = vpop.xlane.xlu0 %4096
      %v4098 = vsel %vm2400, %v3714, 0.0
      %4099 = vadd.xlane.f32.xlu0 %v4098
      %v4100 = vpop.xlane.xlu0 %4099
      %v4101 = vsel %vm2400, %v3716, 0.0
      %4102 = vadd.xlane.f32.xlu0 %v4101
      %v4103 = vpop.xlane.xlu0 %4102
      %v4104 = vsel %vm2400, %v3718, 0.0
      %4105 = vadd.xlane.f32.xlu0 %v4104
      %v4106 = vpop.xlane.xlu0 %4105
      %v4107 = vsel %vm2400, %v3720, 0.0
      %4108 = vadd.xlane.f32.xlu0 %v4107
      %v4109 = vpop.xlane.xlu0 %4108
      %v4110 = vsel %vm2400, %v3722, 0.0
      %4111 = vadd.xlane.f32.xlu0 %v4110
      %v4112 = vpop.xlane.xlu0 %4111
      %v4113 = vsel %vm2400, %v3724, 0.0
      %4114 = vadd.xlane.f32.xlu0 %v4113
      %v4115 = vpop.xlane.xlu0 %4114
      %v4116 = vsel %vm2400, %v3726, 0.0
      %4117 = vadd.xlane.f32.xlu0 %v4116
      %v4118 = vpop.xlane.xlu0 %4117
      %v4119 = vsel %vm2400, %v3728, 0.0
      %4120 = vadd.xlane.f32.xlu0 %v4119
      %v4121 = vpop.xlane.xlu0 %4120
      %v4122 = vsel %vm2400, %v3730, 0.0
      %4123 = vadd.xlane.f32.xlu0 %v4122
      %v4124 = vpop.xlane.xlu0 %4123
      %v4125 = vsel %vm2400, %v3732, 0.0
      %4126 = vadd.xlane.f32.xlu0 %v4125
      %v4127 = vpop.xlane.xlu0 %4126
      %v4128 = vsel %vm2400, %v3734, 0.0
      %4129 = vadd.xlane.f32.xlu0 %v4128
      %v4130 = vpop.xlane.xlu0 %4129
      %v4131 = vsel %vm2400, %v3736, 0.0
      %4132 = vadd.xlane.f32.xlu0 %v4131
      %v4133 = vpop.xlane.xlu0 %4132
      %v4134 = vsel %vm2400, %v3738, 0.0
      %4135 = vadd.xlane.f32.xlu0 %v4134
      %v4136 = vpop.xlane.xlu0 %4135
      %v4137 = vsel %vm2400, %v3740, 0.0
      %4138 = vadd.xlane.f32.xlu0 %v4137
      %v4139 = vpop.xlane.xlu0 %4138
      %v4140 = vsel %vm2400, %v3742, 0.0
      %4141 = vadd.xlane.f32.xlu0 %v4140
      %v4142 = vpop.xlane.xlu0 %4141
      %v4143 = vsel %vm2400, %v3744, 0.0
      %4144 = vadd.xlane.f32.xlu0 %v4143
      %v4145 = vpop.xlane.xlu0 %4144
      %v4146 = vsel %vm2400, %v3746, 0.0
      %4147 = vadd.xlane.f32.xlu0 %v4146
      %v4148 = vpop.xlane.xlu0 %4147
      %v4149 = vsel %vm2400, %v3748, 0.0
      %4150 = vadd.xlane.f32.xlu0 %v4149
      %v4151 = vpop.xlane.xlu0 %4150
      %v4152 = vsel %vm2400, %v3750, 0.0
      %4153 = vadd.xlane.f32.xlu0 %v4152
      %v4154 = vpop.xlane.xlu0 %4153
      %v4155 = vsel %vm2400, %v3752, 0.0
      %4156 = vadd.xlane.f32.xlu0 %v4155
      %v4157 = vpop.xlane.xlu0 %4156
      %v4158 = vsel %vm2400, %v3754, 0.0
      %4159 = vadd.xlane.f32.xlu0 %v4158
      %v4160 = vpop.xlane.xlu0 %4159
      %v4161 = vsel %vm2400, %v3756, 0.0
      %4162 = vadd.xlane.f32.xlu0 %v4161
      %v4163 = vpop.xlane.xlu0 %4162
      %v4164 = vsel %vm2400, %v3758, 0.0
      %4165 = vadd.xlane.f32.xlu0 %v4164
      %v4166 = vpop.xlane.xlu0 %4165
      %v4167 = vsel %vm2400, %v3760, 0.0
      %4168 = vadd.xlane.f32.xlu0 %v4167
      %v4169 = vpop.xlane.xlu0 %4168
      %v4170 = vsel %vm2400, %v3762, 0.0
      %4171 = vadd.xlane.f32.xlu0 %v4170
      %v4172 = vpop.xlane.xlu0 %4171
      %v4173 = vsel %vm2400, %v3764, 0.0
      %4174 = vadd.xlane.f32.xlu0 %v4173
      %v4175 = vpop.xlane.xlu0 %4174
      %v4176 = vsel %vm2400, %v3766, 0.0
      %4177 = vadd.xlane.f32.xlu0 %v4176
      %v4178 = vpop.xlane.xlu0 %4177
      %v4179 = vsel %vm2400, %v3768, 0.0
      %4180 = vadd.xlane.f32.xlu0 %v4179
      %v4181 = vpop.xlane.xlu0 %4180
      %v4182 = vsel %vm2400, %v3770, 0.0
      %4183 = vadd.xlane.f32.xlu0 %v4182
      %v4184 = vpop.xlane.xlu0 %4183
      %v4185 = vsel %vm2400, %v3772, 0.0
      %4186 = vadd.xlane.f32.xlu0 %v4185
      %v4187 = vpop.xlane.xlu0 %4186
      %v4188 = vsel %vm2400, %v3774, 0.0
      %4189 = vadd.xlane.f32.xlu0 %v4188
      %v4190 = vpop.xlane.xlu0 %4189
      %v4191 = vsel %vm2400, %v3776, 0.0
      %4192 = vadd.xlane.f32.xlu0 %v4191
      %v4193 = vpop.xlane.xlu0 %4192
      %v4194 = vsel %vm2400, %v3778, 0.0
      %4195 = vadd.xlane.f32.xlu0 %v4194
      %v4196 = vpop.xlane.xlu0 %4195
      %v4197 = vsel %vm2400, %v3780, 0.0
      %4198 = vadd.xlane.f32.xlu0 %v4197
      %v4199 = vpop.xlane.xlu0 %4198
      %v4200 = vsel %vm2400, %v3782, 0.0
      %4201 = vadd.xlane.f32.xlu0 %v4200
      %v4202 = vpop.xlane.xlu0 %4201
      %v4203 = vsel %vm2400, %v3784, 0.0
      %4204 = vadd.xlane.f32.xlu0 %v4203
      %v4205 = vpop.xlane.xlu0 %4204
      %v4206 = vsel %vm2400, %v3786, 0.0
      %4207 = vadd.xlane.f32.xlu0 %v4206
      %v4208 = vpop.xlane.xlu0 %4207
      %v4209 = vsel %vm2400, %v3788, 0.0
      %4210 = vadd.xlane.f32.xlu0 %v4209
      %v4211 = vpop.xlane.xlu0 %4210
      %v4212 = vsel %vm2400, %v3790, 0.0
      %4213 = vadd.xlane.f32.xlu0 %v4212
      %v4214 = vpop.xlane.xlu0 %4213
      %v4215 = vsel %vm2400, %v3792, 0.0
      %4216 = vadd.xlane.f32.xlu0 %v4215
      %v4217 = vpop.xlane.xlu0 %4216
      %v4218 = vsel %vm2400, %v3794, 0.0
      %4219 = vadd.xlane.f32.xlu0 %v4218
      %v4220 = vpop.xlane.xlu0 %4219
      %v4221 = vsel %vm2400, %v3796, 0.0
      %4222 = vadd.xlane.f32.xlu0 %v4221
      %v4223 = vpop.xlane.xlu0 %4222
      %v4224 = vsel %vm2400, %v3798, 0.0
      %4225 = vadd.xlane.f32.xlu0 %v4224
      %v4226 = vpop.xlane.xlu0 %4225
      %v4227 = vsel %vm2400, %v3800, 0.0
      %4228 = vadd.xlane.f32.xlu0 %v4227
      %v4229 = vpop.xlane.xlu0 %4228
      %v4230 = vsel %vm2400, %v3802, 0.0
      %4231 = vadd.xlane.f32.xlu0 %v4230
      %v4232 = vpop.xlane.xlu0 %4231
      %v4233 = vsel %vm2400, %v3804, 0.0
      %4234 = vadd.xlane.f32.xlu0 %v4233
      %v4235 = vpop.xlane.xlu0 %4234
      %v4236 = vsel %vm2400, %v3806, 0.0
      %4237 = vadd.xlane.f32.xlu0 %v4236
      %v4238 = vpop.xlane.xlu0 %4237
      %v4239 = vsel %vm2400, %v3808, 0.0
      %4240 = vadd.xlane.f32.xlu0 %v4239
      %v4241 = vpop.xlane.xlu0 %4240
      %v4242 = vsel %vm2400, %v3810, 0.0
      %4243 = vadd.xlane.f32.xlu0 %v4242
      %v4244 = vpop.xlane.xlu0 %4243
      %v4245 = vsel %vm2400, %v3812, 0.0
      %4246 = vadd.xlane.f32.xlu0 %v4245
      %v4247 = vpop.xlane.xlu0 %4246
      %v4248 = vsel %vm2400, %v3814, 0.0
      %4249 = vadd.xlane.f32.xlu0 %v4248
      %v4250 = vpop.xlane.xlu0 %4249
      %v4251 = vsel %vm2400, %v3816, 0.0
      %4252 = vadd.xlane.f32.xlu0 %v4251
      %v4253 = vpop.xlane.xlu0 %4252
      %v4254 = vsel %vm2400, %v3818, 0.0
      %4255 = vadd.xlane.f32.xlu0 %v4254
      %v4256 = vpop.xlane.xlu0 %4255
      %v4257 = vsel %vm2400, %v3820, 0.0
      %4258 = vadd.xlane.f32.xlu0 %v4257
      %v4259 = vpop.xlane.xlu0 %4258
      %v4260 = vsel %vm2400, %v3822, 0.0
      %4261 = vadd.xlane.f32.xlu0 %v4260
      %v4262 = vpop.xlane.xlu0 %4261
      %v4263 = vsel %vm2400, %v3824, 0.0
      %4264 = vadd.xlane.f32.xlu0 %v4263
      %v4265 = vpop.xlane.xlu0 %4264
      %v4266 = vsel %vm2400, %v3826, 0.0
      %4267 = vadd.xlane.f32.xlu0 %v4266
      %v4268 = vpop.xlane.xlu0 %4267
      %v4269 = vsel %vm2400, %v3828, 0.0
      %4270 = vadd.xlane.f32.xlu0 %v4269
      %v4271 = vpop.xlane.xlu0 %4270
      %v4272 = vsel %vm2400, %v3830, 0.0
      %4273 = vadd.xlane.f32.xlu0 %v4272
      %v4274 = vpop.xlane.xlu0 %4273
      %v4275 = vsel %vm2400, %v3832, 0.0
      %4276 = vadd.xlane.f32.xlu0 %v4275
      %v4277 = vpop.xlane.xlu0 %4276
      %v4278 = vsel %vm2400, %v3834, 0.0
      %4279 = vadd.xlane.f32.xlu0 %v4278
      %v4280 = vpop.xlane.xlu0 %4279
      %v4281 = vsel %vm2400, %v3836, 0.0
      %4282 = vadd.xlane.f32.xlu0 %v4281
      %v4283 = vpop.xlane.xlu0 %4282
      %v4284 = vsel %vm2400, %v3838, 0.0
      %4285 = vadd.xlane.f32.xlu0 %v4284
      %v4286 = vpop.xlane.xlu0 %4285
      %v4287 = vsel %vm2400, %v3840, 0.0
      %4288 = vadd.xlane.f32.xlu0 %v4287
      %v4289 = vpop.xlane.xlu0 %4288
      %v4290 = vsel %vm2400, %v3842, 0.0
      %4291 = vadd.xlane.f32.xlu0 %v4290
      %v4292 = vpop.xlane.xlu0 %4291
      %v4293 = vsel %vm2400, %v3844, 0.0
      %4294 = vadd.xlane.f32.xlu0 %v4293
      %v4295 = vpop.xlane.xlu0 %4294
      %v4296 = vsel %vm2400, %v3846, 0.0
      %4297 = vadd.xlane.f32.xlu0 %v4296
      %v4298 = vpop.xlane.xlu0 %4297
      %v4299 = vsel %vm2400, %v3848, 0.0
      %4300 = vadd.xlane.f32.xlu0 %v4299
      %v4301 = vpop.xlane.xlu0 %4300
      %v4302 = vsel %vm2400, %v3850, 0.0
      %4303 = vadd.xlane.f32.xlu0 %v4302
      %v4304 = vpop.xlane.xlu0 %4303
      %v4305 = vsel %vm2400, %v3852, 0.0
      %4306 = vadd.xlane.f32.xlu0 %v4305
      %v4307 = vpop.xlane.xlu0 %4306
      %v4308 = vsel %vm2400, %v3854, 0.0
      %4309 = vadd.xlane.f32.xlu0 %v4308
      %v4310 = vpop.xlane.xlu0 %4309
      %v4311 = vsel %vm2400, %v3856, 0.0
      %4312 = vadd.xlane.f32.xlu0 %v4311
      %v4313 = vpop.xlane.xlu0 %4312
      %v4314 = vsel %vm2400, %v3858, 0.0
      %4315 = vadd.xlane.f32.xlu0 %v4314
      %v4316 = vpop.xlane.xlu0 %4315
      %v4317 = vsel %vm2400, %v3860, 0.0
      %4318 = vadd.xlane.f32.xlu0 %v4317
      %v4319 = vpop.xlane.xlu0 %4318
      %v4320 = vsel %vm2400, %v3862, 0.0
      %4321 = vadd.xlane.f32.xlu0 %v4320
      %v4322 = vpop.xlane.xlu0 %4321
      %v4323 = vsel %vm2400, %v3864, 0.0
      %4324 = vadd.xlane.f32.xlu0 %v4323
      %v4325 = vpop.xlane.xlu0 %4324
      %v4326 = vsel %vm2400, %v3866, 0.0
      %4327 = vadd.xlane.f32.xlu0 %v4326
      %v4328 = vpop.xlane.xlu0 %4327
      %v4329 = vsel %vm2400, %v3868, 0.0
      %4330 = vadd.xlane.f32.xlu0 %v4329
      %v4331 = vpop.xlane.xlu0 %4330
      %v4332 = vsel %vm2400, %v3870, 0.0
      %4333 = vadd.xlane.f32.xlu0 %v4332
      %v4334 = vpop.xlane.xlu0 %4333
      %v4335 = vsel %vm2400, %v3872, 0.0
      %4336 = vadd.xlane.f32.xlu0 %v4335
      %v4337 = vpop.xlane.xlu0 %4336
      %v4338 = vsel %vm2400, %v3874, 0.0
      %4339 = vadd.xlane.f32.xlu0 %v4338
      %v4340 = vpop.xlane.xlu0 %4339
      %v4341 = vsel %vm2400, %v3876, 0.0
      %4342 = vadd.xlane.f32.xlu0 %v4341
      %v4343 = vpop.xlane.xlu0 %4342
      %v4344 = vsel %vm2400, %v3878, 0.0
      %4345 = vadd.xlane.f32.xlu0 %v4344
      %v4346 = vpop.xlane.xlu0 %4345
      %v4347 = vsel %vm2400, %v3880, 0.0
      %4348 = vadd.xlane.f32.xlu0 %v4347
      %v4349 = vpop.xlane.xlu0 %4348
      %v4350 = vsel %vm2400, %v3882, 0.0
      %4351 = vadd.xlane.f32.xlu0 %v4350
      %v4352 = vpop.xlane.xlu0 %4351
      %v4353 = vsel %vm2400, %v3884, 0.0
      %4354 = vadd.xlane.f32.xlu0 %v4353
      %v4355 = vpop.xlane.xlu0 %4354
      %v4356 = vsel %vm2400, %v3886, 0.0
      %4357 = vadd.xlane.f32.xlu0 %v4356
      %v4358 = vpop.xlane.xlu0 %4357
      %v4359 = vsel %vm2400, %v3888, 0.0
      %4360 = vadd.xlane.f32.xlu0 %v4359
      %v4361 = vpop.xlane.xlu0 %4360
      %v4362 = vsel %vm2400, %v3890, 0.0
      %4363 = vadd.xlane.f32.xlu0 %v4362
      %v4364 = vpop.xlane.xlu0 %4363
      %v4365 = vsel %vm2400, %v3892, 0.0
      %4366 = vadd.xlane.f32.xlu0 %v4365
      %v4367 = vpop.xlane.xlu0 %4366
      %v4368 = vsel %vm2400, %v3894, 0.0
      %4369 = vadd.xlane.f32.xlu0 %v4368
      %v4370 = vpop.xlane.xlu0 %4369
      %v4371 = vsel %vm2400, %v3896, 0.0
      %4372 = vadd.xlane.f32.xlu0 %v4371
      %v4373 = vpop.xlane.xlu0 %4372
      %v4374 = vsel %vm2400, %v3898, 0.0
      %4375 = vadd.xlane.f32.xlu0 %v4374
      %v4376 = vpop.xlane.xlu0 %4375
      %v4377 = vsel %vm2400, %v3900, 0.0
      %4378 = vadd.xlane.f32.xlu0 %v4377
      %v4379 = vpop.xlane.xlu0 %4378
      %v4380 = vsel %vm2400, %v3902, 0.0
      %4381 = vadd.xlane.f32.xlu0 %v4380
      %v4382 = vpop.xlane.xlu0 %4381
      %v4383 = vsel %vm2400, %v3904, 0.0
      %4384 = vadd.xlane.f32.xlu0 %v4383
      %v4385 = vpop.xlane.xlu0 %4384
      %v4386 = vsel %vm2400, %v3906, 0.0
      %4387 = vadd.xlane.f32.xlu0 %v4386
      %v4388 = vpop.xlane.xlu0 %4387
      %v4389 = vsel %vm2400, %v3908, 0.0
      %4390 = vadd.xlane.f32.xlu0 %v4389
      %v4391 = vpop.xlane.xlu0 %4390
      %v4392 = vsel %vm2400, %v3910, 0.0
      %4393 = vadd.xlane.f32.xlu0 %v4392
      %v4394 = vpop.xlane.xlu0 %4393
      %v4395 = vsel %vm2400, %v3912, 0.0
      %4396 = vadd.xlane.f32.xlu0 %v4395
      %v4397 = vpop.xlane.xlu0 %4396
      %v4398 = vsel %vm2400, %v3914, 0.0
      %4399 = vadd.xlane.f32.xlu0 %v4398
      %v4400 = vpop.xlane.xlu0 %4399
      %v4401 = vsel %vm2400, %v3916, 0.0
      %4402 = vadd.xlane.f32.xlu0 %v4401
      %v4403 = vpop.xlane.xlu0 %4402
      %v4404 = vsel %vm2400, %v3918, 0.0
      %4405 = vadd.xlane.f32.xlu0 %v4404
      %v4406 = vpop.xlane.xlu0 %4405
      %v4407 = vsel %vm2400, %v3920, 0.0
      %4408 = vadd.xlane.f32.xlu0 %v4407
      %v4409 = vpop.xlane.xlu0 %4408
      %v4410 = vsel %vm2400, %v3922, 0.0
      %4411 = vadd.xlane.f32.xlu0 %v4410
      %v4412 = vpop.xlane.xlu0 %4411
      %v4413 = vsel %vm2400, %v3924, 0.0
      %4414 = vadd.xlane.f32.xlu0 %v4413
      %v4415 = vpop.xlane.xlu0 %4414
      %v4416 = vsel %vm2400, %v3926, 0.0
      %4417 = vadd.xlane.f32.xlu0 %v4416
      %v4418 = vpop.xlane.xlu0 %4417
      %v4419 = vsel %vm2400, %v3928, 0.0
      %4420 = vadd.xlane.f32.xlu0 %v4419
      %v4421 = vpop.xlane.xlu0 %4420
      %v4422 = vsel %vm2400, %v3930, 0.0
      %4423 = vadd.xlane.f32.xlu0 %v4422
      %v4424 = vpop.xlane.xlu0 %4423
      %v4425 = vsel %vm2400, %v3932, 0.0
      %4426 = vadd.xlane.f32.xlu0 %v4425
      %v4427 = vpop.xlane.xlu0 %4426
      %v4428 = vsel %vm2400, %v3934, 0.0
      %4429 = vadd.xlane.f32.xlu0 %v4428
      %v4430 = vpop.xlane.xlu0 %4429
      %v4431 = vsel %vm2400, %v3936, 0.0
      %4432 = vadd.xlane.f32.xlu0 %v4431
      %v4433 = vpop.xlane.xlu0 %4432
      %v4434 = vsel %vm2400, %v3938, 0.0
      %4435 = vadd.xlane.f32.xlu0 %v4434
      %v4436 = vpop.xlane.xlu0 %4435
      %v4437 = vsel %vm2400, %v3940, 0.0
      %4438 = vadd.xlane.f32.xlu0 %v4437
      %v4439 = vpop.xlane.xlu0 %4438
      %v4440 = vsel %vm2400, %v3942, 0.0
      %4441 = vadd.xlane.f32.xlu0 %v4440
      %v4442 = vpop.xlane.xlu0 %4441
      %v4443 = vsel %vm2400, %v3944, 0.0
      %4444 = vadd.xlane.f32.xlu0 %v4443
      %v4445 = vpop.xlane.xlu0 %4444
      %v4446 = vsel %vm2400, %v3946, 0.0
      %4447 = vadd.xlane.f32.xlu0 %v4446
      %v4448 = vpop.xlane.xlu0 %4447
      %v4449 = vsel %vm2400, %v3948, 0.0
      %4450 = vadd.xlane.f32.xlu0 %v4449
      %v4451 = vpop.xlane.xlu0 %4450
      %v4452 = vsel %vm2400, %v3950, 0.0
      %4453 = vadd.xlane.f32.xlu0 %v4452
      %v4454 = vpop.xlane.xlu0 %4453
      %v4455 = vsel %vm2400, %v3952, 0.0
      %4456 = vadd.xlane.f32.xlu0 %v4455
      %v4457 = vpop.xlane.xlu0 %4456
      %v4458 = vsel %vm2400, %v3954, 0.0
      %4459 = vadd.xlane.f32.xlu0 %v4458
      %v4460 = vpop.xlane.xlu0 %4459
      %v4461 = vsel %vm2400, %v3956, 0.0
      %4462 = vadd.xlane.f32.xlu0 %v4461
      %v4463 = vpop.xlane.xlu0 %4462
      %v4464 = vsel %vm2400, %v3958, 0.0
      %4465 = vadd.xlane.f32.xlu0 %v4464
      %v4466 = vpop.xlane.xlu0 %4465
      %v4467 = vsel %vm2400, %v3960, 0.0
      %4468 = vadd.xlane.f32.xlu0 %v4467
      %v4469 = vpop.xlane.xlu0 %4468
      %v4470 = vsel %vm2400, %v3962, 0.0
      %4471 = vadd.xlane.f32.xlu0 %v4470
      %v4472 = vpop.xlane.xlu0 %4471
      %v4473 = vsel %vm2400, %v3964, 0.0
      %4474 = vadd.xlane.f32.xlu0 %v4473
      %v4475 = vpop.xlane.xlu0 %4474
      %v4476 = vsel %vm2400, %v3966, 0.0
      %4477 = vadd.xlane.f32.xlu0 %v4476
      %v4478 = vpop.xlane.xlu0 %4477
      %v4607 = vlaneseq
      %v4608 = vshrl.u32 %v4607, 7
      %v4609 = vsub.s32 %v749, %v4608
      %v4610 = vrot.slane %v4097, %v4609
      %v4611 = vlaneseq
      %v4612 = vshrl.u32 %v4611, 7
      %v4613 = vsub.s32 %v2917, %v4612
      %v4614 = vrot.slane %v4100, %v4613
      %v4615 = vsel %vm2922, %v4614, %v4610
      %v4616 = vlaneseq
      %v4617 = vshrl.u32 %v4616, 7
      %v4618 = vsub.s32 %v2924, %v4617
      %v4619 = vrot.slane %v4103, %v4618
      %v4620 = vsel %vm2929, %v4619, %v4615
      %v4621 = vlaneseq
      %v4622 = vshrl.u32 %v4621, 7
      %v4623 = vsub.s32 %v2931, %v4622
      %v4624 = vrot.slane %v4106, %v4623
      %v4625 = vsel %vm2936, %v4624, %v4620
      %v4626 = vlaneseq
      %v4627 = vshrl.u32 %v4626, 7
      %v4628 = vsub.s32 %v749, %v4627
      %v4629 = vrot.slane %v4109, %v4628
      %v4630 = vlaneseq
      %v4631 = vshrl.u32 %v4630, 7
      %v4632 = vsub.s32 %v2917, %v4631
      %v4633 = vrot.slane %v4112, %v4632
      %v4634 = vsel %vm2922, %v4633, %v4629
      %v4635 = vlaneseq
      %v4636 = vshrl.u32 %v4635, 7
      %v4637 = vsub.s32 %v2924, %v4636
      %v4638 = vrot.slane %v4115, %v4637
      %v4639 = vsel %vm2929, %v4638, %v4634
      %v4640 = vlaneseq
      %v4641 = vshrl.u32 %v4640, 7
      %v4642 = vsub.s32 %v2931, %v4641
      %v4643 = vrot.slane %v4118, %v4642
      %v4644 = vsel %vm2936, %v4643, %v4639
      %v4645 = vlaneseq
      %v4646 = vshrl.u32 %v4645, 7
      %v4647 = vsub.s32 %v749, %v4646
      %v4648 = vrot.slane %v4121, %v4647
      %v4649 = vlaneseq
      %v4650 = vshrl.u32 %v4649, 7
      %v4651 = vsub.s32 %v2917, %v4650
      %v4652 = vrot.slane %v4124, %v4651
      %v4653 = vsel %vm2922, %v4652, %v4648
      %v4654 = vlaneseq
      %v4655 = vshrl.u32 %v4654, 7
      %v4656 = vsub.s32 %v2924, %v4655
      %v4657 = vrot.slane %v4127, %v4656
      %v4658 = vsel %vm2929, %v4657, %v4653
      %v4659 = vlaneseq
      %v4660 = vshrl.u32 %v4659, 7
      %v4661 = vsub.s32 %v2931, %v4660
      %v4662 = vrot.slane %v4130, %v4661
      %v4663 = vsel %vm2936, %v4662, %v4658
      %v4664 = vlaneseq
      %v4665 = vshrl.u32 %v4664, 7
      %v4666 = vsub.s32 %v749, %v4665
      %v4667 = vrot.slane %v4133, %v4666
      %v4668 = vlaneseq
      %v4669 = vshrl.u32 %v4668, 7
      %v4670 = vsub.s32 %v2917, %v4669
      %v4671 = vrot.slane %v4136, %v4670
      %v4672 = vsel %vm2922, %v4671, %v4667
      %v4673 = vlaneseq
      %v4674 = vshrl.u32 %v4673, 7
      %v4675 = vsub.s32 %v2924, %v4674
      %v4676 = vrot.slane %v4139, %v4675
      %v4677 = vsel %vm2929, %v4676, %v4672
      %v4678 = vlaneseq
      %v4679 = vshrl.u32 %v4678, 7
      %v4680 = vsub.s32 %v2931, %v4679
      %v4681 = vrot.slane %v4142, %v4680
      %v4682 = vsel %vm2936, %v4681, %v4677
      %v4683 = vlaneseq
      %v4684 = vshrl.u32 %v4683, 7
      %v4685 = vsub.s32 %v749, %v4684
      %v4686 = vrot.slane %v4145, %v4685
      %v4687 = vlaneseq
      %v4688 = vshrl.u32 %v4687, 7
      %v4689 = vsub.s32 %v2917, %v4688
      %v4690 = vrot.slane %v4148, %v4689
      %v4691 = vsel %vm2922, %v4690, %v4686
      %v4692 = vlaneseq
      %v4693 = vshrl.u32 %v4692, 7
      %v4694 = vsub.s32 %v2924, %v4693
      %v4695 = vrot.slane %v4151, %v4694
      %v4696 = vsel %vm2929, %v4695, %v4691
      %v4697 = vlaneseq
      %v4698 = vshrl.u32 %v4697, 7
      %v4699 = vsub.s32 %v2931, %v4698
      %v4700 = vrot.slane %v4154, %v4699
      %v4701 = vsel %vm2936, %v4700, %v4696
      %v4702 = vlaneseq
      %v4703 = vshrl.u32 %v4702, 7
      %v4704 = vsub.s32 %v749, %v4703
      %v4705 = vrot.slane %v4157, %v4704
      %v4706 = vlaneseq
      %v4707 = vshrl.u32 %v4706, 7
      %v4708 = vsub.s32 %v2917, %v4707
      %v4709 = vrot.slane %v4160, %v4708
      %v4710 = vsel %vm2922, %v4709, %v4705
      %v4711 = vlaneseq
      %v4712 = vshrl.u32 %v4711, 7
      %v4713 = vsub.s32 %v2924, %v4712
      %v4714 = vrot.slane %v4163, %v4713
      %v4715 = vsel %vm2929, %v4714, %v4710
      %v4716 = vlaneseq
      %v4717 = vshrl.u32 %v4716, 7
      %v4718 = vsub.s32 %v2931, %v4717
      %v4719 = vrot.slane %v4166, %v4718
      %v4720 = vsel %vm2936, %v4719, %v4715
      %v4721 = vlaneseq
      %v4722 = vshrl.u32 %v4721, 7
      %v4723 = vsub.s32 %v749, %v4722
      %v4724 = vrot.slane %v4169, %v4723
      %v4725 = vlaneseq
      %v4726 = vshrl.u32 %v4725, 7
      %v4727 = vsub.s32 %v2917, %v4726
      %v4728 = vrot.slane %v4172, %v4727
      %v4729 = vsel %vm2922, %v4728, %v4724
      %v4730 = vlaneseq
      %v4731 = vshrl.u32 %v4730, 7
      %v4732 = vsub.s32 %v2924, %v4731
      %v4733 = vrot.slane %v4175, %v4732
      %v4734 = vsel %vm2929, %v4733, %v4729
      %v4735 = vlaneseq
      %v4736 = vshrl.u32 %v4735, 7
      %v4737 = vsub.s32 %v2931, %v4736
      %v4738 = vrot.slane %v4178, %v4737
      %v4739 = vsel %vm2936, %v4738, %v4734
      %v4740 = vlaneseq
      %v4741 = vshrl.u32 %v4740, 7
      %v4742 = vsub.s32 %v749, %v4741
      %v4743 = vrot.slane %v4181, %v4742
      %v4744 = vlaneseq
      %v4745 = vshrl.u32 %v4744, 7
      %v4746 = vsub.s32 %v2917, %v4745
      %v4747 = vrot.slane %v4184, %v4746
      %v4748 = vsel %vm2922, %v4747, %v4743
      %v4749 = vlaneseq
      %v4750 = vshrl.u32 %v4749, 7
      %v4751 = vsub.s32 %v2924, %v4750
      %v4752 = vrot.slane %v4187, %v4751
      %v4753 = vsel %vm2929, %v4752, %v4748
      %v4754 = vlaneseq
      %v4755 = vshrl.u32 %v4754, 7
      %v4756 = vsub.s32 %v2931, %v4755
      %v4757 = vrot.slane %v4190, %v4756
      %v4758 = vsel %vm2936, %v4757, %v4753
      %v4759 = vlaneseq
      %v4760 = vshrl.u32 %v4759, 7
      %v4761 = vsub.s32 %v749, %v4760
      %v4762 = vrot.slane %v4193, %v4761
      %v4763 = vlaneseq
      %v4764 = vshrl.u32 %v4763, 7
      %v4765 = vsub.s32 %v2917, %v4764
      %v4766 = vrot.slane %v4196, %v4765
      %v4767 = vsel %vm2922, %v4766, %v4762
      %v4768 = vlaneseq
      %v4769 = vshrl.u32 %v4768, 7
      %v4770 = vsub.s32 %v2924, %v4769
      %v4771 = vrot.slane %v4199, %v4770
      %v4772 = vsel %vm2929, %v4771, %v4767
      %v4773 = vlaneseq
      %v4774 = vshrl.u32 %v4773, 7
      %v4775 = vsub.s32 %v2931, %v4774
      %v4776 = vrot.slane %v4202, %v4775
      %v4777 = vsel %vm2936, %v4776, %v4772
      %v4778 = vlaneseq
      %v4779 = vshrl.u32 %v4778, 7
      %v4780 = vsub.s32 %v749, %v4779
      %v4781 = vrot.slane %v4205, %v4780
      %v4782 = vlaneseq
      %v4783 = vshrl.u32 %v4782, 7
      %v4784 = vsub.s32 %v2917, %v4783
      %v4785 = vrot.slane %v4208, %v4784
      %v4786 = vsel %vm2922, %v4785, %v4781
      %v4787 = vlaneseq
      %v4788 = vshrl.u32 %v4787, 7
      %v4789 = vsub.s32 %v2924, %v4788
      %v4790 = vrot.slane %v4211, %v4789
      %v4791 = vsel %vm2929, %v4790, %v4786
      %v4792 = vlaneseq
      %v4793 = vshrl.u32 %v4792, 7
      %v4794 = vsub.s32 %v2931, %v4793
      %v4795 = vrot.slane %v4214, %v4794
      %v4796 = vsel %vm2936, %v4795, %v4791
      %v4797 = vlaneseq
      %v4798 = vshrl.u32 %v4797, 7
      %v4799 = vsub.s32 %v749, %v4798
      %v4800 = vrot.slane %v4217, %v4799
      %v4801 = vlaneseq
      %v4802 = vshrl.u32 %v4801, 7
      %v4803 = vsub.s32 %v2917, %v4802
      %v4804 = vrot.slane %v4220, %v4803
      %v4805 = vsel %vm2922, %v4804, %v4800
      %v4806 = vlaneseq
      %v4807 = vshrl.u32 %v4806, 7
      %v4808 = vsub.s32 %v2924, %v4807
      %v4809 = vrot.slane %v4223, %v4808
      %v4810 = vsel %vm2929, %v4809, %v4805
      %v4811 = vlaneseq
      %v4812 = vshrl.u32 %v4811, 7
      %v4813 = vsub.s32 %v2931, %v4812
      %v4814 = vrot.slane %v4226, %v4813
      %v4815 = vsel %vm2936, %v4814, %v4810
      %v4816 = vlaneseq
      %v4817 = vshrl.u32 %v4816, 7
      %v4818 = vsub.s32 %v749, %v4817
      %v4819 = vrot.slane %v4229, %v4818
      %v4820 = vlaneseq
      %v4821 = vshrl.u32 %v4820, 7
      %v4822 = vsub.s32 %v2917, %v4821
      %v4823 = vrot.slane %v4232, %v4822
      %v4824 = vsel %vm2922, %v4823, %v4819
      %v4825 = vlaneseq
      %v4826 = vshrl.u32 %v4825, 7
      %v4827 = vsub.s32 %v2924, %v4826
      %v4828 = vrot.slane %v4235, %v4827
      %v4829 = vsel %vm2929, %v4828, %v4824
      %v4830 = vlaneseq
      %v4831 = vshrl.u32 %v4830, 7
      %v4832 = vsub.s32 %v2931, %v4831
      %v4833 = vrot.slane %v4238, %v4832
      %v4834 = vsel %vm2936, %v4833, %v4829
      %v4835 = vlaneseq
      %v4836 = vshrl.u32 %v4835, 7
      %v4837 = vsub.s32 %v749, %v4836
      %v4838 = vrot.slane %v4241, %v4837
      %v4839 = vlaneseq
      %v4840 = vshrl.u32 %v4839, 7
      %v4841 = vsub.s32 %v2917, %v4840
      %v4842 = vrot.slane %v4244, %v4841
      %v4843 = vsel %vm2922, %v4842, %v4838
      %v4844 = vlaneseq
      %v4845 = vshrl.u32 %v4844, 7
      %v4846 = vsub.s32 %v2924, %v4845
      %v4847 = vrot.slane %v4247, %v4846
      %v4848 = vsel %vm2929, %v4847, %v4843
      %v4849 = vlaneseq
      %v4850 = vshrl.u32 %v4849, 7
      %v4851 = vsub.s32 %v2931, %v4850
      %v4852 = vrot.slane %v4250, %v4851
      %v4853 = vsel %vm2936, %v4852, %v4848
      %v4854 = vlaneseq
      %v4855 = vshrl.u32 %v4854, 7
      %v4856 = vsub.s32 %v749, %v4855
      %v4857 = vrot.slane %v4253, %v4856
      %v4858 = vlaneseq
      %v4859 = vshrl.u32 %v4858, 7
      %v4860 = vsub.s32 %v2917, %v4859
      %v4861 = vrot.slane %v4256, %v4860
      %v4862 = vsel %vm2922, %v4861, %v4857
      %v4863 = vlaneseq
      %v4864 = vshrl.u32 %v4863, 7
      %v4865 = vsub.s32 %v2924, %v4864
      %v4866 = vrot.slane %v4259, %v4865
      %v4867 = vsel %vm2929, %v4866, %v4862
      %v4868 = vlaneseq
      %v4869 = vshrl.u32 %v4868, 7
      %v4870 = vsub.s32 %v2931, %v4869
      %v4871 = vrot.slane %v4262, %v4870
      %v4872 = vsel %vm2936, %v4871, %v4867
      %v4873 = vlaneseq
      %v4874 = vshrl.u32 %v4873, 7
      %v4875 = vsub.s32 %v749, %v4874
      %v4876 = vrot.slane %v4265, %v4875
      %v4877 = vlaneseq
      %v4878 = vshrl.u32 %v4877, 7
      %v4879 = vsub.s32 %v2917, %v4878
      %v4880 = vrot.slane %v4268, %v4879
      %v4881 = vsel %vm2922, %v4880, %v4876
      %v4882 = vlaneseq
      %v4883 = vshrl.u32 %v4882, 7
      %v4884 = vsub.s32 %v2924, %v4883
      %v4885 = vrot.slane %v4271, %v4884
      %v4886 = vsel %vm2929, %v4885, %v4881
      %v4887 = vlaneseq
      %v4888 = vshrl.u32 %v4887, 7
      %v4889 = vsub.s32 %v2931, %v4888
      %v4890 = vrot.slane %v4274, %v4889
      %v4891 = vsel %vm2936, %v4890, %v4886
      %v4892 = vlaneseq
      %v4893 = vshrl.u32 %v4892, 7
      %v4894 = vsub.s32 %v749, %v4893
      %v4895 = vrot.slane %v4277, %v4894
      %v4896 = vlaneseq
      %v4897 = vshrl.u32 %v4896, 7
      %v4898 = vsub.s32 %v2917, %v4897
      %v4899 = vrot.slane %v4280, %v4898
      %v4900 = vsel %vm2922, %v4899, %v4895
      %v4901 = vlaneseq
      %v4902 = vshrl.u32 %v4901, 7
      %v4903 = vsub.s32 %v2924, %v4902
      %v4904 = vrot.slane %v4283, %v4903
      %v4905 = vsel %vm2929, %v4904, %v4900
      %v4906 = vlaneseq
      %v4907 = vshrl.u32 %v4906, 7
      %v4908 = vsub.s32 %v2931, %v4907
      %v4909 = vrot.slane %v4286, %v4908
      %v4910 = vsel %vm2936, %v4909, %v4905
      %v4911 = vlaneseq
      %v4912 = vshrl.u32 %v4911, 7
      %v4913 = vsub.s32 %v749, %v4912
      %v4914 = vrot.slane %v4289, %v4913
      %v4915 = vlaneseq
      %v4916 = vshrl.u32 %v4915, 7
      %v4917 = vsub.s32 %v2917, %v4916
      %v4918 = vrot.slane %v4292, %v4917
      %v4919 = vsel %vm2922, %v4918, %v4914
      %v4920 = vlaneseq
      %v4921 = vshrl.u32 %v4920, 7
      %v4922 = vsub.s32 %v2924, %v4921
      %v4923 = vrot.slane %v4295, %v4922
      %v4924 = vsel %vm2929, %v4923, %v4919
      %v4925 = vlaneseq
      %v4926 = vshrl.u32 %v4925, 7
      %v4927 = vsub.s32 %v2931, %v4926
      %v4928 = vrot.slane %v4298, %v4927
      %v4929 = vsel %vm2936, %v4928, %v4924
      %v4930 = vlaneseq
      %v4931 = vshrl.u32 %v4930, 7
      %v4932 = vsub.s32 %v749, %v4931
      %v4933 = vrot.slane %v4301, %v4932
      %v4934 = vlaneseq
      %v4935 = vshrl.u32 %v4934, 7
      %v4936 = vsub.s32 %v2917, %v4935
      %v4937 = vrot.slane %v4304, %v4936
      %v4938 = vsel %vm2922, %v4937, %v4933
      %v4939 = vlaneseq
      %v4940 = vshrl.u32 %v4939, 7
      %v4941 = vsub.s32 %v2924, %v4940
      %v4942 = vrot.slane %v4307, %v4941
      %v4943 = vsel %vm2929, %v4942, %v4938
      %v4944 = vlaneseq
      %v4945 = vshrl.u32 %v4944, 7
      %v4946 = vsub.s32 %v2931, %v4945
      %v4947 = vrot.slane %v4310, %v4946
      %v4948 = vsel %vm2936, %v4947, %v4943
      %v4949 = vlaneseq
      %v4950 = vshrl.u32 %v4949, 7
      %v4951 = vsub.s32 %v749, %v4950
      %v4952 = vrot.slane %v4313, %v4951
      %v4953 = vlaneseq
      %v4954 = vshrl.u32 %v4953, 7
      %v4955 = vsub.s32 %v2917, %v4954
      %v4956 = vrot.slane %v4316, %v4955
      %v4957 = vsel %vm2922, %v4956, %v4952
      %v4958 = vlaneseq
      %v4959 = vshrl.u32 %v4958, 7
      %v4960 = vsub.s32 %v2924, %v4959
      %v4961 = vrot.slane %v4319, %v4960
      %v4962 = vsel %vm2929, %v4961, %v4957
      %v4963 = vlaneseq
      %v4964 = vshrl.u32 %v4963, 7
      %v4965 = vsub.s32 %v2931, %v4964
      %v4966 = vrot.slane %v4322, %v4965
      %v4967 = vsel %vm2936, %v4966, %v4962
      %v4968 = vlaneseq
      %v4969 = vshrl.u32 %v4968, 7
      %v4970 = vsub.s32 %v749, %v4969
      %v4971 = vrot.slane %v4325, %v4970
      %v4972 = vlaneseq
      %v4973 = vshrl.u32 %v4972, 7
      %v4974 = vsub.s32 %v2917, %v4973
      %v4975 = vrot.slane %v4328, %v4974
      %v4976 = vsel %vm2922, %v4975, %v4971
      %v4977 = vlaneseq
      %v4978 = vshrl.u32 %v4977, 7
      %v4979 = vsub.s32 %v2924, %v4978
      %v4980 = vrot.slane %v4331, %v4979
      %v4981 = vsel %vm2929, %v4980, %v4976
      %v4982 = vlaneseq
      %v4983 = vshrl.u32 %v4982, 7
      %v4984 = vsub.s32 %v2931, %v4983
      %v4985 = vrot.slane %v4334, %v4984
      %v4986 = vsel %vm2936, %v4985, %v4981
      %v4987 = vlaneseq
      %v4988 = vshrl.u32 %v4987, 7
      %v4989 = vsub.s32 %v749, %v4988
      %v4990 = vrot.slane %v4337, %v4989
      %v4991 = vlaneseq
      %v4992 = vshrl.u32 %v4991, 7
      %v4993 = vsub.s32 %v2917, %v4992
      %v4994 = vrot.slane %v4340, %v4993
      %v4995 = vsel %vm2922, %v4994, %v4990
      %v4996 = vlaneseq
      %v4997 = vshrl.u32 %v4996, 7
      %v4998 = vsub.s32 %v2924, %v4997
      %v4999 = vrot.slane %v4343, %v4998
      %v5000 = vsel %vm2929, %v4999, %v4995
      %v5001 = vlaneseq
      %v5002 = vshrl.u32 %v5001, 7
      %v5003 = vsub.s32 %v2931, %v5002
      %v5004 = vrot.slane %v4346, %v5003
      %v5005 = vsel %vm2936, %v5004, %v5000
      %v5006 = vlaneseq
      %v5007 = vshrl.u32 %v5006, 7
      %v5008 = vsub.s32 %v749, %v5007
      %v5009 = vrot.slane %v4349, %v5008
      %v5010 = vlaneseq
      %v5011 = vshrl.u32 %v5010, 7
      %v5012 = vsub.s32 %v2917, %v5011
      %v5013 = vrot.slane %v4352, %v5012
      %v5014 = vsel %vm2922, %v5013, %v5009
      %v5015 = vlaneseq
      %v5016 = vshrl.u32 %v5015, 7
      %v5017 = vsub.s32 %v2924, %v5016
      %v5018 = vrot.slane %v4355, %v5017
      %v5019 = vsel %vm2929, %v5018, %v5014
      %v5020 = vlaneseq
      %v5021 = vshrl.u32 %v5020, 7
      %v5022 = vsub.s32 %v2931, %v5021
      %v5023 = vrot.slane %v4358, %v5022
      %v5024 = vsel %vm2936, %v5023, %v5019
      %v5025 = vlaneseq
      %v5026 = vshrl.u32 %v5025, 7
      %v5027 = vsub.s32 %v749, %v5026
      %v5028 = vrot.slane %v4361, %v5027
      %v5029 = vlaneseq
      %v5030 = vshrl.u32 %v5029, 7
      %v5031 = vsub.s32 %v2917, %v5030
      %v5032 = vrot.slane %v4364, %v5031
      %v5033 = vsel %vm2922, %v5032, %v5028
      %v5034 = vlaneseq
      %v5035 = vshrl.u32 %v5034, 7
      %v5036 = vsub.s32 %v2924, %v5035
      %v5037 = vrot.slane %v4367, %v5036
      %v5038 = vsel %vm2929, %v5037, %v5033
      %v5039 = vlaneseq
      %v5040 = vshrl.u32 %v5039, 7
      %v5041 = vsub.s32 %v2931, %v5040
      %v5042 = vrot.slane %v4370, %v5041
      %v5043 = vsel %vm2936, %v5042, %v5038
      %v5044 = vlaneseq
      %v5045 = vshrl.u32 %v5044, 7
      %v5046 = vsub.s32 %v749, %v5045
      %v5047 = vrot.slane %v4373, %v5046
      %v5048 = vlaneseq
      %v5049 = vshrl.u32 %v5048, 7
      %v5050 = vsub.s32 %v2917, %v5049
      %v5051 = vrot.slane %v4376, %v5050
      %v5052 = vsel %vm2922, %v5051, %v5047
      %v5053 = vlaneseq
      %v5054 = vshrl.u32 %v5053, 7
      %v5055 = vsub.s32 %v2924, %v5054
      %v5056 = vrot.slane %v4379, %v5055
      %v5057 = vsel %vm2929, %v5056, %v5052
      %v5058 = vlaneseq
      %v5059 = vshrl.u32 %v5058, 7
      %v5060 = vsub.s32 %v2931, %v5059
      %v5061 = vrot.slane %v4382, %v5060
      %v5062 = vsel %vm2936, %v5061, %v5057
      %v5063 = vlaneseq
      %v5064 = vshrl.u32 %v5063, 7
      %v5065 = vsub.s32 %v749, %v5064
      %v5066 = vrot.slane %v4385, %v5065
      %v5067 = vlaneseq
      %v5068 = vshrl.u32 %v5067, 7
      %v5069 = vsub.s32 %v2917, %v5068
      %v5070 = vrot.slane %v4388, %v5069
      %v5071 = vsel %vm2922, %v5070, %v5066
      %v5072 = vlaneseq
      %v5073 = vshrl.u32 %v5072, 7
      %v5074 = vsub.s32 %v2924, %v5073
      %v5075 = vrot.slane %v4391, %v5074
      %v5076 = vsel %vm2929, %v5075, %v5071
      %v5077 = vlaneseq
      %v5078 = vshrl.u32 %v5077, 7
      %v5079 = vsub.s32 %v2931, %v5078
      %v5080 = vrot.slane %v4394, %v5079
      %v5081 = vsel %vm2936, %v5080, %v5076
      %v5082 = vlaneseq
      %v5083 = vshrl.u32 %v5082, 7
      %v5084 = vsub.s32 %v749, %v5083
      %v5085 = vrot.slane %v4397, %v5084
      %v5086 = vlaneseq
      %v5087 = vshrl.u32 %v5086, 7
      %v5088 = vsub.s32 %v2917, %v5087
      %v5089 = vrot.slane %v4400, %v5088
      %v5090 = vsel %vm2922, %v5089, %v5085
      %v5091 = vlaneseq
      %v5092 = vshrl.u32 %v5091, 7
      %v5093 = vsub.s32 %v2924, %v5092
      %v5094 = vrot.slane %v4403, %v5093
      %v5095 = vsel %vm2929, %v5094, %v5090
      %v5096 = vlaneseq
      %v5097 = vshrl.u32 %v5096, 7
      %v5098 = vsub.s32 %v2931, %v5097
      %v5099 = vrot.slane %v4406, %v5098
      %v5100 = vsel %vm2936, %v5099, %v5095
      %v5101 = vlaneseq
      %v5102 = vshrl.u32 %v5101, 7
      %v5103 = vsub.s32 %v749, %v5102
      %v5104 = vrot.slane %v4409, %v5103
      %v5105 = vlaneseq
      %v5106 = vshrl.u32 %v5105, 7
      %v5107 = vsub.s32 %v2917, %v5106
      %v5108 = vrot.slane %v4412, %v5107
      %v5109 = vsel %vm2922, %v5108, %v5104
      %v5110 = vlaneseq
      %v5111 = vshrl.u32 %v5110, 7
      %v5112 = vsub.s32 %v2924, %v5111
      %v5113 = vrot.slane %v4415, %v5112
      %v5114 = vsel %vm2929, %v5113, %v5109
      %v5115 = vlaneseq
      %v5116 = vshrl.u32 %v5115, 7
      %v5117 = vsub.s32 %v2931, %v5116
      %v5118 = vrot.slane %v4418, %v5117
      %v5119 = vsel %vm2936, %v5118, %v5114
      %v5120 = vlaneseq
      %v5121 = vshrl.u32 %v5120, 7
      %v5122 = vsub.s32 %v749, %v5121
      %v5123 = vrot.slane %v4421, %v5122
      %v5124 = vlaneseq
      %v5125 = vshrl.u32 %v5124, 7
      %v5126 = vsub.s32 %v2917, %v5125
      %v5127 = vrot.slane %v4424, %v5126
      %v5128 = vsel %vm2922, %v5127, %v5123
      %v5129 = vlaneseq
      %v5130 = vshrl.u32 %v5129, 7
      %v5131 = vsub.s32 %v2924, %v5130
      %v5132 = vrot.slane %v4427, %v5131
      %v5133 = vsel %vm2929, %v5132, %v5128
      %v5134 = vlaneseq
      %v5135 = vshrl.u32 %v5134, 7
      %v5136 = vsub.s32 %v2931, %v5135
      %v5137 = vrot.slane %v4430, %v5136
      %v5138 = vsel %vm2936, %v5137, %v5133
      %v5139 = vlaneseq
      %v5140 = vshrl.u32 %v5139, 7
      %v5141 = vsub.s32 %v749, %v5140
      %v5142 = vrot.slane %v4433, %v5141
      %v5143 = vlaneseq
      %v5144 = vshrl.u32 %v5143, 7
      %v5145 = vsub.s32 %v2917, %v5144
      %v5146 = vrot.slane %v4436, %v5145
      %v5147 = vsel %vm2922, %v5146, %v5142
      %v5148 = vlaneseq
      %v5149 = vshrl.u32 %v5148, 7
      %v5150 = vsub.s32 %v2924, %v5149
      %v5151 = vrot.slane %v4439, %v5150
      %v5152 = vsel %vm2929, %v5151, %v5147
      %v5153 = vlaneseq
      %v5154 = vshrl.u32 %v5153, 7
      %v5155 = vsub.s32 %v2931, %v5154
      %v5156 = vrot.slane %v4442, %v5155
      %v5157 = vsel %vm2936, %v5156, %v5152
      %v5158 = vlaneseq
      %v5159 = vshrl.u32 %v5158, 7
      %v5160 = vsub.s32 %v749, %v5159
      %v5161 = vrot.slane %v4445, %v5160
      %v5162 = vlaneseq
      %v5163 = vshrl.u32 %v5162, 7
      %v5164 = vsub.s32 %v2917, %v5163
      %v5165 = vrot.slane %v4448, %v5164
      %v5166 = vsel %vm2922, %v5165, %v5161
      %v5167 = vlaneseq
      %v5168 = vshrl.u32 %v5167, 7
      %v5169 = vsub.s32 %v2924, %v5168
      %v5170 = vrot.slane %v4451, %v5169
      %v5171 = vsel %vm2929, %v5170, %v5166
      %v5172 = vlaneseq
      %v5173 = vshrl.u32 %v5172, 7
      %v5174 = vsub.s32 %v2931, %v5173
      %v5175 = vrot.slane %v4454, %v5174
      %v5176 = vsel %vm2936, %v5175, %v5171
      %v5177 = vlaneseq
      %v5178 = vshrl.u32 %v5177, 7
      %v5179 = vsub.s32 %v749, %v5178
      %v5180 = vrot.slane %v4457, %v5179
      %v5181 = vlaneseq
      %v5182 = vshrl.u32 %v5181, 7
      %v5183 = vsub.s32 %v2917, %v5182
      %v5184 = vrot.slane %v4460, %v5183
      %v5185 = vsel %vm2922, %v5184, %v5180
      %v5186 = vlaneseq
      %v5187 = vshrl.u32 %v5186, 7
      %v5188 = vsub.s32 %v2924, %v5187
      %v5189 = vrot.slane %v4463, %v5188
      %v5190 = vsel %vm2929, %v5189, %v5185
      %v5191 = vlaneseq
      %v5192 = vshrl.u32 %v5191, 7
      %v5193 = vsub.s32 %v2931, %v5192
      %v5194 = vrot.slane %v4466, %v5193
      %v5195 = vsel %vm2936, %v5194, %v5190
      %v5196 = vlaneseq
      %v5197 = vshrl.u32 %v5196, 7
      %v5198 = vsub.s32 %v749, %v5197
      %v5199 = vrot.slane %v4469, %v5198
      %v5200 = vlaneseq
      %v5201 = vshrl.u32 %v5200, 7
      %v5202 = vsub.s32 %v2917, %v5201
      %v5203 = vrot.slane %v4472, %v5202
      %v5204 = vsel %vm2922, %v5203, %v5199
      %v5205 = vlaneseq
      %v5206 = vshrl.u32 %v5205, 7
      %v5207 = vsub.s32 %v2924, %v5206
      %v5208 = vrot.slane %v4475, %v5207
      %v5209 = vsel %vm2929, %v5208, %v5204
      %v5210 = vlaneseq
      %v5211 = vshrl.u32 %v5210, 7
      %v5212 = vsub.s32 %v2931, %v5211
      %v5213 = vrot.slane %v4478, %v5212
      %v5214 = vsel %vm2936, %v5213, %v5209
      %v5215 = vsel %vm3527, %v4644, %v4625
      %v5216 = vsel %vm3529, %v4663, %v5215
      %v5217 = vsel %vm3531, %v4682, %v5216
      %v5218 = vsel %vm3533, %v4701, %v5217
      %v5219 = vsel %vm3535, %v4720, %v5218
      %v5220 = vsel %vm3537, %v4739, %v5219
      %v5221 = vsel %vm3539, %v4758, %v5220
      %v5222 = vsel %vm3527, %v4796, %v4777
      %v5223 = vsel %vm3529, %v4815, %v5222
      %v5224 = vsel %vm3531, %v4834, %v5223
      %v5225 = vsel %vm3533, %v4853, %v5224
      %v5226 = vsel %vm3535, %v4872, %v5225
      %v5227 = vsel %vm3537, %v4891, %v5226
      %v5228 = vsel %vm3539, %v4910, %v5227
      %v5229 = vsel %vm3527, %v4948, %v4929
      %v5230 = vsel %vm3529, %v4967, %v5229
      %v5231 = vsel %vm3531, %v4986, %v5230
      %v5232 = vsel %vm3533, %v5005, %v5231
      %v5233 = vsel %vm3535, %v5024, %v5232
      %v5234 = vsel %vm3537, %v5043, %v5233
      %v5235 = vsel %vm3539, %v5062, %v5234
      %v5236 = vsel %vm3527, %v5100, %v5081
      %v5237 = vsel %vm3529, %v5119, %v5236
      %v5238 = vsel %vm3531, %v5138, %v5237
      %v5239 = vsel %vm3533, %v5157, %v5238
      %v5240 = vsel %vm3535, %v5176, %v5239
      %v5241 = vsel %vm3537, %v5195, %v5240
      %v5242 = vsel %vm3539, %v5214, %v5241
      %v5247 = vsel %vm758, %v5221, -1e+30
      %v5248 = vsel %vm759, %v5228, -1e+30
      %v5249 = vsel %vm760, %v5235, -1e+30
      %v5250 = vsel %vm761, %v5242, -1e+30
      %v5251 = vsel %vm770, %v5247, -inf
      %5252 = vmax.xlane.f32.xlu0 %v5251
      %v5253 = vpop.xlane.xlu0 %5252
      %v5254 = vsel %vm770, %v5248, -inf
      %5255 = vmax.xlane.f32.xlu0 %v5254
      %v5256 = vpop.xlane.xlu0 %5255
      %v5257 = vsel %vm770, %v5249, -inf
      %5258 = vmax.xlane.f32.xlu0 %v5257
      %v5259 = vpop.xlane.xlu0 %5258
      %v5260 = vsel %vm770, %v5250, -inf
      %5261 = vmax.xlane.f32.xlu0 %v5260
      %v5262 = vpop.xlane.xlu0 %5261
      %v5263 = vsub.f32 %v5247, %v5253
      %v5264 = vsub.f32 %v5248, %v5256
      %v5265 = vsub.f32 %v5249, %v5259
      %v5266 = vsub.f32 %v5250, %v5262
      %v5267 = vmul.f32 %v5263, 1.442695
      %v5268 = vpow.pop %v5267
      %v5269 = vmul.f32 %v5264, 1.442695
      %v5270 = vpow.pop %v5269
      %v5271 = vmul.f32 %v5265, 1.442695
      %v5272 = vpow.pop %v5271
      %v5273 = vmul.f32 %v5266, 1.442695
      %v5274 = vpow.pop %v5273
      %v5275 = vsel %vm770, %v5268, 0.0
      %5276 = vadd.xlane.f32.xlu0 %v5275
      %v5277 = vpop.xlane.xlu0 %5276
      %v5278 = vsel %vm770, %v5270, 0.0
      %5279 = vadd.xlane.f32.xlu0 %v5278
      %v5280 = vpop.xlane.xlu0 %5279
      %v5281 = vsel %vm770, %v5272, 0.0
      %5282 = vadd.xlane.f32.xlu0 %v5281
      %v5283 = vpop.xlane.xlu0 %5282
      %v5284 = vsel %vm770, %v5274, 0.0
      %5285 = vadd.xlane.f32.xlu0 %v5284
      %v5286 = vpop.xlane.xlu0 %5285
      %v5287 = vrcp.pop %v5277
      %v5288 = vrcp.pop %v5280
      %v5289 = vrcp.pop %v5283
      %v5290 = vrcp.pop %v5286
      %v5291 = vmul.f32 %v5268, %v5287
      %v5292 = vmul.f32 %v5270, %v5288
      %v5293 = vmul.f32 %v5272, %v5289
      %v5294 = vmul.f32 %v5274, %v5290
      %5295 = vrot.lane.b32.xlu0 %v850, 120
      %v5296 = vpop.permute.xlu0 %5295
      %5297 = vrot.lane.b32.xlu0 %v855, 120
      %v5298 = vpop.permute.xlu0 %5297
      %5299 = vrot.lane.b32.xlu0 %v860, 120
      %v5300 = vpop.permute.xlu0 %5299
      %5301 = vrot.lane.b32.xlu0 %v865, 120
      %v5302 = vpop.permute.xlu0 %5301
      %v5308 = vsel %vm770, %v5291, 0
      %v5311 = vsel %vm770, %v5292, 0
      %v5314 = vsel %vm770, %v5293, 0
      %v5317 = vsel %vm770, %v5294, 0
      %5319 = vmatprep.subr.mxu0 0.0
      %5320 = vmatpush1.msra.mxu0 %v5296
      %5321 = vmatprep.subr.mxu0 0.0
      %5322 = vmatpush1.msra.mxu0 %v5298
      %5323 = vmatprep.subr.mxu0 0.0
      %5324 = vmatpush1.msra.mxu0 %v5300
      %5325 = vmatprep.subr.mxu0 0.0
      %5326 = vmatpush1.msra.mxu0 %v5302
      %5327 = vmatprep.subr.mxu0 0.0
      %5328 = vmatpush1.msra.mxu0 0.0
      %5329 = vmatprep.subr.mxu0 0.0
      %5330 = vmatpush1.msra.mxu0 0.0
      %5331 = vmatprep.subr.mxu0 0.0
      %5332 = vmatpush1.msra.mxu0 0.0
      %5333 = vmatprep.subr.mxu0 0.0
      %5334 = vmatpush1.msra.mxu0 0.0
      %5335 = vmatprep.subr.mxu0 0.0
      %5336 = vmatpush1.msra.mxu0 0.0
      %5337 = vmatprep.subr.mxu0 0.0
      %5338 = vmatpush1.msra.mxu0 0.0
      %5339 = vmatprep.subr.mxu0 0.0
      %5340 = vmatpush1.msra.mxu0 0.0
      %5341 = vmatprep.subr.mxu0 0.0
      %5342 = vmatpush1.msra.mxu0 0.0
      %5343 = vmatprep.subr.mxu0 0.0
      %5344 = vmatpush1.msra.mxu0 0.0
      %5345 = vmatprep.subr.mxu0 0.0
      %5346 = vmatpush1.msra.mxu0 0.0
      %5347 = vmatprep.subr.mxu0 0.0
      %5348 = vmatpush1.msra.mxu0 0.0
      %5349 = vmatprep.subr.mxu0 0.0
      %5350 = vmatpush1.msra.mxu0 0.0
      %5351 = vmatprep.subr.mxu0 0.0
      %5352 = vmatpush1.msra.mxu0 0.0
      %5353 = vmatprep.subr.mxu0 0.0
      %5354 = vmatpush1.msra.mxu0 0.0
      %5355 = vmatprep.subr.mxu0 0.0
      %5356 = vmatpush1.msra.mxu0 0.0
      %5357 = vmatprep.subr.mxu0 0.0
      %5358 = vmatpush1.msra.mxu0 0.0
      %5359 = vmatprep.subr.mxu0 0.0
      %5360 = vmatpush1.msra.mxu0 0.0
      %5361 = vmatprep.subr.mxu0 0.0
      %5362 = vmatpush1.msra.mxu0 0.0
      %5363 = vmatprep.subr.mxu0 0.0
      %5364 = vmatpush1.msra.mxu0 0.0
      %5365 = vmatprep.subr.mxu0 0.0
      %5366 = vmatpush1.msra.mxu0 0.0
      %5367 = vmatprep.subr.mxu0 0.0
      %5368 = vmatpush1.msra.mxu0 0.0
      %5369 = vmatprep.subr.mxu0 0.0
      %5370 = vmatpush1.msra.mxu0 0.0
      %5371 = vmatprep.subr.mxu0 0.0
      %5372 = vmatpush1.msra.mxu0 0.0
      %5373 = vmatprep.subr.mxu0 0.0
      %5374 = vmatpush1.msra.mxu0 0.0
      %5375 = vmatprep.subr.mxu0 0.0
      %5376 = vmatpush1.msra.mxu0 0.0
      %5377 = vmatprep.subr.mxu0 0.0
      %5378 = vmatpush1.msra.mxu0 0.0
      %5379 = vmatprep.subr.mxu0 0.0
      %5380 = vmatpush1.msra.mxu0 0.0
      %5381 = vmatprep.subr.mxu0 0.0
      %5382 = vmatpush1.msra.mxu0 0.0
      %5383 = vmatprep.mubr.f32.mxu0 0.0
      %5384 = vmatmul.mubr.f32.gmra.mrb[0].mxu0 %v5308
      %v5385 = vpop.f32.mrb[0].mxu0
      %v5386 = vadd.f32 0.0, %v5385
      %v5387 = vpop.f32.mrb[0].mxu0
      %5388 = vmatprep.mubr.f32.mxu0 0.0
      %5389 = vmatmul.mubr.f32.gmra.mrb[0].mxu0 %v5311
      %v5390 = vpop.f32.mrb[0].mxu0
      %v5391 = vadd.f32 0.0, %v5390
      %v5392 = vpop.f32.mrb[0].mxu0
      %5393 = vmatprep.mubr.f32.mxu0 0.0
      %5394 = vmatmul.mubr.f32.gmra.mrb[0].mxu0 %v5314
      %v5395 = vpop.f32.mrb[0].mxu0
      %v5396 = vadd.f32 0.0, %v5395
      %v5397 = vpop.f32.mrb[0].mxu0
      %5398 = vmatprep.mubr.f32.mxu0 0.0
      %5399 = vmatmul.mubr.f32.gmra.mrb[0].mxu0 %v5317
      %v5400 = vpop.f32.mrb[0].mxu0
      %v5401 = vadd.f32 0.0, %v5400
      %v5402 = vpop.f32.mrb[0].mxu0
      %5403 = vdwg.mxu0
      %5408 = vrot.lane.b32.xlu0 %v5386, 8
      %v5409 = vpop.permute.xlu0 %5408
      %5410 = vrot.lane.b32.xlu0 %v5391, 8
      %v5411 = vpop.permute.xlu0 %5410
      %5412 = vrot.lane.b32.xlu0 %v5396, 8
      %v5413 = vpop.permute.xlu0 %5412
      %5414 = vrot.lane.b32.xlu0 %v5401, 8
      %v5415 = vpop.permute.xlu0 %5414
      %v5420 = vsel %vm2400, %v3693, %v5409
      %v5421 = vsel %vm2400, %v3698, %v5411
      %v5422 = vsel %vm2400, %v3703, %v5413
      %v5423 = vsel %vm2400, %v3708, %v5415
      %v5424 = vlaneseq
      %v5425 = vshrl.u32 %v5424, 7
      %v5426 = vsub.s32 5, %v5425
      %v5427 = vrot.slane %v247, %v5426
      %v5428 = vadd.f32 %v5420, %v5427
      %v5429 = vadd.f32 %v5421, %v5427
      %v5430 = vadd.f32 %v5422, %v5427
      %v5431 = vadd.f32 %v5423, %v5427
      %vm5432 = vcmp.gt.f32.partialorder %v5428, 0.0
      %vm5433 = vcmp.gt.f32.partialorder %v5429, 0.0
      %vm5434 = vcmp.gt.f32.partialorder %v5430, 0.0
      %vm5435 = vcmp.gt.f32.partialorder %v5431, 0.0
      %v5436 = vmin.f32 %v5428, 0.0
      %v5437 = vmin.f32 %v5429, 0.0
      %v5438 = vmin.f32 %v5430, 0.0
      %v5439 = vmin.f32 %v5431, 0.0
      %v5440 = vmul.f32 %v5436, 1.442695
      %v5441 = vpow.pop %v5440
      %v5442 = vmul.f32 %v5437, 1.442695
      %v5443 = vpow.pop %v5442
      %v5444 = vmul.f32 %v5438, 1.442695
      %v5445 = vpow.pop %v5444
      %v5446 = vmul.f32 %v5439, 1.442695
      %v5447 = vpow.pop %v5446
      %v5448 = vsub.f32 %v5441, 1.0
      %v5449 = vsub.f32 %v5443, 1.0
      %v5450 = vsub.f32 %v5445, 1.0
      %v5451 = vsub.f32 %v5447, 1.0
      %v5452 = vsel %vm5432, %v5428, %v5448
      %v5453 = vsel %vm5433, %v5429, %v5449
      %v5454 = vsel %vm5434, %v5430, %v5450
      %v5455 = vsel %vm5435, %v5431, %v5451
      %s5456 = scalar_lea.vmem %s3, 32
      %v5457 = vld [vmem:[%s5456] sm:$0xff]
      %v5458 = vld [vmem:[%s5456 + $0x8] sm:$0xff]
      %v5459 = vlaneseq
      %v5460 = vshrl.u32 %v5459, 7
      %v5461 = vsub.s32 1, %v5460
      %v5462 = vrot.slane %v247, %v5461
      %vm5463 = vcmask 130048
      %v5465 = vsel %vm5463, %v5452, 0
      %v5468 = vsel %vm5463, %v5453, 0
      %v5471 = vsel %vm5463, %v5454, 0
      %v5474 = vsel %vm5463, %v5455, 0
      %5476 = vmatprep.subr.mxu0 0.0
      %5477 = vmatpush1.msra.mxu0 %v5457
      %5478 = vmatprep.subr.mxu0 0.0
      %5479 = vmatpush1.msra.mxu0 %v5458
      %5480 = vmatprep.subr.mxu0 0.0
      %5481 = vmatpush1.msra.mxu0 0.0
      %5482 = vmatprep.subr.mxu0 0.0
      %5483 = vmatpush1.msra.mxu0 0.0
      %5484 = vmatprep.subr.mxu0 0.0
      %5485 = vmatpush1.msra.mxu0 0.0
      %5486 = vmatprep.subr.mxu0 0.0
      %5487 = vmatpush1.msra.mxu0 0.0
      %5488 = vmatprep.subr.mxu0 0.0
      %5489 = vmatpush1.msra.mxu0 0.0
      %5490 = vmatprep.subr.mxu0 0.0
      %5491 = vmatpush1.msra.mxu0 0.0
      %5492 = vmatprep.subr.mxu0 0.0
      %5493 = vmatpush1.msra.mxu0 0.0
      %5494 = vmatprep.subr.mxu0 0.0
      %5495 = vmatpush1.msra.mxu0 0.0
      %5496 = vmatprep.subr.mxu0 0.0
      %5497 = vmatpush1.msra.mxu0 0.0
      %5498 = vmatprep.subr.mxu0 0.0
      %5499 = vmatpush1.msra.mxu0 0.0
      %5500 = vmatprep.subr.mxu0 0.0
      %5501 = vmatpush1.msra.mxu0 0.0
      %5502 = vmatprep.subr.mxu0 0.0
      %5503 = vmatpush1.msra.mxu0 0.0
      %5504 = vmatprep.subr.mxu0 0.0
      %5505 = vmatpush1.msra.mxu0 0.0
      %5506 = vmatprep.subr.mxu0 0.0
      %5507 = vmatpush1.msra.mxu0 0.0
      %5508 = vmatprep.subr.mxu0 0.0
      %5509 = vmatpush1.msra.mxu0 0.0
      %5510 = vmatprep.subr.mxu0 0.0
      %5511 = vmatpush1.msra.mxu0 0.0
      %5512 = vmatprep.subr.mxu0 0.0
      %5513 = vmatpush1.msra.mxu0 0.0
      %5514 = vmatprep.subr.mxu0 0.0
      %5515 = vmatpush1.msra.mxu0 0.0
      %5516 = vmatprep.subr.mxu0 0.0
      %5517 = vmatpush1.msra.mxu0 0.0
      %5518 = vmatprep.subr.mxu0 0.0
      %5519 = vmatpush1.msra.mxu0 0.0
      %5520 = vmatprep.subr.mxu0 0.0
      %5521 = vmatpush1.msra.mxu0 0.0
      %5522 = vmatprep.subr.mxu0 0.0
      %5523 = vmatpush1.msra.mxu0 0.0
      %5524 = vmatprep.subr.mxu0 0.0
      %5525 = vmatpush1.msra.mxu0 0.0
      %5526 = vmatprep.subr.mxu0 0.0
      %5527 = vmatpush1.msra.mxu0 0.0
      %5528 = vmatprep.subr.mxu0 0.0
      %5529 = vmatpush1.msra.mxu0 0.0
      %5530 = vmatprep.subr.mxu0 0.0
      %5531 = vmatpush1.msra.mxu0 0.0
      %5532 = vmatprep.subr.mxu0 0.0
      %5533 = vmatpush1.msra.mxu0 0.0
      %5534 = vmatprep.subr.mxu0 0.0
      %5535 = vmatpush1.msra.mxu0 0.0
      %5536 = vmatprep.subr.mxu0 0.0
      %5537 = vmatpush1.msra.mxu0 0.0
      %5538 = vmatprep.subr.mxu0 0.0
      %5539 = vmatpush1.msra.mxu0 0.0
      %5540 = vmatprep.mubr.f32.mxu0 0.0
      %5541 = vmatmul.mubr.f32.gmra.mrb[0].mxu0 %v5465
      %v5542 = vpop.f32.mrb[0].mxu0
      %v5543 = vadd.f32 %v5462, %v5542
      %v5544 = vpop.f32.mrb[0].mxu0
      %5545 = vmatprep.mubr.f32.mxu0 0.0
      %5546 = vmatmul.mubr.f32.gmra.mrb[0].mxu0 %v5468
      %v5547 = vpop.f32.mrb[0].mxu0
      %v5548 = vadd.f32 %v5462, %v5547
      %v5549 = vpop.f32.mrb[0].mxu0
      %5550 = vmatprep.mubr.f32.mxu0 0.0
      %5551 = vmatmul.mubr.f32.gmra.mrb[0].mxu0 %v5471
      %v5552 = vpop.f32.mrb[0].mxu0
      %v5553 = vadd.f32 %v5462, %v5552
      %v5554 = vpop.f32.mrb[0].mxu0
      %5555 = vmatprep.mubr.f32.mxu0 0.0
      %5556 = vmatmul.mubr.f32.gmra.mrb[0].mxu0 %v5474
      %v5557 = vpop.f32.mrb[0].mxu0
      %v5558 = vadd.f32 %v5462, %v5557
      %v5559 = vpop.f32.mrb[0].mxu0
      %5560 = vdwg.mxu0
      %v5565 = vcombine.high %v5543, %v5543
      %v5567 = vunpack.c.l.s4 1966171168
      %v5568 = vunpack.c.0.s8 %v5567
      %v5569 = vlaneseq
      %v5570 = vshrl.u32 %v5569, 7
      %v5571 = vsub.s32 %v5568, %v5570
      %v5572 = vrot.slane %v5543, %v5571
      %v5574 = vunpack.c.l.s4 1966171168
      %v5575 = vunpack.c.0.s8 %v5574
      %v5576 = vlaneseq
      %v5577 = vshrl.u32 %v5576, 7
      %v5578 = vsub.s32 %v5575, %v5577
      %v5579 = vrot.slane %v5565, %v5578
      %v5580 = vcombine.high %v5572, %v5572
      %v5581 = vcombine.high %v5579, %v5579
      %v5583 = vunpack.c.l.s4 1966171168
      %v5584 = vunpack.c.0.s8 %v5583
      %v5585 = vlaneseq
      %v5586 = vshrl.u32 %v5585, 7
      %v5587 = vsub.s32 %v5584, %v5586
      %v5588 = vrot.slane %v5572, %v5587
      %v5590 = vunpack.c.l.s4 1966171168
      %v5591 = vunpack.c.0.s8 %v5590
      %v5592 = vlaneseq
      %v5593 = vshrl.u32 %v5592, 7
      %v5594 = vsub.s32 %v5591, %v5593
      %v5595 = vrot.slane %v5579, %v5594
      %v5597 = vunpack.c.l.s4 1966171168
      %v5598 = vunpack.c.0.s8 %v5597
      %v5599 = vlaneseq
      %v5600 = vshrl.u32 %v5599, 7
      %v5601 = vsub.s32 %v5598, %v5600
      %v5602 = vrot.slane %v5580, %v5601
      %v5604 = vunpack.c.l.s4 1966171168
      %v5605 = vunpack.c.0.s8 %v5604
      %v5606 = vlaneseq
      %v5607 = vshrl.u32 %v5606, 7
      %v5608 = vsub.s32 %v5605, %v5607
      %v5609 = vrot.slane %v5581, %v5608
      %v5610 = vcombine.high %v5588, %v5588
      %v5611 = vcombine.high %v5595, %v5595
      %v5612 = vcombine.high %v5602, %v5602
      %v5613 = vcombine.high %v5609, %v5609
      %v5614 = vcombine.high %v5548, %v5548
      %v5616 = vunpack.c.l.s4 1966171168
      %v5617 = vunpack.c.0.s8 %v5616
      %v5618 = vlaneseq
      %v5619 = vshrl.u32 %v5618, 7
      %v5620 = vsub.s32 %v5617, %v5619
      %v5621 = vrot.slane %v5548, %v5620
      %v5623 = vunpack.c.l.s4 1966171168
      %v5624 = vunpack.c.0.s8 %v5623
      %v5625 = vlaneseq
      %v5626 = vshrl.u32 %v5625, 7
      %v5627 = vsub.s32 %v5624, %v5626
      %v5628 = vrot.slane %v5614, %v5627
      %v5629 = vcombine.high %v5621, %v5621
      %v5630 = vcombine.high %v5628, %v5628
      %v5632 = vunpack.c.l.s4 1966171168
      %v5633 = vunpack.c.0.s8 %v5632
      %v5634 = vlaneseq
      %v5635 = vshrl.u32 %v5634, 7
      %v5636 = vsub.s32 %v5633, %v5635
      %v5637 = vrot.slane %v5621, %v5636
      %v5639 = vunpack.c.l.s4 1966171168
      %v5640 = vunpack.c.0.s8 %v5639
      %v5641 = vlaneseq
      %v5642 = vshrl.u32 %v5641, 7
      %v5643 = vsub.s32 %v5640, %v5642
      %v5644 = vrot.slane %v5628, %v5643
      %v5646 = vunpack.c.l.s4 1966171168
      %v5647 = vunpack.c.0.s8 %v5646
      %v5648 = vlaneseq
      %v5649 = vshrl.u32 %v5648, 7
      %v5650 = vsub.s32 %v5647, %v5649
      %v5651 = vrot.slane %v5629, %v5650
      %v5653 = vunpack.c.l.s4 1966171168
      %v5654 = vunpack.c.0.s8 %v5653
      %v5655 = vlaneseq
      %v5656 = vshrl.u32 %v5655, 7
      %v5657 = vsub.s32 %v5654, %v5656
      %v5658 = vrot.slane %v5630, %v5657
      %v5659 = vcombine.high %v5637, %v5637
      %v5660 = vcombine.high %v5644, %v5644
      %v5661 = vcombine.high %v5651, %v5651
      %v5662 = vcombine.high %v5658, %v5658
      %v5663 = vcombine.high %v5553, %v5553
      %v5665 = vunpack.c.l.s4 1966171168
      %v5666 = vunpack.c.0.s8 %v5665
      %v5667 = vlaneseq
      %v5668 = vshrl.u32 %v5667, 7
      %v5669 = vsub.s32 %v5666, %v5668
      %v5670 = vrot.slane %v5553, %v5669
      %v5672 = vunpack.c.l.s4 1966171168
      %v5673 = vunpack.c.0.s8 %v5672
      %v5674 = vlaneseq
      %v5675 = vshrl.u32 %v5674, 7
      %v5676 = vsub.s32 %v5673, %v5675
      %v5677 = vrot.slane %v5663, %v5676
      %v5678 = vcombine.high %v5670, %v5670
      %v5679 = vcombine.high %v5677, %v5677
      %v5681 = vunpack.c.l.s4 1966171168
      %v5682 = vunpack.c.0.s8 %v5681
      %v5683 = vlaneseq
      %v5684 = vshrl.u32 %v5683, 7
      %v5685 = vsub.s32 %v5682, %v5684
      %v5686 = vrot.slane %v5670, %v5685
      %v5688 = vunpack.c.l.s4 1966171168
      %v5689 = vunpack.c.0.s8 %v5688
      %v5690 = vlaneseq
      %v5691 = vshrl.u32 %v5690, 7
      %v5692 = vsub.s32 %v5689, %v5691
      %v5693 = vrot.slane %v5677, %v5692
      %v5695 = vunpack.c.l.s4 1966171168
      %v5696 = vunpack.c.0.s8 %v5695
      %v5697 = vlaneseq
      %v5698 = vshrl.u32 %v5697, 7
      %v5699 = vsub.s32 %v5696, %v5698
      %v5700 = vrot.slane %v5678, %v5699
      %v5702 = vunpack.c.l.s4 1966171168
      %v5703 = vunpack.c.0.s8 %v5702
      %v5704 = vlaneseq
      %v5705 = vshrl.u32 %v5704, 7
      %v5706 = vsub.s32 %v5703, %v5705
      %v5707 = vrot.slane %v5679, %v5706
      %v5708 = vcombine.high %v5686, %v5686
      %v5709 = vcombine.high %v5693, %v5693
      %v5710 = vcombine.high %v5700, %v5700
      %v5711 = vcombine.high %v5707, %v5707
      %v5712 = vcombine.high %v5558, %v5558
      %v5714 = vunpack.c.l.s4 1966171168
      %v5715 = vunpack.c.0.s8 %v5714
      %v5716 = vlaneseq
      %v5717 = vshrl.u32 %v5716, 7
      %v5718 = vsub.s32 %v5715, %v5717
      %v5719 = vrot.slane %v5558, %v5718
      %v5721 = vunpack.c.l.s4 1966171168
      %v5722 = vunpack.c.0.s8 %v5721
      %v5723 = vlaneseq
      %v5724 = vshrl.u32 %v5723, 7
      %v5725 = vsub.s32 %v5722, %v5724
      %v5726 = vrot.slane %v5712, %v5725
      %v5727 = vcombine.high %v5719, %v5719
      %v5728 = vcombine.high %v5726, %v5726
      %v5730 = vunpack.c.l.s4 1966171168
      %v5731 = vunpack.c.0.s8 %v5730
      %v5732 = vlaneseq
      %v5733 = vshrl.u32 %v5732, 7
      %v5734 = vsub.s32 %v5731, %v5733
      %v5735 = vrot.slane %v5719, %v5734
      %v5737 = vunpack.c.l.s4 1966171168
      %v5738 = vunpack.c.0.s8 %v5737
      %v5739 = vlaneseq
      %v5740 = vshrl.u32 %v5739, 7
      %v5741 = vsub.s32 %v5738, %v5740
      %v5742 = vrot.slane %v5726, %v5741
      %v5744 = vunpack.c.l.s4 1966171168
      %v5745 = vunpack.c.0.s8 %v5744
      %v5746 = vlaneseq
      %v5747 = vshrl.u32 %v5746, 7
      %v5748 = vsub.s32 %v5745, %v5747
      %v5749 = vrot.slane %v5727, %v5748
      %v5751 = vunpack.c.l.s4 1966171168
      %v5752 = vunpack.c.0.s8 %v5751
      %v5753 = vlaneseq
      %v5754 = vshrl.u32 %v5753, 7
      %v5755 = vsub.s32 %v5752, %v5754
      %v5756 = vrot.slane %v5728, %v5755
      %v5757 = vcombine.high %v5735, %v5735
      %v5758 = vcombine.high %v5742, %v5742
      %v5759 = vcombine.high %v5749, %v5749
      %v5760 = vcombine.high %v5756, %v5756
      %v5761 = vlaneseq
      %v5762 = vshrl.u32 %v5761, 7
      %v5763 = vsub.s32 0, %v5762
      %v5764 = vrot.slane %v5588, %v5763
      %v5765 = vlaneseq
      %v5766 = vshrl.u32 %v5765, 7
      %v5767 = vsub.s32 0, %v5766
      %v5768 = vrot.slane %v5602, %v5767
      %v5769 = vlaneseq
      %v5770 = vshrl.u32 %v5769, 7
      %v5771 = vsub.s32 0, %v5770
      %v5772 = vrot.slane %v5610, %v5771
      %v5773 = vlaneseq
      %v5774 = vshrl.u32 %v5773, 7
      %v5775 = vsub.s32 0, %v5774
      %v5776 = vrot.slane %v5612, %v5775
      %v5777 = vlaneseq
      %v5778 = vshrl.u32 %v5777, 7
      %v5779 = vsub.s32 0, %v5778
      %v5780 = vrot.slane %v5595, %v5779
      %v5781 = vlaneseq
      %v5782 = vshrl.u32 %v5781, 7
      %v5783 = vsub.s32 0, %v5782
      %v5784 = vrot.slane %v5609, %v5783
      %v5785 = vlaneseq
      %v5786 = vshrl.u32 %v5785, 7
      %v5787 = vsub.s32 0, %v5786
      %v5788 = vrot.slane %v5611, %v5787
      %v5789 = vlaneseq
      %v5790 = vshrl.u32 %v5789, 7
      %v5791 = vsub.s32 0, %v5790
      %v5792 = vrot.slane %v5613, %v5791
      %v5793 = vlaneseq
      %v5794 = vshrl.u32 %v5793, 7
      %v5795 = vsub.s32 0, %v5794
      %v5796 = vrot.slane %v5637, %v5795
      %v5797 = vlaneseq
      %v5798 = vshrl.u32 %v5797, 7
      %v5799 = vsub.s32 0, %v5798
      %v5800 = vrot.slane %v5651, %v5799
      %v5801 = vlaneseq
      %v5802 = vshrl.u32 %v5801, 7
      %v5803 = vsub.s32 0, %v5802
      %v5804 = vrot.slane %v5659, %v5803
      %v5805 = vlaneseq
      %v5806 = vshrl.u32 %v5805, 7
      %v5807 = vsub.s32 0, %v5806
      %v5808 = vrot.slane %v5661, %v5807
      %v5809 = vlaneseq
      %v5810 = vshrl.u32 %v5809, 7
      %v5811 = vsub.s32 0, %v5810
      %v5812 = vrot.slane %v5644, %v5811
      %v5813 = vlaneseq
      %v5814 = vshrl.u32 %v5813, 7
      %v5815 = vsub.s32 0, %v5814
      %v5816 = vrot.slane %v5658, %v5815
      %v5817 = vlaneseq
      %v5818 = vshrl.u32 %v5817, 7
      %v5819 = vsub.s32 0, %v5818
      %v5820 = vrot.slane %v5660, %v5819
      %v5821 = vlaneseq
      %v5822 = vshrl.u32 %v5821, 7
      %v5823 = vsub.s32 0, %v5822
      %v5824 = vrot.slane %v5662, %v5823
      %v5825 = vlaneseq
      %v5826 = vshrl.u32 %v5825, 7
      %v5827 = vsub.s32 0, %v5826
      %v5828 = vrot.slane %v5686, %v5827
      %v5829 = vlaneseq
      %v5830 = vshrl.u32 %v5829, 7
      %v5831 = vsub.s32 0, %v5830
      %v5832 = vrot.slane %v5700, %v5831
      %v5833 = vlaneseq
      %v5834 = vshrl.u32 %v5833, 7
      %v5835 = vsub.s32 0, %v5834
      %v5836 = vrot.slane %v5708, %v5835
      %v5837 = vlaneseq
      %v5838 = vshrl.u32 %v5837, 7
      %v5839 = vsub.s32 0, %v5838
      %v5840 = vrot.slane %v5710, %v5839
      %v5841 = vlaneseq
      %v5842 = vshrl.u32 %v5841, 7
      %v5843 = vsub.s32 0, %v5842
      %v5844 = vrot.slane %v5693, %v5843
      %v5845 = vlaneseq
      %v5846 = vshrl.u32 %v5845, 7
      %v5847 = vsub.s32 0, %v5846
      %v5848 = vrot.slane %v5707, %v5847
      %v5849 = vlaneseq
      %v5850 = vshrl.u32 %v5849, 7
      %v5851 = vsub.s32 0, %v5850
      %v5852 = vrot.slane %v5709, %v5851
      %v5853 = vlaneseq
      %v5854 = vshrl.u32 %v5853, 7
      %v5855 = vsub.s32 0, %v5854
      %v5856 = vrot.slane %v5711, %v5855
      %v5857 = vlaneseq
      %v5858 = vshrl.u32 %v5857, 7
      %v5859 = vsub.s32 0, %v5858
      %v5860 = vrot.slane %v5735, %v5859
      %v5861 = vlaneseq
      %v5862 = vshrl.u32 %v5861, 7
      %v5863 = vsub.s32 0, %v5862
      %v5864 = vrot.slane %v5749, %v5863
      %v5865 = vlaneseq
      %v5866 = vshrl.u32 %v5865, 7
      %v5867 = vsub.s32 0, %v5866
      %v5868 = vrot.slane %v5757, %v5867
      %v5869 = vlaneseq
      %v5870 = vshrl.u32 %v5869, 7
      %v5871 = vsub.s32 0, %v5870
      %v5872 = vrot.slane %v5759, %v5871
      %v5873 = vlaneseq
      %v5874 = vshrl.u32 %v5873, 7
      %v5875 = vsub.s32 0, %v5874
      %v5876 = vrot.slane %v5742, %v5875
      %v5877 = vlaneseq
      %v5878 = vshrl.u32 %v5877, 7
      %v5879 = vsub.s32 0, %v5878
      %v5880 = vrot.slane %v5756, %v5879
      %v5881 = vlaneseq
      %v5882 = vshrl.u32 %v5881, 7
      %v5883 = vsub.s32 0, %v5882
      %v5884 = vrot.slane %v5758, %v5883
      %v5885 = vlaneseq
      %v5886 = vshrl.u32 %v5885, 7
      %v5887 = vsub.s32 0, %v5886
      %v5888 = vrot.slane %v5760, %v5887
      %5921 = vrot.lane.b32.xlu0 %v5543, 16
      %v5922 = vpop.permute.xlu0 %5921
      %5923 = vrot.lane.b32.xlu0 %v5548, 16
      %v5924 = vpop.permute.xlu0 %5923
      %5925 = vrot.lane.b32.xlu0 %v5553, 16
      %v5926 = vpop.permute.xlu0 %5925
      %5927 = vrot.lane.b32.xlu0 %v5558, 16
      %v5928 = vpop.permute.xlu0 %5927
      %v5933 = vadd.f32 %v5764, %v5922
      %v5934 = vadd.f32 %v5764, %v5924
      %v5935 = vadd.f32 %v5764, %v5926
      %v5936 = vadd.f32 %v5764, %v5928
      %v5937 = vadd.f32 %v5768, %v5922
      %v5938 = vadd.f32 %v5768, %v5924
      %v5939 = vadd.f32 %v5768, %v5926
      %v5940 = vadd.f32 %v5768, %v5928
      %v5941 = vadd.f32 %v5772, %v5922
      %v5942 = vadd.f32 %v5772, %v5924
      %v5943 = vadd.f32 %v5772, %v5926
      %v5944 = vadd.f32 %v5772, %v5928
      %v5945 = vadd.f32 %v5776, %v5922
      %v5946 = vadd.f32 %v5776, %v5924
      %v5947 = vadd.f32 %v5776, %v5926
      %v5948 = vadd.f32 %v5776, %v5928
      %v5949 = vadd.f32 %v5780, %v5922
      %v5950 = vadd.f32 %v5780, %v5924
      %v5951 = vadd.f32 %v5780, %v5926
      %v5952 = vadd.f32 %v5780, %v5928
      %v5953 = vadd.f32 %v5784, %v5922
      %v5954 = vadd.f32 %v5784, %v5924
      %v5955 = vadd.f32 %v5784, %v5926
      %v5956 = vadd.f32 %v5784, %v5928
      %v5957 = vadd.f32 %v5788, %v5922
      %v5958 = vadd.f32 %v5788, %v5924
      %v5959 = vadd.f32 %v5788, %v5926
      %v5960 = vadd.f32 %v5788, %v5928
      %v5961 = vadd.f32 %v5792, %v5922
      %v5962 = vadd.f32 %v5792, %v5924
      %v5963 = vadd.f32 %v5792, %v5926
      %v5964 = vadd.f32 %v5792, %v5928
      %v5965 = vadd.f32 %v5796, %v5922
      %v5966 = vadd.f32 %v5796, %v5924
      %v5967 = vadd.f32 %v5796, %v5926
      %v5968 = vadd.f32 %v5796, %v5928
      %v5969 = vadd.f32 %v5800, %v5922
      %v5970 = vadd.f32 %v5800, %v5924
      %v5971 = vadd.f32 %v5800, %v5926
      %v5972 = vadd.f32 %v5800, %v5928
      %v5973 = vadd.f32 %v5804, %v5922
      %v5974 = vadd.f32 %v5804, %v5924
      %v5975 = vadd.f32 %v5804, %v5926
      %v5976 = vadd.f32 %v5804, %v5928
      %v5977 = vadd.f32 %v5808, %v5922
      %v5978 = vadd.f32 %v5808, %v5924
      %v5979 = vadd.f32 %v5808, %v5926
      %v5980 = vadd.f32 %v5808, %v5928
      %v5981 = vadd.f32 %v5812, %v5922
      %v5982 = vadd.f32 %v5812, %v5924
      %v5983 = vadd.f32 %v5812, %v5926
      %v5984 = vadd.f32 %v5812, %v5928
      %v5985 = vadd.f32 %v5816, %v5922
      %v5986 = vadd.f32 %v5816, %v5924
      %v5987 = vadd.f32 %v5816, %v5926
      %v5988 = vadd.f32 %v5816, %v5928
      %v5989 = vadd.f32 %v5820, %v5922
      %v5990 = vadd.f32 %v5820, %v5924
      %v5991 = vadd.f32 %v5820, %v5926
      %v5992 = vadd.f32 %v5820, %v5928
      %v5993 = vadd.f32 %v5824, %v5922
      %v5994 = vadd.f32 %v5824, %v5924
      %v5995 = vadd.f32 %v5824, %v5926
      %v5996 = vadd.f32 %v5824, %v5928
      %v5997 = vadd.f32 %v5828, %v5922
      %v5998 = vadd.f32 %v5828, %v5924
      %v5999 = vadd.f32 %v5828, %v5926
      %v6000 = vadd.f32 %v5828, %v5928
      %v6001 = vadd.f32 %v5832, %v5922
      %v6002 = vadd.f32 %v5832, %v5924
      %v6003 = vadd.f32 %v5832, %v5926
      %v6004 = vadd.f32 %v5832, %v5928
      %v6005 = vadd.f32 %v5836, %v5922
      %v6006 = vadd.f32 %v5836, %v5924
      %v6007 = vadd.f32 %v5836, %v5926
      %v6008 = vadd.f32 %v5836, %v5928
      %v6009 = vadd.f32 %v5840, %v5922
      %v6010 = vadd.f32 %v5840, %v5924
      %v6011 = vadd.f32 %v5840, %v5926
      %v6012 = vadd.f32 %v5840, %v5928
      %v6013 = vadd.f32 %v5844, %v5922
      %v6014 = vadd.f32 %v5844, %v5924
      %v6015 = vadd.f32 %v5844, %v5926
      %v6016 = vadd.f32 %v5844, %v5928
      %v6017 = vadd.f32 %v5848, %v5922
      %v6018 = vadd.f32 %v5848, %v5924
      %v6019 = vadd.f32 %v5848, %v5926
      %v6020 = vadd.f32 %v5848, %v5928
      %v6021 = vadd.f32 %v5852, %v5922
      %v6022 = vadd.f32 %v5852, %v5924
      %v6023 = vadd.f32 %v5852, %v5926
      %v6024 = vadd.f32 %v5852, %v5928
      %v6025 = vadd.f32 %v5856, %v5922
      %v6026 = vadd.f32 %v5856, %v5924
      %v6027 = vadd.f32 %v5856, %v5926
      %v6028 = vadd.f32 %v5856, %v5928
      %v6029 = vadd.f32 %v5860, %v5922
      %v6030 = vadd.f32 %v5860, %v5924
      %v6031 = vadd.f32 %v5860, %v5926
      %v6032 = vadd.f32 %v5860, %v5928
      %v6033 = vadd.f32 %v5864, %v5922
      %v6034 = vadd.f32 %v5864, %v5924
      %v6035 = vadd.f32 %v5864, %v5926
      %v6036 = vadd.f32 %v5864, %v5928
      %v6037 = vadd.f32 %v5868, %v5922
      %v6038 = vadd.f32 %v5868, %v5924
      %v6039 = vadd.f32 %v5868, %v5926
      %v6040 = vadd.f32 %v5868, %v5928
      %v6041 = vadd.f32 %v5872, %v5922
      %v6042 = vadd.f32 %v5872, %v5924
      %v6043 = vadd.f32 %v5872, %v5926
      %v6044 = vadd.f32 %v5872, %v5928
      %v6045 = vadd.f32 %v5876, %v5922
      %v6046 = vadd.f32 %v5876, %v5924
      %v6047 = vadd.f32 %v5876, %v5926
      %v6048 = vadd.f32 %v5876, %v5928
      %v6049 = vadd.f32 %v5880, %v5922
      %v6050 = vadd.f32 %v5880, %v5924
      %v6051 = vadd.f32 %v5880, %v5926
      %v6052 = vadd.f32 %v5880, %v5928
      %v6053 = vadd.f32 %v5884, %v5922
      %v6054 = vadd.f32 %v5884, %v5924
      %v6055 = vadd.f32 %v5884, %v5926
      %v6056 = vadd.f32 %v5884, %v5928
      %v6057 = vadd.f32 %v5888, %v5922
      %v6058 = vadd.f32 %v5888, %v5924
      %v6059 = vadd.f32 %v5888, %v5926
      %v6060 = vadd.f32 %v5888, %v5928
      %vm6061 = vcmp.gt.f32.partialorder %v5933, 0.0
      %vm6062 = vcmp.gt.f32.partialorder %v5934, 0.0
      %vm6063 = vcmp.gt.f32.partialorder %v5935, 0.0
      %vm6064 = vcmp.gt.f32.partialorder %v5936, 0.0
      %vm6065 = vcmp.gt.f32.partialorder %v5937, 0.0
      %vm6066 = vcmp.gt.f32.partialorder %v5938, 0.0
      %vm6067 = vcmp.gt.f32.partialorder %v5939, 0.0
      %vm6068 = vcmp.gt.f32.partialorder %v5940, 0.0
      %vm6069 = vcmp.gt.f32.partialorder %v5941, 0.0
      %vm6070 = vcmp.gt.f32.partialorder %v5942, 0.0
      %vm6071 = vcmp.gt.f32.partialorder %v5943, 0.0
      %vm6072 = vcmp.gt.f32.partialorder %v5944, 0.0
      %vm6073 = vcmp.gt.f32.partialorder %v5945, 0.0
      %vm6074 = vcmp.gt.f32.partialorder %v5946, 0.0
      %vm6075 = vcmp.gt.f32.partialorder %v5947, 0.0
      %vm6076 = vcmp.gt.f32.partialorder %v5948, 0.0
      %vm6077 = vcmp.gt.f32.partialorder %v5949, 0.0
      %vm6078 = vcmp.gt.f32.partialorder %v5950, 0.0
      %vm6079 = vcmp.gt.f32.partialorder %v5951, 0.0
      %vm6080 = vcmp.gt.f32.partialorder %v5952, 0.0
      %vm6081 = vcmp.gt.f32.partialorder %v5953, 0.0
      %vm6082 = vcmp.gt.f32.partialorder %v5954, 0.0
      %vm6083 = vcmp.gt.f32.partialorder %v5955, 0.0
      %vm6084 = vcmp.gt.f32.partialorder %v5956, 0.0
      %vm6085 = vcmp.gt.f32.partialorder %v5957, 0.0
      %vm6086 = vcmp.gt.f32.partialorder %v5958, 0.0
      %vm6087 = vcmp.gt.f32.partialorder %v5959, 0.0
      %vm6088 = vcmp.gt.f32.partialorder %v5960, 0.0
      %vm6089 = vcmp.gt.f32.partialorder %v5961, 0.0
      %vm6090 = vcmp.gt.f32.partialorder %v5962, 0.0
      %vm6091 = vcmp.gt.f32.partialorder %v5963, 0.0
      %vm6092 = vcmp.gt.f32.partialorder %v5964, 0.0
      %vm6093 = vcmp.gt.f32.partialorder %v5965, 0.0
      %vm6094 = vcmp.gt.f32.partialorder %v5966, 0.0
      %vm6095 = vcmp.gt.f32.partialorder %v5967, 0.0
      %vm6096 = vcmp.gt.f32.partialorder %v5968, 0.0
      %vm6097 = vcmp.gt.f32.partialorder %v5969, 0.0
      %vm6098 = vcmp.gt.f32.partialorder %v5970, 0.0
      %vm6099 = vcmp.gt.f32.partialorder %v5971, 0.0
      %vm6100 = vcmp.gt.f32.partialorder %v5972, 0.0
      %vm6101 = vcmp.gt.f32.partialorder %v5973, 0.0
      %vm6102 = vcmp.gt.f32.partialorder %v5974, 0.0
      %vm6103 = vcmp.gt.f32.partialorder %v5975, 0.0
      %vm6104 = vcmp.gt.f32.partialorder %v5976, 0.0
      %vm6105 = vcmp.gt.f32.partialorder %v5977, 0.0
      %vm6106 = vcmp.gt.f32.partialorder %v5978, 0.0
      %vm6107 = vcmp.gt.f32.partialorder %v5979, 0.0
      %vm6108 = vcmp.gt.f32.partialorder %v5980, 0.0
      %vm6109 = vcmp.gt.f32.partialorder %v5981, 0.0
      %vm6110 = vcmp.gt.f32.partialorder %v5982, 0.0
      %vm6111 = vcmp.gt.f32.partialorder %v5983, 0.0
      %vm6112 = vcmp.gt.f32.partialorder %v5984, 0.0
      %vm6113 = vcmp.gt.f32.partialorder %v5985, 0.0
      %vm6114 = vcmp.gt.f32.partialorder %v5986, 0.0
      %vm6115 = vcmp.gt.f32.partialorder %v5987, 0.0
      %vm6116 = vcmp.gt.f32.partialorder %v5988, 0.0
      %vm6117 = vcmp.gt.f32.partialorder %v5989, 0.0
      %vm6118 = vcmp.gt.f32.partialorder %v5990, 0.0
      %vm6119 = vcmp.gt.f32.partialorder %v5991, 0.0
      %vm6120 = vcmp.gt.f32.partialorder %v5992, 0.0
      %vm6121 = vcmp.gt.f32.partialorder %v5993, 0.0
      %vm6122 = vcmp.gt.f32.partialorder %v5994, 0.0
      %vm6123 = vcmp.gt.f32.partialorder %v5995, 0.0
      %vm6124 = vcmp.gt.f32.partialorder %v5996, 0.0
      %vm6125 = vcmp.gt.f32.partialorder %v5997, 0.0
      %vm6126 = vcmp.gt.f32.partialorder %v5998, 0.0
      %vm6127 = vcmp.gt.f32.partialorder %v5999, 0.0
      %vm6128 = vcmp.gt.f32.partialorder %v6000, 0.0
      %vm6129 = vcmp.gt.f32.partialorder %v6001, 0.0
      %vm6130 = vcmp.gt.f32.partialorder %v6002, 0.0
      %vm6131 = vcmp.gt.f32.partialorder %v6003, 0.0
      %vm6132 = vcmp.gt.f32.partialorder %v6004, 0.0
      %vm6133 = vcmp.gt.f32.partialorder %v6005, 0.0
      %vm6134 = vcmp.gt.f32.partialorder %v6006, 0.0
      %vm6135 = vcmp.gt.f32.partialorder %v6007, 0.0
      %vm6136 = vcmp.gt.f32.partialorder %v6008, 0.0
      %vm6137 = vcmp.gt.f32.partialorder %v6009, 0.0
      %vm6138 = vcmp.gt.f32.partialorder %v6010, 0.0
      %vm6139 = vcmp.gt.f32.partialorder %v6011, 0.0
      %vm6140 = vcmp.gt.f32.partialorder %v6012, 0.0
      %vm6141 = vcmp.gt.f32.partialorder %v6013, 0.0
      %vm6142 = vcmp.gt.f32.partialorder %v6014, 0.0
      %vm6143 = vcmp.gt.f32.partialorder %v6015, 0.0
      %vm6144 = vcmp.gt.f32.partialorder %v6016, 0.0
      %vm6145 = vcmp.gt.f32.partialorder %v6017, 0.0
      %vm6146 = vcmp.gt.f32.partialorder %v6018, 0.0
      %vm6147 = vcmp.gt.f32.partialorder %v6019, 0.0
      %vm6148 = vcmp.gt.f32.partialorder %v6020, 0.0
      %vm6149 = vcmp.gt.f32.partialorder %v6021, 0.0
      %vm6150 = vcmp.gt.f32.partialorder %v6022, 0.0
      %vm6151 = vcmp.gt.f32.partialorder %v6023, 0.0
      %vm6152 = vcmp.gt.f32.partialorder %v6024, 0.0
      %vm6153 = vcmp.gt.f32.partialorder %v6025, 0.0
      %vm6154 = vcmp.gt.f32.partialorder %v6026, 0.0
      %vm6155 = vcmp.gt.f32.partialorder %v6027, 0.0
      %vm6156 = vcmp.gt.f32.partialorder %v6028, 0.0
      %vm6157 = vcmp.gt.f32.partialorder %v6029, 0.0
      %vm6158 = vcmp.gt.f32.partialorder %v6030, 0.0
      %vm6159 = vcmp.gt.f32.partialorder %v6031, 0.0
      %vm6160 = vcmp.gt.f32.partialorder %v6032, 0.0
      %vm6161 = vcmp.gt.f32.partialorder %v6033, 0.0
      %vm6162 = vcmp.gt.f32.partialorder %v6034, 0.0
      %vm6163 = vcmp.gt.f32.partialorder %v6035, 0.0
      %vm6164 = vcmp.gt.f32.partialorder %v6036, 0.0
      %vm6165 = vcmp.gt.f32.partialorder %v6037, 0.0
      %vm6166 = vcmp.gt.f32.partialorder %v6038, 0.0
      %vm6167 = vcmp.gt.f32.partialorder %v6039, 0.0
      %vm6168 = vcmp.gt.f32.partialorder %v6040, 0.0
      %vm6169 = vcmp.gt.f32.partialorder %v6041, 0.0
      %vm6170 = vcmp.gt.f32.partialorder %v6042, 0.0
      %vm6171 = vcmp.gt.f32.partialorder %v6043, 0.0
      %vm6172 = vcmp.gt.f32.partialorder %v6044, 0.0
      %vm6173 = vcmp.gt.f32.partialorder %v6045, 0.0
      %vm6174 = vcmp.gt.f32.partialorder %v6046, 0.0
      %vm6175 = vcmp.gt.f32.partialorder %v6047, 0.0
      %vm6176 = vcmp.gt.f32.partialorder %v6048, 0.0
      %vm6177 = vcmp.gt.f32.partialorder %v6049, 0.0
      %vm6178 = vcmp.gt.f32.partialorder %v6050, 0.0
      %vm6179 = vcmp.gt.f32.partialorder %v6051, 0.0
      %vm6180 = vcmp.gt.f32.partialorder %v6052, 0.0
      %vm6181 = vcmp.gt.f32.partialorder %v6053, 0.0
      %vm6182 = vcmp.gt.f32.partialorder %v6054, 0.0
      %vm6183 = vcmp.gt.f32.partialorder %v6055, 0.0
      %vm6184 = vcmp.gt.f32.partialorder %v6056, 0.0
      %vm6185 = vcmp.gt.f32.partialorder %v6057, 0.0
      %vm6186 = vcmp.gt.f32.partialorder %v6058, 0.0
      %vm6187 = vcmp.gt.f32.partialorder %v6059, 0.0
      %vm6188 = vcmp.gt.f32.partialorder %v6060, 0.0
      %v6189 = vmul.f32 %v5933, 0.2
      %v6190 = vmul.f32 %v5934, 0.2
      %v6191 = vmul.f32 %v5935, 0.2
      %v6192 = vmul.f32 %v5936, 0.2
      %v6193 = vmul.f32 %v5937, 0.2
      %v6194 = vmul.f32 %v5938, 0.2
      %v6195 = vmul.f32 %v5939, 0.2
      %v6196 = vmul.f32 %v5940, 0.2
      %v6197 = vmul.f32 %v5941, 0.2
      %v6198 = vmul.f32 %v5942, 0.2
      %v6199 = vmul.f32 %v5943, 0.2
      %v6200 = vmul.f32 %v5944, 0.2
      %v6201 = vmul.f32 %v5945, 0.2
      %v6202 = vmul.f32 %v5946, 0.2
      %v6203 = vmul.f32 %v5947, 0.2
      %v6204 = vmul.f32 %v5948, 0.2
      %v6205 = vmul.f32 %v5949, 0.2
      %v6206 = vmul.f32 %v5950, 0.2
      %v6207 = vmul.f32 %v5951, 0.2
      %v6208 = vmul.f32 %v5952, 0.2
      %v6209 = vmul.f32 %v5953, 0.2
      %v6210 = vmul.f32 %v5954, 0.2
      %v6211 = vmul.f32 %v5955, 0.2
      %v6212 = vmul.f32 %v5956, 0.2
      %v6213 = vmul.f32 %v5957, 0.2
      %v6214 = vmul.f32 %v5958, 0.2
      %v6215 = vmul.f32 %v5959, 0.2
      %v6216 = vmul.f32 %v5960, 0.2
      %v6217 = vmul.f32 %v5961, 0.2
      %v6218 = vmul.f32 %v5962, 0.2
      %v6219 = vmul.f32 %v5963, 0.2
      %v6220 = vmul.f32 %v5964, 0.2
      %v6221 = vmul.f32 %v5965, 0.2
      %v6222 = vmul.f32 %v5966, 0.2
      %v6223 = vmul.f32 %v5967, 0.2
      %v6224 = vmul.f32 %v5968, 0.2
      %v6225 = vmul.f32 %v5969, 0.2
      %v6226 = vmul.f32 %v5970, 0.2
      %v6227 = vmul.f32 %v5971, 0.2
      %v6228 = vmul.f32 %v5972, 0.2
      %v6229 = vmul.f32 %v5973, 0.2
      %v6230 = vmul.f32 %v5974, 0.2
      %v6231 = vmul.f32 %v5975, 0.2
      %v6232 = vmul.f32 %v5976, 0.2
      %v6233 = vmul.f32 %v5977, 0.2
      %v6234 = vmul.f32 %v5978, 0.2
      %v6235 = vmul.f32 %v5979, 0.2
      %v6236 = vmul.f32 %v5980, 0.2
      %v6237 = vmul.f32 %v5981, 0.2
      %v6238 = vmul.f32 %v5982, 0.2
      %v6239 = vmul.f32 %v5983, 0.2
      %v6240 = vmul.f32 %v5984, 0.2
      %v6241 = vmul.f32 %v5985, 0.2
      %v6242 = vmul.f32 %v5986, 0.2
      %v6243 = vmul.f32 %v5987, 0.2
      %v6244 = vmul.f32 %v5988, 0.2
      %v6245 = vmul.f32 %v5989, 0.2
      %v6246 = vmul.f32 %v5990, 0.2
      %v6247 = vmul.f32 %v5991, 0.2
      %v6248 = vmul.f32 %v5992, 0.2
      %v6249 = vmul.f32 %v5993, 0.2
      %v6250 = vmul.f32 %v5994, 0.2
      %v6251 = vmul.f32 %v5995, 0.2
      %v6252 = vmul.f32 %v5996, 0.2
      %v6253 = vmul.f32 %v5997, 0.2
      %v6254 = vmul.f32 %v5998, 0.2
      %v6255 = vmul.f32 %v5999, 0.2
      %v6256 = vmul.f32 %v6000, 0.2
      %v6257 = vmul.f32 %v6001, 0.2
      %v6258 = vmul.f32 %v6002, 0.2
      %v6259 = vmul.f32 %v6003, 0.2
      %v6260 = vmul.f32 %v6004, 0.2
      %v6261 = vmul.f32 %v6005, 0.2
      %v6262 = vmul.f32 %v6006, 0.2
      %v6263 = vmul.f32 %v6007, 0.2
      %v6264 = vmul.f32 %v6008, 0.2
      %v6265 = vmul.f32 %v6009, 0.2
      %v6266 = vmul.f32 %v6010, 0.2
      %v6267 = vmul.f32 %v6011, 0.2
      %v6268 = vmul.f32 %v6012, 0.2
      %v6269 = vmul.f32 %v6013, 0.2
      %v6270 = vmul.f32 %v6014, 0.2
      %v6271 = vmul.f32 %v6015, 0.2
      %v6272 = vmul.f32 %v6016, 0.2
      %v6273 = vmul.f32 %v6017, 0.2
      %v6274 = vmul.f32 %v6018, 0.2
      %v6275 = vmul.f32 %v6019, 0.2
      %v6276 = vmul.f32 %v6020, 0.2
      %v6277 = vmul.f32 %v6021, 0.2
      %v6278 = vmul.f32 %v6022, 0.2
      %v6279 = vmul.f32 %v6023, 0.2
      %v6280 = vmul.f32 %v6024, 0.2
      %v6281 = vmul.f32 %v6025, 0.2
      %v6282 = vmul.f32 %v6026, 0.2
      %v6283 = vmul.f32 %v6027, 0.2
      %v6284 = vmul.f32 %v6028, 0.2
      %v6285 = vmul.f32 %v6029, 0.2
      %v6286 = vmul.f32 %v6030, 0.2
      %v6287 = vmul.f32 %v6031, 0.2
      %v6288 = vmul.f32 %v6032, 0.2
      %v6289 = vmul.f32 %v6033, 0.2
      %v6290 = vmul.f32 %v6034, 0.2
      %v6291 = vmul.f32 %v6035, 0.2
      %v6292 = vmul.f32 %v6036, 0.2
      %v6293 = vmul.f32 %v6037, 0.2
      %v6294 = vmul.f32 %v6038, 0.2
      %v6295 = vmul.f32 %v6039, 0.2
      %v6296 = vmul.f32 %v6040, 0.2
      %v6297 = vmul.f32 %v6041, 0.2
      %v6298 = vmul.f32 %v6042, 0.2
      %v6299 = vmul.f32 %v6043, 0.2
      %v6300 = vmul.f32 %v6044, 0.2
      %v6301 = vmul.f32 %v6045, 0.2
      %v6302 = vmul.f32 %v6046, 0.2
      %v6303 = vmul.f32 %v6047, 0.2
      %v6304 = vmul.f32 %v6048, 0.2
      %v6305 = vmul.f32 %v6049, 0.2
      %v6306 = vmul.f32 %v6050, 0.2
      %v6307 = vmul.f32 %v6051, 0.2
      %v6308 = vmul.f32 %v6052, 0.2
      %v6309 = vmul.f32 %v6053, 0.2
      %v6310 = vmul.f32 %v6054, 0.2
      %v6311 = vmul.f32 %v6055, 0.2
      %v6312 = vmul.f32 %v6056, 0.2
      %v6313 = vmul.f32 %v6057, 0.2
      %v6314 = vmul.f32 %v6058, 0.2
      %v6315 = vmul.f32 %v6059, 0.2
      %v6316 = vmul.f32 %v6060, 0.2
      %v6317 = vsel %vm6061, %v5933, %v6189
      %v6318 = vsel %vm6062, %v5934, %v6190
      %v6319 = vsel %vm6063, %v5935, %v6191
      %v6320 = vsel %vm6064, %v5936, %v6192
      %v6321 = vsel %vm6065, %v5937, %v6193
      %v6322 = vsel %vm6066, %v5938, %v6194
      %v6323 = vsel %vm6067, %v5939, %v6195
      %v6324 = vsel %vm6068, %v5940, %v6196
      %v6325 = vsel %vm6069, %v5941, %v6197
      %v6326 = vsel %vm6070, %v5942, %v6198
      %v6327 = vsel %vm6071, %v5943, %v6199
      %v6328 = vsel %vm6072, %v5944, %v6200
      %v6329 = vsel %vm6073, %v5945, %v6201
      %v6330 = vsel %vm6074, %v5946, %v6202
      %v6331 = vsel %vm6075, %v5947, %v6203
      %v6332 = vsel %vm6076, %v5948, %v6204
      %v6333 = vsel %vm6077, %v5949, %v6205
      %v6334 = vsel %vm6078, %v5950, %v6206
      %v6335 = vsel %vm6079, %v5951, %v6207
      %v6336 = vsel %vm6080, %v5952, %v6208
      %v6337 = vsel %vm6081, %v5953, %v6209
      %v6338 = vsel %vm6082, %v5954, %v6210
      %v6339 = vsel %vm6083, %v5955, %v6211
      %v6340 = vsel %vm6084, %v5956, %v6212
      %v6341 = vsel %vm6085, %v5957, %v6213
      %v6342 = vsel %vm6086, %v5958, %v6214
      %v6343 = vsel %vm6087, %v5959, %v6215
      %v6344 = vsel %vm6088, %v5960, %v6216
      %v6345 = vsel %vm6089, %v5961, %v6217
      %v6346 = vsel %vm6090, %v5962, %v6218
      %v6347 = vsel %vm6091, %v5963, %v6219
      %v6348 = vsel %vm6092, %v5964, %v6220
      %v6349 = vsel %vm6093, %v5965, %v6221
      %v6350 = vsel %vm6094, %v5966, %v6222
      %v6351 = vsel %vm6095, %v5967, %v6223
      %v6352 = vsel %vm6096, %v5968, %v6224
      %v6353 = vsel %vm6097, %v5969, %v6225
      %v6354 = vsel %vm6098, %v5970, %v6226
      %v6355 = vsel %vm6099, %v5971, %v6227
      %v6356 = vsel %vm6100, %v5972, %v6228
      %v6357 = vsel %vm6101, %v5973, %v6229
      %v6358 = vsel %vm6102, %v5974, %v6230
      %v6359 = vsel %vm6103, %v5975, %v6231
      %v6360 = vsel %vm6104, %v5976, %v6232
      %v6361 = vsel %vm6105, %v5977, %v6233
      %v6362 = vsel %vm6106, %v5978, %v6234
      %v6363 = vsel %vm6107, %v5979, %v6235
      %v6364 = vsel %vm6108, %v5980, %v6236
      %v6365 = vsel %vm6109, %v5981, %v6237
      %v6366 = vsel %vm6110, %v5982, %v6238
      %v6367 = vsel %vm6111, %v5983, %v6239
      %v6368 = vsel %vm6112, %v5984, %v6240
      %v6369 = vsel %vm6113, %v5985, %v6241
      %v6370 = vsel %vm6114, %v5986, %v6242
      %v6371 = vsel %vm6115, %v5987, %v6243
      %v6372 = vsel %vm6116, %v5988, %v6244
      %v6373 = vsel %vm6117, %v5989, %v6245
      %v6374 = vsel %vm6118, %v5990, %v6246
      %v6375 = vsel %vm6119, %v5991, %v6247
      %v6376 = vsel %vm6120, %v5992, %v6248
      %v6377 = vsel %vm6121, %v5993, %v6249
      %v6378 = vsel %vm6122, %v5994, %v6250
      %v6379 = vsel %vm6123, %v5995, %v6251
      %v6380 = vsel %vm6124, %v5996, %v6252
      %v6381 = vsel %vm6125, %v5997, %v6253
      %v6382 = vsel %vm6126, %v5998, %v6254
      %v6383 = vsel %vm6127, %v5999, %v6255
      %v6384 = vsel %vm6128, %v6000, %v6256
      %v6385 = vsel %vm6129, %v6001, %v6257
      %v6386 = vsel %vm6130, %v6002, %v6258
      %v6387 = vsel %vm6131, %v6003, %v6259
      %v6388 = vsel %vm6132, %v6004, %v6260
      %v6389 = vsel %vm6133, %v6005, %v6261
      %v6390 = vsel %vm6134, %v6006, %v6262
      %v6391 = vsel %vm6135, %v6007, %v6263
      %v6392 = vsel %vm6136, %v6008, %v6264
      %v6393 = vsel %vm6137, %v6009, %v6265
      %v6394 = vsel %vm6138, %v6010, %v6266
      %v6395 = vsel %vm6139, %v6011, %v6267
      %v6396 = vsel %vm6140, %v6012, %v6268
      %v6397 = vsel %vm6141, %v6013, %v6269
      %v6398 = vsel %vm6142, %v6014, %v6270
      %v6399 = vsel %vm6143, %v6015, %v6271
      %v6400 = vsel %vm6144, %v6016, %v6272
      %v6401 = vsel %vm6145, %v6017, %v6273
      %v6402 = vsel %vm6146, %v6018, %v6274
      %v6403 = vsel %vm6147, %v6019, %v6275
      %v6404 = vsel %vm6148, %v6020, %v6276
      %v6405 = vsel %vm6149, %v6021, %v6277
      %v6406 = vsel %vm6150, %v6022, %v6278
      %v6407 = vsel %vm6151, %v6023, %v6279
      %v6408 = vsel %vm6152, %v6024, %v6280
      %v6409 = vsel %vm6153, %v6025, %v6281
      %v6410 = vsel %vm6154, %v6026, %v6282
      %v6411 = vsel %vm6155, %v6027, %v6283
      %v6412 = vsel %vm6156, %v6028, %v6284
      %v6413 = vsel %vm6157, %v6029, %v6285
      %v6414 = vsel %vm6158, %v6030, %v6286
      %v6415 = vsel %vm6159, %v6031, %v6287
      %v6416 = vsel %vm6160, %v6032, %v6288
      %v6417 = vsel %vm6161, %v6033, %v6289
      %v6418 = vsel %vm6162, %v6034, %v6290
      %v6419 = vsel %vm6163, %v6035, %v6291
      %v6420 = vsel %vm6164, %v6036, %v6292
      %v6421 = vsel %vm6165, %v6037, %v6293
      %v6422 = vsel %vm6166, %v6038, %v6294
      %v6423 = vsel %vm6167, %v6039, %v6295
      %v6424 = vsel %vm6168, %v6040, %v6296
      %v6425 = vsel %vm6169, %v6041, %v6297
      %v6426 = vsel %vm6170, %v6042, %v6298
      %v6427 = vsel %vm6171, %v6043, %v6299
      %v6428 = vsel %vm6172, %v6044, %v6300
      %v6429 = vsel %vm6173, %v6045, %v6301
      %v6430 = vsel %vm6174, %v6046, %v6302
      %v6431 = vsel %vm6175, %v6047, %v6303
      %v6432 = vsel %vm6176, %v6048, %v6304
      %v6433 = vsel %vm6177, %v6049, %v6305
      %v6434 = vsel %vm6178, %v6050, %v6306
      %v6435 = vsel %vm6179, %v6051, %v6307
      %v6436 = vsel %vm6180, %v6052, %v6308
      %v6437 = vsel %vm6181, %v6053, %v6309
      %v6438 = vsel %vm6182, %v6054, %v6310
      %v6439 = vsel %vm6183, %v6055, %v6311
      %v6440 = vsel %vm6184, %v6056, %v6312
      %v6441 = vsel %vm6185, %v6057, %v6313
      %v6442 = vsel %vm6186, %v6058, %v6314
      %v6443 = vsel %vm6187, %v6059, %v6315
      %v6444 = vsel %vm6188, %v6060, %v6316
      %v6445 = vlaneseq
      %v6446 = vshrl.u32 %v6445, 7
      %v6447 = vsub.s32 4, %v6446
      %v6448 = vrot.slane %v247, %v6447
      %6450 = vrot.lane.b32.xlu0 %v6448, 16
      %v6451 = vpop.permute.xlu0 %6450
      %v6453 = vmul.f32 %v6317, %v6451
      %v6454 = vmul.f32 %v6318, %v6451
      %v6455 = vmul.f32 %v6319, %v6451
      %v6456 = vmul.f32 %v6320, %v6451
      %v6457 = vmul.f32 %v6321, %v6451
      %v6458 = vmul.f32 %v6322, %v6451
      %v6459 = vmul.f32 %v6323, %v6451
      %v6460 = vmul.f32 %v6324, %v6451
      %v6461 = vmul.f32 %v6325, %v6451
      %v6462 = vmul.f32 %v6326, %v6451
      %v6463 = vmul.f32 %v6327, %v6451
      %v6464 = vmul.f32 %v6328, %v6451
      %v6465 = vmul.f32 %v6329, %v6451
      %v6466 = vmul.f32 %v6330, %v6451
      %v6467 = vmul.f32 %v6331, %v6451
      %v6468 = vmul.f32 %v6332, %v6451
      %v6469 = vmul.f32 %v6333, %v6451
      %v6470 = vmul.f32 %v6334, %v6451
      %v6471 = vmul.f32 %v6335, %v6451
      %v6472 = vmul.f32 %v6336, %v6451
      %v6473 = vmul.f32 %v6337, %v6451
      %v6474 = vmul.f32 %v6338, %v6451
      %v6475 = vmul.f32 %v6339, %v6451
      %v6476 = vmul.f32 %v6340, %v6451
      %v6477 = vmul.f32 %v6341, %v6451
      %v6478 = vmul.f32 %v6342, %v6451
      %v6479 = vmul.f32 %v6343, %v6451
      %v6480 = vmul.f32 %v6344, %v6451
      %v6481 = vmul.f32 %v6345, %v6451
      %v6482 = vmul.f32 %v6346, %v6451
      %v6483 = vmul.f32 %v6347, %v6451
      %v6484 = vmul.f32 %v6348, %v6451
      %v6485 = vmul.f32 %v6349, %v6451
      %v6486 = vmul.f32 %v6350, %v6451
      %v6487 = vmul.f32 %v6351, %v6451
      %v6488 = vmul.f32 %v6352, %v6451
      %v6489 = vmul.f32 %v6353, %v6451
      %v6490 = vmul.f32 %v6354, %v6451
      %v6491 = vmul.f32 %v6355, %v6451
      %v6492 = vmul.f32 %v6356, %v6451
      %v6493 = vmul.f32 %v6357, %v6451
      %v6494 = vmul.f32 %v6358, %v6451
      %v6495 = vmul.f32 %v6359, %v6451
      %v6496 = vmul.f32 %v6360, %v6451
      %v6497 = vmul.f32 %v6361, %v6451
      %v6498 = vmul.f32 %v6362, %v6451
      %v6499 = vmul.f32 %v6363, %v6451
      %v6500 = vmul.f32 %v6364, %v6451
      %v6501 = vmul.f32 %v6365, %v6451
      %v6502 = vmul.f32 %v6366, %v6451
      %v6503 = vmul.f32 %v6367, %v6451
      %v6504 = vmul.f32 %v6368, %v6451
      %v6505 = vmul.f32 %v6369, %v6451
      %v6506 = vmul.f32 %v6370, %v6451
      %v6507 = vmul.f32 %v6371, %v6451
      %v6508 = vmul.f32 %v6372, %v6451
      %v6509 = vmul.f32 %v6373, %v6451
      %v6510 = vmul.f32 %v6374, %v6451
      %v6511 = vmul.f32 %v6375, %v6451
      %v6512 = vmul.f32 %v6376, %v6451
      %v6513 = vmul.f32 %v6377, %v6451
      %v6514 = vmul.f32 %v6378, %v6451
      %v6515 = vmul.f32 %v6379, %v6451
      %v6516 = vmul.f32 %v6380, %v6451
      %v6517 = vmul.f32 %v6381, %v6451
      %v6518 = vmul.f32 %v6382, %v6451
      %v6519 = vmul.f32 %v6383, %v6451
      %v6520 = vmul.f32 %v6384, %v6451
      %v6521 = vmul.f32 %v6385, %v6451
      %v6522 = vmul.f32 %v6386, %v6451
      %v6523 = vmul.f32 %v6387, %v6451
      %v6524 = vmul.f32 %v6388, %v6451
      %v6525 = vmul.f32 %v6389, %v6451
      %v6526 = vmul.f32 %v6390, %v6451
      %v6527 = vmul.f32 %v6391, %v6451
      %v6528 = vmul.f32 %v6392, %v6451
      %v6529 = vmul.f32 %v6393, %v6451
      %v6530 = vmul.f32 %v6394, %v6451
      %v6531 = vmul.f32 %v6395, %v6451
      %v6532 = vmul.f32 %v6396, %v6451
      %v6533 = vmul.f32 %v6397, %v6451
      %v6534 = vmul.f32 %v6398, %v6451
      %v6535 = vmul.f32 %v6399, %v6451
      %v6536 = vmul.f32 %v6400, %v6451
      %v6537 = vmul.f32 %v6401, %v6451
      %v6538 = vmul.f32 %v6402, %v6451
      %v6539 = vmul.f32 %v6403, %v6451
      %v6540 = vmul.f32 %v6404, %v6451
      %v6541 = vmul.f32 %v6405, %v6451
      %v6542 = vmul.f32 %v6406, %v6451
      %v6543 = vmul.f32 %v6407, %v6451
      %v6544 = vmul.f32 %v6408, %v6451
      %v6545 = vmul.f32 %v6409, %v6451
      %v6546 = vmul.f32 %v6410, %v6451
      %v6547 = vmul.f32 %v6411, %v6451
      %v6548 = vmul.f32 %v6412, %v6451
      %v6549 = vmul.f32 %v6413, %v6451
      %v6550 = vmul.f32 %v6414, %v6451
      %v6551 = vmul.f32 %v6415, %v6451
      %v6552 = vmul.f32 %v6416, %v6451
      %v6553 = vmul.f32 %v6417, %v6451
      %v6554 = vmul.f32 %v6418, %v6451
      %v6555 = vmul.f32 %v6419, %v6451
      %v6556 = vmul.f32 %v6420, %v6451
      %v6557 = vmul.f32 %v6421, %v6451
      %v6558 = vmul.f32 %v6422, %v6451
      %v6559 = vmul.f32 %v6423, %v6451
      %v6560 = vmul.f32 %v6424, %v6451
      %v6561 = vmul.f32 %v6425, %v6451
      %v6562 = vmul.f32 %v6426, %v6451
      %v6563 = vmul.f32 %v6427, %v6451
      %v6564 = vmul.f32 %v6428, %v6451
      %v6565 = vmul.f32 %v6429, %v6451
      %v6566 = vmul.f32 %v6430, %v6451
      %v6567 = vmul.f32 %v6431, %v6451
      %v6568 = vmul.f32 %v6432, %v6451
      %v6569 = vmul.f32 %v6433, %v6451
      %v6570 = vmul.f32 %v6434, %v6451
      %v6571 = vmul.f32 %v6435, %v6451
      %v6572 = vmul.f32 %v6436, %v6451
      %v6573 = vmul.f32 %v6437, %v6451
      %v6574 = vmul.f32 %v6438, %v6451
      %v6575 = vmul.f32 %v6439, %v6451
      %v6576 = vmul.f32 %v6440, %v6451
      %v6577 = vmul.f32 %v6441, %v6451
      %v6578 = vmul.f32 %v6442, %v6451
      %v6579 = vmul.f32 %v6443, %v6451
      %v6580 = vmul.f32 %v6444, %v6451
      %6709 = vrot.lane.b32.xlu0 %v6453, 112
      %v6710 = vpop.permute.xlu0 %6709
      %6711 = vrot.lane.b32.xlu0 %v6454, 112
      %v6712 = vpop.permute.xlu0 %6711
      %6713 = vrot.lane.b32.xlu0 %v6455, 112
      %v6714 = vpop.permute.xlu0 %6713
      %6715 = vrot.lane.b32.xlu0 %v6456, 112
      %v6716 = vpop.permute.xlu0 %6715
      %6717 = vrot.lane.b32.xlu0 %v6457, 112
      %v6718 = vpop.permute.xlu0 %6717
      %6719 = vrot.lane.b32.xlu0 %v6458, 112
      %v6720 = vpop.permute.xlu0 %6719
      %6721 = vrot.lane.b32.xlu0 %v6459, 112
      %v6722 = vpop.permute.xlu0 %6721
      %6723 = vrot.lane.b32.xlu0 %v6460, 112
      %v6724 = vpop.permute.xlu0 %6723
      %6725 = vrot.lane.b32.xlu0 %v6461, 112
      %v6726 = vpop.permute.xlu0 %6725
      %6727 = vrot.lane.b32.xlu0 %v6462, 112
      %v6728 = vpop.permute.xlu0 %6727
      %6729 = vrot.lane.b32.xlu0 %v6463, 112
      %v6730 = vpop.permute.xlu0 %6729
      %6731 = vrot.lane.b32.xlu0 %v6464, 112
      %v6732 = vpop.permute.xlu0 %6731
      %6733 = vrot.lane.b32.xlu0 %v6465, 112
      %v6734 = vpop.permute.xlu0 %6733
      %6735 = vrot.lane.b32.xlu0 %v6466, 112
      %v6736 = vpop.permute.xlu0 %6735
      %6737 = vrot.lane.b32.xlu0 %v6467, 112
      %v6738 = vpop.permute.xlu0 %6737
      %6739 = vrot.lane.b32.xlu0 %v6468, 112
      %v6740 = vpop.permute.xlu0 %6739
      %6741 = vrot.lane.b32.xlu0 %v6469, 112
      %v6742 = vpop.permute.xlu0 %6741
      %6743 = vrot.lane.b32.xlu0 %v6470, 112
      %v6744 = vpop.permute.xlu0 %6743
      %6745 = vrot.lane.b32.xlu0 %v6471, 112
      %v6746 = vpop.permute.xlu0 %6745
      %6747 = vrot.lane.b32.xlu0 %v6472, 112
      %v6748 = vpop.permute.xlu0 %6747
      %6749 = vrot.lane.b32.xlu0 %v6473, 112
      %v6750 = vpop.permute.xlu0 %6749
      %6751 = vrot.lane.b32.xlu0 %v6474, 112
      %v6752 = vpop.permute.xlu0 %6751
      %6753 = vrot.lane.b32.xlu0 %v6475, 112
      %v6754 = vpop.permute.xlu0 %6753
      %6755 = vrot.lane.b32.xlu0 %v6476, 112
      %v6756 = vpop.permute.xlu0 %6755
      %6757 = vrot.lane.b32.xlu0 %v6477, 112
      %v6758 = vpop.permute.xlu0 %6757
      %6759 = vrot.lane.b32.xlu0 %v6478, 112
      %v6760 = vpop.permute.xlu0 %6759
      %6761 = vrot.lane.b32.xlu0 %v6479, 112
      %v6762 = vpop.permute.xlu0 %6761
      %6763 = vrot.lane.b32.xlu0 %v6480, 112
      %v6764 = vpop.permute.xlu0 %6763
      %6765 = vrot.lane.b32.xlu0 %v6481, 112
      %v6766 = vpop.permute.xlu0 %6765
      %6767 = vrot.lane.b32.xlu0 %v6482, 112
      %v6768 = vpop.permute.xlu0 %6767
      %6769 = vrot.lane.b32.xlu0 %v6483, 112
      %v6770 = vpop.permute.xlu0 %6769
      %6771 = vrot.lane.b32.xlu0 %v6484, 112
      %v6772 = vpop.permute.xlu0 %6771
      %6773 = vrot.lane.b32.xlu0 %v6485, 112
      %v6774 = vpop.permute.xlu0 %6773
      %6775 = vrot.lane.b32.xlu0 %v6486, 112
      %v6776 = vpop.permute.xlu0 %6775
      %6777 = vrot.lane.b32.xlu0 %v6487, 112
      %v6778 = vpop.permute.xlu0 %6777
      %6779 = vrot.lane.b32.xlu0 %v6488, 112
      %v6780 = vpop.permute.xlu0 %6779
      %6781 = vrot.lane.b32.xlu0 %v6489, 112
      %v6782 = vpop.permute.xlu0 %6781
      %6783 = vrot.lane.b32.xlu0 %v6490, 112
      %v6784 = vpop.permute.xlu0 %6783
      %6785 = vrot.lane.b32.xlu0 %v6491, 112
      %v6786 = vpop.permute.xlu0 %6785
      %6787 = vrot.lane.b32.xlu0 %v6492, 112
      %v6788 = vpop.permute.xlu0 %6787
      %6789 = vrot.lane.b32.xlu0 %v6493, 112
      %v6790 = vpop.permute.xlu0 %6789
      %6791 = vrot.lane.b32.xlu0 %v6494, 112
      %v6792 = vpop.permute.xlu0 %6791
      %6793 = vrot.lane.b32.xlu0 %v6495, 112
      %v6794 = vpop.permute.xlu0 %6793
      %6795 = vrot.lane.b32.xlu0 %v6496, 112
      %v6796 = vpop.permute.xlu0 %6795
      %6797 = vrot.lane.b32.xlu0 %v6497, 112
      %v6798 = vpop.permute.xlu0 %6797
      %6799 = vrot.lane.b32.xlu0 %v6498, 112
      %v6800 = vpop.permute.xlu0 %6799
      %6801 = vrot.lane.b32.xlu0 %v6499, 112
      %v6802 = vpop.permute.xlu0 %6801
      %6803 = vrot.lane.b32.xlu0 %v6500, 112
      %v6804 = vpop.permute.xlu0 %6803
      %6805 = vrot.lane.b32.xlu0 %v6501, 112
      %v6806 = vpop.permute.xlu0 %6805
      %6807 = vrot.lane.b32.xlu0 %v6502, 112
      %v6808 = vpop.permute.xlu0 %6807
      %6809 = vrot.lane.b32.xlu0 %v6503, 112
      %v6810 = vpop.permute.xlu0 %6809
      %6811 = vrot.lane.b32.xlu0 %v6504, 112
      %v6812 = vpop.permute.xlu0 %6811
      %6813 = vrot.lane.b32.xlu0 %v6505, 112
      %v6814 = vpop.permute.xlu0 %6813
      %6815 = vrot.lane.b32.xlu0 %v6506, 112
      %v6816 = vpop.permute.xlu0 %6815
      %6817 = vrot.lane.b32.xlu0 %v6507, 112
      %v6818 = vpop.permute.xlu0 %6817
      %6819 = vrot.lane.b32.xlu0 %v6508, 112
      %v6820 = vpop.permute.xlu0 %6819
      %6821 = vrot.lane.b32.xlu0 %v6509, 112
      %v6822 = vpop.permute.xlu0 %6821
      %6823 = vrot.lane.b32.xlu0 %v6510, 112
      %v6824 = vpop.permute.xlu0 %6823
      %6825 = vrot.lane.b32.xlu0 %v6511, 112
      %v6826 = vpop.permute.xlu0 %6825
      %6827 = vrot.lane.b32.xlu0 %v6512, 112
      %v6828 = vpop.permute.xlu0 %6827
      %6829 = vrot.lane.b32.xlu0 %v6513, 112
      %v6830 = vpop.permute.xlu0 %6829
      %6831 = vrot.lane.b32.xlu0 %v6514, 112
      %v6832 = vpop.permute.xlu0 %6831
      %6833 = vrot.lane.b32.xlu0 %v6515, 112
      %v6834 = vpop.permute.xlu0 %6833
      %6835 = vrot.lane.b32.xlu0 %v6516, 112
      %v6836 = vpop.permute.xlu0 %6835
      %6837 = vrot.lane.b32.xlu0 %v6517, 112
      %v6838 = vpop.permute.xlu0 %6837
      %6839 = vrot.lane.b32.xlu0 %v6518, 112
      %v6840 = vpop.permute.xlu0 %6839
      %6841 = vrot.lane.b32.xlu0 %v6519, 112
      %v6842 = vpop.permute.xlu0 %6841
      %6843 = vrot.lane.b32.xlu0 %v6520, 112
      %v6844 = vpop.permute.xlu0 %6843
      %6845 = vrot.lane.b32.xlu0 %v6521, 112
      %v6846 = vpop.permute.xlu0 %6845
      %6847 = vrot.lane.b32.xlu0 %v6522, 112
      %v6848 = vpop.permute.xlu0 %6847
      %6849 = vrot.lane.b32.xlu0 %v6523, 112
      %v6850 = vpop.permute.xlu0 %6849
      %6851 = vrot.lane.b32.xlu0 %v6524, 112
      %v6852 = vpop.permute.xlu0 %6851
      %6853 = vrot.lane.b32.xlu0 %v6525, 112
      %v6854 = vpop.permute.xlu0 %6853
      %6855 = vrot.lane.b32.xlu0 %v6526, 112
      %v6856 = vpop.permute.xlu0 %6855
      %6857 = vrot.lane.b32.xlu0 %v6527, 112
      %v6858 = vpop.permute.xlu0 %6857
      %6859 = vrot.lane.b32.xlu0 %v6528, 112
      %v6860 = vpop.permute.xlu0 %6859
      %6861 = vrot.lane.b32.xlu0 %v6529, 112
      %v6862 = vpop.permute.xlu0 %6861
      %6863 = vrot.lane.b32.xlu0 %v6530, 112
      %v6864 = vpop.permute.xlu0 %6863
      %6865 = vrot.lane.b32.xlu0 %v6531, 112
      %v6866 = vpop.permute.xlu0 %6865
      %6867 = vrot.lane.b32.xlu0 %v6532, 112
      %v6868 = vpop.permute.xlu0 %6867
      %6869 = vrot.lane.b32.xlu0 %v6533, 112
      %v6870 = vpop.permute.xlu0 %6869
      %6871 = vrot.lane.b32.xlu0 %v6534, 112
      %v6872 = vpop.permute.xlu0 %6871
      %6873 = vrot.lane.b32.xlu0 %v6535, 112
      %v6874 = vpop.permute.xlu0 %6873
      %6875 = vrot.lane.b32.xlu0 %v6536, 112
      %v6876 = vpop.permute.xlu0 %6875
      %6877 = vrot.lane.b32.xlu0 %v6537, 112
      %v6878 = vpop.permute.xlu0 %6877
      %6879 = vrot.lane.b32.xlu0 %v6538, 112
      %v6880 = vpop.permute.xlu0 %6879
      %6881 = vrot.lane.b32.xlu0 %v6539, 112
      %v6882 = vpop.permute.xlu0 %6881
      %6883 = vrot.lane.b32.xlu0 %v6540, 112
      %v6884 = vpop.permute.xlu0 %6883
      %6885 = vrot.lane.b32.xlu0 %v6541, 112
      %v6886 = vpop.permute.xlu0 %6885
      %6887 = vrot.lane.b32.xlu0 %v6542, 112
      %v6888 = vpop.permute.xlu0 %6887
      %6889 = vrot.lane.b32.xlu0 %v6543, 112
      %v6890 = vpop.permute.xlu0 %6889
      %6891 = vrot.lane.b32.xlu0 %v6544, 112
      %v6892 = vpop.permute.xlu0 %6891
      %6893 = vrot.lane.b32.xlu0 %v6545, 112
      %v6894 = vpop.permute.xlu0 %6893
      %6895 = vrot.lane.b32.xlu0 %v6546, 112
      %v6896 = vpop.permute.xlu0 %6895
      %6897 = vrot.lane.b32.xlu0 %v6547, 112
      %v6898 = vpop.permute.xlu0 %6897
      %6899 = vrot.lane.b32.xlu0 %v6548, 112
      %v6900 = vpop.permute.xlu0 %6899
      %6901 = vrot.lane.b32.xlu0 %v6549, 112
      %v6902 = vpop.permute.xlu0 %6901
      %6903 = vrot.lane.b32.xlu0 %v6550, 112
      %v6904 = vpop.permute.xlu0 %6903
      %6905 = vrot.lane.b32.xlu0 %v6551, 112
      %v6906 = vpop.permute.xlu0 %6905
      %6907 = vrot.lane.b32.xlu0 %v6552, 112
      %v6908 = vpop.permute.xlu0 %6907
      %6909 = vrot.lane.b32.xlu0 %v6553, 112
      %v6910 = vpop.permute.xlu0 %6909
      %6911 = vrot.lane.b32.xlu0 %v6554, 112
      %v6912 = vpop.permute.xlu0 %6911
      %6913 = vrot.lane.b32.xlu0 %v6555, 112
      %v6914 = vpop.permute.xlu0 %6913
      %6915 = vrot.lane.b32.xlu0 %v6556, 112
      %v6916 = vpop.permute.xlu0 %6915
      %6917 = vrot.lane.b32.xlu0 %v6557, 112
      %v6918 = vpop.permute.xlu0 %6917
      %6919 = vrot.lane.b32.xlu0 %v6558, 112
      %v6920 = vpop.permute.xlu0 %6919
      %6921 = vrot.lane.b32.xlu0 %v6559, 112
      %v6922 = vpop.permute.xlu0 %6921
      %6923 = vrot.lane.b32.xlu0 %v6560, 112
      %v6924 = vpop.permute.xlu0 %6923
      %6925 = vrot.lane.b32.xlu0 %v6561, 112
      %v6926 = vpop.permute.xlu0 %6925
      %6927 = vrot.lane.b32.xlu0 %v6562, 112
      %v6928 = vpop.permute.xlu0 %6927
      %6929 = vrot.lane.b32.xlu0 %v6563, 112
      %v6930 = vpop.permute.xlu0 %6929
      %6931 = vrot.lane.b32.xlu0 %v6564, 112
      %v6932 = vpop.permute.xlu0 %6931
      %6933 = vrot.lane.b32.xlu0 %v6565, 112
      %v6934 = vpop.permute.xlu0 %6933
      %6935 = vrot.lane.b32.xlu0 %v6566, 112
      %v6936 = vpop.permute.xlu0 %6935
      %6937 = vrot.lane.b32.xlu0 %v6567, 112
      %v6938 = vpop.permute.xlu0 %6937
      %6939 = vrot.lane.b32.xlu0 %v6568, 112
      %v6940 = vpop.permute.xlu0 %6939
      %6941 = vrot.lane.b32.xlu0 %v6569, 112
      %v6942 = vpop.permute.xlu0 %6941
      %6943 = vrot.lane.b32.xlu0 %v6570, 112
      %v6944 = vpop.permute.xlu0 %6943
      %6945 = vrot.lane.b32.xlu0 %v6571, 112
      %v6946 = vpop.permute.xlu0 %6945
      %6947 = vrot.lane.b32.xlu0 %v6572, 112
      %v6948 = vpop.permute.xlu0 %6947
      %6949 = vrot.lane.b32.xlu0 %v6573, 112
      %v6950 = vpop.permute.xlu0 %6949
      %6951 = vrot.lane.b32.xlu0 %v6574, 112
      %v6952 = vpop.permute.xlu0 %6951
      %6953 = vrot.lane.b32.xlu0 %v6575, 112
      %v6954 = vpop.permute.xlu0 %6953
      %6955 = vrot.lane.b32.xlu0 %v6576, 112
      %v6956 = vpop.permute.xlu0 %6955
      %6957 = vrot.lane.b32.xlu0 %v6577, 112
      %v6958 = vpop.permute.xlu0 %6957
      %6959 = vrot.lane.b32.xlu0 %v6578, 112
      %v6960 = vpop.permute.xlu0 %6959
      %6961 = vrot.lane.b32.xlu0 %v6579, 112
      %v6962 = vpop.permute.xlu0 %6961
      %6963 = vrot.lane.b32.xlu0 %v6580, 112
      %v6964 = vpop.permute.xlu0 %6963
      %v7093 = vsel %vm5463, %v6710, 0.0
      %7094 = vadd.xlane.f32.xlu0 %v7093
      %v7095 = vpop.xlane.xlu0 %7094
      %v7096 = vsel %vm5463, %v6712, 0.0
      %7097 = vadd.xlane.f32.xlu0 %v7096
      %v7098 = vpop.xlane.xlu0 %7097
      %v7099 = vsel %vm5463, %v6714, 0.0
      %7100 = vadd.xlane.f32.xlu0 %v7099
      %v7101 = vpop.xlane.xlu0 %7100
      %v7102 = vsel %vm5463, %v6716, 0.0
      %7103 = vadd.xlane.f32.xlu0 %v7102
      %v7104 = vpop.xlane.xlu0 %7103
      %v7105 = vsel %vm5463, %v6718, 0.0
      %7106 = vadd.xlane.f32.xlu0 %v7105
      %v7107 = vpop.xlane.xlu0 %7106
      %v7108 = vsel %vm5463, %v6720, 0.0
      %7109 = vadd.xlane.f32.xlu0 %v7108
      %v7110 = vpop.xlane.xlu0 %7109
      %v7111 = vsel %vm5463, %v6722, 0.0
      %7112 = vadd.xlane.f32.xlu0 %v7111
      %v7113 = vpop.xlane.xlu0 %7112
      %v7114 = vsel %vm5463, %v6724, 0.0
      %7115 = vadd.xlane.f32.xlu0 %v7114
      %v7116 = vpop.xlane.xlu0 %7115
      %v7117 = vsel %vm5463, %v6726, 0.0
      %7118 = vadd.xlane.f32.xlu0 %v7117
      %v7119 = vpop.xlane.xlu0 %7118
      %v7120 = vsel %vm5463, %v6728, 0.0
      %7121 = vadd.xlane.f32.xlu0 %v7120
      %v7122 = vpop.xlane.xlu0 %7121
      %v7123 = vsel %vm5463, %v6730, 0.0
      %7124 = vadd.xlane.f32.xlu0 %v7123
      %v7125 = vpop.xlane.xlu0 %7124
      %v7126 = vsel %vm5463, %v6732, 0.0
      %7127 = vadd.xlane.f32.xlu0 %v7126
      %v7128 = vpop.xlane.xlu0 %7127
      %v7129 = vsel %vm5463, %v6734, 0.0
      %7130 = vadd.xlane.f32.xlu0 %v7129
      %v7131 = vpop.xlane.xlu0 %7130
      %v7132 = vsel %vm5463, %v6736, 0.0
      %7133 = vadd.xlane.f32.xlu0 %v7132
      %v7134 = vpop.xlane.xlu0 %7133
      %v7135 = vsel %vm5463, %v6738, 0.0
      %7136 = vadd.xlane.f32.xlu0 %v7135
      %v7137 = vpop.xlane.xlu0 %7136
      %v7138 = vsel %vm5463, %v6740, 0.0
      %7139 = vadd.xlane.f32.xlu0 %v7138
      %v7140 = vpop.xlane.xlu0 %7139
      %v7141 = vsel %vm5463, %v6742, 0.0
      %7142 = vadd.xlane.f32.xlu0 %v7141
      %v7143 = vpop.xlane.xlu0 %7142
      %v7144 = vsel %vm5463, %v6744, 0.0
      %7145 = vadd.xlane.f32.xlu0 %v7144
      %v7146 = vpop.xlane.xlu0 %7145
      %v7147 = vsel %vm5463, %v6746, 0.0
      %7148 = vadd.xlane.f32.xlu0 %v7147
      %v7149 = vpop.xlane.xlu0 %7148
      %v7150 = vsel %vm5463, %v6748, 0.0
      %7151 = vadd.xlane.f32.xlu0 %v7150
      %v7152 = vpop.xlane.xlu0 %7151
      %v7153 = vsel %vm5463, %v6750, 0.0
      %7154 = vadd.xlane.f32.xlu0 %v7153
      %v7155 = vpop.xlane.xlu0 %7154
      %v7156 = vsel %vm5463, %v6752, 0.0
      %7157 = vadd.xlane.f32.xlu0 %v7156
      %v7158 = vpop.xlane.xlu0 %7157
      %v7159 = vsel %vm5463, %v6754, 0.0
      %7160 = vadd.xlane.f32.xlu0 %v7159
      %v7161 = vpop.xlane.xlu0 %7160
      %v7162 = vsel %vm5463, %v6756, 0.0
      %7163 = vadd.xlane.f32.xlu0 %v7162
      %v7164 = vpop.xlane.xlu0 %7163
      %v7165 = vsel %vm5463, %v6758, 0.0
      %7166 = vadd.xlane.f32.xlu0 %v7165
      %v7167 = vpop.xlane.xlu0 %7166
      %v7168 = vsel %vm5463, %v6760, 0.0
      %7169 = vadd.xlane.f32.xlu0 %v7168
      %v7170 = vpop.xlane.xlu0 %7169
      %v7171 = vsel %vm5463, %v6762, 0.0
      %7172 = vadd.xlane.f32.xlu0 %v7171
      %v7173 = vpop.xlane.xlu0 %7172
      %v7174 = vsel %vm5463, %v6764, 0.0
      %7175 = vadd.xlane.f32.xlu0 %v7174
      %v7176 = vpop.xlane.xlu0 %7175
      %v7177 = vsel %vm5463, %v6766, 0.0
      %7178 = vadd.xlane.f32.xlu0 %v7177
      %v7179 = vpop.xlane.xlu0 %7178
      %v7180 = vsel %vm5463, %v6768, 0.0
      %7181 = vadd.xlane.f32.xlu0 %v7180
      %v7182 = vpop.xlane.xlu0 %7181
      %v7183 = vsel %vm5463, %v6770, 0.0
      %7184 = vadd.xlane.f32.xlu0 %v7183
      %v7185 = vpop.xlane.xlu0 %7184
      %v7186 = vsel %vm5463, %v6772, 0.0
      %7187 = vadd.xlane.f32.xlu0 %v7186
      %v7188 = vpop.xlane.xlu0 %7187
      %v7189 = vsel %vm5463, %v6774, 0.0
      %7190 = vadd.xlane.f32.xlu0 %v7189
      %v7191 = vpop.xlane.xlu0 %7190
      %v7192 = vsel %vm5463, %v6776, 0.0
      %7193 = vadd.xlane.f32.xlu0 %v7192
      %v7194 = vpop.xlane.xlu0 %7193
      %v7195 = vsel %vm5463, %v6778, 0.0
      %7196 = vadd.xlane.f32.xlu0 %v7195
      %v7197 = vpop.xlane.xlu0 %7196
      %v7198 = vsel %vm5463, %v6780, 0.0
      %7199 = vadd.xlane.f32.xlu0 %v7198
      %v7200 = vpop.xlane.xlu0 %7199
      %v7201 = vsel %vm5463, %v6782, 0.0
      %7202 = vadd.xlane.f32.xlu0 %v7201
      %v7203 = vpop.xlane.xlu0 %7202
      %v7204 = vsel %vm5463, %v6784, 0.0
      %7205 = vadd.xlane.f32.xlu0 %v7204
      %v7206 = vpop.xlane.xlu0 %7205
      %v7207 = vsel %vm5463, %v6786, 0.0
      %7208 = vadd.xlane.f32.xlu0 %v7207
      %v7209 = vpop.xlane.xlu0 %7208
      %v7210 = vsel %vm5463, %v6788, 0.0
      %7211 = vadd.xlane.f32.xlu0 %v7210
      %v7212 = vpop.xlane.xlu0 %7211
      %v7213 = vsel %vm5463, %v6790, 0.0
      %7214 = vadd.xlane.f32.xlu0 %v7213
      %v7215 = vpop.xlane.xlu0 %7214
      %v7216 = vsel %vm5463, %v6792, 0.0
      %7217 = vadd.xlane.f32.xlu0 %v7216
      %v7218 = vpop.xlane.xlu0 %7217
      %v7219 = vsel %vm5463, %v6794, 0.0
      %7220 = vadd.xlane.f32.xlu0 %v7219
      %v7221 = vpop.xlane.xlu0 %7220
      %v7222 = vsel %vm5463, %v6796, 0.0
      %7223 = vadd.xlane.f32.xlu0 %v7222
      %v7224 = vpop.xlane.xlu0 %7223
      %v7225 = vsel %vm5463, %v6798, 0.0
      %7226 = vadd.xlane.f32.xlu0 %v7225
      %v7227 = vpop.xlane.xlu0 %7226
      %v7228 = vsel %vm5463, %v6800, 0.0
      %7229 = vadd.xlane.f32.xlu0 %v7228
      %v7230 = vpop.xlane.xlu0 %7229
      %v7231 = vsel %vm5463, %v6802, 0.0
      %7232 = vadd.xlane.f32.xlu0 %v7231
      %v7233 = vpop.xlane.xlu0 %7232
      %v7234 = vsel %vm5463, %v6804, 0.0
      %7235 = vadd.xlane.f32.xlu0 %v7234
      %v7236 = vpop.xlane.xlu0 %7235
      %v7237 = vsel %vm5463, %v6806, 0.0
      %7238 = vadd.xlane.f32.xlu0 %v7237
      %v7239 = vpop.xlane.xlu0 %7238
      %v7240 = vsel %vm5463, %v6808, 0.0
      %7241 = vadd.xlane.f32.xlu0 %v7240
      %v7242 = vpop.xlane.xlu0 %7241
      %v7243 = vsel %vm5463, %v6810, 0.0
      %7244 = vadd.xlane.f32.xlu0 %v7243
      %v7245 = vpop.xlane.xlu0 %7244
      %v7246 = vsel %vm5463, %v6812, 0.0
      %7247 = vadd.xlane.f32.xlu0 %v7246
      %v7248 = vpop.xlane.xlu0 %7247
      %v7249 = vsel %vm5463, %v6814, 0.0
      %7250 = vadd.xlane.f32.xlu0 %v7249
      %v7251 = vpop.xlane.xlu0 %7250
      %v7252 = vsel %vm5463, %v6816, 0.0
      %7253 = vadd.xlane.f32.xlu0 %v7252
      %v7254 = vpop.xlane.xlu0 %7253
      %v7255 = vsel %vm5463, %v6818, 0.0
      %7256 = vadd.xlane.f32.xlu0 %v7255
      %v7257 = vpop.xlane.xlu0 %7256
      %v7258 = vsel %vm5463, %v6820, 0.0
      %7259 = vadd.xlane.f32.xlu0 %v7258
      %v7260 = vpop.xlane.xlu0 %7259
      %v7261 = vsel %vm5463, %v6822, 0.0
      %7262 = vadd.xlane.f32.xlu0 %v7261
      %v7263 = vpop.xlane.xlu0 %7262
      %v7264 = vsel %vm5463, %v6824, 0.0
      %7265 = vadd.xlane.f32.xlu0 %v7264
      %v7266 = vpop.xlane.xlu0 %7265
      %v7267 = vsel %vm5463, %v6826, 0.0
      %7268 = vadd.xlane.f32.xlu0 %v7267
      %v7269 = vpop.xlane.xlu0 %7268
      %v7270 = vsel %vm5463, %v6828, 0.0
      %7271 = vadd.xlane.f32.xlu0 %v7270
      %v7272 = vpop.xlane.xlu0 %7271
      %v7273 = vsel %vm5463, %v6830, 0.0
      %7274 = vadd.xlane.f32.xlu0 %v7273
      %v7275 = vpop.xlane.xlu0 %7274
      %v7276 = vsel %vm5463, %v6832, 0.0
      %7277 = vadd.xlane.f32.xlu0 %v7276
      %v7278 = vpop.xlane.xlu0 %7277
      %v7279 = vsel %vm5463, %v6834, 0.0
      %7280 = vadd.xlane.f32.xlu0 %v7279
      %v7281 = vpop.xlane.xlu0 %7280
      %v7282 = vsel %vm5463, %v6836, 0.0
      %7283 = vadd.xlane.f32.xlu0 %v7282
      %v7284 = vpop.xlane.xlu0 %7283
      %v7285 = vsel %vm5463, %v6838, 0.0
      %7286 = vadd.xlane.f32.xlu0 %v7285
      %v7287 = vpop.xlane.xlu0 %7286
      %v7288 = vsel %vm5463, %v6840, 0.0
      %7289 = vadd.xlane.f32.xlu0 %v7288
      %v7290 = vpop.xlane.xlu0 %7289
      %v7291 = vsel %vm5463, %v6842, 0.0
      %7292 = vadd.xlane.f32.xlu0 %v7291
      %v7293 = vpop.xlane.xlu0 %7292
      %v7294 = vsel %vm5463, %v6844, 0.0
      %7295 = vadd.xlane.f32.xlu0 %v7294
      %v7296 = vpop.xlane.xlu0 %7295
      %v7297 = vsel %vm5463, %v6846, 0.0
      %7298 = vadd.xlane.f32.xlu0 %v7297
      %v7299 = vpop.xlane.xlu0 %7298
      %v7300 = vsel %vm5463, %v6848, 0.0
      %7301 = vadd.xlane.f32.xlu0 %v7300
      %v7302 = vpop.xlane.xlu0 %7301
      %v7303 = vsel %vm5463, %v6850, 0.0
      %7304 = vadd.xlane.f32.xlu0 %v7303
      %v7305 = vpop.xlane.xlu0 %7304
      %v7306 = vsel %vm5463, %v6852, 0.0
      %7307 = vadd.xlane.f32.xlu0 %v7306
      %v7308 = vpop.xlane.xlu0 %7307
      %v7309 = vsel %vm5463, %v6854, 0.0
      %7310 = vadd.xlane.f32.xlu0 %v7309
      %v7311 = vpop.xlane.xlu0 %7310
      %v7312 = vsel %vm5463, %v6856, 0.0
      %7313 = vadd.xlane.f32.xlu0 %v7312
      %v7314 = vpop.xlane.xlu0 %7313
      %v7315 = vsel %vm5463, %v6858, 0.0
      %7316 = vadd.xlane.f32.xlu0 %v7315
      %v7317 = vpop.xlane.xlu0 %7316
      %v7318 = vsel %vm5463, %v6860, 0.0
      %7319 = vadd.xlane.f32.xlu0 %v7318
      %v7320 = vpop.xlane.xlu0 %7319
      %v7321 = vsel %vm5463, %v6862, 0.0
      %7322 = vadd.xlane.f32.xlu0 %v7321
      %v7323 = vpop.xlane.xlu0 %7322
      %v7324 = vsel %vm5463, %v6864, 0.0
      %7325 = vadd.xlane.f32.xlu0 %v7324
      %v7326 = vpop.xlane.xlu0 %7325
      %v7327 = vsel %vm5463, %v6866, 0.0
      %7328 = vadd.xlane.f32.xlu0 %v7327
      %v7329 = vpop.xlane.xlu0 %7328
      %v7330 = vsel %vm5463, %v6868, 0.0
      %7331 = vadd.xlane.f32.xlu0 %v7330
      %v7332 = vpop.xlane.xlu0 %7331
      %v7333 = vsel %vm5463, %v6870, 0.0
      %7334 = vadd.xlane.f32.xlu0 %v7333
      %v7335 = vpop.xlane.xlu0 %7334
      %v7336 = vsel %vm5463, %v6872, 0.0
      %7337 = vadd.xlane.f32.xlu0 %v7336
      %v7338 = vpop.xlane.xlu0 %7337
      %v7339 = vsel %vm5463, %v6874, 0.0
      %7340 = vadd.xlane.f32.xlu0 %v7339
      %v7341 = vpop.xlane.xlu0 %7340
      %v7342 = vsel %vm5463, %v6876, 0.0
      %7343 = vadd.xlane.f32.xlu0 %v7342
      %v7344 = vpop.xlane.xlu0 %7343
      %v7345 = vsel %vm5463, %v6878, 0.0
      %7346 = vadd.xlane.f32.xlu0 %v7345
      %v7347 = vpop.xlane.xlu0 %7346
      %v7348 = vsel %vm5463, %v6880, 0.0
      %7349 = vadd.xlane.f32.xlu0 %v7348
      %v7350 = vpop.xlane.xlu0 %7349
      %v7351 = vsel %vm5463, %v6882, 0.0
      %7352 = vadd.xlane.f32.xlu0 %v7351
      %v7353 = vpop.xlane.xlu0 %7352
      %v7354 = vsel %vm5463, %v6884, 0.0
      %7355 = vadd.xlane.f32.xlu0 %v7354
      %v7356 = vpop.xlane.xlu0 %7355
      %v7357 = vsel %vm5463, %v6886, 0.0
      %7358 = vadd.xlane.f32.xlu0 %v7357
      %v7359 = vpop.xlane.xlu0 %7358
      %v7360 = vsel %vm5463, %v6888, 0.0
      %7361 = vadd.xlane.f32.xlu0 %v7360
      %v7362 = vpop.xlane.xlu0 %7361
      %v7363 = vsel %vm5463, %v6890, 0.0
      %7364 = vadd.xlane.f32.xlu0 %v7363
      %v7365 = vpop.xlane.xlu0 %7364
      %v7366 = vsel %vm5463, %v6892, 0.0
      %7367 = vadd.xlane.f32.xlu0 %v7366
      %v7368 = vpop.xlane.xlu0 %7367
      %v7369 = vsel %vm5463, %v6894, 0.0
      %7370 = vadd.xlane.f32.xlu0 %v7369
      %v7371 = vpop.xlane.xlu0 %7370
      %v7372 = vsel %vm5463, %v6896, 0.0
      %7373 = vadd.xlane.f32.xlu0 %v7372
      %v7374 = vpop.xlane.xlu0 %7373
      %v7375 = vsel %vm5463, %v6898, 0.0
      %7376 = vadd.xlane.f32.xlu0 %v7375
      %v7377 = vpop.xlane.xlu0 %7376
      %v7378 = vsel %vm5463, %v6900, 0.0
      %7379 = vadd.xlane.f32.xlu0 %v7378
      %v7380 = vpop.xlane.xlu0 %7379
      %v7381 = vsel %vm5463, %v6902, 0.0
      %7382 = vadd.xlane.f32.xlu0 %v7381
      %v7383 = vpop.xlane.xlu0 %7382
      %v7384 = vsel %vm5463, %v6904, 0.0
      %7385 = vadd.xlane.f32.xlu0 %v7384
      %v7386 = vpop.xlane.xlu0 %7385
      %v7387 = vsel %vm5463, %v6906, 0.0
      %7388 = vadd.xlane.f32.xlu0 %v7387
      %v7389 = vpop.xlane.xlu0 %7388
      %v7390 = vsel %vm5463, %v6908, 0.0
      %7391 = vadd.xlane.f32.xlu0 %v7390
      %v7392 = vpop.xlane.xlu0 %7391
      %v7393 = vsel %vm5463, %v6910, 0.0
      %7394 = vadd.xlane.f32.xlu0 %v7393
      %v7395 = vpop.xlane.xlu0 %7394
      %v7396 = vsel %vm5463, %v6912, 0.0
      %7397 = vadd.xlane.f32.xlu0 %v7396
      %v7398 = vpop.xlane.xlu0 %7397
      %v7399 = vsel %vm5463, %v6914, 0.0
      %7400 = vadd.xlane.f32.xlu0 %v7399
      %v7401 = vpop.xlane.xlu0 %7400
      %v7402 = vsel %vm5463, %v6916, 0.0
      %7403 = vadd.xlane.f32.xlu0 %v7402
      %v7404 = vpop.xlane.xlu0 %7403
      %v7405 = vsel %vm5463, %v6918, 0.0
      %7406 = vadd.xlane.f32.xlu0 %v7405
      %v7407 = vpop.xlane.xlu0 %7406
      %v7408 = vsel %vm5463, %v6920, 0.0
      %7409 = vadd.xlane.f32.xlu0 %v7408
      %v7410 = vpop.xlane.xlu0 %7409
      %v7411 = vsel %vm5463, %v6922, 0.0
      %7412 = vadd.xlane.f32.xlu0 %v7411
      %v7413 = vpop.xlane.xlu0 %7412
      %v7414 = vsel %vm5463, %v6924, 0.0
      %7415 = vadd.xlane.f32.xlu0 %v7414
      %v7416 = vpop.xlane.xlu0 %7415
      %v7417 = vsel %vm5463, %v6926, 0.0
      %7418 = vadd.xlane.f32.xlu0 %v7417
      %v7419 = vpop.xlane.xlu0 %7418
      %v7420 = vsel %vm5463, %v6928, 0.0
      %7421 = vadd.xlane.f32.xlu0 %v7420
      %v7422 = vpop.xlane.xlu0 %7421
      %v7423 = vsel %vm5463, %v6930, 0.0
      %7424 = vadd.xlane.f32.xlu0 %v7423
      %v7425 = vpop.xlane.xlu0 %7424
      %v7426 = vsel %vm5463, %v6932, 0.0
      %7427 = vadd.xlane.f32.xlu0 %v7426
      %v7428 = vpop.xlane.xlu0 %7427
      %v7429 = vsel %vm5463, %v6934, 0.0
      %7430 = vadd.xlane.f32.xlu0 %v7429
      %v7431 = vpop.xlane.xlu0 %7430
      %v7432 = vsel %vm5463, %v6936, 0.0
      %7433 = vadd.xlane.f32.xlu0 %v7432
      %v7434 = vpop.xlane.xlu0 %7433
      %v7435 = vsel %vm5463, %v6938, 0.0
      %7436 = vadd.xlane.f32.xlu0 %v7435
      %v7437 = vpop.xlane.xlu0 %7436
      %v7438 = vsel %vm5463, %v6940, 0.0
      %7439 = vadd.xlane.f32.xlu0 %v7438
      %v7440 = vpop.xlane.xlu0 %7439
      %v7441 = vsel %vm5463, %v6942, 0.0
      %7442 = vadd.xlane.f32.xlu0 %v7441
      %v7443 = vpop.xlane.xlu0 %7442
      %v7444 = vsel %vm5463, %v6944, 0.0
      %7445 = vadd.xlane.f32.xlu0 %v7444
      %v7446 = vpop.xlane.xlu0 %7445
      %v7447 = vsel %vm5463, %v6946, 0.0
      %7448 = vadd.xlane.f32.xlu0 %v7447
      %v7449 = vpop.xlane.xlu0 %7448
      %v7450 = vsel %vm5463, %v6948, 0.0
      %7451 = vadd.xlane.f32.xlu0 %v7450
      %v7452 = vpop.xlane.xlu0 %7451
      %v7453 = vsel %vm5463, %v6950, 0.0
      %7454 = vadd.xlane.f32.xlu0 %v7453
      %v7455 = vpop.xlane.xlu0 %7454
      %v7456 = vsel %vm5463, %v6952, 0.0
      %7457 = vadd.xlane.f32.xlu0 %v7456
      %v7458 = vpop.xlane.xlu0 %7457
      %v7459 = vsel %vm5463, %v6954, 0.0
      %7460 = vadd.xlane.f32.xlu0 %v7459
      %v7461 = vpop.xlane.xlu0 %7460
      %v7462 = vsel %vm5463, %v6956, 0.0
      %7463 = vadd.xlane.f32.xlu0 %v7462
      %v7464 = vpop.xlane.xlu0 %7463
      %v7465 = vsel %vm5463, %v6958, 0.0
      %7466 = vadd.xlane.f32.xlu0 %v7465
      %v7467 = vpop.xlane.xlu0 %7466
      %v7468 = vsel %vm5463, %v6960, 0.0
      %7469 = vadd.xlane.f32.xlu0 %v7468
      %v7470 = vpop.xlane.xlu0 %7469
      %v7471 = vsel %vm5463, %v6962, 0.0
      %7472 = vadd.xlane.f32.xlu0 %v7471
      %v7473 = vpop.xlane.xlu0 %7472
      %v7474 = vsel %vm5463, %v6964, 0.0
      %7475 = vadd.xlane.f32.xlu0 %v7474
      %v7476 = vpop.xlane.xlu0 %7475
      %v7605 = vlaneseq
      %v7606 = vshrl.u32 %v7605, 7
      %v7607 = vsub.s32 %v749, %v7606
      %v7608 = vrot.slane %v7095, %v7607
      %v7609 = vlaneseq
      %v7610 = vshrl.u32 %v7609, 7
      %v7611 = vsub.s32 %v2917, %v7610
      %v7612 = vrot.slane %v7098, %v7611
      %v7613 = vsel %vm2922, %v7612, %v7608
      %v7614 = vlaneseq
      %v7615 = vshrl.u32 %v7614, 7
      %v7616 = vsub.s32 %v2924, %v7615
      %v7617 = vrot.slane %v7101, %v7616
      %v7618 = vsel %vm2929, %v7617, %v7613
      %v7619 = vlaneseq
      %v7620 = vshrl.u32 %v7619, 7
      %v7621 = vsub.s32 %v2931, %v7620
      %v7622 = vrot.slane %v7104, %v7621
      %v7623 = vsel %vm2936, %v7622, %v7618
      %v7624 = vlaneseq
      %v7625 = vshrl.u32 %v7624, 7
      %v7626 = vsub.s32 %v749, %v7625
      %v7627 = vrot.slane %v7107, %v7626
      %v7628 = vlaneseq
      %v7629 = vshrl.u32 %v7628, 7
      %v7630 = vsub.s32 %v2917, %v7629
      %v7631 = vrot.slane %v7110, %v7630
      %v7632 = vsel %vm2922, %v7631, %v7627
      %v7633 = vlaneseq
      %v7634 = vshrl.u32 %v7633, 7
      %v7635 = vsub.s32 %v2924, %v7634
      %v7636 = vrot.slane %v7113, %v7635
      %v7637 = vsel %vm2929, %v7636, %v7632
      %v7638 = vlaneseq
      %v7639 = vshrl.u32 %v7638, 7
      %v7640 = vsub.s32 %v2931, %v7639
      %v7641 = vrot.slane %v7116, %v7640
      %v7642 = vsel %vm2936, %v7641, %v7637
      %v7643 = vlaneseq
      %v7644 = vshrl.u32 %v7643, 7
      %v7645 = vsub.s32 %v749, %v7644
      %v7646 = vrot.slane %v7119, %v7645
      %v7647 = vlaneseq
      %v7648 = vshrl.u32 %v7647, 7
      %v7649 = vsub.s32 %v2917, %v7648
      %v7650 = vrot.slane %v7122, %v7649
      %v7651 = vsel %vm2922, %v7650, %v7646
      %v7652 = vlaneseq
      %v7653 = vshrl.u32 %v7652, 7
      %v7654 = vsub.s32 %v2924, %v7653
      %v7655 = vrot.slane %v7125, %v7654
      %v7656 = vsel %vm2929, %v7655, %v7651
      %v7657 = vlaneseq
      %v7658 = vshrl.u32 %v7657, 7
      %v7659 = vsub.s32 %v2931, %v7658
      %v7660 = vrot.slane %v7128, %v7659
      %v7661 = vsel %vm2936, %v7660, %v7656
      %v7662 = vlaneseq
      %v7663 = vshrl.u32 %v7662, 7
      %v7664 = vsub.s32 %v749, %v7663
      %v7665 = vrot.slane %v7131, %v7664
      %v7666 = vlaneseq
      %v7667 = vshrl.u32 %v7666, 7
      %v7668 = vsub.s32 %v2917, %v7667
      %v7669 = vrot.slane %v7134, %v7668
      %v7670 = vsel %vm2922, %v7669, %v7665
      %v7671 = vlaneseq
      %v7672 = vshrl.u32 %v7671, 7
      %v7673 = vsub.s32 %v2924, %v7672
      %v7674 = vrot.slane %v7137, %v7673
      %v7675 = vsel %vm2929, %v7674, %v7670
      %v7676 = vlaneseq
      %v7677 = vshrl.u32 %v7676, 7
      %v7678 = vsub.s32 %v2931, %v7677
      %v7679 = vrot.slane %v7140, %v7678
      %v7680 = vsel %vm2936, %v7679, %v7675
      %v7681 = vlaneseq
      %v7682 = vshrl.u32 %v7681, 7
      %v7683 = vsub.s32 %v749, %v7682
      %v7684 = vrot.slane %v7143, %v7683
      %v7685 = vlaneseq
      %v7686 = vshrl.u32 %v7685, 7
      %v7687 = vsub.s32 %v2917, %v7686
      %v7688 = vrot.slane %v7146, %v7687
      %v7689 = vsel %vm2922, %v7688, %v7684
      %v7690 = vlaneseq
      %v7691 = vshrl.u32 %v7690, 7
      %v7692 = vsub.s32 %v2924, %v7691
      %v7693 = vrot.slane %v7149, %v7692
      %v7694 = vsel %vm2929, %v7693, %v7689
      %v7695 = vlaneseq
      %v7696 = vshrl.u32 %v7695, 7
      %v7697 = vsub.s32 %v2931, %v7696
      %v7698 = vrot.slane %v7152, %v7697
      %v7699 = vsel %vm2936, %v7698, %v7694
      %v7700 = vlaneseq
      %v7701 = vshrl.u32 %v7700, 7
      %v7702 = vsub.s32 %v749, %v7701
      %v7703 = vrot.slane %v7155, %v7702
      %v7704 = vlaneseq
      %v7705 = vshrl.u32 %v7704, 7
      %v7706 = vsub.s32 %v2917, %v7705
      %v7707 = vrot.slane %v7158, %v7706
      %v7708 = vsel %vm2922, %v7707, %v7703
      %v7709 = vlaneseq
      %v7710 = vshrl.u32 %v7709, 7
      %v7711 = vsub.s32 %v2924, %v7710
      %v7712 = vrot.slane %v7161, %v7711
      %v7713 = vsel %vm2929, %v7712, %v7708
      %v7714 = vlaneseq
      %v7715 = vshrl.u32 %v7714, 7
      %v7716 = vsub.s32 %v2931, %v7715
      %v7717 = vrot.slane %v7164, %v7716
      %v7718 = vsel %vm2936, %v7717, %v7713
      %v7719 = vlaneseq
      %v7720 = vshrl.u32 %v7719, 7
      %v7721 = vsub.s32 %v749, %v7720
      %v7722 = vrot.slane %v7167, %v7721
      %v7723 = vlaneseq
      %v7724 = vshrl.u32 %v7723, 7
      %v7725 = vsub.s32 %v2917, %v7724
      %v7726 = vrot.slane %v7170, %v7725
      %v7727 = vsel %vm2922, %v7726, %v7722
      %v7728 = vlaneseq
      %v7729 = vshrl.u32 %v7728, 7
      %v7730 = vsub.s32 %v2924, %v7729
      %v7731 = vrot.slane %v7173, %v7730
      %v7732 = vsel %vm2929, %v7731, %v7727
      %v7733 = vlaneseq
      %v7734 = vshrl.u32 %v7733, 7
      %v7735 = vsub.s32 %v2931, %v7734
      %v7736 = vrot.slane %v7176, %v7735
      %v7737 = vsel %vm2936, %v7736, %v7732
      %v7738 = vlaneseq
      %v7739 = vshrl.u32 %v7738, 7
      %v7740 = vsub.s32 %v749, %v7739
      %v7741 = vrot.slane %v7179, %v7740
      %v7742 = vlaneseq
      %v7743 = vshrl.u32 %v7742, 7
      %v7744 = vsub.s32 %v2917, %v7743
      %v7745 = vrot.slane %v7182, %v7744
      %v7746 = vsel %vm2922, %v7745, %v7741
      %v7747 = vlaneseq
      %v7748 = vshrl.u32 %v7747, 7
      %v7749 = vsub.s32 %v2924, %v7748
      %v7750 = vrot.slane %v7185, %v7749
      %v7751 = vsel %vm2929, %v7750, %v7746
      %v7752 = vlaneseq
      %v7753 = vshrl.u32 %v7752, 7
      %v7754 = vsub.s32 %v2931, %v7753
      %v7755 = vrot.slane %v7188, %v7754
      %v7756 = vsel %vm2936, %v7755, %v7751
      %v7757 = vlaneseq
      %v7758 = vshrl.u32 %v7757, 7
      %v7759 = vsub.s32 %v749, %v7758
      %v7760 = vrot.slane %v7191, %v7759
      %v7761 = vlaneseq
      %v7762 = vshrl.u32 %v7761, 7
      %v7763 = vsub.s32 %v2917, %v7762
      %v7764 = vrot.slane %v7194, %v7763
      %v7765 = vsel %vm2922, %v7764, %v7760
      %v7766 = vlaneseq
      %v7767 = vshrl.u32 %v7766, 7
      %v7768 = vsub.s32 %v2924, %v7767
      %v7769 = vrot.slane %v7197, %v7768
      %v7770 = vsel %vm2929, %v7769, %v7765
      %v7771 = vlaneseq
      %v7772 = vshrl.u32 %v7771, 7
      %v7773 = vsub.s32 %v2931, %v7772
      %v7774 = vrot.slane %v7200, %v7773
      %v7775 = vsel %vm2936, %v7774, %v7770
      %v7776 = vlaneseq
      %v7777 = vshrl.u32 %v7776, 7
      %v7778 = vsub.s32 %v749, %v7777
      %v7779 = vrot.slane %v7203, %v7778
      %v7780 = vlaneseq
      %v7781 = vshrl.u32 %v7780, 7
      %v7782 = vsub.s32 %v2917, %v7781
      %v7783 = vrot.slane %v7206, %v7782
      %v7784 = vsel %vm2922, %v7783, %v7779
      %v7785 = vlaneseq
      %v7786 = vshrl.u32 %v7785, 7
      %v7787 = vsub.s32 %v2924, %v7786
      %v7788 = vrot.slane %v7209, %v7787
      %v7789 = vsel %vm2929, %v7788, %v7784
      %v7790 = vlaneseq
      %v7791 = vshrl.u32 %v7790, 7
      %v7792 = vsub.s32 %v2931, %v7791
      %v7793 = vrot.slane %v7212, %v7792
      %v7794 = vsel %vm2936, %v7793, %v7789
      %v7795 = vlaneseq
      %v7796 = vshrl.u32 %v7795, 7
      %v7797 = vsub.s32 %v749, %v7796
      %v7798 = vrot.slane %v7215, %v7797
      %v7799 = vlaneseq
      %v7800 = vshrl.u32 %v7799, 7
      %v7801 = vsub.s32 %v2917, %v7800
      %v7802 = vrot.slane %v7218, %v7801
      %v7803 = vsel %vm2922, %v7802, %v7798
      %v7804 = vlaneseq
      %v7805 = vshrl.u32 %v7804, 7
      %v7806 = vsub.s32 %v2924, %v7805
      %v7807 = vrot.slane %v7221, %v7806
      %v7808 = vsel %vm2929, %v7807, %v7803
      %v7809 = vlaneseq
      %v7810 = vshrl.u32 %v7809, 7
      %v7811 = vsub.s32 %v2931, %v7810
      %v7812 = vrot.slane %v7224, %v7811
      %v7813 = vsel %vm2936, %v7812, %v7808
      %v7814 = vlaneseq
      %v7815 = vshrl.u32 %v7814, 7
      %v7816 = vsub.s32 %v749, %v7815
      %v7817 = vrot.slane %v7227, %v7816
      %v7818 = vlaneseq
      %v7819 = vshrl.u32 %v7818, 7
      %v7820 = vsub.s32 %v2917, %v7819
      %v7821 = vrot.slane %v7230, %v7820
      %v7822 = vsel %vm2922, %v7821, %v7817
      %v7823 = vlaneseq
      %v7824 = vshrl.u32 %v7823, 7
      %v7825 = vsub.s32 %v2924, %v7824
      %v7826 = vrot.slane %v7233, %v7825
      %v7827 = vsel %vm2929, %v7826, %v7822
      %v7828 = vlaneseq
      %v7829 = vshrl.u32 %v7828, 7
      %v7830 = vsub.s32 %v2931, %v7829
      %v7831 = vrot.slane %v7236, %v7830
      %v7832 = vsel %vm2936, %v7831, %v7827
      %v7833 = vlaneseq
      %v7834 = vshrl.u32 %v7833, 7
      %v7835 = vsub.s32 %v749, %v7834
      %v7836 = vrot.slane %v7239, %v7835
      %v7837 = vlaneseq
      %v7838 = vshrl.u32 %v7837, 7
      %v7839 = vsub.s32 %v2917, %v7838
      %v7840 = vrot.slane %v7242, %v7839
      %v7841 = vsel %vm2922, %v7840, %v7836
      %v7842 = vlaneseq
      %v7843 = vshrl.u32 %v7842, 7
      %v7844 = vsub.s32 %v2924, %v7843
      %v7845 = vrot.slane %v7245, %v7844
      %v7846 = vsel %vm2929, %v7845, %v7841
      %v7847 = vlaneseq
      %v7848 = vshrl.u32 %v7847, 7
      %v7849 = vsub.s32 %v2931, %v7848
      %v7850 = vrot.slane %v7248, %v7849
      %v7851 = vsel %vm2936, %v7850, %v7846
      %v7852 = vlaneseq
      %v7853 = vshrl.u32 %v7852, 7
      %v7854 = vsub.s32 %v749, %v7853
      %v7855 = vrot.slane %v7251, %v7854
      %v7856 = vlaneseq
      %v7857 = vshrl.u32 %v7856, 7
      %v7858 = vsub.s32 %v2917, %v7857
      %v7859 = vrot.slane %v7254, %v7858
      %v7860 = vsel %vm2922, %v7859, %v7855
      %v7861 = vlaneseq
      %v7862 = vshrl.u32 %v7861, 7
      %v7863 = vsub.s32 %v2924, %v7862
      %v7864 = vrot.slane %v7257, %v7863
      %v7865 = vsel %vm2929, %v7864, %v7860
      %v7866 = vlaneseq
      %v7867 = vshrl.u32 %v7866, 7
      %v7868 = vsub.s32 %v2931, %v7867
      %v7869 = vrot.slane %v7260, %v7868
      %v7870 = vsel %vm2936, %v7869, %v7865
      %v7871 = vlaneseq
      %v7872 = vshrl.u32 %v7871, 7
      %v7873 = vsub.s32 %v749, %v7872
      %v7874 = vrot.slane %v7263, %v7873
      %v7875 = vlaneseq
      %v7876 = vshrl.u32 %v7875, 7
      %v7877 = vsub.s32 %v2917, %v7876
      %v7878 = vrot.slane %v7266, %v7877
      %v7879 = vsel %vm2922, %v7878, %v7874
      %v7880 = vlaneseq
      %v7881 = vshrl.u32 %v7880, 7
      %v7882 = vsub.s32 %v2924, %v7881
      %v7883 = vrot.slane %v7269, %v7882
      %v7884 = vsel %vm2929, %v7883, %v7879
      %v7885 = vlaneseq
      %v7886 = vshrl.u32 %v7885, 7
      %v7887 = vsub.s32 %v2931, %v7886
      %v7888 = vrot.slane %v7272, %v7887
      %v7889 = vsel %vm2936, %v7888, %v7884
      %v7890 = vlaneseq
      %v7891 = vshrl.u32 %v7890, 7
      %v7892 = vsub.s32 %v749, %v7891
      %v7893 = vrot.slane %v7275, %v7892
      %v7894 = vlaneseq
      %v7895 = vshrl.u32 %v7894, 7
      %v7896 = vsub.s32 %v2917, %v7895
      %v7897 = vrot.slane %v7278, %v7896
      %v7898 = vsel %vm2922, %v7897, %v7893
      %v7899 = vlaneseq
      %v7900 = vshrl.u32 %v7899, 7
      %v7901 = vsub.s32 %v2924, %v7900
      %v7902 = vrot.slane %v7281, %v7901
      %v7903 = vsel %vm2929, %v7902, %v7898
      %v7904 = vlaneseq
      %v7905 = vshrl.u32 %v7904, 7
      %v7906 = vsub.s32 %v2931, %v7905
      %v7907 = vrot.slane %v7284, %v7906
      %v7908 = vsel %vm2936, %v7907, %v7903
      %v7909 = vlaneseq
      %v7910 = vshrl.u32 %v7909, 7
      %v7911 = vsub.s32 %v749, %v7910
      %v7912 = vrot.slane %v7287, %v7911
      %v7913 = vlaneseq
      %v7914 = vshrl.u32 %v7913, 7
      %v7915 = vsub.s32 %v2917, %v7914
      %v7916 = vrot.slane %v7290, %v7915
      %v7917 = vsel %vm2922, %v7916, %v7912
      %v7918 = vlaneseq
      %v7919 = vshrl.u32 %v7918, 7
      %v7920 = vsub.s32 %v2924, %v7919
      %v7921 = vrot.slane %v7293, %v7920
      %v7922 = vsel %vm2929, %v7921, %v7917
      %v7923 = vlaneseq
      %v7924 = vshrl.u32 %v7923, 7
      %v7925 = vsub.s32 %v2931, %v7924
      %v7926 = vrot.slane %v7296, %v7925
      %v7927 = vsel %vm2936, %v7926, %v7922
      %v7928 = vlaneseq
      %v7929 = vshrl.u32 %v7928, 7
      %v7930 = vsub.s32 %v749, %v7929
      %v7931 = vrot.slane %v7299, %v7930
      %v7932 = vlaneseq
      %v7933 = vshrl.u32 %v7932, 7
      %v7934 = vsub.s32 %v2917, %v7933
      %v7935 = vrot.slane %v7302, %v7934
      %v7936 = vsel %vm2922, %v7935, %v7931
      %v7937 = vlaneseq
      %v7938 = vshrl.u32 %v7937, 7
      %v7939 = vsub.s32 %v2924, %v7938
      %v7940 = vrot.slane %v7305, %v7939
      %v7941 = vsel %vm2929, %v7940, %v7936
      %v7942 = vlaneseq
      %v7943 = vshrl.u32 %v7942, 7
      %v7944 = vsub.s32 %v2931, %v7943
      %v7945 = vrot.slane %v7308, %v7944
      %v7946 = vsel %vm2936, %v7945, %v7941
      %v7947 = vlaneseq
      %v7948 = vshrl.u32 %v7947, 7
      %v7949 = vsub.s32 %v749, %v7948
      %v7950 = vrot.slane %v7311, %v7949
      %v7951 = vlaneseq
      %v7952 = vshrl.u32 %v7951, 7
      %v7953 = vsub.s32 %v2917, %v7952
      %v7954 = vrot.slane %v7314, %v7953
      %v7955 = vsel %vm2922, %v7954, %v7950
      %v7956 = vlaneseq
      %v7957 = vshrl.u32 %v7956, 7
      %v7958 = vsub.s32 %v2924, %v7957
      %v7959 = vrot.slane %v7317, %v7958
      %v7960 = vsel %vm2929, %v7959, %v7955
      %v7961 = vlaneseq
      %v7962 = vshrl.u32 %v7961, 7
      %v7963 = vsub.s32 %v2931, %v7962
      %v7964 = vrot.slane %v7320, %v7963
      %v7965 = vsel %vm2936, %v7964, %v7960
      %v7966 = vlaneseq
      %v7967 = vshrl.u32 %v7966, 7
      %v7968 = vsub.s32 %v749, %v7967
      %v7969 = vrot.slane %v7323, %v7968
      %v7970 = vlaneseq
      %v7971 = vshrl.u32 %v7970, 7
      %v7972 = vsub.s32 %v2917, %v7971
      %v7973 = vrot.slane %v7326, %v7972
      %v7974 = vsel %vm2922, %v7973, %v7969
      %v7975 = vlaneseq
      %v7976 = vshrl.u32 %v7975, 7
      %v7977 = vsub.s32 %v2924, %v7976
      %v7978 = vrot.slane %v7329, %v7977
      %v7979 = vsel %vm2929, %v7978, %v7974
      %v7980 = vlaneseq
      %v7981 = vshrl.u32 %v7980, 7
      %v7982 = vsub.s32 %v2931, %v7981
      %v7983 = vrot.slane %v7332, %v7982
      %v7984 = vsel %vm2936, %v7983, %v7979
      %v7985 = vlaneseq
      %v7986 = vshrl.u32 %v7985, 7
      %v7987 = vsub.s32 %v749, %v7986
      %v7988 = vrot.slane %v7335, %v7987
      %v7989 = vlaneseq
      %v7990 = vshrl.u32 %v7989, 7
      %v7991 = vsub.s32 %v2917, %v7990
      %v7992 = vrot.slane %v7338, %v7991
      %v7993 = vsel %vm2922, %v7992, %v7988
      %v7994 = vlaneseq
      %v7995 = vshrl.u32 %v7994, 7
      %v7996 = vsub.s32 %v2924, %v7995
      %v7997 = vrot.slane %v7341, %v7996
      %v7998 = vsel %vm2929, %v7997, %v7993
      %v7999 = vlaneseq
      %v8000 = vshrl.u32 %v7999, 7
      %v8001 = vsub.s32 %v2931, %v8000
      %v8002 = vrot.slane %v7344, %v8001
      %v8003 = vsel %vm2936, %v8002, %v7998
      %v8004 = vlaneseq
      %v8005 = vshrl.u32 %v8004, 7
      %v8006 = vsub.s32 %v749, %v8005
      %v8007 = vrot.slane %v7347, %v8006
      %v8008 = vlaneseq
      %v8009 = vshrl.u32 %v8008, 7
      %v8010 = vsub.s32 %v2917, %v8009
      %v8011 = vrot.slane %v7350, %v8010
      %v8012 = vsel %vm2922, %v8011, %v8007
      %v8013 = vlaneseq
      %v8014 = vshrl.u32 %v8013, 7
      %v8015 = vsub.s32 %v2924, %v8014
      %v8016 = vrot.slane %v7353, %v8015
      %v8017 = vsel %vm2929, %v8016, %v8012
      %v8018 = vlaneseq
      %v8019 = vshrl.u32 %v8018, 7
      %v8020 = vsub.s32 %v2931, %v8019
      %v8021 = vrot.slane %v7356, %v8020
      %v8022 = vsel %vm2936, %v8021, %v8017
      %v8023 = vlaneseq
      %v8024 = vshrl.u32 %v8023, 7
      %v8025 = vsub.s32 %v749, %v8024
      %v8026 = vrot.slane %v7359, %v8025
      %v8027 = vlaneseq
      %v8028 = vshrl.u32 %v8027, 7
      %v8029 = vsub.s32 %v2917, %v8028
      %v8030 = vrot.slane %v7362, %v8029
      %v8031 = vsel %vm2922, %v8030, %v8026
      %v8032 = vlaneseq
      %v8033 = vshrl.u32 %v8032, 7
      %v8034 = vsub.s32 %v2924, %v8033
      %v8035 = vrot.slane %v7365, %v8034
      %v8036 = vsel %vm2929, %v8035, %v8031
      %v8037 = vlaneseq
      %v8038 = vshrl.u32 %v8037, 7
      %v8039 = vsub.s32 %v2931, %v8038
      %v8040 = vrot.slane %v7368, %v8039
      %v8041 = vsel %vm2936, %v8040, %v8036
      %v8042 = vlaneseq
      %v8043 = vshrl.u32 %v8042, 7
      %v8044 = vsub.s32 %v749, %v8043
      %v8045 = vrot.slane %v7371, %v8044
      %v8046 = vlaneseq
      %v8047 = vshrl.u32 %v8046, 7
      %v8048 = vsub.s32 %v2917, %v8047
      %v8049 = vrot.slane %v7374, %v8048
      %v8050 = vsel %vm2922, %v8049, %v8045
      %v8051 = vlaneseq
      %v8052 = vshrl.u32 %v8051, 7
      %v8053 = vsub.s32 %v2924, %v8052
      %v8054 = vrot.slane %v7377, %v8053
      %v8055 = vsel %vm2929, %v8054, %v8050
      %v8056 = vlaneseq
      %v8057 = vshrl.u32 %v8056, 7
      %v8058 = vsub.s32 %v2931, %v8057
      %v8059 = vrot.slane %v7380, %v8058
      %v8060 = vsel %vm2936, %v8059, %v8055
      %v8061 = vlaneseq
      %v8062 = vshrl.u32 %v8061, 7
      %v8063 = vsub.s32 %v749, %v8062
      %v8064 = vrot.slane %v7383, %v8063
      %v8065 = vlaneseq
      %v8066 = vshrl.u32 %v8065, 7
      %v8067 = vsub.s32 %v2917, %v8066
      %v8068 = vrot.slane %v7386, %v8067
      %v8069 = vsel %vm2922, %v8068, %v8064
      %v8070 = vlaneseq
      %v8071 = vshrl.u32 %v8070, 7
      %v8072 = vsub.s32 %v2924, %v8071
      %v8073 = vrot.slane %v7389, %v8072
      %v8074 = vsel %vm2929, %v8073, %v8069
      %v8075 = vlaneseq
      %v8076 = vshrl.u32 %v8075, 7
      %v8077 = vsub.s32 %v2931, %v8076
      %v8078 = vrot.slane %v7392, %v8077
      %v8079 = vsel %vm2936, %v8078, %v8074
      %v8080 = vlaneseq
      %v8081 = vshrl.u32 %v8080, 7
      %v8082 = vsub.s32 %v749, %v8081
      %v8083 = vrot.slane %v7395, %v8082
      %v8084 = vlaneseq
      %v8085 = vshrl.u32 %v8084, 7
      %v8086 = vsub.s32 %v2917, %v8085
      %v8087 = vrot.slane %v7398, %v8086
      %v8088 = vsel %vm2922, %v8087, %v8083
      %v8089 = vlaneseq
      %v8090 = vshrl.u32 %v8089, 7
      %v8091 = vsub.s32 %v2924, %v8090
      %v8092 = vrot.slane %v7401, %v8091
      %v8093 = vsel %vm2929, %v8092, %v8088
      %v8094 = vlaneseq
      %v8095 = vshrl.u32 %v8094, 7
      %v8096 = vsub.s32 %v2931, %v8095
      %v8097 = vrot.slane %v7404, %v8096
      %v8098 = vsel %vm2936, %v8097, %v8093
      %v8099 = vlaneseq
      %v8100 = vshrl.u32 %v8099, 7
      %v8101 = vsub.s32 %v749, %v8100
      %v8102 = vrot.slane %v7407, %v8101
      %v8103 = vlaneseq
      %v8104 = vshrl.u32 %v8103, 7
      %v8105 = vsub.s32 %v2917, %v8104
      %v8106 = vrot.slane %v7410, %v8105
      %v8107 = vsel %vm2922, %v8106, %v8102
      %v8108 = vlaneseq
      %v8109 = vshrl.u32 %v8108, 7
      %v8110 = vsub.s32 %v2924, %v8109
      %v8111 = vrot.slane %v7413, %v8110
      %v8112 = vsel %vm2929, %v8111, %v8107
      %v8113 = vlaneseq
      %v8114 = vshrl.u32 %v8113, 7
      %v8115 = vsub.s32 %v2931, %v8114
      %v8116 = vrot.slane %v7416, %v8115
      %v8117 = vsel %vm2936, %v8116, %v8112
      %v8118 = vlaneseq
      %v8119 = vshrl.u32 %v8118, 7
      %v8120 = vsub.s32 %v749, %v8119
      %v8121 = vrot.slane %v7419, %v8120
      %v8122 = vlaneseq
      %v8123 = vshrl.u32 %v8122, 7
      %v8124 = vsub.s32 %v2917, %v8123
      %v8125 = vrot.slane %v7422, %v8124
      %v8126 = vsel %vm2922, %v8125, %v8121
      %v8127 = vlaneseq
      %v8128 = vshrl.u32 %v8127, 7
      %v8129 = vsub.s32 %v2924, %v8128
      %v8130 = vrot.slane %v7425, %v8129
      %v8131 = vsel %vm2929, %v8130, %v8126
      %v8132 = vlaneseq
      %v8133 = vshrl.u32 %v8132, 7
      %v8134 = vsub.s32 %v2931, %v8133
      %v8135 = vrot.slane %v7428, %v8134
      %v8136 = vsel %vm2936, %v8135, %v8131
      %v8137 = vlaneseq
      %v8138 = vshrl.u32 %v8137, 7
      %v8139 = vsub.s32 %v749, %v8138
      %v8140 = vrot.slane %v7431, %v8139
      %v8141 = vlaneseq
      %v8142 = vshrl.u32 %v8141, 7
      %v8143 = vsub.s32 %v2917, %v8142
      %v8144 = vrot.slane %v7434, %v8143
      %v8145 = vsel %vm2922, %v8144, %v8140
      %v8146 = vlaneseq
      %v8147 = vshrl.u32 %v8146, 7
      %v8148 = vsub.s32 %v2924, %v8147
      %v8149 = vrot.slane %v7437, %v8148
      %v8150 = vsel %vm2929, %v8149, %v8145
      %v8151 = vlaneseq
      %v8152 = vshrl.u32 %v8151, 7
      %v8153 = vsub.s32 %v2931, %v8152
      %v8154 = vrot.slane %v7440, %v8153
      %v8155 = vsel %vm2936, %v8154, %v8150
      %v8156 = vlaneseq
      %v8157 = vshrl.u32 %v8156, 7
      %v8158 = vsub.s32 %v749, %v8157
      %v8159 = vrot.slane %v7443, %v8158
      %v8160 = vlaneseq
      %v8161 = vshrl.u32 %v8160, 7
      %v8162 = vsub.s32 %v2917, %v8161
      %v8163 = vrot.slane %v7446, %v8162
      %v8164 = vsel %vm2922, %v8163, %v8159
      %v8165 = vlaneseq
      %v8166 = vshrl.u32 %v8165, 7
      %v8167 = vsub.s32 %v2924, %v8166
      %v8168 = vrot.slane %v7449, %v8167
      %v8169 = vsel %vm2929, %v8168, %v8164
      %v8170 = vlaneseq
      %v8171 = vshrl.u32 %v8170, 7
      %v8172 = vsub.s32 %v2931, %v8171
      %v8173 = vrot.slane %v7452, %v8172
      %v8174 = vsel %vm2936, %v8173, %v8169
      %v8175 = vlaneseq
      %v8176 = vshrl.u32 %v8175, 7
      %v8177 = vsub.s32 %v749, %v8176
      %v8178 = vrot.slane %v7455, %v8177
      %v8179 = vlaneseq
      %v8180 = vshrl.u32 %v8179, 7
      %v8181 = vsub.s32 %v2917, %v8180
      %v8182 = vrot.slane %v7458, %v8181
      %v8183 = vsel %vm2922, %v8182, %v8178
      %v8184 = vlaneseq
      %v8185 = vshrl.u32 %v8184, 7
      %v8186 = vsub.s32 %v2924, %v8185
      %v8187 = vrot.slane %v7461, %v8186
      %v8188 = vsel %vm2929, %v8187, %v8183
      %v8189 = vlaneseq
      %v8190 = vshrl.u32 %v8189, 7
      %v8191 = vsub.s32 %v2931, %v8190
      %v8192 = vrot.slane %v7464, %v8191
      %v8193 = vsel %vm2936, %v8192, %v8188
      %v8194 = vlaneseq
      %v8195 = vshrl.u32 %v8194, 7
      %v8196 = vsub.s32 %v749, %v8195
      %v8197 = vrot.slane %v7467, %v8196
      %v8198 = vlaneseq
      %v8199 = vshrl.u32 %v8198, 7
      %v8200 = vsub.s32 %v2917, %v8199
      %v8201 = vrot.slane %v7470, %v8200
      %v8202 = vsel %vm2922, %v8201, %v8197
      %v8203 = vlaneseq
      %v8204 = vshrl.u32 %v8203, 7
      %v8205 = vsub.s32 %v2924, %v8204
      %v8206 = vrot.slane %v7473, %v8205
      %v8207 = vsel %vm2929, %v8206, %v8202
      %v8208 = vlaneseq
      %v8209 = vshrl.u32 %v8208, 7
      %v8210 = vsub.s32 %v2931, %v8209
      %v8211 = vrot.slane %v7476, %v8210
      %v8212 = vsel %vm2936, %v8211, %v8207
      %v8213 = vsel %vm3527, %v7642, %v7623
      %v8214 = vsel %vm3529, %v7661, %v8213
      %v8215 = vsel %vm3531, %v7680, %v8214
      %v8216 = vsel %vm3533, %v7699, %v8215
      %v8217 = vsel %vm3535, %v7718, %v8216
      %v8218 = vsel %vm3537, %v7737, %v8217
      %v8219 = vsel %vm3539, %v7756, %v8218
      %v8220 = vsel %vm3527, %v7794, %v7775
      %v8221 = vsel %vm3529, %v7813, %v8220
      %v8222 = vsel %vm3531, %v7832, %v8221
      %v8223 = vsel %vm3533, %v7851, %v8222
      %v8224 = vsel %vm3535, %v7870, %v8223
      %v8225 = vsel %vm3537, %v7889, %v8224
      %v8226 = vsel %vm3539, %v7908, %v8225
      %v8227 = vsel %vm3527, %v7946, %v7927
      %v8228 = vsel %vm3529, %v7965, %v8227
      %v8229 = vsel %vm3531, %v7984, %v8228
      %v8230 = vsel %vm3533, %v8003, %v8229
      %v8231 = vsel %vm3535, %v8022, %v8230
      %v8232 = vsel %vm3537, %v8041, %v8231
      %v8233 = vsel %vm3539, %v8060, %v8232
      %v8234 = vsel %vm3527, %v8098, %v8079
      %v8235 = vsel %vm3529, %v8117, %v8234
      %v8236 = vsel %vm3531, %v8136, %v8235
      %v8237 = vsel %vm3533, %v8155, %v8236
      %v8238 = vsel %vm3535, %v8174, %v8237
      %v8239 = vsel %vm3537, %v8193, %v8238
      %v8240 = vsel %vm3539, %v8212, %v8239
      %v8245 = vsel %vm758, %v8219, -1e+30
      %v8246 = vsel %vm759, %v8226, -1e+30
      %v8247 = vsel %vm760, %v8233, -1e+30
      %v8248 = vsel %vm761, %v8240, -1e+30
      %v8249 = vsel %vm770, %v8245, -inf
      %8250 = vmax.xlane.f32.xlu0 %v8249
      %v8251 = vpop.xlane.xlu0 %8250
      %v8252 = vsel %vm770, %v8246, -inf
      %8253 = vmax.xlane.f32.xlu0 %v8252
      %v8254 = vpop.xlane.xlu0 %8253
      %v8255 = vsel %vm770, %v8247, -inf
      %8256 = vmax.xlane.f32.xlu0 %v8255
      %v8257 = vpop.xlane.xlu0 %8256
      %v8258 = vsel %vm770, %v8248, -inf
      %8259 = vmax.xlane.f32.xlu0 %v8258
      %v8260 = vpop.xlane.xlu0 %8259
      %v8261 = vsub.f32 %v8245, %v8251
      %v8262 = vsub.f32 %v8246, %v8254
      %v8263 = vsub.f32 %v8247, %v8257
      %v8264 = vsub.f32 %v8248, %v8260
      %v8265 = vmul.f32 %v8261, 1.442695
      %v8266 = vpow.pop %v8265
      %v8267 = vmul.f32 %v8262, 1.442695
      %v8268 = vpow.pop %v8267
      %v8269 = vmul.f32 %v8263, 1.442695
      %v8270 = vpow.pop %v8269
      %v8271 = vmul.f32 %v8264, 1.442695
      %v8272 = vpow.pop %v8271
      %v8273 = vsel %vm770, %v8266, 0.0
      %8274 = vadd.xlane.f32.xlu0 %v8273
      %v8275 = vpop.xlane.xlu0 %8274
      %v8276 = vsel %vm770, %v8268, 0.0
      %8277 = vadd.xlane.f32.xlu0 %v8276
      %v8278 = vpop.xlane.xlu0 %8277
      %v8279 = vsel %vm770, %v8270, 0.0
      %8280 = vadd.xlane.f32.xlu0 %v8279
      %v8281 = vpop.xlane.xlu0 %8280
      %v8282 = vsel %vm770, %v8272, 0.0
      %8283 = vadd.xlane.f32.xlu0 %v8282
      %v8284 = vpop.xlane.xlu0 %8283
      %v8285 = vrcp.pop %v8275
      %v8286 = vrcp.pop %v8278
      %v8287 = vrcp.pop %v8281
      %v8288 = vrcp.pop %v8284
      %v8289 = vmul.f32 %v8266, %v8285
      %v8290 = vmul.f32 %v8268, %v8286
      %v8291 = vmul.f32 %v8270, %v8287
      %v8292 = vmul.f32 %v8272, %v8288
      %v8293 = vlaneseq
      %v8294 = vshrl.u32 %v8293, 7
      %v8295 = vsub.s32 6, %v8294
      %v8296 = vrot.slane %v247, %v8295
      %v8298 = vsel %vm770, %v8289, 0
      %v8301 = vsel %vm770, %v8290, 0
      %v8304 = vsel %vm770, %v8291, 0
      %v8307 = vsel %vm770, %v8292, 0
      %8309 = vmatprep.subr.mxu0 0.0
      %8310 = vmatpush1.msra.mxu0 %v5543
      %8311 = vmatprep.subr.mxu0 0.0
      %8312 = vmatpush1.msra.mxu0 %v5548
      %8313 = vmatprep.subr.mxu0 0.0
      %8314 = vmatpush1.msra.mxu0 %v5553
      %8315 = vmatprep.subr.mxu0 0.0
      %8316 = vmatpush1.msra.mxu0 %v5558
      %8317 = vmatprep.subr.mxu0 0.0
      %8318 = vmatpush1.msra.mxu0 0.0
      %8319 = vmatprep.subr.mxu0 0.0
      %8320 = vmatpush1.msra.mxu0 0.0
      %8321 = vmatprep.subr.mxu0 0.0
      %8322 = vmatpush1.msra.mxu0 0.0
      %8323 = vmatprep.subr.mxu0 0.0
      %8324 = vmatpush1.msra.mxu0 0.0
      %8325 = vmatprep.subr.mxu0 0.0
      %8326 = vmatpush1.msra.mxu0 0.0
      %8327 = vmatprep.subr.mxu0 0.0
      %8328 = vmatpush1.msra.mxu0 0.0
      %8329 = vmatprep.subr.mxu0 0.0
      %8330 = vmatpush1.msra.mxu0 0.0
      %8331 = vmatprep.subr.mxu0 0.0
      %8332 = vmatpush1.msra.mxu0 0.0
      %8333 = vmatprep.subr.mxu0 0.0
      %8334 = vmatpush1.msra.mxu0 0.0
      %8335 = vmatprep.subr.mxu0 0.0
      %8336 = vmatpush1.msra.mxu0 0.0
      %8337 = vmatprep.subr.mxu0 0.0
      %8338 = vmatpush1.msra.mxu0 0.0
      %8339 = vmatprep.subr.mxu0 0.0
      %8340 = vmatpush1.msra.mxu0 0.0
      %8341 = vmatprep.subr.mxu0 0.0
      %8342 = vmatpush1.msra.mxu0 0.0
      %8343 = vmatprep.subr.mxu0 0.0
      %8344 = vmatpush1.msra.mxu0 0.0
      %8345 = vmatprep.subr.mxu0 0.0
      %8346 = vmatpush1.msra.mxu0 0.0
      %8347 = vmatprep.subr.mxu0 0.0
      %8348 = vmatpush1.msra.mxu0 0.0
      %8349 = vmatprep.subr.mxu0 0.0
      %8350 = vmatpush1.msra.mxu0 0.0
      %8351 = vmatprep.subr.mxu0 0.0
      %8352 = vmatpush1.msra.mxu0 0.0
      %8353 = vmatprep.subr.mxu0 0.0
      %8354 = vmatpush1.msra.mxu0 0.0
      %8355 = vmatprep.subr.mxu0 0.0
      %8356 = vmatpush1.msra.mxu0 0.0
      %8357 = vmatprep.subr.mxu0 0.0
      %8358 = vmatpush1.msra.mxu0 0.0
      %8359 = vmatprep.subr.mxu0 0.0
      %8360 = vmatpush1.msra.mxu0 0.0
      %8361 = vmatprep.subr.mxu0 0.0
      %8362 = vmatpush1.msra.mxu0 0.0
      %8363 = vmatprep.subr.mxu0 0.0
      %8364 = vmatpush1.msra.mxu0 0.0
      %8365 = vmatprep.subr.mxu0 0.0
      %8366 = vmatpush1.msra.mxu0 0.0
      %8367 = vmatprep.subr.mxu0 0.0
      %8368 = vmatpush1.msra.mxu0 0.0
      %8369 = vmatprep.subr.mxu0 0.0
      %8370 = vmatpush1.msra.mxu0 0.0
      %8371 = vmatprep.subr.mxu0 0.0
      %8372 = vmatpush1.msra.mxu0 0.0
      %8373 = vmatprep.mubr.f32.mxu0 0.0
      %8374 = vmatmul.mubr.f32.gmra.mrb[0].mxu0 %v8298
      %v8375 = vpop.f32.mrb[0].mxu0
      %v8376 = vadd.f32 %v8296, %v8375
      %v8377 = vpop.f32.mrb[0].mxu0
      %8378 = vmatprep.mubr.f32.mxu0 0.0
      %8379 = vmatmul.mubr.f32.gmra.mrb[0].mxu0 %v8301
      %v8380 = vpop.f32.mrb[0].mxu0
      %v8381 = vadd.f32 %v8296, %v8380
      %v8382 = vpop.f32.mrb[0].mxu0
      %8383 = vmatprep.mubr.f32.mxu0 0.0
      %8384 = vmatmul.mubr.f32.gmra.mrb[0].mxu0 %v8304
      %v8385 = vpop.f32.mrb[0].mxu0
      %v8386 = vadd.f32 %v8296, %v8385
      %v8387 = vpop.f32.mrb[0].mxu0
      %8388 = vmatprep.mubr.f32.mxu0 0.0
      %8389 = vmatmul.mubr.f32.gmra.mrb[0].mxu0 %v8307
      %v8390 = vpop.f32.mrb[0].mxu0
      %v8391 = vadd.f32 %v8296, %v8390
      %v8392 = vpop.f32.mrb[0].mxu0
      %8393 = vdwg.mxu0
      %v8394 = vlaneseq
      %v8395 = vshrl.u32 %v8394, 7
      %v8396 = vsub.s32 7, %v8395
      %v8397 = vrot.slane %v247, %v8396
      %v8398 = vmul.f32 %v8376, %v8397
      %v8399 = vmul.f32 %v8381, %v8397
      %v8400 = vmul.f32 %v8386, %v8397
      %v8401 = vmul.f32 %v8391, %v8397
      %v8402 = vsel %vm5463, %v8398, 0.0
      %8403 = vadd.xlane.f32.xlu0 %v8402
      %v8404 = vpop.xlane.xlu0 %8403
      %v8405 = vsel %vm5463, %v8399, 0.0
      %8406 = vadd.xlane.f32.xlu0 %v8405
      %v8407 = vpop.xlane.xlu0 %8406
      %v8408 = vsel %vm5463, %v8400, 0.0
      %8409 = vadd.xlane.f32.xlu0 %v8408
      %v8410 = vpop.xlane.xlu0 %8409
      %v8411 = vsel %vm5463, %v8401, 0.0
      %8412 = vadd.xlane.f32.xlu0 %v8411
      %v8413 = vpop.xlane.xlu0 %8412
      %v8414 = vadd.f32 %v8404, %v8397
      %v8415 = vadd.f32 %v8407, %v8397
      %v8416 = vadd.f32 %v8410, %v8397
      %v8417 = vadd.f32 %v8413, %v8397
      %8422 = vrot.lane.b32.xlu0 %v8414, 112
      %v8423 = vpop.permute.xlu0 %8422
      %8424 = vrot.lane.b32.xlu0 %v8415, 112
      %v8425 = vpop.permute.xlu0 %8424
      %8426 = vrot.lane.b32.xlu0 %v8416, 112
      %v8427 = vpop.permute.xlu0 %8426
      %8428 = vrot.lane.b32.xlu0 %v8417, 112
      %v8429 = vpop.permute.xlu0 %8428
      %vm8434 = vcmask 7168
      %8435 = vst.msk [vmem:[%s241] sm:$0xff] %vm8434, %v8423
      %8436 = vst.msk [vmem:[%s241 + $0x8] sm:$0xff] %vm8434, %v8425
      %8437 = vst.msk [vmem:[%s241 + $0x10] sm:$0xff] %vm8434, %v8427
      %8438 = vst.msk [vmem:[%s241 + $0x18] sm:$0xff] %vm8434, %v8429
      %p8439 = scmp.lt.s32.totalorder %s16, 3
      %s8440 = scalar_select %p8439, %s16, 3
      %s8441 = smul.addr %s8440, 4
      %s8442 = smul.addr %s8441, 8
      %s8443 = scalar_lea.vmem %s5, %s8442
      // Predicated region
      $region41: #{gat_net_forward_batched.1} parent=39 // pred_check
        %p8444 = pneg %p149
      $region42: #{gat_net_forward_batched.1} parent=39 // pred_check_branch
        %8446 = sbr.rel (%p8444) target = $region44
      $region43: #{gat_net_forward_batched.1} parent=39 // pred_region
        _
      $region44: #{gat_net_forward_batched.1} parent=39 // pred_fallthru
        _
    $region40: #{gat_net_forward_batched.1} parent=5 // pred_fallthru
      _
    %p8447 = scmp.le.s32.totalorder 2, %s11
    // Predicated region
    $region45: #{gat_net_forward_batched.1} parent=5 // pred_check
      %p8448 = pneg %p8447
    $region46: #{gat_net_forward_batched.1} parent=5 // pred_check_branch
      %8450 = sbr.rel (%p8448) target = $region48
    $region47: #{gat_net_forward_batched.1} parent=5 // pred_region
      %s8451 = ssub.s32 %s11, 2
      // Predicated region
      $region49: #{gat_net_forward_batched.1} parent=47 // pred_check
        %p8452 = pneg %p155
      $region50: #{gat_net_forward_batched.1} parent=47 // pred_check_branch
        %8454 = sbr.rel (%p8452) target = $region52
      $region51: #{gat_net_forward_batched.1} parent=47 // pred_region
        %p8455 = scmp.lt.s32.totalorder %s17, 3
        %s8456 = scalar_select %p8455, %s17, 3
        %s8457 = smul.addr %s8456, 4
        %s8458 = smul.addr %s8457, 8
        %s8459 = scalar_lea.vmem %s5, %s8458
      $region52: #{gat_net_forward_batched.1} parent=47 // pred_fallthru
        _
    $region48: #{gat_net_forward_batched.1} parent=5 // pred_fallthru
      _
  $region6: #{gat_net_forward_batched.1} parent=0 // loop_footer
    %s15 = sadd.s32 1, %s11
  $region7: #{gat_net_forward_batched.1} parent=0 // loop_footer_branch
    %10 = sbr.rel target = $region3
  $region8: #{gat_net_forward_batched.1} parent=0 // loop_exit
    _

</llo_original>
